<compile_context>
chip_gen: v7x
topology: tpu7x:2x2x1
jax: 0.10.0
libtpu: 0.0.40
codegen_flags: <defaults>
</compile_context>

<pallas_src>
import collections
import functools
import math

import numpy as np
import jax
import jax.numpy as jnp
from jax.experimental import pallas as pl
from jax.experimental.pallas import tpu as pltpu


_MXU_DTYPE = jnp.bfloat16   # MXU operand dtype; accumulation stays f32.

LayerCfg = collections.namedtuple(
    "LayerCfg", ["stride", "cin", "cout", "hin", "win", "hout", "wout", "wf"])


def _round_up(v, m):
    return (v + m - 1) // m * m


def _layer_cfgs(H, W):
    """Reduced DRN-style base: stride pattern 1,2,2,2 (total stride 8)."""
    specs = [(3, 8, 1), (8, 16, 2), (16, 16, 2), (16, 32, 2)]
    cfgs = []
    hin, win = H, W
    for cin, cout, stride in specs:
        hout, wout = hin // stride, win // stride
        # wf = width at which the taps are evaluated (kept a multiple of 8 so
        # every in-kernel reshape is sublane aligned).
        wf = wout if stride == 1 else _round_up(win, 8)
        cfgs.append(LayerCfg(stride, cin, cout, hin, win, hout, wout, wf))
        hin, win = hout, wout
    return tuple(cfgs)


def _build_up_matrix(h_in):
    """1-D factor of the fixed bilinear ConvTranspose2d(k=16, s=8, p=4)."""
    K, S, P = 16, 8, 4
    h_out = (h_in - 1) * S - 2 * P + K            # == 8 * h_in
    f = math.ceil(K / 2)                          # 8
    c = (2 * f - 1 - f % 2) / (2.0 * f)           # 15/16
    w1d = np.array([1.0 - abs(i / f - c) for i in range(K)], dtype=np.float32)
    a = np.zeros((h_out, h_in), dtype=np.float32)
    for o in range(h_out):
        for i in range(h_in):
            k = o + P - S * i
            if 0 <= k < K:
                a[o, i] += w1d[k]
    return a


def _const_spec(shape):
    """Full-array block that is identical for every grid step."""
    return pl.BlockSpec(tuple(shape), lambda i, _nd=len(shape): (0,) * _nd)


# -----------------------------------------------------------------------------
# Fused kernel: conv backbone + 1x1 seg head + bilinear x8 up-sampling.
# -----------------------------------------------------------------------------
def _generator_kernel(cfgs,
                      x_ref,
                      w0_ref, b0_ref, w1_ref, b1_ref,
                      w2_ref, b2_ref, w3_ref, b3_ref,
                      wseg_ref, bseg_ref,
                      s1_ref, s2_ref, s3_ref,
                      k1t_ref, k2t_ref,
                      o_ref,
                      pad0, pad1, pad2, pad3):
    pads = (pad0, pad1, pad2, pad3)
    wrefs = (w0_ref, w1_ref, w2_ref, w3_ref)
    brefs = (b0_ref, b1_ref, b2_ref, b3_ref)
    srefs = (None, s1_ref, s2_ref, s3_ref)

    # Zero the halo buffers (borders must be zero; interiors are overwritten).
    for p in pads:
        p[...] = jnp.zeros_like(p)

    # Stage the (H, W, 3) input tile into the first halo buffer.
    c0 = cfgs[0]
    pad0[1:1 + c0.hin, 1:1 + c0.win, :] = x_ref[0]

    h = None
    for li, cfg in enumerate(cfgs):
        pad_ref = pads[li]
        acc = jnp.zeros((cfg.hout * cfg.wf, cfg.cout), jnp.float32)
        # 3x3 taps: each tap is one flat MXU matmul (M = hout*wf, K = cin).
        for ky in range(3):
            for kx in range(3):
                blk = pad_ref[ky:ky + cfg.stride * cfg.hout, kx:kx + cfg.wf, :]
                if cfg.stride > 1:
                    # H decimation: leading-dim regrouping only (layout free).
                    blk = blk.reshape(cfg.hout, cfg.stride, cfg.wf, cfg.cin)[:, 0]
                patch = blk.reshape(cfg.hout * cfg.wf, cfg.cin).astype(_MXU_DTYPE)
                acc = acc + jnp.dot(patch, wrefs[li][ky * 3 + kx],
                                    preferred_element_type=jnp.float32)
        if cfg.stride > 1:
            # W decimation folded into one matmul with a 0/1 selection matrix
            # (avoids sublane-strided loads; stays entirely in VMEM).
            acc = jnp.dot(srefs[li][...], acc, preferred_element_type=jnp.float32)
        # f32 bias + ReLU epilogue on the VPU.
        h = jnp.maximum(acc + brefs[li][...], 0.0)          # (hout*wout, cout)

        if li + 1 < len(cfgs):
            nxt = pads[li + 1]
            if cfg.wout % 8 == 0:
                nxt[1:1 + cfg.hout, 1:1 + cfg.wout, :] = (
                    h.reshape(cfg.hout, cfg.wout, cfg.cout))
            else:
                # Row-wise interior write keeps every reshape sublane aligned.
                for oy in range(cfg.hout):
                    nxt[1 + oy, 1:1 + cfg.wout, :] = (
                        h[oy * cfg.wout:(oy + 1) * cfg.wout, :])

    # 1x1 segmentation head to 2 channels (no ReLU).
    seg = jnp.dot(h.astype(_MXU_DTYPE), wseg_ref[...],
                  preferred_element_type=jnp.float32) + bseg_ref[...]

    # Fixed bilinear x8 ConvTranspose (k=16, s=8, p=4, groups=2), separable:
    #   OUT[c, (oy,ox)] = (seg^T @ kron(A_h, I_Win)^T @ kron(I_Hout, A_w)^T)
    # Both channels are folded into the same two MXU matmuls; the result is
    # stored lane-dense as (C, Hout*Wout).
    seg_t = seg.T                                            # (2, hin_u*win_u)
    up = jnp.dot(seg_t, k1t_ref[...], preferred_element_type=jnp.float32)
    up = jnp.dot(up, k2t_ref[...], preferred_element_type=jnp.float32)
    o_ref[0] = up.astype(o_ref.dtype)


# -----------------------------------------------------------------------------
# Wrapper: weight prep + constant matrices + pallas_call.
# -----------------------------------------------------------------------------
def generator_forward(x_nchw, params):
    """x_nchw: (N, 3, H, W) NCHW -> (N, 2, H, W) NCHW."""
    n, cin, H, W = x_nchw.shape
    assert cin == 3 and H % 8 == 0 and W % 8 == 0, (cin, H, W)
    cfgs = _layer_cfgs(H, W)

    x_nhwc = jnp.transpose(x_nchw, (0, 2, 3, 1)).astype(jnp.float32)

    # Weight prep: tap-major (9, Cin, Cout) bf16 weights, (1, Cout) f32 biases.
    conv_w, conv_b = [], []
    for i in range(4):
        w = params[f"w{i}"]
        conv_w.append(jnp.reshape(w, (9, w.shape[2], w.shape[3])).astype(_MXU_DTYPE))
        conv_b.append(jnp.reshape(params[f"b{i}"], (1, -1)).astype(jnp.float32))
    wseg = jnp.reshape(params["wseg"],
                       (params["wseg"].shape[2], params["wseg"].shape[3])
                       ).astype(_MXU_DTYPE)                      # (32, 2)
    bseg = jnp.reshape(params["bseg"], (1, -1)).astype(jnp.float32)

    # 0/1 W-decimation (column selection) matrices for the stride-2 layers.
    s_mats = []
    for cfg in cfgs[1:]:
        s = np.zeros((cfg.hout * cfg.wout, cfg.hout * cfg.wf), np.float32)
        for oy in range(cfg.hout):
            for ox in range(cfg.wout):
                s[oy * cfg.wout + ox, oy * cfg.wf + cfg.stride * ox] = 1.0
        s_mats.append(jnp.asarray(s))

    # Separable factors of the fixed bilinear ConvTranspose.
    hin_u, win_u = cfgs[-1].hout, cfgs[-1].wout
    a_h = _build_up_matrix(hin_u)                     # (H, H//8)
    a_w = _build_up_matrix(win_u)                     # (W, W//8)
    k1t = jnp.asarray(np.kron(a_h, np.eye(win_u, dtype=np.float32)).T)
    k2t = jnp.asarray(np.kron(np.eye(a_h.shape[0], dtype=np.float32), a_w).T)

    kernel = functools.partial(_generator_kernel, cfgs)

    in_specs = [pl.BlockSpec((1, H, W, 3), lambda i: (i, 0, 0, 0))]
    operands = [x_nhwc]
    for w, b in zip(conv_w, conv_b):
        in_specs += [_const_spec(w.shape), _const_spec(b.shape)]
        operands += [w, b]
    in_specs += [_const_spec(wseg.shape), _const_spec(bseg.shape)]
    operands += [wseg, bseg]
    for s in s_mats:
        in_specs.append(_const_spec(s.shape))
        operands.append(s)
    in_specs += [_const_spec(k1t.shape), _const_spec(k2t.shape)]
    operands += [k1t, k2t]

    out = pl.pallas_call(
        kernel,
        out_shape=jax.ShapeDtypeStruct((n, 2, H * W), jnp.float32),
        grid=(n,),
        in_specs=in_specs,
        out_specs=pl.BlockSpec((1, 2, H * W), lambda i: (i, 0, 0)),
        scratch_shapes=[pltpu.VMEM((c.hin + 2, c.wf + 2, c.cin), jnp.float32)
                        for c in cfgs],
        compiler_params=pltpu.CompilerParams(
            dimension_semantics=("parallel",)),
    )(*operands)
    # (N, 2, H*W) -> (N, 2, H, W): contiguous, free metadata reshape.
    return out.reshape(n, 2, H, W)


# -----------------------------------------------------------------------------
# Parameter init + pure-JAX reference (for a correctness cross-check).
# -----------------------------------------------------------------------------
def init_params(key):
    def conv_init(k_, ksz, cin, cout):
        kw, kb = jax.random.split(k_)
        fan = ksz * ksz * cout
        std = math.sqrt(2.0 / fan)
        w = jax.random.normal(kw, (ksz, ksz, cin, cout), jnp.float32) * std
        b = jax.random.normal(kb, (cout,), jnp.float32) * 0.05
        return w, b

    keys = jax.random.split(key, 5)
    p = {}
    p["w0"], p["b0"] = conv_init(keys[0], 3, 3, 8)     # stride 1
    p["w1"], p["b1"] = conv_init(keys[1], 3, 8, 16)    # stride 2
    p["w2"], p["b2"] = conv_init(keys[2], 3, 16, 16)   # stride 2
    p["w3"], p["b3"] = conv_init(keys[3], 3, 16, 32)   # stride 2
    p["wseg"], p["bseg"] = conv_init(keys[4], 1, 32, 2)  # 1x1 seg head
    return p


def _reference_forward(x_nchw, params):
    """Pure-JAX/XLA reference of the same reduced model (f32)."""
    x = jnp.transpose(x_nchw, (0, 2, 3, 1)).astype(jnp.float32)
    dn = ("NHWC", "HWIO", "NHWC")

    def conv(h, w, b, stride, relu=True):
        out = jax.lax.conv_general_dilated(
            h, w, (stride, stride), ((1, 1), (1, 1)), dimension_numbers=dn)
        out = out + b.reshape(1, 1, 1, -1)
        return jnp.maximum(out, 0.0) if relu else out

    h = conv(x, params["w0"], params["b0"], 1)
    h = conv(h, params["w1"], params["b1"], 2)
    h = conv(h, params["w2"], params["b2"], 2)
    h = conv(h, params["w3"], params["b3"], 2)
    seg = jax.lax.conv_general_dilated(
        h, params["wseg"], (1, 1), ((0, 0), (0, 0)), dimension_numbers=dn)
    seg = seg + params["bseg"].reshape(1, 1, 1, -1)

    a_h = jnp.asarray(_build_up_matrix(seg.shape[1]))
    a_w = jnp.asarray(_build_up_matrix(seg.shape[2]))
    return jnp.einsum("oi,nijc,pj->ncop", a_h, seg, a_w)


if __name__ == "__main__":
    key = jax.random.PRNGKey(0)
    kx, kp = jax.random.split(key)

    # small shapes: batch=2, 3 input channels, 16x16 spatial
    x = jax.random.normal(kx, (2, 3, 16, 16), dtype=jnp.float32)
    params = init_params(kp)

    fwd = jax.jit(generator_forward)
    y = jax.block_until_ready(fwd(x, params))

    assert y.shape == (2, 2, 16, 16), y.shape
    assert y.dtype == jnp.float32
    assert bool(jnp.all(jnp.isfinite(y)))

    # Cross-check vs pure-JAX reference (kernel feeds the MXU bf16 operands, so
    # compare relative to the output peak with a generous margin).
    y_ref = _reference_forward(x, params)
    rel_err = float(jnp.max(jnp.abs(y - y_ref)) /
                    (jnp.max(jnp.abs(y_ref)) + 1e-6))
    assert rel_err < 0.1, f"kernel/reference mismatch: rel_err={rel_err:.4f}"

    print("KERNEL_OK")
</pallas_src>

<mosaic_0001>
module attributes {stable_mosaic.version = 11 : i64} {
  func.func @_generator_kernel(%arg0: i32, %arg1: memref<1x16x16x3xf32, #tpu.memory_space<vmem>>, %arg2: memref<9x3x8xbf16, #tpu.memory_space<vmem>>, %arg3: memref<1x8xf32, #tpu.memory_space<vmem>>, %arg4: memref<9x8x16xbf16, #tpu.memory_space<vmem>>, %arg5: memref<1x16xf32, #tpu.memory_space<vmem>>, %arg6: memref<9x16x16xbf16, #tpu.memory_space<vmem>>, %arg7: memref<1x16xf32, #tpu.memory_space<vmem>>, %arg8: memref<9x16x32xbf16, #tpu.memory_space<vmem>>, %arg9: memref<1x32xf32, #tpu.memory_space<vmem>>, %arg10: memref<32x2xbf16, #tpu.memory_space<vmem>>, %arg11: memref<1x2xf32, #tpu.memory_space<vmem>>, %arg12: memref<64x128xf32, #tpu.memory_space<vmem>>, %arg13: memref<16x32xf32, #tpu.memory_space<vmem>>, %arg14: memref<4x16xf32, #tpu.memory_space<vmem>>, %arg15: memref<4x32xf32, #tpu.memory_space<vmem>>, %arg16: memref<32x256xf32, #tpu.memory_space<vmem>>, %arg17: memref<1x2x256xf32, #tpu.memory_space<vmem>>, %arg18: memref<18x18x3xf32, #tpu.memory_space<vmem>>, %arg19: memref<18x18x8xf32, #tpu.memory_space<vmem>>, %arg20: memref<10x10x16xf32, #tpu.memory_space<vmem>>, %arg21: memref<6x10x16xf32, #tpu.memory_space<vmem>>) attributes {dimension_semantics = [#tpu.dimension_semantics<parallel>], iteration_bounds = array<i64: 2>, scalar_prefetch = 0 : i64, scratch_operands = 4 : i64, tpu.core_type = #tpu.core_type<tc>, window_params = [{transform_indices = @transform_0, window_bounds = array<i64: 1, 16, 16, 3>}, {pipeline_mode = #tpu.pipeline_mode<synchronous>, transform_indices = @transform_1, window_bounds = array<i64: 9, 3, 8>}, {pipeline_mode = #tpu.pipeline_mode<synchronous>, transform_indices = @transform_2, window_bounds = array<i64: 1, 8>}, {pipeline_mode = #tpu.pipeline_mode<synchronous>, transform_indices = @transform_3, window_bounds = array<i64: 9, 8, 16>}, {pipeline_mode = #tpu.pipeline_mode<synchronous>, transform_indices = @transform_4, window_bounds = array<i64: 1, 16>}, {pipeline_mode = #tpu.pipeline_mode<synchronous>, transform_indices = @transform_5, window_bounds = array<i64: 9, 16, 16>}, {pipeline_mode = #tpu.pipeline_mode<synchronous>, transform_indices = @transform_6, window_bounds = array<i64: 1, 16>}, {pipeline_mode = #tpu.pipeline_mode<synchronous>, transform_indices = @transform_7, window_bounds = array<i64: 9, 16, 32>}, {pipeline_mode = #tpu.pipeline_mode<synchronous>, transform_indices = @transform_8, window_bounds = array<i64: 1, 32>}, {pipeline_mode = #tpu.pipeline_mode<synchronous>, transform_indices = @transform_9, window_bounds = array<i64: 32, 2>}, {pipeline_mode = #tpu.pipeline_mode<synchronous>, transform_indices = @transform_10, window_bounds = array<i64: 1, 2>}, {pipeline_mode = #tpu.pipeline_mode<synchronous>, transform_indices = @transform_11, window_bounds = array<i64: 64, 128>}, {pipeline_mode = #tpu.pipeline_mode<synchronous>, transform_indices = @transform_12, window_bounds = array<i64: 16, 32>}, {pipeline_mode = #tpu.pipeline_mode<synchronous>, transform_indices = @transform_13, window_bounds = array<i64: 4, 16>}, {pipeline_mode = #tpu.pipeline_mode<synchronous>, transform_indices = @transform_14, window_bounds = array<i64: 4, 32>}, {pipeline_mode = #tpu.pipeline_mode<synchronous>, transform_indices = @transform_15, window_bounds = array<i64: 32, 256>}, {transform_indices = @transform_16, window_bounds = array<i64: 1, 2, 256>}]} {
    %cst = arith.constant 0.000000e+00 : f32
    %0 = vector.broadcast %cst : f32 to vector<18x18x3xf32>
    %c0 = arith.constant 0 : index
    %c0_0 = arith.constant 0 : index
    %c0_1 = arith.constant 0 : index
    %1 = vector.load %arg18[%c0, %c0_0, %c0_1] : memref<18x18x3xf32, #tpu.memory_space<vmem>>, vector<18x18x3xf32>
    tpu.vector_store %arg18[%c0, %c0_0, %c0_1], %0 {strides = array<i32>} : memref<18x18x3xf32, #tpu.memory_space<vmem>>, vector<18x18x3xf32>,
    %cst_2 = arith.constant 0.000000e+00 : f32
    %2 = vector.broadcast %cst_2 : f32 to vector<18x18x8xf32>
    %c0_3 = arith.constant 0 : index
    %c0_4 = arith.constant 0 : index
    %c0_5 = arith.constant 0 : index
    %3 = vector.load %arg19[%c0_3, %c0_4, %c0_5] : memref<18x18x8xf32, #tpu.memory_space<vmem>>, vector<18x18x8xf32>
    tpu.vector_store %arg19[%c0_3, %c0_4, %c0_5], %2 {strides = array<i32>} : memref<18x18x8xf32, #tpu.memory_space<vmem>>, vector<18x18x8xf32>,
    %cst_6 = arith.constant 0.000000e+00 : f32
    %4 = vector.broadcast %cst_6 : f32 to vector<10x10x16xf32>
    %c0_7 = arith.constant 0 : index
    %c0_8 = arith.constant 0 : index
    %c0_9 = arith.constant 0 : index
    %5 = vector.load %arg20[%c0_7, %c0_8, %c0_9] : memref<10x10x16xf32, #tpu.memory_space<vmem>>, vector<10x10x16xf32>
    tpu.vector_store %arg20[%c0_7, %c0_8, %c0_9], %4 {strides = array<i32>} : memref<10x10x16xf32, #tpu.memory_space<vmem>>, vector<10x10x16xf32>,
    %cst_10 = arith.constant 0.000000e+00 : f32
    %6 = vector.broadcast %cst_10 : f32 to vector<6x10x16xf32>
    %c0_11 = arith.constant 0 : index
    %c0_12 = arith.constant 0 : index
    %c0_13 = arith.constant 0 : index
    %7 = vector.load %arg21[%c0_11, %c0_12, %c0_13] : memref<6x10x16xf32, #tpu.memory_space<vmem>>, vector<6x10x16xf32>
    tpu.vector_store %arg21[%c0_11, %c0_12, %c0_13], %6 {strides = array<i32>} : memref<6x10x16xf32, #tpu.memory_space<vmem>>, vector<6x10x16xf32>,
    %c0_14 = arith.constant 0 : index
    %c0_15 = arith.constant 0 : index
    %c0_16 = arith.constant 0 : index
    %c0_17 = arith.constant 0 : index
    %8 = vector.load %arg1[%c0_14, %c0_15, %c0_16, %c0_17] : memref<1x16x16x3xf32, #tpu.memory_space<vmem>>, vector<1x16x16x3xf32>
    %9 = vector.shape_cast %8 : vector<1x16x16x3xf32> to vector<16x16x3xf32>
    %c1 = arith.constant 1 : index
    %c1_18 = arith.constant 1 : index
    %c0_19 = arith.constant 0 : index
    %10 = vector.load %arg18[%c1, %c1_18, %c0_19] : memref<18x18x3xf32, #tpu.memory_space<vmem>>, vector<16x16x3xf32>
    tpu.vector_store %arg18[%c1, %c1_18, %c0_19], %9 {strides = array<i32>} : memref<18x18x3xf32, #tpu.memory_space<vmem>>, vector<16x16x3xf32>,
    %cst_20 = arith.constant 0.000000e+00 : f32
    %11 = vector.broadcast %cst_20 : f32 to vector<256x8xf32>
    %c0_21 = arith.constant 0 : index
    %c0_22 = arith.constant 0 : index
    %c0_23 = arith.constant 0 : index
    %12 = vector.load %arg18[%c0_21, %c0_22, %c0_23] : memref<18x18x3xf32, #tpu.memory_space<vmem>>, vector<16x16x3xf32>
    %13 = vector.shape_cast %12 : vector<16x16x3xf32> to vector<256x3xf32>
    %14 = arith.truncf %13 : vector<256x3xf32> to vector<256x3xbf16>
    %c0_24 = arith.constant 0 : index
    %c0_25 = arith.constant 0 : index
    %c0_26 = arith.constant 0 : index
    %15 = vector.load %arg2[%c0_24, %c0_25, %c0_26] : memref<9x3x8xbf16, #tpu.memory_space<vmem>>, vector<1x3x8xbf16>
    %16 = vector.shape_cast %15 : vector<1x3x8xbf16> to vector<3x8xbf16>
    %cst_27 = arith.constant dense<0.000000e+00> : vector<256x8xf32>
    %17 = tpu.matmul %14, %16, %cst_27 {dimension_numbers = #tpu.dot_dimension_numbers<[1], [0], [0], [1], [0, 0, 1, 1], [], []>} : vector<256x3xbf16>, vector<3x8xbf16>, vector<256x8xf32> -> vector<256x8xf32>
    %18 = arith.addf %11, %17 : vector<256x8xf32>
    %c0_28 = arith.constant 0 : index
    %c1_29 = arith.constant 1 : index
    %c0_30 = arith.constant 0 : index
    %19 = vector.load %arg18[%c0_28, %c1_29, %c0_30] : memref<18x18x3xf32, #tpu.memory_space<vmem>>, vector<16x16x3xf32>
    %20 = vector.shape_cast %19 : vector<16x16x3xf32> to vector<256x3xf32>
    %21 = arith.truncf %20 : vector<256x3xf32> to vector<256x3xbf16>
    %c1_31 = arith.constant 1 : index
    %c0_32 = arith.constant 0 : index
    %c0_33 = arith.constant 0 : index
    %22 = vector.load %arg2[%c1_31, %c0_32, %c0_33] : memref<9x3x8xbf16, #tpu.memory_space<vmem>>, vector<1x3x8xbf16>
    %23 = vector.shape_cast %22 : vector<1x3x8xbf16> to vector<3x8xbf16>
    %cst_34 = arith.constant dense<0.000000e+00> : vector<256x8xf32>
    %24 = tpu.matmul %21, %23, %cst_34 {dimension_numbers = #tpu.dot_dimension_numbers<[1], [0], [0], [1], [0, 0, 1, 1], [], []>} : vector<256x3xbf16>, vector<3x8xbf16>, vector<256x8xf32> -> vector<256x8xf32>
    %25 = arith.addf %18, %24 : vector<256x8xf32>
    %c0_35 = arith.constant 0 : index
    %c2 = arith.constant 2 : index
    %c0_36 = arith.constant 0 : index
    %26 = vector.load %arg18[%c0_35, %c2, %c0_36] : memref<18x18x3xf32, #tpu.memory_space<vmem>>, vector<16x16x3xf32>
    %27 = vector.shape_cast %26 : vector<16x16x3xf32> to vector<256x3xf32>
    %28 = arith.truncf %27 : vector<256x3xf32> to vector<256x3xbf16>
    %c2_37 = arith.constant 2 : index
    %c0_38 = arith.constant 0 : index
    %c0_39 = arith.constant 0 : index
    %29 = vector.load %arg2[%c2_37, %c0_38, %c0_39] : memref<9x3x8xbf16, #tpu.memory_space<vmem>>, vector<1x3x8xbf16>
    %30 = vector.shape_cast %29 : vector<1x3x8xbf16> to vector<3x8xbf16>
    %cst_40 = arith.constant dense<0.000000e+00> : vector<256x8xf32>
    %31 = tpu.matmul %28, %30, %cst_40 {dimension_numbers = #tpu.dot_dimension_numbers<[1], [0], [0], [1], [0, 0, 1, 1], [], []>} : vector<256x3xbf16>, vector<3x8xbf16>, vector<256x8xf32> -> vector<256x8xf32>
    %32 = arith.addf %25, %31 : vector<256x8xf32>
    %c1_41 = arith.constant 1 : index
    %c0_42 = arith.constant 0 : index
    %c0_43 = arith.constant 0 : index
    %33 = vector.load %arg18[%c1_41, %c0_42, %c0_43] : memref<18x18x3xf32, #tpu.memory_space<vmem>>, vector<16x16x3xf32>
    %34 = vector.shape_cast %33 : vector<16x16x3xf32> to vector<256x3xf32>
    %35 = arith.truncf %34 : vector<256x3xf32> to vector<256x3xbf16>
    %c3 = arith.constant 3 : index
    %c0_44 = arith.constant 0 : index
    %c0_45 = arith.constant 0 : index
    %36 = vector.load %arg2[%c3, %c0_44, %c0_45] : memref<9x3x8xbf16, #tpu.memory_space<vmem>>, vector<1x3x8xbf16>
    %37 = vector.shape_cast %36 : vector<1x3x8xbf16> to vector<3x8xbf16>
    %cst_46 = arith.constant dense<0.000000e+00> : vector<256x8xf32>
    %38 = tpu.matmul %35, %37, %cst_46 {dimension_numbers = #tpu.dot_dimension_numbers<[1], [0], [0], [1], [0, 0, 1, 1], [], []>} : vector<256x3xbf16>, vector<3x8xbf16>, vector<256x8xf32> -> vector<256x8xf32>
    %39 = arith.addf %32, %38 : vector<256x8xf32>
    %c1_47 = arith.constant 1 : index
    %c1_48 = arith.constant 1 : index
    %c0_49 = arith.constant 0 : index
    %40 = vector.load %arg18[%c1_47, %c1_48, %c0_49] : memref<18x18x3xf32, #tpu.memory_space<vmem>>, vector<16x16x3xf32>
    %41 = vector.shape_cast %40 : vector<16x16x3xf32> to vector<256x3xf32>
    %42 = arith.truncf %41 : vector<256x3xf32> to vector<256x3xbf16>
    %c4 = arith.constant 4 : index
    %c0_50 = arith.constant 0 : index
    %c0_51 = arith.constant 0 : index
    %43 = vector.load %arg2[%c4, %c0_50, %c0_51] : memref<9x3x8xbf16, #tpu.memory_space<vmem>>, vector<1x3x8xbf16>
    %44 = vector.shape_cast %43 : vector<1x3x8xbf16> to vector<3x8xbf16>
    %cst_52 = arith.constant dense<0.000000e+00> : vector<256x8xf32>
    %45 = tpu.matmul %42, %44, %cst_52 {dimension_numbers = #tpu.dot_dimension_numbers<[1], [0], [0], [1], [0, 0, 1, 1], [], []>} : vector<256x3xbf16>, vector<3x8xbf16>, vector<256x8xf32> -> vector<256x8xf32>
    %46 = arith.addf %39, %45 : vector<256x8xf32>
    %c1_53 = arith.constant 1 : index
    %c2_54 = arith.constant 2 : index
    %c0_55 = arith.constant 0 : index
    %47 = vector.load %arg18[%c1_53, %c2_54, %c0_55] : memref<18x18x3xf32, #tpu.memory_space<vmem>>, vector<16x16x3xf32>
    %48 = vector.shape_cast %47 : vector<16x16x3xf32> to vector<256x3xf32>
    %49 = arith.truncf %48 : vector<256x3xf32> to vector<256x3xbf16>
    %c5 = arith.constant 5 : index
    %c0_56 = arith.constant 0 : index
    %c0_57 = arith.constant 0 : index
    %50 = vector.load %arg2[%c5, %c0_56, %c0_57] : memref<9x3x8xbf16, #tpu.memory_space<vmem>>, vector<1x3x8xbf16>
    %51 = vector.shape_cast %50 : vector<1x3x8xbf16> to vector<3x8xbf16>
    %cst_58 = arith.constant dense<0.000000e+00> : vector<256x8xf32>
    %52 = tpu.matmul %49, %51, %cst_58 {dimension_numbers = #tpu.dot_dimension_numbers<[1], [0], [0], [1], [0, 0, 1, 1], [], []>} : vector<256x3xbf16>, vector<3x8xbf16>, vector<256x8xf32> -> vector<256x8xf32>
    %53 = arith.addf %46, %52 : vector<256x8xf32>
    %c2_59 = arith.constant 2 : index
    %c0_60 = arith.constant 0 : index
    %c0_61 = arith.constant 0 : index
    %54 = vector.load %arg18[%c2_59, %c0_60, %c0_61] : memref<18x18x3xf32, #tpu.memory_space<vmem>>, vector<16x16x3xf32>
    %55 = vector.shape_cast %54 : vector<16x16x3xf32> to vector<256x3xf32>
    %56 = arith.truncf %55 : vector<256x3xf32> to vector<256x3xbf16>
    %c6 = arith.constant 6 : index
    %c0_62 = arith.constant 0 : index
    %c0_63 = arith.constant 0 : index
    %57 = vector.load %arg2[%c6, %c0_62, %c0_63] : memref<9x3x8xbf16, #tpu.memory_space<vmem>>, vector<1x3x8xbf16>
    %58 = vector.shape_cast %57 : vector<1x3x8xbf16> to vector<3x8xbf16>
    %cst_64 = arith.constant dense<0.000000e+00> : vector<256x8xf32>
    %59 = tpu.matmul %56, %58, %cst_64 {dimension_numbers = #tpu.dot_dimension_numbers<[1], [0], [0], [1], [0, 0, 1, 1], [], []>} : vector<256x3xbf16>, vector<3x8xbf16>, vector<256x8xf32> -> vector<256x8xf32>
    %60 = arith.addf %53, %59 : vector<256x8xf32>
    %c2_65 = arith.constant 2 : index
    %c1_66 = arith.constant 1 : index
    %c0_67 = arith.constant 0 : index
    %61 = vector.load %arg18[%c2_65, %c1_66, %c0_67] : memref<18x18x3xf32, #tpu.memory_space<vmem>>, vector<16x16x3xf32>
    %62 = vector.shape_cast %61 : vector<16x16x3xf32> to vector<256x3xf32>
    %63 = arith.truncf %62 : vector<256x3xf32> to vector<256x3xbf16>
    %c7 = arith.constant 7 : index
    %c0_68 = arith.constant 0 : index
    %c0_69 = arith.constant 0 : index
    %64 = vector.load %arg2[%c7, %c0_68, %c0_69] : memref<9x3x8xbf16, #tpu.memory_space<vmem>>, vector<1x3x8xbf16>
    %65 = vector.shape_cast %64 : vector<1x3x8xbf16> to vector<3x8xbf16>
    %cst_70 = arith.constant dense<0.000000e+00> : vector<256x8xf32>
    %66 = tpu.matmul %63, %65, %cst_70 {dimension_numbers = #tpu.dot_dimension_numbers<[1], [0], [0], [1], [0, 0, 1, 1], [], []>} : vector<256x3xbf16>, vector<3x8xbf16>, vector<256x8xf32> -> vector<256x8xf32>
    %67 = arith.addf %60, %66 : vector<256x8xf32>
    %c2_71 = arith.constant 2 : index
    %c2_72 = arith.constant 2 : index
    %c0_73 = arith.constant 0 : index
    %68 = vector.load %arg18[%c2_71, %c2_72, %c0_73] : memref<18x18x3xf32, #tpu.memory_space<vmem>>, vector<16x16x3xf32>
    %69 = vector.shape_cast %68 : vector<16x16x3xf32> to vector<256x3xf32>
    %70 = arith.truncf %69 : vector<256x3xf32> to vector<256x3xbf16>
    %c8 = arith.constant 8 : index
    %c0_74 = arith.constant 0 : index
    %c0_75 = arith.constant 0 : index
    %71 = vector.load %arg2[%c8, %c0_74, %c0_75] : memref<9x3x8xbf16, #tpu.memory_space<vmem>>, vector<1x3x8xbf16>
    %72 = vector.shape_cast %71 : vector<1x3x8xbf16> to vector<3x8xbf16>
    %cst_76 = arith.constant dense<0.000000e+00> : vector<256x8xf32>
    %73 = tpu.matmul %70, %72, %cst_76 {dimension_numbers = #tpu.dot_dimension_numbers<[1], [0], [0], [1], [0, 0, 1, 1], [], []>} : vector<256x3xbf16>, vector<3x8xbf16>, vector<256x8xf32> -> vector<256x8xf32>
    %74 = arith.addf %67, %73 : vector<256x8xf32>
    %c0_77 = arith.constant 0 : index
    %c0_78 = arith.constant 0 : index
    %75 = vector.load %arg3[%c0_77, %c0_78] : memref<1x8xf32, #tpu.memory_space<vmem>>, vector<1x8xf32>
    %76 = vector.broadcast %75 : vector<1x8xf32> to vector<256x8xf32>
    %77 = arith.addf %74, %76 : vector<256x8xf32>
    %cst_79 = arith.constant 0.000000e+00 : f32
    %78 = vector.broadcast %cst_79 : f32 to vector<256x8xf32>
    %79 = arith.maximumf %77, %78 : vector<256x8xf32>
    %80 = vector.shape_cast %79 : vector<256x8xf32> to vector<16x16x8xf32>
    %c1_80 = arith.constant 1 : index
    %c1_81 = arith.constant 1 : index
    %c0_82 = arith.constant 0 : index
    %81 = vector.load %arg19[%c1_80, %c1_81, %c0_82] : memref<18x18x8xf32, #tpu.memory_space<vmem>>, vector<16x16x8xf32>
    tpu.vector_store %arg19[%c1_80, %c1_81, %c0_82], %80 {strides = array<i32>} : memref<18x18x8xf32, #tpu.memory_space<vmem>>, vector<16x16x8xf32>,
    %cst_83 = arith.constant 0.000000e+00 : f32
    %82 = vector.broadcast %cst_83 : f32 to vector<128x16xf32>
    %c0_84 = arith.constant 0 : index
    %c0_85 = arith.constant 0 : index
    %c0_86 = arith.constant 0 : index
    %83 = vector.load %arg19[%c0_84, %c0_85, %c0_86] : memref<18x18x8xf32, #tpu.memory_space<vmem>>, vector<16x16x8xf32>
    %84 = vector.shape_cast %83 : vector<16x16x8xf32> to vector<8x2x16x8xf32>
    %85 = vector.extract_strided_slice %84 {offsets = [0, 0, 0, 0], sizes = [8, 1, 16, 8], strides = [1, 1, 1, 1]} : vector<8x2x16x8xf32> to vector<8x1x16x8xf32>
    %86 = vector.shape_cast %85 : vector<8x1x16x8xf32> to vector<8x16x8xf32>
    %87 = vector.shape_cast %86 : vector<8x16x8xf32> to vector<128x8xf32>
    %88 = arith.truncf %87 : vector<128x8xf32> to vector<128x8xbf16>
    %c0_87 = arith.constant 0 : index
    %c0_88 = arith.constant 0 : index
    %c0_89 = arith.constant 0 : index
    %89 = vector.load %arg4[%c0_87, %c0_88, %c0_89] : memref<9x8x16xbf16, #tpu.memory_space<vmem>>, vector<1x8x16xbf16>
    %90 = vector.shape_cast %89 : vector<1x8x16xbf16> to vector<8x16xbf16>
    %cst_90 = arith.constant dense<0.000000e+00> : vector<128x16xf32>
    %91 = tpu.matmul %88, %90, %cst_90 {dimension_numbers = #tpu.dot_dimension_numbers<[1], [0], [0], [1], [0, 0, 1, 1], [], []>} : vector<128x8xbf16>, vector<8x16xbf16>, vector<128x16xf32> -> vector<128x16xf32>
    %92 = arith.addf %82, %91 : vector<128x16xf32>
    %c0_91 = arith.constant 0 : index
    %c1_92 = arith.constant 1 : index
    %c0_93 = arith.constant 0 : index
    %93 = vector.load %arg19[%c0_91, %c1_92, %c0_93] : memref<18x18x8xf32, #tpu.memory_space<vmem>>, vector<16x16x8xf32>
    %94 = vector.shape_cast %93 : vector<16x16x8xf32> to vector<8x2x16x8xf32>
    %95 = vector.extract_strided_slice %94 {offsets = [0, 0, 0, 0], sizes = [8, 1, 16, 8], strides = [1, 1, 1, 1]} : vector<8x2x16x8xf32> to vector<8x1x16x8xf32>
    %96 = vector.shape_cast %95 : vector<8x1x16x8xf32> to vector<8x16x8xf32>
    %97 = vector.shape_cast %96 : vector<8x16x8xf32> to vector<128x8xf32>
    %98 = arith.truncf %97 : vector<128x8xf32> to vector<128x8xbf16>
    %c1_94 = arith.constant 1 : index
    %c0_95 = arith.constant 0 : index
    %c0_96 = arith.constant 0 : index
    %99 = vector.load %arg4[%c1_94, %c0_95, %c0_96] : memref<9x8x16xbf16, #tpu.memory_space<vmem>>, vector<1x8x16xbf16>
    %100 = vector.shape_cast %99 : vector<1x8x16xbf16> to vector<8x16xbf16>
    %cst_97 = arith.constant dense<0.000000e+00> : vector<128x16xf32>
    %101 = tpu.matmul %98, %100, %cst_97 {dimension_numbers = #tpu.dot_dimension_numbers<[1], [0], [0], [1], [0, 0, 1, 1], [], []>} : vector<128x8xbf16>, vector<8x16xbf16>, vector<128x16xf32> -> vector<128x16xf32>
    %102 = arith.addf %92, %101 : vector<128x16xf32>
    %c0_98 = arith.constant 0 : index
    %c2_99 = arith.constant 2 : index
    %c0_100 = arith.constant 0 : index
    %103 = vector.load %arg19[%c0_98, %c2_99, %c0_100] : memref<18x18x8xf32, #tpu.memory_space<vmem>>, vector<16x16x8xf32>
    %104 = vector.shape_cast %103 : vector<16x16x8xf32> to vector<8x2x16x8xf32>
    %105 = vector.extract_strided_slice %104 {offsets = [0, 0, 0, 0], sizes = [8, 1, 16, 8], strides = [1, 1, 1, 1]} : vector<8x2x16x8xf32> to vector<8x1x16x8xf32>
    %106 = vector.shape_cast %105 : vector<8x1x16x8xf32> to vector<8x16x8xf32>
    %107 = vector.shape_cast %106 : vector<8x16x8xf32> to vector<128x8xf32>
    %108 = arith.truncf %107 : vector<128x8xf32> to vector<128x8xbf16>
    %c2_101 = arith.constant 2 : index
    %c0_102 = arith.constant 0 : index
    %c0_103 = arith.constant 0 : index
    %109 = vector.load %arg4[%c2_101, %c0_102, %c0_103] : memref<9x8x16xbf16, #tpu.memory_space<vmem>>, vector<1x8x16xbf16>
    %110 = vector.shape_cast %109 : vector<1x8x16xbf16> to vector<8x16xbf16>
    %cst_104 = arith.constant dense<0.000000e+00> : vector<128x16xf32>
    %111 = tpu.matmul %108, %110, %cst_104 {dimension_numbers = #tpu.dot_dimension_numbers<[1], [0], [0], [1], [0, 0, 1, 1], [], []>} : vector<128x8xbf16>, vector<8x16xbf16>, vector<128x16xf32> -> vector<128x16xf32>
    %112 = arith.addf %102, %111 : vector<128x16xf32>
    %c1_105 = arith.constant 1 : index
    %c0_106 = arith.constant 0 : index
    %c0_107 = arith.constant 0 : index
    %113 = vector.load %arg19[%c1_105, %c0_106, %c0_107] : memref<18x18x8xf32, #tpu.memory_space<vmem>>, vector<16x16x8xf32>
    %114 = vector.shape_cast %113 : vector<16x16x8xf32> to vector<8x2x16x8xf32>
    %115 = vector.extract_strided_slice %114 {offsets = [0, 0, 0, 0], sizes = [8, 1, 16, 8], strides = [1, 1, 1, 1]} : vector<8x2x16x8xf32> to vector<8x1x16x8xf32>
    %116 = vector.shape_cast %115 : vector<8x1x16x8xf32> to vector<8x16x8xf32>
    %117 = vector.shape_cast %116 : vector<8x16x8xf32> to vector<128x8xf32>
    %118 = arith.truncf %117 : vector<128x8xf32> to vector<128x8xbf16>
    %c3_108 = arith.constant 3 : index
    %c0_109 = arith.constant 0 : index
    %c0_110 = arith.constant 0 : index
    %119 = vector.load %arg4[%c3_108, %c0_109, %c0_110] : memref<9x8x16xbf16, #tpu.memory_space<vmem>>, vector<1x8x16xbf16>
    %120 = vector.shape_cast %119 : vector<1x8x16xbf16> to vector<8x16xbf16>
    %cst_111 = arith.constant dense<0.000000e+00> : vector<128x16xf32>
    %121 = tpu.matmul %118, %120, %cst_111 {dimension_numbers = #tpu.dot_dimension_numbers<[1], [0], [0], [1], [0, 0, 1, 1], [], []>} : vector<128x8xbf16>, vector<8x16xbf16>, vector<128x16xf32> -> vector<128x16xf32>
    %122 = arith.addf %112, %121 : vector<128x16xf32>
    %c1_112 = arith.constant 1 : index
    %c1_113 = arith.constant 1 : index
    %c0_114 = arith.constant 0 : index
    %123 = vector.load %arg19[%c1_112, %c1_113, %c0_114] : memref<18x18x8xf32, #tpu.memory_space<vmem>>, vector<16x16x8xf32>
    %124 = vector.shape_cast %123 : vector<16x16x8xf32> to vector<8x2x16x8xf32>
    %125 = vector.extract_strided_slice %124 {offsets = [0, 0, 0, 0], sizes = [8, 1, 16, 8], strides = [1, 1, 1, 1]} : vector<8x2x16x8xf32> to vector<8x1x16x8xf32>
    %126 = vector.shape_cast %125 : vector<8x1x16x8xf32> to vector<8x16x8xf32>
    %127 = vector.shape_cast %126 : vector<8x16x8xf32> to vector<128x8xf32>
    %128 = arith.truncf %127 : vector<128x8xf32> to vector<128x8xbf16>
    %c4_115 = arith.constant 4 : index
    %c0_116 = arith.constant 0 : index
    %c0_117 = arith.constant 0 : index
    %129 = vector.load %arg4[%c4_115, %c0_116, %c0_117] : memref<9x8x16xbf16, #tpu.memory_space<vmem>>, vector<1x8x16xbf16>
    %130 = vector.shape_cast %129 : vector<1x8x16xbf16> to vector<8x16xbf16>
    %cst_118 = arith.constant dense<0.000000e+00> : vector<128x16xf32>
    %131 = tpu.matmul %128, %130, %cst_118 {dimension_numbers = #tpu.dot_dimension_numbers<[1], [0], [0], [1], [0, 0, 1, 1], [], []>} : vector<128x8xbf16>, vector<8x16xbf16>, vector<128x16xf32> -> vector<128x16xf32>
    %132 = arith.addf %122, %131 : vector<128x16xf32>
    %c1_119 = arith.constant 1 : index
    %c2_120 = arith.constant 2 : index
    %c0_121 = arith.constant 0 : index
    %133 = vector.load %arg19[%c1_119, %c2_120, %c0_121] : memref<18x18x8xf32, #tpu.memory_space<vmem>>, vector<16x16x8xf32>
    %134 = vector.shape_cast %133 : vector<16x16x8xf32> to vector<8x2x16x8xf32>
    %135 = vector.extract_strided_slice %134 {offsets = [0, 0, 0, 0], sizes = [8, 1, 16, 8], strides = [1, 1, 1, 1]} : vector<8x2x16x8xf32> to vector<8x1x16x8xf32>
    %136 = vector.shape_cast %135 : vector<8x1x16x8xf32> to vector<8x16x8xf32>
    %137 = vector.shape_cast %136 : vector<8x16x8xf32> to vector<128x8xf32>
    %138 = arith.truncf %137 : vector<128x8xf32> to vector<128x8xbf16>
    %c5_122 = arith.constant 5 : index
    %c0_123 = arith.constant 0 : index
    %c0_124 = arith.constant 0 : index
    %139 = vector.load %arg4[%c5_122, %c0_123, %c0_124] : memref<9x8x16xbf16, #tpu.memory_space<vmem>>, vector<1x8x16xbf16>
    %140 = vector.shape_cast %139 : vector<1x8x16xbf16> to vector<8x16xbf16>
    %cst_125 = arith.constant dense<0.000000e+00> : vector<128x16xf32>
    %141 = tpu.matmul %138, %140, %cst_125 {dimension_numbers = #tpu.dot_dimension_numbers<[1], [0], [0], [1], [0, 0, 1, 1], [], []>} : vector<128x8xbf16>, vector<8x16xbf16>, vector<128x16xf32> -> vector<128x16xf32>
    %142 = arith.addf %132, %141 : vector<128x16xf32>
    %c2_126 = arith.constant 2 : index
    %c0_127 = arith.constant 0 : index
    %c0_128 = arith.constant 0 : index
    %143 = vector.load %arg19[%c2_126, %c0_127, %c0_128] : memref<18x18x8xf32, #tpu.memory_space<vmem>>, vector<16x16x8xf32>
    %144 = vector.shape_cast %143 : vector<16x16x8xf32> to vector<8x2x16x8xf32>
    %145 = vector.extract_strided_slice %144 {offsets = [0, 0, 0, 0], sizes = [8, 1, 16, 8], strides = [1, 1, 1, 1]} : vector<8x2x16x8xf32> to vector<8x1x16x8xf32>
    %146 = vector.shape_cast %145 : vector<8x1x16x8xf32> to vector<8x16x8xf32>
    %147 = vector.shape_cast %146 : vector<8x16x8xf32> to vector<128x8xf32>
    %148 = arith.truncf %147 : vector<128x8xf32> to vector<128x8xbf16>
    %c6_129 = arith.constant 6 : index
    %c0_130 = arith.constant 0 : index
    %c0_131 = arith.constant 0 : index
    %149 = vector.load %arg4[%c6_129, %c0_130, %c0_131] : memref<9x8x16xbf16, #tpu.memory_space<vmem>>, vector<1x8x16xbf16>
    %150 = vector.shape_cast %149 : vector<1x8x16xbf16> to vector<8x16xbf16>
    %cst_132 = arith.constant dense<0.000000e+00> : vector<128x16xf32>
    %151 = tpu.matmul %148, %150, %cst_132 {dimension_numbers = #tpu.dot_dimension_numbers<[1], [0], [0], [1], [0, 0, 1, 1], [], []>} : vector<128x8xbf16>, vector<8x16xbf16>, vector<128x16xf32> -> vector<128x16xf32>
    %152 = arith.addf %142, %151 : vector<128x16xf32>
    %c2_133 = arith.constant 2 : index
    %c1_134 = arith.constant 1 : index
    %c0_135 = arith.constant 0 : index
    %153 = vector.load %arg19[%c2_133, %c1_134, %c0_135] : memref<18x18x8xf32, #tpu.memory_space<vmem>>, vector<16x16x8xf32>
    %154 = vector.shape_cast %153 : vector<16x16x8xf32> to vector<8x2x16x8xf32>
    %155 = vector.extract_strided_slice %154 {offsets = [0, 0, 0, 0], sizes = [8, 1, 16, 8], strides = [1, 1, 1, 1]} : vector<8x2x16x8xf32> to vector<8x1x16x8xf32>
    %156 = vector.shape_cast %155 : vector<8x1x16x8xf32> to vector<8x16x8xf32>
    %157 = vector.shape_cast %156 : vector<8x16x8xf32> to vector<128x8xf32>
    %158 = arith.truncf %157 : vector<128x8xf32> to vector<128x8xbf16>
    %c7_136 = arith.constant 7 : index
    %c0_137 = arith.constant 0 : index
    %c0_138 = arith.constant 0 : index
    %159 = vector.load %arg4[%c7_136, %c0_137, %c0_138] : memref<9x8x16xbf16, #tpu.memory_space<vmem>>, vector<1x8x16xbf16>
    %160 = vector.shape_cast %159 : vector<1x8x16xbf16> to vector<8x16xbf16>
    %cst_139 = arith.constant dense<0.000000e+00> : vector<128x16xf32>
    %161 = tpu.matmul %158, %160, %cst_139 {dimension_numbers = #tpu.dot_dimension_numbers<[1], [0], [0], [1], [0, 0, 1, 1], [], []>} : vector<128x8xbf16>, vector<8x16xbf16>, vector<128x16xf32> -> vector<128x16xf32>
    %162 = arith.addf %152, %161 : vector<128x16xf32>
    %c2_140 = arith.constant 2 : index
    %c2_141 = arith.constant 2 : index
    %c0_142 = arith.constant 0 : index
    %163 = vector.load %arg19[%c2_140, %c2_141, %c0_142] : memref<18x18x8xf32, #tpu.memory_space<vmem>>, vector<16x16x8xf32>
    %164 = vector.shape_cast %163 : vector<16x16x8xf32> to vector<8x2x16x8xf32>
    %165 = vector.extract_strided_slice %164 {offsets = [0, 0, 0, 0], sizes = [8, 1, 16, 8], strides = [1, 1, 1, 1]} : vector<8x2x16x8xf32> to vector<8x1x16x8xf32>
    %166 = vector.shape_cast %165 : vector<8x1x16x8xf32> to vector<8x16x8xf32>
    %167 = vector.shape_cast %166 : vector<8x16x8xf32> to vector<128x8xf32>
    %168 = arith.truncf %167 : vector<128x8xf32> to vector<128x8xbf16>
    %c8_143 = arith.constant 8 : index
    %c0_144 = arith.constant 0 : index
    %c0_145 = arith.constant 0 : index
    %169 = vector.load %arg4[%c8_143, %c0_144, %c0_145] : memref<9x8x16xbf16, #tpu.memory_space<vmem>>, vector<1x8x16xbf16>
    %170 = vector.shape_cast %169 : vector<1x8x16xbf16> to vector<8x16xbf16>
    %cst_146 = arith.constant dense<0.000000e+00> : vector<128x16xf32>
    %171 = tpu.matmul %168, %170, %cst_146 {dimension_numbers = #tpu.dot_dimension_numbers<[1], [0], [0], [1], [0, 0, 1, 1], [], []>} : vector<128x8xbf16>, vector<8x16xbf16>, vector<128x16xf32> -> vector<128x16xf32>
    %172 = arith.addf %162, %171 : vector<128x16xf32>
    %c0_147 = arith.constant 0 : index
    %c0_148 = arith.constant 0 : index
    %173 = vector.load %arg12[%c0_147, %c0_148] : memref<64x128xf32, #tpu.memory_space<vmem>>, vector<64x128xf32>
    %cst_149 = arith.constant dense<0.000000e+00> : vector<64x16xf32>
    %174 = tpu.matmul %173, %172, %cst_149 {dimension_numbers = #tpu.dot_dimension_numbers<[1], [0], [0], [1], [0, 0, 1, 1], [], []>} : vector<64x128xf32>, vector<128x16xf32>, vector<64x16xf32> -> vector<64x16xf32>
    %c0_150 = arith.constant 0 : index
    %c0_151 = arith.constant 0 : index
    %175 = vector.load %arg5[%c0_150, %c0_151] : memref<1x16xf32, #tpu.memory_space<vmem>>, vector<1x16xf32>
    %176 = vector.broadcast %175 : vector<1x16xf32> to vector<64x16xf32>
    %177 = arith.addf %174, %176 : vector<64x16xf32>
    %cst_152 = arith.constant 0.000000e+00 : f32
    %178 = vector.broadcast %cst_152 : f32 to vector<64x16xf32>
    %179 = arith.maximumf %177, %178 : vector<64x16xf32>
    %180 = vector.shape_cast %179 : vector<64x16xf32> to vector<8x8x16xf32>
    %c1_153 = arith.constant 1 : index
    %c1_154 = arith.constant 1 : index
    %c0_155 = arith.constant 0 : index
    %181 = vector.load %arg20[%c1_153, %c1_154, %c0_155] : memref<10x10x16xf32, #tpu.memory_space<vmem>>, vector<8x8x16xf32>
    tpu.vector_store %arg20[%c1_153, %c1_154, %c0_155], %180 {strides = array<i32>} : memref<10x10x16xf32, #tpu.memory_space<vmem>>, vector<8x8x16xf32>,
    %cst_156 = arith.constant 0.000000e+00 : f32
    %182 = vector.broadcast %cst_156 : f32 to vector<32x16xf32>
    %c0_157 = arith.constant 0 : index
    %c0_158 = arith.constant 0 : index
    %c0_159 = arith.constant 0 : index
    %183 = vector.load %arg20[%c0_157, %c0_158, %c0_159] : memref<10x10x16xf32, #tpu.memory_space<vmem>>, vector<8x8x16xf32>
    %184 = vector.shape_cast %183 : vector<8x8x16xf32> to vector<4x2x8x16xf32>
    %185 = vector.extract_strided_slice %184 {offsets = [0, 0, 0, 0], sizes = [4, 1, 8, 16], strides = [1, 1, 1, 1]} : vector<4x2x8x16xf32> to vector<4x1x8x16xf32>
    %186 = vector.shape_cast %185 : vector<4x1x8x16xf32> to vector<4x8x16xf32>
    %187 = vector.shape_cast %186 : vector<4x8x16xf32> to vector<32x16xf32>
    %188 = arith.truncf %187 : vector<32x16xf32> to vector<32x16xbf16>
    %c0_160 = arith.constant 0 : index
    %c0_161 = arith.constant 0 : index
    %c0_162 = arith.constant 0 : index
    %189 = vector.load %arg6[%c0_160, %c0_161, %c0_162] : memref<9x16x16xbf16, #tpu.memory_space<vmem>>, vector<1x16x16xbf16>
    %190 = vector.shape_cast %189 : vector<1x16x16xbf16> to vector<16x16xbf16>
    %cst_163 = arith.constant dense<0.000000e+00> : vector<32x16xf32>
    %191 = tpu.matmul %188, %190, %cst_163 {dimension_numbers = #tpu.dot_dimension_numbers<[1], [0], [0], [1], [0, 0, 1, 1], [], []>} : vector<32x16xbf16>, vector<16x16xbf16>, vector<32x16xf32> -> vector<32x16xf32>
    %192 = arith.addf %182, %191 : vector<32x16xf32>
    %c0_164 = arith.constant 0 : index
    %c1_165 = arith.constant 1 : index
    %c0_166 = arith.constant 0 : index
    %193 = vector.load %arg20[%c0_164, %c1_165, %c0_166] : memref<10x10x16xf32, #tpu.memory_space<vmem>>, vector<8x8x16xf32>
    %194 = vector.shape_cast %193 : vector<8x8x16xf32> to vector<4x2x8x16xf32>
    %195 = vector.extract_strided_slice %194 {offsets = [0, 0, 0, 0], sizes = [4, 1, 8, 16], strides = [1, 1, 1, 1]} : vector<4x2x8x16xf32> to vector<4x1x8x16xf32>
    %196 = vector.shape_cast %195 : vector<4x1x8x16xf32> to vector<4x8x16xf32>
    %197 = vector.shape_cast %196 : vector<4x8x16xf32> to vector<32x16xf32>
    %198 = arith.truncf %197 : vector<32x16xf32> to vector<32x16xbf16>
    %c1_167 = arith.constant 1 : index
    %c0_168 = arith.constant 0 : index
    %c0_169 = arith.constant 0 : index
    %199 = vector.load %arg6[%c1_167, %c0_168, %c0_169] : memref<9x16x16xbf16, #tpu.memory_space<vmem>>, vector<1x16x16xbf16>
    %200 = vector.shape_cast %199 : vector<1x16x16xbf16> to vector<16x16xbf16>
    %cst_170 = arith.constant dense<0.000000e+00> : vector<32x16xf32>
    %201 = tpu.matmul %198, %200, %cst_170 {dimension_numbers = #tpu.dot_dimension_numbers<[1], [0], [0], [1], [0, 0, 1, 1], [], []>} : vector<32x16xbf16>, vector<16x16xbf16>, vector<32x16xf32> -> vector<32x16xf32>
    %202 = arith.addf %192, %201 : vector<32x16xf32>
    %c0_171 = arith.constant 0 : index
    %c2_172 = arith.constant 2 : index
    %c0_173 = arith.constant 0 : index
    %203 = vector.load %arg20[%c0_171, %c2_172, %c0_173] : memref<10x10x16xf32, #tpu.memory_space<vmem>>, vector<8x8x16xf32>
    %204 = vector.shape_cast %203 : vector<8x8x16xf32> to vector<4x2x8x16xf32>
    %205 = vector.extract_strided_slice %204 {offsets = [0, 0, 0, 0], sizes = [4, 1, 8, 16], strides = [1, 1, 1, 1]} : vector<4x2x8x16xf32> to vector<4x1x8x16xf32>
    %206 = vector.shape_cast %205 : vector<4x1x8x16xf32> to vector<4x8x16xf32>
    %207 = vector.shape_cast %206 : vector<4x8x16xf32> to vector<32x16xf32>
    %208 = arith.truncf %207 : vector<32x16xf32> to vector<32x16xbf16>
    %c2_174 = arith.constant 2 : index
    %c0_175 = arith.constant 0 : index
    %c0_176 = arith.constant 0 : index
    %209 = vector.load %arg6[%c2_174, %c0_175, %c0_176] : memref<9x16x16xbf16, #tpu.memory_space<vmem>>, vector<1x16x16xbf16>
    %210 = vector.shape_cast %209 : vector<1x16x16xbf16> to vector<16x16xbf16>
    %cst_177 = arith.constant dense<0.000000e+00> : vector<32x16xf32>
    %211 = tpu.matmul %208, %210, %cst_177 {dimension_numbers = #tpu.dot_dimension_numbers<[1], [0], [0], [1], [0, 0, 1, 1], [], []>} : vector<32x16xbf16>, vector<16x16xbf16>, vector<32x16xf32> -> vector<32x16xf32>
    %212 = arith.addf %202, %211 : vector<32x16xf32>
    %c1_178 = arith.constant 1 : index
    %c0_179 = arith.constant 0 : index
    %c0_180 = arith.constant 0 : index
    %213 = vector.load %arg20[%c1_178, %c0_179, %c0_180] : memref<10x10x16xf32, #tpu.memory_space<vmem>>, vector<8x8x16xf32>
    %214 = vector.shape_cast %213 : vector<8x8x16xf32> to vector<4x2x8x16xf32>
    %215 = vector.extract_strided_slice %214 {offsets = [0, 0, 0, 0], sizes = [4, 1, 8, 16], strides = [1, 1, 1, 1]} : vector<4x2x8x16xf32> to vector<4x1x8x16xf32>
    %216 = vector.shape_cast %215 : vector<4x1x8x16xf32> to vector<4x8x16xf32>
    %217 = vector.shape_cast %216 : vector<4x8x16xf32> to vector<32x16xf32>
    %218 = arith.truncf %217 : vector<32x16xf32> to vector<32x16xbf16>
    %c3_181 = arith.constant 3 : index
    %c0_182 = arith.constant 0 : index
    %c0_183 = arith.constant 0 : index
    %219 = vector.load %arg6[%c3_181, %c0_182, %c0_183] : memref<9x16x16xbf16, #tpu.memory_space<vmem>>, vector<1x16x16xbf16>
    %220 = vector.shape_cast %219 : vector<1x16x16xbf16> to vector<16x16xbf16>
    %cst_184 = arith.constant dense<0.000000e+00> : vector<32x16xf32>
    %221 = tpu.matmul %218, %220, %cst_184 {dimension_numbers = #tpu.dot_dimension_numbers<[1], [0], [0], [1], [0, 0, 1, 1], [], []>} : vector<32x16xbf16>, vector<16x16xbf16>, vector<32x16xf32> -> vector<32x16xf32>
    %222 = arith.addf %212, %221 : vector<32x16xf32>
    %c1_185 = arith.constant 1 : index
    %c1_186 = arith.constant 1 : index
    %c0_187 = arith.constant 0 : index
    %223 = vector.load %arg20[%c1_185, %c1_186, %c0_187] : memref<10x10x16xf32, #tpu.memory_space<vmem>>, vector<8x8x16xf32>
    %224 = vector.shape_cast %223 : vector<8x8x16xf32> to vector<4x2x8x16xf32>
    %225 = vector.extract_strided_slice %224 {offsets = [0, 0, 0, 0], sizes = [4, 1, 8, 16], strides = [1, 1, 1, 1]} : vector<4x2x8x16xf32> to vector<4x1x8x16xf32>
    %226 = vector.shape_cast %225 : vector<4x1x8x16xf32> to vector<4x8x16xf32>
    %227 = vector.shape_cast %226 : vector<4x8x16xf32> to vector<32x16xf32>
    %228 = arith.truncf %227 : vector<32x16xf32> to vector<32x16xbf16>
    %c4_188 = arith.constant 4 : index
    %c0_189 = arith.constant 0 : index
    %c0_190 = arith.constant 0 : index
    %229 = vector.load %arg6[%c4_188, %c0_189, %c0_190] : memref<9x16x16xbf16, #tpu.memory_space<vmem>>, vector<1x16x16xbf16>
    %230 = vector.shape_cast %229 : vector<1x16x16xbf16> to vector<16x16xbf16>
    %cst_191 = arith.constant dense<0.000000e+00> : vector<32x16xf32>
    %231 = tpu.matmul %228, %230, %cst_191 {dimension_numbers = #tpu.dot_dimension_numbers<[1], [0], [0], [1], [0, 0, 1, 1], [], []>} : vector<32x16xbf16>, vector<16x16xbf16>, vector<32x16xf32> -> vector<32x16xf32>
    %232 = arith.addf %222, %231 : vector<32x16xf32>
    %c1_192 = arith.constant 1 : index
    %c2_193 = arith.constant 2 : index
    %c0_194 = arith.constant 0 : index
    %233 = vector.load %arg20[%c1_192, %c2_193, %c0_194] : memref<10x10x16xf32, #tpu.memory_space<vmem>>, vector<8x8x16xf32>
    %234 = vector.shape_cast %233 : vector<8x8x16xf32> to vector<4x2x8x16xf32>
    %235 = vector.extract_strided_slice %234 {offsets = [0, 0, 0, 0], sizes = [4, 1, 8, 16], strides = [1, 1, 1, 1]} : vector<4x2x8x16xf32> to vector<4x1x8x16xf32>
    %236 = vector.shape_cast %235 : vector<4x1x8x16xf32> to vector<4x8x16xf32>
    %237 = vector.shape_cast %236 : vector<4x8x16xf32> to vector<32x16xf32>
    %238 = arith.truncf %237 : vector<32x16xf32> to vector<32x16xbf16>
    %c5_195 = arith.constant 5 : index
    %c0_196 = arith.constant 0 : index
    %c0_197 = arith.constant 0 : index
    %239 = vector.load %arg6[%c5_195, %c0_196, %c0_197] : memref<9x16x16xbf16, #tpu.memory_space<vmem>>, vector<1x16x16xbf16>
    %240 = vector.shape_cast %239 : vector<1x16x16xbf16> to vector<16x16xbf16>
    %cst_198 = arith.constant dense<0.000000e+00> : vector<32x16xf32>
    %241 = tpu.matmul %238, %240, %cst_198 {dimension_numbers = #tpu.dot_dimension_numbers<[1], [0], [0], [1], [0, 0, 1, 1], [], []>} : vector<32x16xbf16>, vector<16x16xbf16>, vector<32x16xf32> -> vector<32x16xf32>
    %242 = arith.addf %232, %241 : vector<32x16xf32>
    %c2_199 = arith.constant 2 : index
    %c0_200 = arith.constant 0 : index
    %c0_201 = arith.constant 0 : index
    %243 = vector.load %arg20[%c2_199, %c0_200, %c0_201] : memref<10x10x16xf32, #tpu.memory_space<vmem>>, vector<8x8x16xf32>
    %244 = vector.shape_cast %243 : vector<8x8x16xf32> to vector<4x2x8x16xf32>
    %245 = vector.extract_strided_slice %244 {offsets = [0, 0, 0, 0], sizes = [4, 1, 8, 16], strides = [1, 1, 1, 1]} : vector<4x2x8x16xf32> to vector<4x1x8x16xf32>
    %246 = vector.shape_cast %245 : vector<4x1x8x16xf32> to vector<4x8x16xf32>
    %247 = vector.shape_cast %246 : vector<4x8x16xf32> to vector<32x16xf32>
    %248 = arith.truncf %247 : vector<32x16xf32> to vector<32x16xbf16>
    %c6_202 = arith.constant 6 : index
    %c0_203 = arith.constant 0 : index
    %c0_204 = arith.constant 0 : index
    %249 = vector.load %arg6[%c6_202, %c0_203, %c0_204] : memref<9x16x16xbf16, #tpu.memory_space<vmem>>, vector<1x16x16xbf16>
    %250 = vector.shape_cast %249 : vector<1x16x16xbf16> to vector<16x16xbf16>
    %cst_205 = arith.constant dense<0.000000e+00> : vector<32x16xf32>
    %251 = tpu.matmul %248, %250, %cst_205 {dimension_numbers = #tpu.dot_dimension_numbers<[1], [0], [0], [1], [0, 0, 1, 1], [], []>} : vector<32x16xbf16>, vector<16x16xbf16>, vector<32x16xf32> -> vector<32x16xf32>
    %252 = arith.addf %242, %251 : vector<32x16xf32>
    %c2_206 = arith.constant 2 : index
    %c1_207 = arith.constant 1 : index
    %c0_208 = arith.constant 0 : index
    %253 = vector.load %arg20[%c2_206, %c1_207, %c0_208] : memref<10x10x16xf32, #tpu.memory_space<vmem>>, vector<8x8x16xf32>
    %254 = vector.shape_cast %253 : vector<8x8x16xf32> to vector<4x2x8x16xf32>
    %255 = vector.extract_strided_slice %254 {offsets = [0, 0, 0, 0], sizes = [4, 1, 8, 16], strides = [1, 1, 1, 1]} : vector<4x2x8x16xf32> to vector<4x1x8x16xf32>
    %256 = vector.shape_cast %255 : vector<4x1x8x16xf32> to vector<4x8x16xf32>
    %257 = vector.shape_cast %256 : vector<4x8x16xf32> to vector<32x16xf32>
    %258 = arith.truncf %257 : vector<32x16xf32> to vector<32x16xbf16>
    %c7_209 = arith.constant 7 : index
    %c0_210 = arith.constant 0 : index
    %c0_211 = arith.constant 0 : index
    %259 = vector.load %arg6[%c7_209, %c0_210, %c0_211] : memref<9x16x16xbf16, #tpu.memory_space<vmem>>, vector<1x16x16xbf16>
    %260 = vector.shape_cast %259 : vector<1x16x16xbf16> to vector<16x16xbf16>
    %cst_212 = arith.constant dense<0.000000e+00> : vector<32x16xf32>
    %261 = tpu.matmul %258, %260, %cst_212 {dimension_numbers = #tpu.dot_dimension_numbers<[1], [0], [0], [1], [0, 0, 1, 1], [], []>} : vector<32x16xbf16>, vector<16x16xbf16>, vector<32x16xf32> -> vector<32x16xf32>
    %262 = arith.addf %252, %261 : vector<32x16xf32>
    %c2_213 = arith.constant 2 : index
    %c2_214 = arith.constant 2 : index
    %c0_215 = arith.constant 0 : index
    %263 = vector.load %arg20[%c2_213, %c2_214, %c0_215] : memref<10x10x16xf32, #tpu.memory_space<vmem>>, vector<8x8x16xf32>
    %264 = vector.shape_cast %263 : vector<8x8x16xf32> to vector<4x2x8x16xf32>
    %265 = vector.extract_strided_slice %264 {offsets = [0, 0, 0, 0], sizes = [4, 1, 8, 16], strides = [1, 1, 1, 1]} : vector<4x2x8x16xf32> to vector<4x1x8x16xf32>
    %266 = vector.shape_cast %265 : vector<4x1x8x16xf32> to vector<4x8x16xf32>
    %267 = vector.shape_cast %266 : vector<4x8x16xf32> to vector<32x16xf32>
    %268 = arith.truncf %267 : vector<32x16xf32> to vector<32x16xbf16>
    %c8_216 = arith.constant 8 : index
    %c0_217 = arith.constant 0 : index
    %c0_218 = arith.constant 0 : index
    %269 = vector.load %arg6[%c8_216, %c0_217, %c0_218] : memref<9x16x16xbf16, #tpu.memory_space<vmem>>, vector<1x16x16xbf16>
    %270 = vector.shape_cast %269 : vector<1x16x16xbf16> to vector<16x16xbf16>
    %cst_219 = arith.constant dense<0.000000e+00> : vector<32x16xf32>
    %271 = tpu.matmul %268, %270, %cst_219 {dimension_numbers = #tpu.dot_dimension_numbers<[1], [0], [0], [1], [0, 0, 1, 1], [], []>} : vector<32x16xbf16>, vector<16x16xbf16>, vector<32x16xf32> -> vector<32x16xf32>
    %272 = arith.addf %262, %271 : vector<32x16xf32>
    %c0_220 = arith.constant 0 : index
    %c0_221 = arith.constant 0 : index
    %273 = vector.load %arg13[%c0_220, %c0_221] : memref<16x32xf32, #tpu.memory_space<vmem>>, vector<16x32xf32>
    %cst_222 = arith.constant dense<0.000000e+00> : vector<16x16xf32>
    %274 = tpu.matmul %273, %272, %cst_222 {dimension_numbers = #tpu.dot_dimension_numbers<[1], [0], [0], [1], [0, 0, 1, 1], [], []>} : vector<16x32xf32>, vector<32x16xf32>, vector<16x16xf32> -> vector<16x16xf32>
    %c0_223 = arith.constant 0 : index
    %c0_224 = arith.constant 0 : index
    %275 = vector.load %arg7[%c0_223, %c0_224] : memref<1x16xf32, #tpu.memory_space<vmem>>, vector<1x16xf32>
    %276 = vector.broadcast %275 : vector<1x16xf32> to vector<16x16xf32>
    %277 = arith.addf %274, %276 : vector<16x16xf32>
    %cst_225 = arith.constant 0.000000e+00 : f32
    %278 = vector.broadcast %cst_225 : f32 to vector<16x16xf32>
    %279 = arith.maximumf %277, %278 : vector<16x16xf32>
    %280 = vector.extract_strided_slice %279 {offsets = [0, 0], sizes = [4, 16], strides = [1, 1]} : vector<16x16xf32> to vector<4x16xf32>
    %c1_226 = arith.constant 1 : index
    %c1_227 = arith.constant 1 : index
    %c0_228 = arith.constant 0 : index
    %281 = vector.load %arg21[%c1_226, %c1_227, %c0_228] : memref<6x10x16xf32, #tpu.memory_space<vmem>>, vector<1x4x16xf32>
    %282 = vector.shape_cast %281 : vector<1x4x16xf32> to vector<4x16xf32>
    %283 = vector.shape_cast %280 : vector<4x16xf32> to vector<1x4x16xf32>
    tpu.vector_store %arg21[%c1_226, %c1_227, %c0_228], %283 {strides = array<i32>} : memref<6x10x16xf32, #tpu.memory_space<vmem>>, vector<1x4x16xf32>,
    %284 = vector.extract_strided_slice %279 {offsets = [4, 0], sizes = [4, 16], strides = [1, 1]} : vector<16x16xf32> to vector<4x16xf32>
    %c2_229 = arith.constant 2 : index
    %c1_230 = arith.constant 1 : index
    %c0_231 = arith.constant 0 : index
    %285 = vector.load %arg21[%c2_229, %c1_230, %c0_231] : memref<6x10x16xf32, #tpu.memory_space<vmem>>, vector<1x4x16xf32>
    %286 = vector.shape_cast %285 : vector<1x4x16xf32> to vector<4x16xf32>
    %287 = vector.shape_cast %284 : vector<4x16xf32> to vector<1x4x16xf32>
    tpu.vector_store %arg21[%c2_229, %c1_230, %c0_231], %287 {strides = array<i32>} : memref<6x10x16xf32, #tpu.memory_space<vmem>>, vector<1x4x16xf32>,
    %288 = vector.extract_strided_slice %279 {offsets = [8, 0], sizes = [4, 16], strides = [1, 1]} : vector<16x16xf32> to vector<4x16xf32>
    %c3_232 = arith.constant 3 : index
    %c1_233 = arith.constant 1 : index
    %c0_234 = arith.constant 0 : index
    %289 = vector.load %arg21[%c3_232, %c1_233, %c0_234] : memref<6x10x16xf32, #tpu.memory_space<vmem>>, vector<1x4x16xf32>
    %290 = vector.shape_cast %289 : vector<1x4x16xf32> to vector<4x16xf32>
    %291 = vector.shape_cast %288 : vector<4x16xf32> to vector<1x4x16xf32>
    tpu.vector_store %arg21[%c3_232, %c1_233, %c0_234], %291 {strides = array<i32>} : memref<6x10x16xf32, #tpu.memory_space<vmem>>, vector<1x4x16xf32>,
    %292 = vector.extract_strided_slice %279 {offsets = [12, 0], sizes = [4, 16], strides = [1, 1]} : vector<16x16xf32> to vector<4x16xf32>
    %c4_235 = arith.constant 4 : index
    %c1_236 = arith.constant 1 : index
    %c0_237 = arith.constant 0 : index
    %293 = vector.load %arg21[%c4_235, %c1_236, %c0_237] : memref<6x10x16xf32, #tpu.memory_space<vmem>>, vector<1x4x16xf32>
    %294 = vector.shape_cast %293 : vector<1x4x16xf32> to vector<4x16xf32>
    %295 = vector.shape_cast %292 : vector<4x16xf32> to vector<1x4x16xf32>
    tpu.vector_store %arg21[%c4_235, %c1_236, %c0_237], %295 {strides = array<i32>} : memref<6x10x16xf32, #tpu.memory_space<vmem>>, vector<1x4x16xf32>,
    %cst_238 = arith.constant 0.000000e+00 : f32
    %296 = vector.broadcast %cst_238 : f32 to vector<16x32xf32>
    %c0_239 = arith.constant 0 : index
    %c0_240 = arith.constant 0 : index
    %c0_241 = arith.constant 0 : index
    %297 = vector.load %arg21[%c0_239, %c0_240, %c0_241] : memref<6x10x16xf32, #tpu.memory_space<vmem>>, vector<4x8x16xf32>
    %298 = vector.shape_cast %297 : vector<4x8x16xf32> to vector<2x2x8x16xf32>
    %299 = vector.extract_strided_slice %298 {offsets = [0, 0, 0, 0], sizes = [2, 1, 8, 16], strides = [1, 1, 1, 1]} : vector<2x2x8x16xf32> to vector<2x1x8x16xf32>
    %300 = vector.shape_cast %299 : vector<2x1x8x16xf32> to vector<2x8x16xf32>
    %301 = vector.shape_cast %300 : vector<2x8x16xf32> to vector<16x16xf32>
    %302 = arith.truncf %301 : vector<16x16xf32> to vector<16x16xbf16>
    %c0_242 = arith.constant 0 : index
    %c0_243 = arith.constant 0 : index
    %c0_244 = arith.constant 0 : index
    %303 = vector.load %arg8[%c0_242, %c0_243, %c0_244] : memref<9x16x32xbf16, #tpu.memory_space<vmem>>, vector<1x16x32xbf16>
    %304 = vector.shape_cast %303 : vector<1x16x32xbf16> to vector<16x32xbf16>
    %cst_245 = arith.constant dense<0.000000e+00> : vector<16x32xf32>
    %305 = tpu.matmul %302, %304, %cst_245 {dimension_numbers = #tpu.dot_dimension_numbers<[1], [0], [0], [1], [0, 0, 1, 1], [], []>} : vector<16x16xbf16>, vector<16x32xbf16>, vector<16x32xf32> -> vector<16x32xf32>
    %306 = arith.addf %296, %305 : vector<16x32xf32>
    %c0_246 = arith.constant 0 : index
    %c1_247 = arith.constant 1 : index
    %c0_248 = arith.constant 0 : index
    %307 = vector.load %arg21[%c0_246, %c1_247, %c0_248] : memref<6x10x16xf32, #tpu.memory_space<vmem>>, vector<4x8x16xf32>
    %308 = vector.shape_cast %307 : vector<4x8x16xf32> to vector<2x2x8x16xf32>
    %309 = vector.extract_strided_slice %308 {offsets = [0, 0, 0, 0], sizes = [2, 1, 8, 16], strides = [1, 1, 1, 1]} : vector<2x2x8x16xf32> to vector<2x1x8x16xf32>
    %310 = vector.shape_cast %309 : vector<2x1x8x16xf32> to vector<2x8x16xf32>
    %311 = vector.shape_cast %310 : vector<2x8x16xf32> to vector<16x16xf32>
    %312 = arith.truncf %311 : vector<16x16xf32> to vector<16x16xbf16>
    %c1_249 = arith.constant 1 : index
    %c0_250 = arith.constant 0 : index
    %c0_251 = arith.constant 0 : index
    %313 = vector.load %arg8[%c1_249, %c0_250, %c0_251] : memref<9x16x32xbf16, #tpu.memory_space<vmem>>, vector<1x16x32xbf16>
    %314 = vector.shape_cast %313 : vector<1x16x32xbf16> to vector<16x32xbf16>
    %cst_252 = arith.constant dense<0.000000e+00> : vector<16x32xf32>
    %315 = tpu.matmul %312, %314, %cst_252 {dimension_numbers = #tpu.dot_dimension_numbers<[1], [0], [0], [1], [0, 0, 1, 1], [], []>} : vector<16x16xbf16>, vector<16x32xbf16>, vector<16x32xf32> -> vector<16x32xf32>
    %316 = arith.addf %306, %315 : vector<16x32xf32>
    %c0_253 = arith.constant 0 : index
    %c2_254 = arith.constant 2 : index
    %c0_255 = arith.constant 0 : index
    %317 = vector.load %arg21[%c0_253, %c2_254, %c0_255] : memref<6x10x16xf32, #tpu.memory_space<vmem>>, vector<4x8x16xf32>
    %318 = vector.shape_cast %317 : vector<4x8x16xf32> to vector<2x2x8x16xf32>
    %319 = vector.extract_strided_slice %318 {offsets = [0, 0, 0, 0], sizes = [2, 1, 8, 16], strides = [1, 1, 1, 1]} : vector<2x2x8x16xf32> to vector<2x1x8x16xf32>
    %320 = vector.shape_cast %319 : vector<2x1x8x16xf32> to vector<2x8x16xf32>
    %321 = vector.shape_cast %320 : vector<2x8x16xf32> to vector<16x16xf32>
    %322 = arith.truncf %321 : vector<16x16xf32> to vector<16x16xbf16>
    %c2_256 = arith.constant 2 : index
    %c0_257 = arith.constant 0 : index
    %c0_258 = arith.constant 0 : index
    %323 = vector.load %arg8[%c2_256, %c0_257, %c0_258] : memref<9x16x32xbf16, #tpu.memory_space<vmem>>, vector<1x16x32xbf16>
    %324 = vector.shape_cast %323 : vector<1x16x32xbf16> to vector<16x32xbf16>
    %cst_259 = arith.constant dense<0.000000e+00> : vector<16x32xf32>
    %325 = tpu.matmul %322, %324, %cst_259 {dimension_numbers = #tpu.dot_dimension_numbers<[1], [0], [0], [1], [0, 0, 1, 1], [], []>} : vector<16x16xbf16>, vector<16x32xbf16>, vector<16x32xf32> -> vector<16x32xf32>
    %326 = arith.addf %316, %325 : vector<16x32xf32>
    %c1_260 = arith.constant 1 : index
    %c0_261 = arith.constant 0 : index
    %c0_262 = arith.constant 0 : index
    %327 = vector.load %arg21[%c1_260, %c0_261, %c0_262] : memref<6x10x16xf32, #tpu.memory_space<vmem>>, vector<4x8x16xf32>
    %328 = vector.shape_cast %327 : vector<4x8x16xf32> to vector<2x2x8x16xf32>
    %329 = vector.extract_strided_slice %328 {offsets = [0, 0, 0, 0], sizes = [2, 1, 8, 16], strides = [1, 1, 1, 1]} : vector<2x2x8x16xf32> to vector<2x1x8x16xf32>
    %330 = vector.shape_cast %329 : vector<2x1x8x16xf32> to vector<2x8x16xf32>
    %331 = vector.shape_cast %330 : vector<2x8x16xf32> to vector<16x16xf32>
    %332 = arith.truncf %331 : vector<16x16xf32> to vector<16x16xbf16>
    %c3_263 = arith.constant 3 : index
    %c0_264 = arith.constant 0 : index
    %c0_265 = arith.constant 0 : index
    %333 = vector.load %arg8[%c3_263, %c0_264, %c0_265] : memref<9x16x32xbf16, #tpu.memory_space<vmem>>, vector<1x16x32xbf16>
    %334 = vector.shape_cast %333 : vector<1x16x32xbf16> to vector<16x32xbf16>
    %cst_266 = arith.constant dense<0.000000e+00> : vector<16x32xf32>
    %335 = tpu.matmul %332, %334, %cst_266 {dimension_numbers = #tpu.dot_dimension_numbers<[1], [0], [0], [1], [0, 0, 1, 1], [], []>} : vector<16x16xbf16>, vector<16x32xbf16>, vector<16x32xf32> -> vector<16x32xf32>
    %336 = arith.addf %326, %335 : vector<16x32xf32>
    %c1_267 = arith.constant 1 : index
    %c1_268 = arith.constant 1 : index
    %c0_269 = arith.constant 0 : index
    %337 = vector.load %arg21[%c1_267, %c1_268, %c0_269] : memref<6x10x16xf32, #tpu.memory_space<vmem>>, vector<4x8x16xf32>
    %338 = vector.shape_cast %337 : vector<4x8x16xf32> to vector<2x2x8x16xf32>
    %339 = vector.extract_strided_slice %338 {offsets = [0, 0, 0, 0], sizes = [2, 1, 8, 16], strides = [1, 1, 1, 1]} : vector<2x2x8x16xf32> to vector<2x1x8x16xf32>
    %340 = vector.shape_cast %339 : vector<2x1x8x16xf32> to vector<2x8x16xf32>
    %341 = vector.shape_cast %340 : vector<2x8x16xf32> to vector<16x16xf32>
    %342 = arith.truncf %341 : vector<16x16xf32> to vector<16x16xbf16>
    %c4_270 = arith.constant 4 : index
    %c0_271 = arith.constant 0 : index
    %c0_272 = arith.constant 0 : index
    %343 = vector.load %arg8[%c4_270, %c0_271, %c0_272] : memref<9x16x32xbf16, #tpu.memory_space<vmem>>, vector<1x16x32xbf16>
    %344 = vector.shape_cast %343 : vector<1x16x32xbf16> to vector<16x32xbf16>
    %cst_273 = arith.constant dense<0.000000e+00> : vector<16x32xf32>
    %345 = tpu.matmul %342, %344, %cst_273 {dimension_numbers = #tpu.dot_dimension_numbers<[1], [0], [0], [1], [0, 0, 1, 1], [], []>} : vector<16x16xbf16>, vector<16x32xbf16>, vector<16x32xf32> -> vector<16x32xf32>
    %346 = arith.addf %336, %345 : vector<16x32xf32>
    %c1_274 = arith.constant 1 : index
    %c2_275 = arith.constant 2 : index
    %c0_276 = arith.constant 0 : index
    %347 = vector.load %arg21[%c1_274, %c2_275, %c0_276] : memref<6x10x16xf32, #tpu.memory_space<vmem>>, vector<4x8x16xf32>
    %348 = vector.shape_cast %347 : vector<4x8x16xf32> to vector<2x2x8x16xf32>
    %349 = vector.extract_strided_slice %348 {offsets = [0, 0, 0, 0], sizes = [2, 1, 8, 16], strides = [1, 1, 1, 1]} : vector<2x2x8x16xf32> to vector<2x1x8x16xf32>
    %350 = vector.shape_cast %349 : vector<2x1x8x16xf32> to vector<2x8x16xf32>
    %351 = vector.shape_cast %350 : vector<2x8x16xf32> to vector<16x16xf32>
    %352 = arith.truncf %351 : vector<16x16xf32> to vector<16x16xbf16>
    %c5_277 = arith.constant 5 : index
    %c0_278 = arith.constant 0 : index
    %c0_279 = arith.constant 0 : index
    %353 = vector.load %arg8[%c5_277, %c0_278, %c0_279] : memref<9x16x32xbf16, #tpu.memory_space<vmem>>, vector<1x16x32xbf16>
    %354 = vector.shape_cast %353 : vector<1x16x32xbf16> to vector<16x32xbf16>
    %cst_280 = arith.constant dense<0.000000e+00> : vector<16x32xf32>
    %355 = tpu.matmul %352, %354, %cst_280 {dimension_numbers = #tpu.dot_dimension_numbers<[1], [0], [0], [1], [0, 0, 1, 1], [], []>} : vector<16x16xbf16>, vector<16x32xbf16>, vector<16x32xf32> -> vector<16x32xf32>
    %356 = arith.addf %346, %355 : vector<16x32xf32>
    %c2_281 = arith.constant 2 : index
    %c0_282 = arith.constant 0 : index
    %c0_283 = arith.constant 0 : index
    %357 = vector.load %arg21[%c2_281, %c0_282, %c0_283] : memref<6x10x16xf32, #tpu.memory_space<vmem>>, vector<4x8x16xf32>
    %358 = vector.shape_cast %357 : vector<4x8x16xf32> to vector<2x2x8x16xf32>
    %359 = vector.extract_strided_slice %358 {offsets = [0, 0, 0, 0], sizes = [2, 1, 8, 16], strides = [1, 1, 1, 1]} : vector<2x2x8x16xf32> to vector<2x1x8x16xf32>
    %360 = vector.shape_cast %359 : vector<2x1x8x16xf32> to vector<2x8x16xf32>
    %361 = vector.shape_cast %360 : vector<2x8x16xf32> to vector<16x16xf32>
    %362 = arith.truncf %361 : vector<16x16xf32> to vector<16x16xbf16>
    %c6_284 = arith.constant 6 : index
    %c0_285 = arith.constant 0 : index
    %c0_286 = arith.constant 0 : index
    %363 = vector.load %arg8[%c6_284, %c0_285, %c0_286] : memref<9x16x32xbf16, #tpu.memory_space<vmem>>, vector<1x16x32xbf16>
    %364 = vector.shape_cast %363 : vector<1x16x32xbf16> to vector<16x32xbf16>
    %cst_287 = arith.constant dense<0.000000e+00> : vector<16x32xf32>
    %365 = tpu.matmul %362, %364, %cst_287 {dimension_numbers = #tpu.dot_dimension_numbers<[1], [0], [0], [1], [0, 0, 1, 1], [], []>} : vector<16x16xbf16>, vector<16x32xbf16>, vector<16x32xf32> -> vector<16x32xf32>
    %366 = arith.addf %356, %365 : vector<16x32xf32>
    %c2_288 = arith.constant 2 : index
    %c1_289 = arith.constant 1 : index
    %c0_290 = arith.constant 0 : index
    %367 = vector.load %arg21[%c2_288, %c1_289, %c0_290] : memref<6x10x16xf32, #tpu.memory_space<vmem>>, vector<4x8x16xf32>
    %368 = vector.shape_cast %367 : vector<4x8x16xf32> to vector<2x2x8x16xf32>
    %369 = vector.extract_strided_slice %368 {offsets = [0, 0, 0, 0], sizes = [2, 1, 8, 16], strides = [1, 1, 1, 1]} : vector<2x2x8x16xf32> to vector<2x1x8x16xf32>
    %370 = vector.shape_cast %369 : vector<2x1x8x16xf32> to vector<2x8x16xf32>
    %371 = vector.shape_cast %370 : vector<2x8x16xf32> to vector<16x16xf32>
    %372 = arith.truncf %371 : vector<16x16xf32> to vector<16x16xbf16>
    %c7_291 = arith.constant 7 : index
    %c0_292 = arith.constant 0 : index
    %c0_293 = arith.constant 0 : index
    %373 = vector.load %arg8[%c7_291, %c0_292, %c0_293] : memref<9x16x32xbf16, #tpu.memory_space<vmem>>, vector<1x16x32xbf16>
    %374 = vector.shape_cast %373 : vector<1x16x32xbf16> to vector<16x32xbf16>
    %cst_294 = arith.constant dense<0.000000e+00> : vector<16x32xf32>
    %375 = tpu.matmul %372, %374, %cst_294 {dimension_numbers = #tpu.dot_dimension_numbers<[1], [0], [0], [1], [0, 0, 1, 1], [], []>} : vector<16x16xbf16>, vector<16x32xbf16>, vector<16x32xf32> -> vector<16x32xf32>
    %376 = arith.addf %366, %375 : vector<16x32xf32>
    %c2_295 = arith.constant 2 : index
    %c2_296 = arith.constant 2 : index
    %c0_297 = arith.constant 0 : index
    %377 = vector.load %arg21[%c2_295, %c2_296, %c0_297] : memref<6x10x16xf32, #tpu.memory_space<vmem>>, vector<4x8x16xf32>
    %378 = vector.shape_cast %377 : vector<4x8x16xf32> to vector<2x2x8x16xf32>
    %379 = vector.extract_strided_slice %378 {offsets = [0, 0, 0, 0], sizes = [2, 1, 8, 16], strides = [1, 1, 1, 1]} : vector<2x2x8x16xf32> to vector<2x1x8x16xf32>
    %380 = vector.shape_cast %379 : vector<2x1x8x16xf32> to vector<2x8x16xf32>
    %381 = vector.shape_cast %380 : vector<2x8x16xf32> to vector<16x16xf32>
    %382 = arith.truncf %381 : vector<16x16xf32> to vector<16x16xbf16>
    %c8_298 = arith.constant 8 : index
    %c0_299 = arith.constant 0 : index
    %c0_300 = arith.constant 0 : index
    %383 = vector.load %arg8[%c8_298, %c0_299, %c0_300] : memref<9x16x32xbf16, #tpu.memory_space<vmem>>, vector<1x16x32xbf16>
    %384 = vector.shape_cast %383 : vector<1x16x32xbf16> to vector<16x32xbf16>
    %cst_301 = arith.constant dense<0.000000e+00> : vector<16x32xf32>
    %385 = tpu.matmul %382, %384, %cst_301 {dimension_numbers = #tpu.dot_dimension_numbers<[1], [0], [0], [1], [0, 0, 1, 1], [], []>} : vector<16x16xbf16>, vector<16x32xbf16>, vector<16x32xf32> -> vector<16x32xf32>
    %386 = arith.addf %376, %385 : vector<16x32xf32>
    %c0_302 = arith.constant 0 : index
    %c0_303 = arith.constant 0 : index
    %387 = vector.load %arg14[%c0_302, %c0_303] : memref<4x16xf32, #tpu.memory_space<vmem>>, vector<4x16xf32>
    %cst_304 = arith.constant dense<0.000000e+00> : vector<4x32xf32>
    %388 = tpu.matmul %387, %386, %cst_304 {dimension_numbers = #tpu.dot_dimension_numbers<[1], [0], [0], [1], [0, 0, 1, 1], [], []>} : vector<4x16xf32>, vector<16x32xf32>, vector<4x32xf32> -> vector<4x32xf32>
    %c0_305 = arith.constant 0 : index
    %c0_306 = arith.constant 0 : index
    %389 = vector.load %arg9[%c0_305, %c0_306] : memref<1x32xf32, #tpu.memory_space<vmem>>, vector<1x32xf32>
    %390 = vector.broadcast %389 : vector<1x32xf32> to vector<4x32xf32>
    %391 = arith.addf %388, %390 : vector<4x32xf32>
    %cst_307 = arith.constant 0.000000e+00 : f32
    %392 = vector.broadcast %cst_307 : f32 to vector<4x32xf32>
    %393 = arith.maximumf %391, %392 : vector<4x32xf32>
    %394 = arith.truncf %393 : vector<4x32xf32> to vector<4x32xbf16>
    %c0_308 = arith.constant 0 : index
    %c0_309 = arith.constant 0 : index
    %395 = vector.load %arg10[%c0_308, %c0_309] : memref<32x2xbf16, #tpu.memory_space<vmem>>, vector<32x2xbf16>
    %cst_310 = arith.constant dense<0.000000e+00> : vector<4x2xf32>
    %396 = tpu.matmul %394, %395, %cst_310 {dimension_numbers = #tpu.dot_dimension_numbers<[1], [0], [0], [1], [0, 0, 1, 1], [], []>} : vector<4x32xbf16>, vector<32x2xbf16>, vector<4x2xf32> -> vector<4x2xf32>
    %c0_311 = arith.constant 0 : index
    %c0_312 = arith.constant 0 : index
    %397 = vector.load %arg11[%c0_311, %c0_312] : memref<1x2xf32, #tpu.memory_space<vmem>>, vector<1x2xf32>
    %398 = vector.broadcast %397 : vector<1x2xf32> to vector<4x2xf32>
    %399 = arith.addf %396, %398 : vector<4x2xf32>
    %400 = tpu.transpose %399, [1, 0] : vector<4x2xf32> -> vector<2x4xf32>
    %c0_313 = arith.constant 0 : index
    %c0_314 = arith.constant 0 : index
    %401 = vector.load %arg15[%c0_313, %c0_314] : memref<4x32xf32, #tpu.memory_space<vmem>>, vector<4x32xf32>
    %cst_315 = arith.constant dense<0.000000e+00> : vector<2x32xf32>
    %402 = tpu.matmul %400, %401, %cst_315 {dimension_numbers = #tpu.dot_dimension_numbers<[1], [0], [0], [1], [0, 0, 1, 1], [], []>} : vector<2x4xf32>, vector<4x32xf32>, vector<2x32xf32> -> vector<2x32xf32>
    %c0_316 = arith.constant 0 : index
    %c0_317 = arith.constant 0 : index
    %403 = vector.load %arg16[%c0_316, %c0_317] : memref<32x256xf32, #tpu.memory_space<vmem>>, vector<32x256xf32>
    %cst_318 = arith.constant dense<0.000000e+00> : vector<2x256xf32>
    %404 = tpu.matmul %402, %403, %cst_318 {dimension_numbers = #tpu.dot_dimension_numbers<[1], [0], [0], [1], [0, 0, 1, 1], [], []>} : vector<2x32xf32>, vector<32x256xf32>, vector<2x256xf32> -> vector<2x256xf32>
    %c0_319 = arith.constant 0 : index
    %c0_320 = arith.constant 0 : index
    %c0_321 = arith.constant 0 : index
    %405 = vector.load %arg17[%c0_319, %c0_320, %c0_321] : memref<1x2x256xf32, #tpu.memory_space<vmem>>, vector<1x2x256xf32>
    %406 = vector.shape_cast %405 : vector<1x2x256xf32> to vector<2x256xf32>
    %407 = vector.shape_cast %404 : vector<2x256xf32> to vector<1x2x256xf32>
    tpu.vector_store %arg17[%c0_319, %c0_320, %c0_321], %407 {strides = array<i32>} : memref<1x2x256xf32, #tpu.memory_space<vmem>>, vector<1x2x256xf32>,
    return
  }
  func.func @transform_0(%arg0: i32) -> (i32, i32, i32, i32) {
    %c0_i32 = arith.constant 0 : i32
    %c0_i32_0 = arith.constant 0 : i32
    %c0_i32_1 = arith.constant 0 : i32
    %c0_i32_2 = arith.constant 0 : i32
    return %arg0, %c0_i32, %c0_i32_0, %c0_i32_1 : i32, i32, i32, i32
  }
  func.func @transform_1(%arg0: i32) -> (i32, i32, i32) {
    %c0_i32 = arith.constant 0 : i32
    %c0_i32_0 = arith.constant 0 : i32
    %c0_i32_1 = arith.constant 0 : i32
    %c0_i32_2 = arith.constant 0 : i32
    return %c0_i32, %c0_i32_0, %c0_i32_1 : i32, i32, i32
  }
  func.func @transform_2(%arg0: i32) -> (i32, i32) {
    %c0_i32 = arith.constant 0 : i32
    %c0_i32_0 = arith.constant 0 : i32
    %c0_i32_1 = arith.constant 0 : i32
    return %c0_i32, %c0_i32_0 : i32, i32
  }
  func.func @transform_3(%arg0: i32) -> (i32, i32, i32) {
    %c0_i32 = arith.constant 0 : i32
    %c0_i32_0 = arith.constant 0 : i32
    %c0_i32_1 = arith.constant 0 : i32
    %c0_i32_2 = arith.constant 0 : i32
    return %c0_i32, %c0_i32_0, %c0_i32_1 : i32, i32, i32
  }
  func.func @transform_4(%arg0: i32) -> (i32, i32) {
    %c0_i32 = arith.constant 0 : i32
    %c0_i32_0 = arith.constant 0 : i32
    %c0_i32_1 = arith.constant 0 : i32
    return %c0_i32, %c0_i32_0 : i32, i32
  }
  func.func @transform_5(%arg0: i32) -> (i32, i32, i32) {
    %c0_i32 = arith.constant 0 : i32
    %c0_i32_0 = arith.constant 0 : i32
    %c0_i32_1 = arith.constant 0 : i32
    %c0_i32_2 = arith.constant 0 : i32
    return %c0_i32, %c0_i32_0, %c0_i32_1 : i32, i32, i32
  }
  func.func @transform_6(%arg0: i32) -> (i32, i32) {
    %c0_i32 = arith.constant 0 : i32
    %c0_i32_0 = arith.constant 0 : i32
    %c0_i32_1 = arith.constant 0 : i32
    return %c0_i32, %c0_i32_0 : i32, i32
  }
  func.func @transform_7(%arg0: i32) -> (i32, i32, i32) {
    %c0_i32 = arith.constant 0 : i32
    %c0_i32_0 = arith.constant 0 : i32
    %c0_i32_1 = arith.constant 0 : i32
    %c0_i32_2 = arith.constant 0 : i32
    return %c0_i32, %c0_i32_0, %c0_i32_1 : i32, i32, i32
  }
  func.func @transform_8(%arg0: i32) -> (i32, i32) {
    %c0_i32 = arith.constant 0 : i32
    %c0_i32_0 = arith.constant 0 : i32
    %c0_i32_1 = arith.constant 0 : i32
    return %c0_i32, %c0_i32_0 : i32, i32
  }
  func.func @transform_9(%arg0: i32) -> (i32, i32) {
    %c0_i32 = arith.constant 0 : i32
    %c0_i32_0 = arith.constant 0 : i32
    %c0_i32_1 = arith.constant 0 : i32
    return %c0_i32, %c0_i32_0 : i32, i32
  }
  func.func @transform_10(%arg0: i32) -> (i32, i32) {
    %c0_i32 = arith.constant 0 : i32
    %c0_i32_0 = arith.constant 0 : i32
    %c0_i32_1 = arith.constant 0 : i32
    return %c0_i32, %c0_i32_0 : i32, i32
  }
  func.func @transform_11(%arg0: i32) -> (i32, i32) {
    %c0_i32 = arith.constant 0 : i32
    %c0_i32_0 = arith.constant 0 : i32
    %c0_i32_1 = arith.constant 0 : i32
    return %c0_i32, %c0_i32_0 : i32, i32
  }
  func.func @transform_12(%arg0: i32) -> (i32, i32) {
    %c0_i32 = arith.constant 0 : i32
    %c0_i32_0 = arith.constant 0 : i32
    %c0_i32_1 = arith.constant 0 : i32
    return %c0_i32, %c0_i32_0 : i32, i32
  }
  func.func @transform_13(%arg0: i32) -> (i32, i32) {
    %c0_i32 = arith.constant 0 : i32
    %c0_i32_0 = arith.constant 0 : i32
    %c0_i32_1 = arith.constant 0 : i32
    return %c0_i32, %c0_i32_0 : i32, i32
  }
  func.func @transform_14(%arg0: i32) -> (i32, i32) {
    %c0_i32 = arith.constant 0 : i32
    %c0_i32_0 = arith.constant 0 : i32
    %c0_i32_1 = arith.constant 0 : i32
    return %c0_i32, %c0_i32_0 : i32, i32
  }
  func.func @transform_15(%arg0: i32) -> (i32, i32) {
    %c0_i32 = arith.constant 0 : i32
    %c0_i32_0 = arith.constant 0 : i32
    %c0_i32_1 = arith.constant 0 : i32
    return %c0_i32, %c0_i32_0 : i32, i32
  }
  func.func @transform_16(%arg0: i32) -> (i32, i32, i32) {
    %c0_i32 = arith.constant 0 : i32
    %c0_i32_0 = arith.constant 0 : i32
    %c0_i32_1 = arith.constant 0 : i32
    return %arg0, %c0_i32, %c0_i32_0 : i32, i32, i32
  }
}

</mosaic_0001>

<llo_original>
// kernel: generator_forward.1
$region0: #{generator_forward.1}
  #allocation0 [shape = 'u32[]', space=smem, size = 0x4, offset = 0x4, fixed_abs, tag = 'smem constant byte address 0x4 - core index']
  #allocation1 [shape = 'u32[144,128]{1,0:T(1,128)}', space=vmem, size = 0x12000, scoped, tag = 'internal scratch']
  #allocation2 [shape = 'f32[18,18,3]{2,1,0:T(8,128)}', space=vmem, size = 0x36000, scoped, tag = 'scratch operand']
  #allocation3 [shape = 'f32[18,18,8]{2,1,0:T(8,128)}', space=vmem, size = 0x36000, scoped, tag = 'scratch operand']
  #allocation4 [shape = 'f32[10,10,16]{2,1,0:T(8,128)}', space=vmem, size = 0x14000, scoped, tag = 'scratch operand']
  #allocation5 [shape = 'f32[6,10,16]{2,1,0:T(8,128)}', space=vmem, size = 0xc000, scoped, tag = 'scratch operand']
  %s0 = inlined_call_operand.vmem [shape: f32[2,16,16,3], index: 0, kind: input, shape index: {}]
  %s1 = inlined_call_operand.vmem [shape: bf16[9,3,8], index: 1, kind: input, shape index: {}]
  %s2 = inlined_call_operand.vmem [shape: f32[1,8], index: 2, kind: input, shape index: {}]
  %s3 = inlined_call_operand.vmem [shape: bf16[9,8,16], index: 3, kind: input, shape index: {}]
  %s4 = inlined_call_operand.vmem [shape: f32[1,16], index: 4, kind: input, shape index: {}]
  %s5 = inlined_call_operand.vmem [shape: bf16[9,16,16], index: 5, kind: input, shape index: {}]
  %s6 = inlined_call_operand.vmem [shape: f32[1,16], index: 6, kind: input, shape index: {}]
  %s7 = inlined_call_operand.vmem [shape: bf16[9,16,32], index: 7, kind: input, shape index: {}]
  %s8 = inlined_call_operand.vmem [shape: f32[1,32], index: 8, kind: input, shape index: {}]
  %s9 = inlined_call_operand.vmem [shape: bf16[32,2], index: 9, kind: input, shape index: {}]
  %s10 = inlined_call_operand.vmem [shape: f32[1,2], index: 10, kind: input, shape index: {}]
  %s11 = inlined_call_operand.vmem [shape: f32[64,128], index: 11, kind: input, shape index: {}]
  %s12 = inlined_call_operand.vmem [shape: f32[16,32], index: 12, kind: input, shape index: {}]
  %s13 = inlined_call_operand.vmem [shape: f32[4,16], index: 13, kind: input, shape index: {}]
  %s14 = inlined_call_operand.vmem [shape: f32[4,32], index: 14, kind: input, shape index: {}]
  %s15 = inlined_call_operand.vmem [shape: f32[32,256], index: 15, kind: input, shape index: {}]
  %s16 = inlined_call_operand.vmem [shape: f32[2,2,256], index: 16, kind: output, shape index: {}]
  %s17 = sld [smem:[#allocation0]]
  $region97: #{generator_forward.1} parent=0
    _
  %s19 = ssub.s32 1, %s17
  %s20 = scalar_select 0, %s19, %s17
  loop: start=0, step=1, limit=4
  $region2: #{generator_forward.1} parent=0 // loop_pre_header
    _
  $region3: #{generator_forward.1} parent=0 // loop_header
    %s22 = sphi 0, %s26
    %p23 = scmp.ge.s32.totalorder %s22, 4
    %s32 = sphi 0, %s34
    %s35 = sphi 0, %s32
    %s36 = sphi 0, %s35
    %s52 = sphi 0, %s36
    %s56 = sphi 0, %s56
    %s58 = sphi 0, %s56
    %s59 = sphi 0, %s58
    %s73 = sphi 0, %s59
    %s77 = sphi 0, %s77
    %s79 = sphi 0, %s77
    %s80 = sphi 0, %s79
    %s94 = sphi 0, %s80
    %s98 = sphi 0, %s98
    %s100 = sphi 0, %s98
    %s101 = sphi 0, %s100
    %s115 = sphi 0, %s101
    %s119 = sphi 0, %s119
    %s121 = sphi 0, %s119
    %s122 = sphi 0, %s121
    %s136 = sphi 0, %s122
    %s140 = sphi 0, %s140
    %s142 = sphi 0, %s140
    %s143 = sphi 0, %s142
    %s157 = sphi 0, %s143
    %s161 = sphi 0, %s161
    %s163 = sphi 0, %s161
    %s164 = sphi 0, %s163
    %s178 = sphi 0, %s164
    %s182 = sphi 0, %s182
    %s184 = sphi 0, %s182
    %s185 = sphi 0, %s184
    %s199 = sphi 0, %s185
    %s203 = sphi 0, %s203
    %s205 = sphi 0, %s203
    %s206 = sphi 0, %s205
    %s220 = sphi 0, %s206
    %s224 = sphi 0, %s224
    %s226 = sphi 0, %s224
    %s227 = sphi 0, %s226
    %s241 = sphi 0, %s227
    %s245 = sphi 0, %s245
    %s247 = sphi 0, %s245
    %s248 = sphi 0, %s247
    %s262 = sphi 0, %s248
    %s266 = sphi 0, %s266
    %s268 = sphi 0, %s266
    %s269 = sphi 0, %s268
    %s283 = sphi 0, %s269
    %s287 = sphi 0, %s287
    %s289 = sphi 0, %s287
    %s290 = sphi 0, %s289
    %s304 = sphi 0, %s290
    %s308 = sphi 0, %s308
    %s310 = sphi 0, %s308
    %s311 = sphi 0, %s310
    %s325 = sphi 0, %s311
    %s329 = sphi 0, %s329
    %s331 = sphi 0, %s329
    %s332 = sphi 0, %s331
    %s346 = sphi 0, %s332
    %s350 = sphi 0, %s350
    %s352 = sphi 0, %s350
    %s353 = sphi 0, %s352
    %s367 = sphi 0, %s353
    %s373 = sphi 0, %s375
    %s376 = sphi 0, %s373
    %s377 = sphi 0, %s376
    %s393 = sphi 0, %s377
  $region4: #{generator_forward.1} parent=0 // loop_header_branch
    %25 = sbr.rel (%p23) target = $region8
  $region5: #{generator_forward.1} parent=0 // loop_body
    %s27 = ssub.s32 %s22, 1
    %s28 = ssub.s32 %s22, 2
    %s29 = sadd.s32 %s22, 1
    %s30 = ssub.s32 %s22, %s29
    %p31 = scmp.eq.s32.totalorder %s30, 0
    %s33 = sadd.s32 %s32, 1
    %s34 = scalar_select %p31, %s32, %s33
    %p37 = pneg %p31
    %p38 = scmp.eq.s32.totalorder %s22, 1
    %p39 = por %p37, %p38
    %p40 = scmp.ne.s32.totalorder %s32, %s35
    %p41 = scmp.eq.s32.totalorder %s22, 0
    %p42 = por %p40, %p41
    %p43 = scmp.ne.s32.totalorder %s32, %s35
    %p44 = scmp.eq.s32.totalorder %s27, 1
    %p45 = por %p43, %p44
    %p46 = scmp.ne.s32.totalorder %s35, %s36
    %p47 = scmp.eq.s32.totalorder %s27, 0
    %p48 = por %p46, %p47
    %p49 = scmp.ne.s32.totalorder %s35, %s36
    %p50 = scmp.eq.s32.totalorder %s28, 1
    %p51 = por %p49, %p50
    %p53 = scmp.ne.s32.totalorder %s36, %s52
    %p54 = scmp.eq.s32.totalorder %s28, 0
    %p55 = por %p53, %p54
    %s57 = sadd.s32 %s56, 1
    %p60 = scmp.eq.s32.totalorder %s22, 1
    %p61 = scmp.ne.s32.totalorder %s56, %s58
    %p62 = scmp.eq.s32.totalorder %s22, 0
    %p63 = por %p61, %p62
    %p64 = scmp.ne.s32.totalorder %s56, %s58
    %p65 = scmp.eq.s32.totalorder %s27, 1
    %p66 = por %p64, %p65
    %p67 = scmp.ne.s32.totalorder %s58, %s59
    %p68 = scmp.eq.s32.totalorder %s27, 0
    %p69 = por %p67, %p68
    %p70 = scmp.ne.s32.totalorder %s58, %s59
    %p71 = scmp.eq.s32.totalorder %s28, 1
    %p72 = por %p70, %p71
    %p74 = scmp.ne.s32.totalorder %s59, %s73
    %p75 = scmp.eq.s32.totalorder %s28, 0
    %p76 = por %p74, %p75
    %s78 = sadd.s32 %s77, 1
    %p81 = scmp.eq.s32.totalorder %s22, 1
    %p82 = scmp.ne.s32.totalorder %s77, %s79
    %p83 = scmp.eq.s32.totalorder %s22, 0
    %p84 = por %p82, %p83
    %p85 = scmp.ne.s32.totalorder %s77, %s79
    %p86 = scmp.eq.s32.totalorder %s27, 1
    %p87 = por %p85, %p86
    %p88 = scmp.ne.s32.totalorder %s79, %s80
    %p89 = scmp.eq.s32.totalorder %s27, 0
    %p90 = por %p88, %p89
    %p91 = scmp.ne.s32.totalorder %s79, %s80
    %p92 = scmp.eq.s32.totalorder %s28, 1
    %p93 = por %p91, %p92
    %p95 = scmp.ne.s32.totalorder %s80, %s94
    %p96 = scmp.eq.s32.totalorder %s28, 0
    %p97 = por %p95, %p96
    %s99 = sadd.s32 %s98, 1
    %p102 = scmp.eq.s32.totalorder %s22, 1
    %p103 = scmp.ne.s32.totalorder %s98, %s100
    %p104 = scmp.eq.s32.totalorder %s22, 0
    %p105 = por %p103, %p104
    %p106 = scmp.ne.s32.totalorder %s98, %s100
    %p107 = scmp.eq.s32.totalorder %s27, 1
    %p108 = por %p106, %p107
    %p109 = scmp.ne.s32.totalorder %s100, %s101
    %p110 = scmp.eq.s32.totalorder %s27, 0
    %p111 = por %p109, %p110
    %p112 = scmp.ne.s32.totalorder %s100, %s101
    %p113 = scmp.eq.s32.totalorder %s28, 1
    %p114 = por %p112, %p113
    %p116 = scmp.ne.s32.totalorder %s101, %s115
    %p117 = scmp.eq.s32.totalorder %s28, 0
    %p118 = por %p116, %p117
    %s120 = sadd.s32 %s119, 1
    %p123 = scmp.eq.s32.totalorder %s22, 1
    %p124 = scmp.ne.s32.totalorder %s119, %s121
    %p125 = scmp.eq.s32.totalorder %s22, 0
    %p126 = por %p124, %p125
    %p127 = scmp.ne.s32.totalorder %s119, %s121
    %p128 = scmp.eq.s32.totalorder %s27, 1
    %p129 = por %p127, %p128
    %p130 = scmp.ne.s32.totalorder %s121, %s122
    %p131 = scmp.eq.s32.totalorder %s27, 0
    %p132 = por %p130, %p131
    %p133 = scmp.ne.s32.totalorder %s121, %s122
    %p134 = scmp.eq.s32.totalorder %s28, 1
    %p135 = por %p133, %p134
    %p137 = scmp.ne.s32.totalorder %s122, %s136
    %p138 = scmp.eq.s32.totalorder %s28, 0
    %p139 = por %p137, %p138
    %s141 = sadd.s32 %s140, 1
    %p144 = scmp.eq.s32.totalorder %s22, 1
    %p145 = scmp.ne.s32.totalorder %s140, %s142
    %p146 = scmp.eq.s32.totalorder %s22, 0
    %p147 = por %p145, %p146
    %p148 = scmp.ne.s32.totalorder %s140, %s142
    %p149 = scmp.eq.s32.totalorder %s27, 1
    %p150 = por %p148, %p149
    %p151 = scmp.ne.s32.totalorder %s142, %s143
    %p152 = scmp.eq.s32.totalorder %s27, 0
    %p153 = por %p151, %p152
    %p154 = scmp.ne.s32.totalorder %s142, %s143
    %p155 = scmp.eq.s32.totalorder %s28, 1
    %p156 = por %p154, %p155
    %p158 = scmp.ne.s32.totalorder %s143, %s157
    %p159 = scmp.eq.s32.totalorder %s28, 0
    %p160 = por %p158, %p159
    %s162 = sadd.s32 %s161, 1
    %p165 = scmp.eq.s32.totalorder %s22, 1
    %p166 = scmp.ne.s32.totalorder %s161, %s163
    %p167 = scmp.eq.s32.totalorder %s22, 0
    %p168 = por %p166, %p167
    %p169 = scmp.ne.s32.totalorder %s161, %s163
    %p170 = scmp.eq.s32.totalorder %s27, 1
    %p171 = por %p169, %p170
    %p172 = scmp.ne.s32.totalorder %s163, %s164
    %p173 = scmp.eq.s32.totalorder %s27, 0
    %p174 = por %p172, %p173
    %p175 = scmp.ne.s32.totalorder %s163, %s164
    %p176 = scmp.eq.s32.totalorder %s28, 1
    %p177 = por %p175, %p176
    %p179 = scmp.ne.s32.totalorder %s164, %s178
    %p180 = scmp.eq.s32.totalorder %s28, 0
    %p181 = por %p179, %p180
    %s183 = sadd.s32 %s182, 1
    %p186 = scmp.eq.s32.totalorder %s22, 1
    %p187 = scmp.ne.s32.totalorder %s182, %s184
    %p188 = scmp.eq.s32.totalorder %s22, 0
    %p189 = por %p187, %p188
    %p190 = scmp.ne.s32.totalorder %s182, %s184
    %p191 = scmp.eq.s32.totalorder %s27, 1
    %p192 = por %p190, %p191
    %p193 = scmp.ne.s32.totalorder %s184, %s185
    %p194 = scmp.eq.s32.totalorder %s27, 0
    %p195 = por %p193, %p194
    %p196 = scmp.ne.s32.totalorder %s184, %s185
    %p197 = scmp.eq.s32.totalorder %s28, 1
    %p198 = por %p196, %p197
    %p200 = scmp.ne.s32.totalorder %s185, %s199
    %p201 = scmp.eq.s32.totalorder %s28, 0
    %p202 = por %p200, %p201
    %s204 = sadd.s32 %s203, 1
    %p207 = scmp.eq.s32.totalorder %s22, 1
    %p208 = scmp.ne.s32.totalorder %s203, %s205
    %p209 = scmp.eq.s32.totalorder %s22, 0
    %p210 = por %p208, %p209
    %p211 = scmp.ne.s32.totalorder %s203, %s205
    %p212 = scmp.eq.s32.totalorder %s27, 1
    %p213 = por %p211, %p212
    %p214 = scmp.ne.s32.totalorder %s205, %s206
    %p215 = scmp.eq.s32.totalorder %s27, 0
    %p216 = por %p214, %p215
    %p217 = scmp.ne.s32.totalorder %s205, %s206
    %p218 = scmp.eq.s32.totalorder %s28, 1
    %p219 = por %p217, %p218
    %p221 = scmp.ne.s32.totalorder %s206, %s220
    %p222 = scmp.eq.s32.totalorder %s28, 0
    %p223 = por %p221, %p222
    %s225 = sadd.s32 %s224, 1
    %p228 = scmp.eq.s32.totalorder %s22, 1
    %p229 = scmp.ne.s32.totalorder %s224, %s226
    %p230 = scmp.eq.s32.totalorder %s22, 0
    %p231 = por %p229, %p230
    %p232 = scmp.ne.s32.totalorder %s224, %s226
    %p233 = scmp.eq.s32.totalorder %s27, 1
    %p234 = por %p232, %p233
    %p235 = scmp.ne.s32.totalorder %s226, %s227
    %p236 = scmp.eq.s32.totalorder %s27, 0
    %p237 = por %p235, %p236
    %p238 = scmp.ne.s32.totalorder %s226, %s227
    %p239 = scmp.eq.s32.totalorder %s28, 1
    %p240 = por %p238, %p239
    %p242 = scmp.ne.s32.totalorder %s227, %s241
    %p243 = scmp.eq.s32.totalorder %s28, 0
    %p244 = por %p242, %p243
    %s246 = sadd.s32 %s245, 1
    %p249 = scmp.eq.s32.totalorder %s22, 1
    %p250 = scmp.ne.s32.totalorder %s245, %s247
    %p251 = scmp.eq.s32.totalorder %s22, 0
    %p252 = por %p250, %p251
    %p253 = scmp.ne.s32.totalorder %s245, %s247
    %p254 = scmp.eq.s32.totalorder %s27, 1
    %p255 = por %p253, %p254
    %p256 = scmp.ne.s32.totalorder %s247, %s248
    %p257 = scmp.eq.s32.totalorder %s27, 0
    %p258 = por %p256, %p257
    %p259 = scmp.ne.s32.totalorder %s247, %s248
    %p260 = scmp.eq.s32.totalorder %s28, 1
    %p261 = por %p259, %p260
    %p263 = scmp.ne.s32.totalorder %s248, %s262
    %p264 = scmp.eq.s32.totalorder %s28, 0
    %p265 = por %p263, %p264
    %s267 = sadd.s32 %s266, 1
    %p270 = scmp.eq.s32.totalorder %s22, 1
    %p271 = scmp.ne.s32.totalorder %s266, %s268
    %p272 = scmp.eq.s32.totalorder %s22, 0
    %p273 = por %p271, %p272
    %p274 = scmp.ne.s32.totalorder %s266, %s268
    %p275 = scmp.eq.s32.totalorder %s27, 1
    %p276 = por %p274, %p275
    %p277 = scmp.ne.s32.totalorder %s268, %s269
    %p278 = scmp.eq.s32.totalorder %s27, 0
    %p279 = por %p277, %p278
    %p280 = scmp.ne.s32.totalorder %s268, %s269
    %p281 = scmp.eq.s32.totalorder %s28, 1
    %p282 = por %p280, %p281
    %p284 = scmp.ne.s32.totalorder %s269, %s283
    %p285 = scmp.eq.s32.totalorder %s28, 0
    %p286 = por %p284, %p285
    %s288 = sadd.s32 %s287, 1
    %p291 = scmp.eq.s32.totalorder %s22, 1
    %p292 = scmp.ne.s32.totalorder %s287, %s289
    %p293 = scmp.eq.s32.totalorder %s22, 0
    %p294 = por %p292, %p293
    %p295 = scmp.ne.s32.totalorder %s287, %s289
    %p296 = scmp.eq.s32.totalorder %s27, 1
    %p297 = por %p295, %p296
    %p298 = scmp.ne.s32.totalorder %s289, %s290
    %p299 = scmp.eq.s32.totalorder %s27, 0
    %p300 = por %p298, %p299
    %p301 = scmp.ne.s32.totalorder %s289, %s290
    %p302 = scmp.eq.s32.totalorder %s28, 1
    %p303 = por %p301, %p302
    %p305 = scmp.ne.s32.totalorder %s290, %s304
    %p306 = scmp.eq.s32.totalorder %s28, 0
    %p307 = por %p305, %p306
    %s309 = sadd.s32 %s308, 1
    %p312 = scmp.eq.s32.totalorder %s22, 1
    %p313 = scmp.ne.s32.totalorder %s308, %s310
    %p314 = scmp.eq.s32.totalorder %s22, 0
    %p315 = por %p313, %p314
    %p316 = scmp.ne.s32.totalorder %s308, %s310
    %p317 = scmp.eq.s32.totalorder %s27, 1
    %p318 = por %p316, %p317
    %p319 = scmp.ne.s32.totalorder %s310, %s311
    %p320 = scmp.eq.s32.totalorder %s27, 0
    %p321 = por %p319, %p320
    %p322 = scmp.ne.s32.totalorder %s310, %s311
    %p323 = scmp.eq.s32.totalorder %s28, 1
    %p324 = por %p322, %p323
    %p326 = scmp.ne.s32.totalorder %s311, %s325
    %p327 = scmp.eq.s32.totalorder %s28, 0
    %p328 = por %p326, %p327
    %s330 = sadd.s32 %s329, 1
    %p333 = scmp.eq.s32.totalorder %s22, 1
    %p334 = scmp.ne.s32.totalorder %s329, %s331
    %p335 = scmp.eq.s32.totalorder %s22, 0
    %p336 = por %p334, %p335
    %p337 = scmp.ne.s32.totalorder %s329, %s331
    %p338 = scmp.eq.s32.totalorder %s27, 1
    %p339 = por %p337, %p338
    %p340 = scmp.ne.s32.totalorder %s331, %s332
    %p341 = scmp.eq.s32.totalorder %s27, 0
    %p342 = por %p340, %p341
    %p343 = scmp.ne.s32.totalorder %s331, %s332
    %p344 = scmp.eq.s32.totalorder %s28, 1
    %p345 = por %p343, %p344
    %p347 = scmp.ne.s32.totalorder %s332, %s346
    %p348 = scmp.eq.s32.totalorder %s28, 0
    %p349 = por %p347, %p348
    %s351 = sadd.s32 %s350, 1
    %p354 = scmp.eq.s32.totalorder %s22, 1
    %p355 = scmp.ne.s32.totalorder %s350, %s352
    %p356 = scmp.eq.s32.totalorder %s22, 0
    %p357 = por %p355, %p356
    %p358 = scmp.ne.s32.totalorder %s350, %s352
    %p359 = scmp.eq.s32.totalorder %s27, 1
    %p360 = por %p358, %p359
    %p361 = scmp.ne.s32.totalorder %s352, %s353
    %p362 = scmp.eq.s32.totalorder %s27, 0
    %p363 = por %p361, %p362
    %p364 = scmp.ne.s32.totalorder %s352, %s353
    %p365 = scmp.eq.s32.totalorder %s28, 1
    %p366 = por %p364, %p365
    %p368 = scmp.ne.s32.totalorder %s353, %s367
    %p369 = scmp.eq.s32.totalorder %s28, 0
    %p370 = por %p368, %p369
    %s371 = ssub.s32 %s22, %s29
    %p372 = scmp.eq.s32.totalorder %s371, 0
    %s374 = sadd.s32 %s373, 1
    %s375 = scalar_select %p372, %s373, %s374
    %p378 = pneg %p372
    %p379 = scmp.eq.s32.totalorder %s22, 1
    %p380 = por %p378, %p379
    %p381 = scmp.ne.s32.totalorder %s373, %s376
    %p382 = scmp.eq.s32.totalorder %s22, 0
    %p383 = por %p381, %p382
    %p384 = scmp.ne.s32.totalorder %s373, %s376
    %p385 = scmp.eq.s32.totalorder %s27, 1
    %p386 = por %p384, %p385
    %p387 = scmp.ne.s32.totalorder %s376, %s377
    %p388 = scmp.eq.s32.totalorder %s27, 0
    %p389 = por %p387, %p388
    %p390 = scmp.ne.s32.totalorder %s376, %s377
    %p391 = scmp.eq.s32.totalorder %s28, 1
    %p392 = por %p390, %p391
    %p394 = scmp.ne.s32.totalorder %s377, %s393
    %p395 = scmp.eq.s32.totalorder %s28, 0
    %p396 = por %p394, %p395
    %p397 = scmp.le.s32.totalorder 1, %s22
    %p398 = scmp.lt.s32.totalorder %s22, 3
    %p399 = pnand %p397, %p398
    %p400 = pneg %p399
    // Predicated region
    $region9: #{generator_forward.1} parent=5 // pred_check
      _
    $region10: #{generator_forward.1} parent=5 // pred_check_branch
      %402 = sbr.rel (%p399) target = $region12
    $region11: #{generator_forward.1} parent=5 // pred_region
      %s403 = ssub.s32 %s22, 1
      // Predicated region
      $region13: #{generator_forward.1} parent=11 // pred_check
        %p404 = pneg %p69
      $region14: #{generator_forward.1} parent=11 // pred_check_branch
        %406 = sbr.rel (%p404) target = $region16
      $region15: #{generator_forward.1} parent=11 // pred_region
        _
      $region16: #{generator_forward.1} parent=11 // pred_fallthru
        _
      // Predicated region
      $region17: #{generator_forward.1} parent=11 // pred_check
        %p407 = pneg %p90
      $region18: #{generator_forward.1} parent=11 // pred_check_branch
        %409 = sbr.rel (%p407) target = $region20
      $region19: #{generator_forward.1} parent=11 // pred_region
        _
      $region20: #{generator_forward.1} parent=11 // pred_fallthru
        _
      // Predicated region
      $region21: #{generator_forward.1} parent=11 // pred_check
        %p410 = pneg %p111
      $region22: #{generator_forward.1} parent=11 // pred_check_branch
        %412 = sbr.rel (%p410) target = $region24
      $region23: #{generator_forward.1} parent=11 // pred_region
        _
      $region24: #{generator_forward.1} parent=11 // pred_fallthru
        _
      // Predicated region
      $region25: #{generator_forward.1} parent=11 // pred_check
        %p413 = pneg %p132
      $region26: #{generator_forward.1} parent=11 // pred_check_branch
        %415 = sbr.rel (%p413) target = $region28
      $region27: #{generator_forward.1} parent=11 // pred_region
        _
      $region28: #{generator_forward.1} parent=11 // pred_fallthru
        _
      // Predicated region
      $region29: #{generator_forward.1} parent=11 // pred_check
        %p416 = pneg %p153
      $region30: #{generator_forward.1} parent=11 // pred_check_branch
        %418 = sbr.rel (%p416) target = $region32
      $region31: #{generator_forward.1} parent=11 // pred_region
        _
      $region32: #{generator_forward.1} parent=11 // pred_fallthru
        _
      // Predicated region
      $region33: #{generator_forward.1} parent=11 // pred_check
        %p419 = pneg %p174
      $region34: #{generator_forward.1} parent=11 // pred_check_branch
        %421 = sbr.rel (%p419) target = $region36
      $region35: #{generator_forward.1} parent=11 // pred_region
        _
      $region36: #{generator_forward.1} parent=11 // pred_fallthru
        _
      // Predicated region
      $region37: #{generator_forward.1} parent=11 // pred_check
        %p422 = pneg %p195
      $region38: #{generator_forward.1} parent=11 // pred_check_branch
        %424 = sbr.rel (%p422) target = $region40
      $region39: #{generator_forward.1} parent=11 // pred_region
        _
      $region40: #{generator_forward.1} parent=11 // pred_fallthru
        _
      // Predicated region
      $region41: #{generator_forward.1} parent=11 // pred_check
        %p425 = pneg %p216
      $region42: #{generator_forward.1} parent=11 // pred_check_branch
        %427 = sbr.rel (%p425) target = $region44
      $region43: #{generator_forward.1} parent=11 // pred_region
        _
      $region44: #{generator_forward.1} parent=11 // pred_fallthru
        _
      // Predicated region
      $region45: #{generator_forward.1} parent=11 // pred_check
        %p428 = pneg %p237
      $region46: #{generator_forward.1} parent=11 // pred_check_branch
        %430 = sbr.rel (%p428) target = $region48
      $region47: #{generator_forward.1} parent=11 // pred_region
        _
      $region48: #{generator_forward.1} parent=11 // pred_fallthru
        _
      // Predicated region
      $region49: #{generator_forward.1} parent=11 // pred_check
        %p431 = pneg %p258
      $region50: #{generator_forward.1} parent=11 // pred_check_branch
        %433 = sbr.rel (%p431) target = $region52
      $region51: #{generator_forward.1} parent=11 // pred_region
        _
      $region52: #{generator_forward.1} parent=11 // pred_fallthru
        _
      // Predicated region
      $region53: #{generator_forward.1} parent=11 // pred_check
        %p434 = pneg %p279
      $region54: #{generator_forward.1} parent=11 // pred_check_branch
        %436 = sbr.rel (%p434) target = $region56
      $region55: #{generator_forward.1} parent=11 // pred_region
        _
      $region56: #{generator_forward.1} parent=11 // pred_fallthru
        _
      // Predicated region
      $region57: #{generator_forward.1} parent=11 // pred_check
        %p437 = pneg %p300
      $region58: #{generator_forward.1} parent=11 // pred_check_branch
        %439 = sbr.rel (%p437) target = $region60
      $region59: #{generator_forward.1} parent=11 // pred_region
        _
      $region60: #{generator_forward.1} parent=11 // pred_fallthru
        _
      // Predicated region
      $region61: #{generator_forward.1} parent=11 // pred_check
        %p440 = pneg %p321
      $region62: #{generator_forward.1} parent=11 // pred_check_branch
        %442 = sbr.rel (%p440) target = $region64
      $region63: #{generator_forward.1} parent=11 // pred_region
        _
      $region64: #{generator_forward.1} parent=11 // pred_fallthru
        _
      // Predicated region
      $region65: #{generator_forward.1} parent=11 // pred_check
        %p443 = pneg %p342
      $region66: #{generator_forward.1} parent=11 // pred_check_branch
        %445 = sbr.rel (%p443) target = $region68
      $region67: #{generator_forward.1} parent=11 // pred_region
        _
      $region68: #{generator_forward.1} parent=11 // pred_fallthru
        _
      // Predicated region
      $region69: #{generator_forward.1} parent=11 // pred_check
        %p446 = pneg %p363
      $region70: #{generator_forward.1} parent=11 // pred_check_branch
        %448 = sbr.rel (%p446) target = $region72
      $region71: #{generator_forward.1} parent=11 // pred_region
        _
      $region72: #{generator_forward.1} parent=11 // pred_fallthru
        _
    $region12: #{generator_forward.1} parent=5 // pred_fallthru
      _
    %p449 = scmp.lt.s32.totalorder %s22, 2
    // Predicated region
    $region73: #{generator_forward.1} parent=5 // pred_check
      %p450 = pneg %p449
    $region74: #{generator_forward.1} parent=5 // pred_check_branch
      %452 = sbr.rel (%p450) target = $region76
    $region75: #{generator_forward.1} parent=5 // pred_region
      // Predicated region
      $region77: #{generator_forward.1} parent=75 // pred_check
        %p453 = pneg %p42
      $region78: #{generator_forward.1} parent=75 // pred_check_branch
        %455 = sbr.rel (%p453) target = $region80
      $region79: #{generator_forward.1} parent=75 // pred_region
        %p456 = scmp.lt.s32.totalorder %s22, 1
        %s457 = scalar_select %p456, %s22, 1
        %s458 = smul.addr %s457, 32
        %s459 = smul.addr %s458, 8
        %s460 = scalar_lea.vmem %s0, %s459
      $region80: #{generator_forward.1} parent=75 // pred_fallthru
        _
    $region76: #{generator_forward.1} parent=5 // pred_fallthru
      _
    %p461 = scmp.le.s32.totalorder 1, %s22
    %p462 = scmp.lt.s32.totalorder %s22, 3
    %p463 = pnand %p461, %p462
    %p464 = pneg %p463
    // Predicated region
    $region81: #{generator_forward.1} parent=5 // pred_check
      _
    $region82: #{generator_forward.1} parent=5 // pred_check_branch
      %466 = sbr.rel (%p463) target = $region84
    $region83: #{generator_forward.1} parent=5 // pred_region
      %s467 = ssub.s32 %s22, 1
      %p468 = scmp.lt.s32.totalorder %s27, 1
      %s469 = scalar_select %p468, %s27, 1
      %s470 = smul.addr %s469, 32
      %s471 = smul.addr %s470, 8
      %s472 = scalar_lea.vmem %s0, %s471
      %p473 = pneg %p48
      %p474 = pneg %p45
      %p475 = pneg %p69
      %p476 = pneg %p66
      %p477 = pneg %p90
      %p478 = pneg %p87
      %p479 = pneg %p111
      %p480 = pneg %p108
      %p481 = pneg %p132
      %p482 = pneg %p129
      %p483 = pneg %p153
      %p484 = pneg %p150
      %p485 = pneg %p174
      %p486 = pneg %p171
      %p487 = pneg %p195
      %p488 = pneg %p192
      %p489 = pneg %p216
      %p490 = pneg %p213
      %p491 = pneg %p237
      %p492 = pneg %p234
      %p493 = pneg %p258
      %p494 = pneg %p255
      %p495 = pneg %p279
      %p496 = pneg %p276
      %p497 = pneg %p300
      %p498 = pneg %p297
      %p499 = pneg %p321
      %p500 = pneg %p318
      %p501 = pneg %p342
      %p502 = pneg %p339
      %p503 = pneg %p363
      %p504 = pneg %p360
      %p505 = pneg %p389
      %p506 = pneg %p386
      %p507 = scmp.lt.s32.totalorder %s27, 1
      %s508 = scalar_select %p507, %s27, 1
      %s509 = smul.addr %s508, 2
      %s510 = smul.addr %s509, 2
      %s511 = scalar_lea.vmem %s16, %s510
      %p512 = scmp.lt.s32.totalorder %s27, 1
      %s513 = scalar_select %p512, %s27, 1
      %s514 = smul.addr %s513, 32
      %s515 = smul.addr %s514, 8
      %s516 = scalar_lea.vmem %s0, %s515
      %p517 = scmp.lt.s32.totalorder %s27, 1
      %s518 = scalar_select %p517, %s27, 1
      %s519 = smul.addr %s518, 2
      %s520 = smul.addr %s519, 2
      %s521 = scalar_lea.vmem %s16, %s520
      %vm523 = vcmask 23552
      %524 = vst.msk [vmem:[#allocation2] sm:$0xff] %vm523, 0.0
      %525 = vst.msk [vmem:[#allocation2 + $0x8] sm:$0xff] %vm523, 0.0
      %vm526 = vcmask 17408
      %527 = vst.msk [vmem:[#allocation2 + $0x10] sm:$0x3] %vm526, 0.0
      %528 = vst.msk [vmem:[#allocation2 + $0x18] sm:$0xff] %vm523, 0.0
      %529 = vst.msk [vmem:[#allocation2 + $0x20] sm:$0xff] %vm523, 0.0
      %530 = vst.msk [vmem:[#allocation2 + $0x28] sm:$0x3] %vm526, 0.0
      %531 = vst.msk [vmem:[#allocation2 + $0x30] sm:$0xff] %vm523, 0.0
      %532 = vst.msk [vmem:[#allocation2 + $0x38] sm:$0xff] %vm523, 0.0
      %533 = vst.msk [vmem:[#allocation2 + $0x40] sm:$0x3] %vm526, 0.0
      %534 = vst.msk [vmem:[#allocation2 + $0x48] sm:$0xff] %vm523, 0.0
      %535 = vst.msk [vmem:[#allocation2 + $0x50] sm:$0xff] %vm523, 0.0
      %536 = vst.msk [vmem:[#allocation2 + $0x58] sm:$0x3] %vm526, 0.0
      %537 = vst.msk [vmem:[#allocation2 + $0x60] sm:$0xff] %vm523, 0.0
      %538 = vst.msk [vmem:[#allocation2 + $0x68] sm:$0xff] %vm523, 0.0
      %539 = vst.msk [vmem:[#allocation2 + $0x70] sm:$0x3] %vm526, 0.0
      %540 = vst.msk [vmem:[#allocation2 + $0x78] sm:$0xff] %vm523, 0.0
      %541 = vst.msk [vmem:[#allocation2 + $0x80] sm:$0xff] %vm523, 0.0
      %542 = vst.msk [vmem:[#allocation2 + $0x88] sm:$0x3] %vm526, 0.0
      %543 = vst.msk [vmem:[#allocation2 + $0x90] sm:$0xff] %vm523, 0.0
      %544 = vst.msk [vmem:[#allocation2 + $0x98] sm:$0xff] %vm523, 0.0
      %545 = vst.msk [vmem:[#allocation2 + $0xa0] sm:$0x3] %vm526, 0.0
      %546 = vst.msk [vmem:[#allocation2 + $0xa8] sm:$0xff] %vm523, 0.0
      %547 = vst.msk [vmem:[#allocation2 + $0xb0] sm:$0xff] %vm523, 0.0
      %548 = vst.msk [vmem:[#allocation2 + $0xb8] sm:$0x3] %vm526, 0.0
      %549 = vst.msk [vmem:[#allocation2 + $0xc0] sm:$0xff] %vm523, 0.0
      %550 = vst.msk [vmem:[#allocation2 + $0xc8] sm:$0xff] %vm523, 0.0
      %551 = vst.msk [vmem:[#allocation2 + $0xd0] sm:$0x3] %vm526, 0.0
      %552 = vst.msk [vmem:[#allocation2 + $0xd8] sm:$0xff] %vm523, 0.0
      %553 = vst.msk [vmem:[#allocation2 + $0xe0] sm:$0xff] %vm523, 0.0
      %554 = vst.msk [vmem:[#allocation2 + $0xe8] sm:$0x3] %vm526, 0.0
      %555 = vst.msk [vmem:[#allocation2 + $0xf0] sm:$0xff] %vm523, 0.0
      %556 = vst.msk [vmem:[#allocation2 + $0xf8] sm:$0xff] %vm523, 0.0
      %557 = vst.msk [vmem:[#allocation2 + $0x100] sm:$0x3] %vm526, 0.0
      %558 = vst.msk [vmem:[#allocation2 + $0x108] sm:$0xff] %vm523, 0.0
      %559 = vst.msk [vmem:[#allocation2 + $0x110] sm:$0xff] %vm523, 0.0
      %560 = vst.msk [vmem:[#allocation2 + $0x118] sm:$0x3] %vm526, 0.0
      %561 = vst.msk [vmem:[#allocation2 + $0x120] sm:$0xff] %vm523, 0.0
      %562 = vst.msk [vmem:[#allocation2 + $0x128] sm:$0xff] %vm523, 0.0
      %563 = vst.msk [vmem:[#allocation2 + $0x130] sm:$0x3] %vm526, 0.0
      %564 = vst.msk [vmem:[#allocation2 + $0x138] sm:$0xff] %vm523, 0.0
      %565 = vst.msk [vmem:[#allocation2 + $0x140] sm:$0xff] %vm523, 0.0
      %566 = vst.msk [vmem:[#allocation2 + $0x148] sm:$0x3] %vm526, 0.0
      %567 = vst.msk [vmem:[#allocation2 + $0x150] sm:$0xff] %vm523, 0.0
      %568 = vst.msk [vmem:[#allocation2 + $0x158] sm:$0xff] %vm523, 0.0
      %569 = vst.msk [vmem:[#allocation2 + $0x160] sm:$0x3] %vm526, 0.0
      %570 = vst.msk [vmem:[#allocation2 + $0x168] sm:$0xff] %vm523, 0.0
      %571 = vst.msk [vmem:[#allocation2 + $0x170] sm:$0xff] %vm523, 0.0
      %572 = vst.msk [vmem:[#allocation2 + $0x178] sm:$0x3] %vm526, 0.0
      %573 = vst.msk [vmem:[#allocation2 + $0x180] sm:$0xff] %vm523, 0.0
      %574 = vst.msk [vmem:[#allocation2 + $0x188] sm:$0xff] %vm523, 0.0
      %575 = vst.msk [vmem:[#allocation2 + $0x190] sm:$0x3] %vm526, 0.0
      %576 = vst.msk [vmem:[#allocation2 + $0x198] sm:$0xff] %vm523, 0.0
      %577 = vst.msk [vmem:[#allocation2 + $0x1a0] sm:$0xff] %vm523, 0.0
      %578 = vst.msk [vmem:[#allocation2 + $0x1a8] sm:$0x3] %vm526, 0.0
      %vm579 = vcmask 64512
      %580 = vst.msk [vmem:[#allocation3] sm:$0xff] %vm579, 0.0
      %581 = vst.msk [vmem:[#allocation3 + $0x8] sm:$0xff] %vm579, 0.0
      %vm582 = vcmask 58368
      %583 = vst.msk [vmem:[#allocation3 + $0x10] sm:$0x3] %vm582, 0.0
      %584 = vst.msk [vmem:[#allocation3 + $0x18] sm:$0xff] %vm579, 0.0
      %585 = vst.msk [vmem:[#allocation3 + $0x20] sm:$0xff] %vm579, 0.0
      %586 = vst.msk [vmem:[#allocation3 + $0x28] sm:$0x3] %vm582, 0.0
      %587 = vst.msk [vmem:[#allocation3 + $0x30] sm:$0xff] %vm579, 0.0
      %588 = vst.msk [vmem:[#allocation3 + $0x38] sm:$0xff] %vm579, 0.0
      %589 = vst.msk [vmem:[#allocation3 + $0x40] sm:$0x3] %vm582, 0.0
      %590 = vst.msk [vmem:[#allocation3 + $0x48] sm:$0xff] %vm579, 0.0
      %591 = vst.msk [vmem:[#allocation3 + $0x50] sm:$0xff] %vm579, 0.0
      %592 = vst.msk [vmem:[#allocation3 + $0x58] sm:$0x3] %vm582, 0.0
      %593 = vst.msk [vmem:[#allocation3 + $0x60] sm:$0xff] %vm579, 0.0
      %594 = vst.msk [vmem:[#allocation3 + $0x68] sm:$0xff] %vm579, 0.0
      %595 = vst.msk [vmem:[#allocation3 + $0x70] sm:$0x3] %vm582, 0.0
      %596 = vst.msk [vmem:[#allocation3 + $0x78] sm:$0xff] %vm579, 0.0
      %597 = vst.msk [vmem:[#allocation3 + $0x80] sm:$0xff] %vm579, 0.0
      %598 = vst.msk [vmem:[#allocation3 + $0x88] sm:$0x3] %vm582, 0.0
      %599 = vst.msk [vmem:[#allocation3 + $0x90] sm:$0xff] %vm579, 0.0
      %600 = vst.msk [vmem:[#allocation3 + $0x98] sm:$0xff] %vm579, 0.0
      %601 = vst.msk [vmem:[#allocation3 + $0xa0] sm:$0x3] %vm582, 0.0
      %602 = vst.msk [vmem:[#allocation3 + $0xa8] sm:$0xff] %vm579, 0.0
      %603 = vst.msk [vmem:[#allocation3 + $0xb0] sm:$0xff] %vm579, 0.0
      %604 = vst.msk [vmem:[#allocation3 + $0xb8] sm:$0x3] %vm582, 0.0
      %605 = vst.msk [vmem:[#allocation3 + $0xc0] sm:$0xff] %vm579, 0.0
      %606 = vst.msk [vmem:[#allocation3 + $0xc8] sm:$0xff] %vm579, 0.0
      %607 = vst.msk [vmem:[#allocation3 + $0xd0] sm:$0x3] %vm582, 0.0
      %608 = vst.msk [vmem:[#allocation3 + $0xd8] sm:$0xff] %vm579, 0.0
      %609 = vst.msk [vmem:[#allocation3 + $0xe0] sm:$0xff] %vm579, 0.0
      %610 = vst.msk [vmem:[#allocation3 + $0xe8] sm:$0x3] %vm582, 0.0
      %611 = vst.msk [vmem:[#allocation3 + $0xf0] sm:$0xff] %vm579, 0.0
      %612 = vst.msk [vmem:[#allocation3 + $0xf8] sm:$0xff] %vm579, 0.0
      %613 = vst.msk [vmem:[#allocation3 + $0x100] sm:$0x3] %vm582, 0.0
      %614 = vst.msk [vmem:[#allocation3 + $0x108] sm:$0xff] %vm579, 0.0
      %615 = vst.msk [vmem:[#allocation3 + $0x110] sm:$0xff] %vm579, 0.0
      %616 = vst.msk [vmem:[#allocation3 + $0x118] sm:$0x3] %vm582, 0.0
      %617 = vst.msk [vmem:[#allocation3 + $0x120] sm:$0xff] %vm579, 0.0
      %618 = vst.msk [vmem:[#allocation3 + $0x128] sm:$0xff] %vm579, 0.0
      %619 = vst.msk [vmem:[#allocation3 + $0x130] sm:$0x3] %vm582, 0.0
      %620 = vst.msk [vmem:[#allocation3 + $0x138] sm:$0xff] %vm579, 0.0
      %621 = vst.msk [vmem:[#allocation3 + $0x140] sm:$0xff] %vm579, 0.0
      %622 = vst.msk [vmem:[#allocation3 + $0x148] sm:$0x3] %vm582, 0.0
      %623 = vst.msk [vmem:[#allocation3 + $0x150] sm:$0xff] %vm579, 0.0
      %624 = vst.msk [vmem:[#allocation3 + $0x158] sm:$0xff] %vm579, 0.0
      %625 = vst.msk [vmem:[#allocation3 + $0x160] sm:$0x3] %vm582, 0.0
      %626 = vst.msk [vmem:[#allocation3 + $0x168] sm:$0xff] %vm579, 0.0
      %627 = vst.msk [vmem:[#allocation3 + $0x170] sm:$0xff] %vm579, 0.0
      %628 = vst.msk [vmem:[#allocation3 + $0x178] sm:$0x3] %vm582, 0.0
      %629 = vst.msk [vmem:[#allocation3 + $0x180] sm:$0xff] %vm579, 0.0
      %630 = vst.msk [vmem:[#allocation3 + $0x188] sm:$0xff] %vm579, 0.0
      %631 = vst.msk [vmem:[#allocation3 + $0x190] sm:$0x3] %vm582, 0.0
      %632 = vst.msk [vmem:[#allocation3 + $0x198] sm:$0xff] %vm579, 0.0
      %633 = vst.msk [vmem:[#allocation3 + $0x1a0] sm:$0xff] %vm579, 0.0
      %634 = vst.msk [vmem:[#allocation3 + $0x1a8] sm:$0x3] %vm582, 0.0
      %vm635 = vcmask 130048
      %636 = vst.msk [vmem:[#allocation4] sm:$0xff] %vm635, 0.0
      %vm637 = vcmask 123904
      %638 = vst.msk [vmem:[#allocation4 + $0x8] sm:$0x3] %vm637, 0.0
      %639 = vst.msk [vmem:[#allocation4 + $0x10] sm:$0xff] %vm635, 0.0
      %640 = vst.msk [vmem:[#allocation4 + $0x18] sm:$0x3] %vm637, 0.0
      %641 = vst.msk [vmem:[#allocation4 + $0x20] sm:$0xff] %vm635, 0.0
      %642 = vst.msk [vmem:[#allocation4 + $0x28] sm:$0x3] %vm637, 0.0
      %643 = vst.msk [vmem:[#allocation4 + $0x30] sm:$0xff] %vm635, 0.0
      %644 = vst.msk [vmem:[#allocation4 + $0x38] sm:$0x3] %vm637, 0.0
      %645 = vst.msk [vmem:[#allocation4 + $0x40] sm:$0xff] %vm635, 0.0
      %646 = vst.msk [vmem:[#allocation4 + $0x48] sm:$0x3] %vm637, 0.0
      %647 = vst.msk [vmem:[#allocation4 + $0x50] sm:$0xff] %vm635, 0.0
      %648 = vst.msk [vmem:[#allocation4 + $0x58] sm:$0x3] %vm637, 0.0
      %649 = vst.msk [vmem:[#allocation4 + $0x60] sm:$0xff] %vm635, 0.0
      %650 = vst.msk [vmem:[#allocation4 + $0x68] sm:$0x3] %vm637, 0.0
      %651 = vst.msk [vmem:[#allocation4 + $0x70] sm:$0xff] %vm635, 0.0
      %652 = vst.msk [vmem:[#allocation4 + $0x78] sm:$0x3] %vm637, 0.0
      %653 = vst.msk [vmem:[#allocation4 + $0x80] sm:$0xff] %vm635, 0.0
      %654 = vst.msk [vmem:[#allocation4 + $0x88] sm:$0x3] %vm637, 0.0
      %655 = vst.msk [vmem:[#allocation4 + $0x90] sm:$0xff] %vm635, 0.0
      %656 = vst.msk [vmem:[#allocation4 + $0x98] sm:$0x3] %vm637, 0.0
      %657 = vst.msk [vmem:[#allocation5] sm:$0xff] %vm635, 0.0
      %658 = vst.msk [vmem:[#allocation5 + $0x8] sm:$0x3] %vm637, 0.0
      %659 = vst.msk [vmem:[#allocation5 + $0x10] sm:$0xff] %vm635, 0.0
      %660 = vst.msk [vmem:[#allocation5 + $0x18] sm:$0x3] %vm637, 0.0
      %661 = vst.msk [vmem:[#allocation5 + $0x20] sm:$0xff] %vm635, 0.0
      %662 = vst.msk [vmem:[#allocation5 + $0x28] sm:$0x3] %vm637, 0.0
      %663 = vst.msk [vmem:[#allocation5 + $0x30] sm:$0xff] %vm635, 0.0
      %664 = vst.msk [vmem:[#allocation5 + $0x38] sm:$0x3] %vm637, 0.0
      %665 = vst.msk [vmem:[#allocation5 + $0x40] sm:$0xff] %vm635, 0.0
      %666 = vst.msk [vmem:[#allocation5 + $0x48] sm:$0x3] %vm637, 0.0
      %667 = vst.msk [vmem:[#allocation5 + $0x50] sm:$0xff] %vm635, 0.0
      %668 = vst.msk [vmem:[#allocation5 + $0x58] sm:$0x3] %vm637, 0.0
      %v669 = vld [vmem:[%s516] sm:$0xff]
      %v670 = vld [vmem:[%s516 + $0x8] sm:$0xff]
      %v671 = vld [vmem:[%s516 + $0x10] sm:$0xff]
      %v672 = vld [vmem:[%s516 + $0x18] sm:$0xff]
      %v673 = vld [vmem:[%s516 + $0x20] sm:$0xff]
      %v674 = vld [vmem:[%s516 + $0x28] sm:$0xff]
      %v675 = vld [vmem:[%s516 + $0x30] sm:$0xff]
      %v676 = vld [vmem:[%s516 + $0x38] sm:$0xff]
      %v677 = vld [vmem:[%s516 + $0x40] sm:$0xff]
      %v678 = vld [vmem:[%s516 + $0x48] sm:$0xff]
      %v679 = vld [vmem:[%s516 + $0x50] sm:$0xff]
      %v680 = vld [vmem:[%s516 + $0x58] sm:$0xff]
      %v681 = vld [vmem:[%s516 + $0x60] sm:$0xff]
      %v682 = vld [vmem:[%s516 + $0x68] sm:$0xff]
      %v683 = vld [vmem:[%s516 + $0x70] sm:$0xff]
      %v684 = vld [vmem:[%s516 + $0x78] sm:$0xff]
      %v685 = vld [vmem:[%s516 + $0x80] sm:$0xff]
      %v686 = vld [vmem:[%s516 + $0x88] sm:$0xff]
      %v687 = vld [vmem:[%s516 + $0x90] sm:$0xff]
      %v688 = vld [vmem:[%s516 + $0x98] sm:$0xff]
      %v689 = vld [vmem:[%s516 + $0xa0] sm:$0xff]
      %v690 = vld [vmem:[%s516 + $0xa8] sm:$0xff]
      %v691 = vld [vmem:[%s516 + $0xb0] sm:$0xff]
      %v692 = vld [vmem:[%s516 + $0xb8] sm:$0xff]
      %v693 = vld [vmem:[%s516 + $0xc0] sm:$0xff]
      %v694 = vld [vmem:[%s516 + $0xc8] sm:$0xff]
      %v695 = vld [vmem:[%s516 + $0xd0] sm:$0xff]
      %v696 = vld [vmem:[%s516 + $0xd8] sm:$0xff]
      %v697 = vld [vmem:[%s516 + $0xe0] sm:$0xff]
      %v698 = vld [vmem:[%s516 + $0xe8] sm:$0xff]
      %v699 = vld [vmem:[%s516 + $0xf0] sm:$0xff]
      %v700 = vld [vmem:[%s516 + $0xf8] sm:$0xff]
      %s701 = scalar_lea.vmem [#allocation2], 24
      %702 = vst.msk [vmem:[%s701 + $0x1] sm:$0xff] %vm523, %v669
      %703 = vst.msk [vmem:[%s701 + $0x9] sm:$0xff] %vm523, %v670
      %704 = vst.msk [vmem:[%s701 + $0x19] sm:$0xff] %vm523, %v671
      %705 = vst.msk [vmem:[%s701 + $0x21] sm:$0xff] %vm523, %v672
      %706 = vst.msk [vmem:[%s701 + $0x31] sm:$0xff] %vm523, %v673
      %707 = vst.msk [vmem:[%s701 + $0x39] sm:$0xff] %vm523, %v674
      %708 = vst.msk [vmem:[%s701 + $0x49] sm:$0xff] %vm523, %v675
      %709 = vst.msk [vmem:[%s701 + $0x51] sm:$0xff] %vm523, %v676
      %710 = vst.msk [vmem:[%s701 + $0x61] sm:$0xff] %vm523, %v677
      %711 = vst.msk [vmem:[%s701 + $0x69] sm:$0xff] %vm523, %v678
      %712 = vst.msk [vmem:[%s701 + $0x79] sm:$0xff] %vm523, %v679
      %713 = vst.msk [vmem:[%s701 + $0x81] sm:$0xff] %vm523, %v680
      %714 = vst.msk [vmem:[%s701 + $0x91] sm:$0xff] %vm523, %v681
      %715 = vst.msk [vmem:[%s701 + $0x99] sm:$0xff] %vm523, %v682
      %716 = vst.msk [vmem:[%s701 + $0xa9] sm:$0xff] %vm523, %v683
      %717 = vst.msk [vmem:[%s701 + $0xb1] sm:$0xff] %vm523, %v684
      %718 = vst.msk [vmem:[%s701 + $0xc1] sm:$0xff] %vm523, %v685
      %719 = vst.msk [vmem:[%s701 + $0xc9] sm:$0xff] %vm523, %v686
      %720 = vst.msk [vmem:[%s701 + $0xd9] sm:$0xff] %vm523, %v687
      %721 = vst.msk [vmem:[%s701 + $0xe1] sm:$0xff] %vm523, %v688
      %722 = vst.msk [vmem:[%s701 + $0xf1] sm:$0xff] %vm523, %v689
      %723 = vst.msk [vmem:[%s701 + $0xf9] sm:$0xff] %vm523, %v690
      %724 = vst.msk [vmem:[%s701 + $0x109] sm:$0xff] %vm523, %v691
      %725 = vst.msk [vmem:[%s701 + $0x111] sm:$0xff] %vm523, %v692
      %726 = vst.msk [vmem:[%s701 + $0x121] sm:$0xff] %vm523, %v693
      %727 = vst.msk [vmem:[%s701 + $0x129] sm:$0xff] %vm523, %v694
      %728 = vst.msk [vmem:[%s701 + $0x139] sm:$0xff] %vm523, %v695
      %729 = vst.msk [vmem:[%s701 + $0x141] sm:$0xff] %vm523, %v696
      %730 = vst.msk [vmem:[%s701 + $0x151] sm:$0xff] %vm523, %v697
      %731 = vst.msk [vmem:[%s701 + $0x159] sm:$0xff] %vm523, %v698
      %732 = vst.msk [vmem:[%s701 + $0x169] sm:$0xff] %vm523, %v699
      %733 = vst.msk [vmem:[%s701 + $0x171] sm:$0xff] %vm523, %v700
      %v734 = vld [vmem:[#allocation2] sm:$0xff]
      %v735 = vld [vmem:[#allocation2 + $0x8] sm:$0xff]
      %v736 = vld [vmem:[#allocation2 + $0x18] sm:$0xff]
      %v737 = vld [vmem:[#allocation2 + $0x20] sm:$0xff]
      %v738 = vld [vmem:[#allocation2 + $0x30] sm:$0xff]
      %v739 = vld [vmem:[#allocation2 + $0x38] sm:$0xff]
      %v740 = vld [vmem:[#allocation2 + $0x48] sm:$0xff]
      %v741 = vld [vmem:[#allocation2 + $0x50] sm:$0xff]
      %v742 = vld [vmem:[#allocation2 + $0x60] sm:$0xff]
      %v743 = vld [vmem:[#allocation2 + $0x68] sm:$0xff]
      %v744 = vld [vmem:[#allocation2 + $0x78] sm:$0xff]
      %v745 = vld [vmem:[#allocation2 + $0x80] sm:$0xff]
      %v746 = vld [vmem:[#allocation2 + $0x90] sm:$0xff]
      %v747 = vld [vmem:[#allocation2 + $0x98] sm:$0xff]
      %v748 = vld [vmem:[#allocation2 + $0xa8] sm:$0xff]
      %v749 = vld [vmem:[#allocation2 + $0xb0] sm:$0xff]
      %v750 = vld [vmem:[#allocation2 + $0xc0] sm:$0xff]
      %v751 = vld [vmem:[#allocation2 + $0xc8] sm:$0xff]
      %v752 = vld [vmem:[#allocation2 + $0xd8] sm:$0xff]
      %v753 = vld [vmem:[#allocation2 + $0xe0] sm:$0xff]
      %v754 = vld [vmem:[#allocation2 + $0xf0] sm:$0xff]
      %v755 = vld [vmem:[#allocation2 + $0xf8] sm:$0xff]
      %v756 = vld [vmem:[#allocation2 + $0x108] sm:$0xff]
      %v757 = vld [vmem:[#allocation2 + $0x110] sm:$0xff]
      %v758 = vld [vmem:[#allocation2 + $0x120] sm:$0xff]
      %v759 = vld [vmem:[#allocation2 + $0x128] sm:$0xff]
      %v760 = vld [vmem:[#allocation2 + $0x138] sm:$0xff]
      %v761 = vld [vmem:[#allocation2 + $0x140] sm:$0xff]
      %v762 = vld [vmem:[#allocation2 + $0x150] sm:$0xff]
      %v763 = vld [vmem:[#allocation2 + $0x158] sm:$0xff]
      %v764 = vld [vmem:[#allocation2 + $0x168] sm:$0xff]
      %v765 = vld [vmem:[#allocation2 + $0x170] sm:$0xff]
      %v766 = vpack.c.bf16 %v735, %v734
      %v767 = vpack.c.bf16 %v737, %v736
      %v768 = vpack.c.bf16 %v739, %v738
      %v769 = vpack.c.bf16 %v741, %v740
      %v770 = vpack.c.bf16 %v743, %v742
      %v771 = vpack.c.bf16 %v745, %v744
      %v772 = vpack.c.bf16 %v747, %v746
      %v773 = vpack.c.bf16 %v749, %v748
      %v774 = vpack.c.bf16 %v751, %v750
      %v775 = vpack.c.bf16 %v753, %v752
      %v776 = vpack.c.bf16 %v755, %v754
      %v777 = vpack.c.bf16 %v757, %v756
      %v778 = vpack.c.bf16 %v759, %v758
      %v779 = vpack.c.bf16 %v761, %v760
      %v780 = vpack.c.bf16 %v763, %v762
      %v781 = vpack.c.bf16 %v765, %v764
      %v782 = vld [vmem:[%s1] sm:$0x3]
      %v783 = vld [vmem:[#allocation2 + $0x1] sm:$0xff]
      %v784 = vld [vmem:[#allocation2 + $0x9] sm:$0xff]
      %v785 = vld [vmem:[#allocation2 + $0x19] sm:$0xff]
      %v786 = vld [vmem:[#allocation2 + $0x21] sm:$0xff]
      %v787 = vld [vmem:[#allocation2 + $0x31] sm:$0xff]
      %v788 = vld [vmem:[#allocation2 + $0x39] sm:$0xff]
      %v789 = vld [vmem:[#allocation2 + $0x49] sm:$0xff]
      %v790 = vld [vmem:[#allocation2 + $0x51] sm:$0xff]
      %v791 = vld [vmem:[#allocation2 + $0x61] sm:$0xff]
      %v792 = vld [vmem:[#allocation2 + $0x69] sm:$0xff]
      %v793 = vld [vmem:[#allocation2 + $0x79] sm:$0xff]
      %v794 = vld [vmem:[#allocation2 + $0x81] sm:$0xff]
      %v795 = vld [vmem:[#allocation2 + $0x91] sm:$0xff]
      %v796 = vld [vmem:[#allocation2 + $0x99] sm:$0xff]
      %v797 = vld [vmem:[#allocation2 + $0xa9] sm:$0xff]
      %v798 = vld [vmem:[#allocation2 + $0xb1] sm:$0xff]
      %v799 = vld [vmem:[#allocation2 + $0xc1] sm:$0xff]
      %v800 = vld [vmem:[#allocation2 + $0xc9] sm:$0xff]
      %v801 = vld [vmem:[#allocation2 + $0xd9] sm:$0xff]
      %v802 = vld [vmem:[#allocation2 + $0xe1] sm:$0xff]
      %v803 = vld [vmem:[#allocation2 + $0xf1] sm:$0xff]
      %v804 = vld [vmem:[#allocation2 + $0xf9] sm:$0xff]
      %v805 = vld [vmem:[#allocation2 + $0x109] sm:$0xff]
      %v806 = vld [vmem:[#allocation2 + $0x111] sm:$0xff]
      %v807 = vld [vmem:[#allocation2 + $0x121] sm:$0xff]
      %v808 = vld [vmem:[#allocation2 + $0x129] sm:$0xff]
      %v809 = vld [vmem:[#allocation2 + $0x139] sm:$0xff]
      %v810 = vld [vmem:[#allocation2 + $0x141] sm:$0xff]
      %v811 = vld [vmem:[#allocation2 + $0x151] sm:$0xff]
      %v812 = vld [vmem:[#allocation2 + $0x159] sm:$0xff]
      %v813 = vld [vmem:[#allocation2 + $0x169] sm:$0xff]
      %v814 = vld [vmem:[#allocation2 + $0x171] sm:$0xff]
      %v815 = vpack.c.bf16 %v784, %v783
      %v816 = vpack.c.bf16 %v786, %v785
      %v817 = vpack.c.bf16 %v788, %v787
      %v818 = vpack.c.bf16 %v790, %v789
      %v819 = vpack.c.bf16 %v792, %v791
      %v820 = vpack.c.bf16 %v794, %v793
      %v821 = vpack.c.bf16 %v796, %v795
      %v822 = vpack.c.bf16 %v798, %v797
      %v823 = vpack.c.bf16 %v800, %v799
      %v824 = vpack.c.bf16 %v802, %v801
      %v825 = vpack.c.bf16 %v804, %v803
      %v826 = vpack.c.bf16 %v806, %v805
      %v827 = vpack.c.bf16 %v808, %v807
      %v828 = vpack.c.bf16 %v810, %v809
      %v829 = vpack.c.bf16 %v812, %v811
      %v830 = vpack.c.bf16 %v814, %v813
      %s831 = scalar_lea.vmem %s1, 2
      %v832 = vld [vmem:[%s831] sm:$0x3]
      %v834 = vsel %vm523, %v815, 0
      %v837 = vsel %vm523, %v816, 0
      %v840 = vsel %vm523, %v817, 0
      %v843 = vsel %vm523, %v818, 0
      %v846 = vsel %vm523, %v819, 0
      %v849 = vsel %vm523, %v820, 0
      %v852 = vsel %vm523, %v821, 0
      %v855 = vsel %vm523, %v822, 0
      %v858 = vsel %vm523, %v823, 0
      %v861 = vsel %vm523, %v824, 0
      %v864 = vsel %vm523, %v825, 0
      %v867 = vsel %vm523, %v826, 0
      %v870 = vsel %vm523, %v827, 0
      %v873 = vsel %vm523, %v828, 0
      %v876 = vsel %vm523, %v829, 0
      %v879 = vsel %vm523, %v830, 0
      %vm881 = vcmask 1040384
      %vm882 = vcmask 1041408
      %v883 = vsel %vm881, 4294967295, 65535
      %v884 = vsel %vm882, %v883, 0
      %v886 = vand.u32 %v832, %v884
      %888 = vmatprep.subr.bf16.mxu0 0
      %889 = vmatpush1.bf16.msra.mxu0 %v886
      %890 = vmatprep.subr.bf16.mxu0 0
      %891 = vmatpush1.bf16.msra.mxu0 0
      %892 = vmatprep.subr.bf16.mxu0 0
      %893 = vmatpush1.bf16.msra.mxu0 0
      %894 = vmatprep.subr.bf16.mxu0 0
      %895 = vmatpush1.bf16.msra.mxu0 0
      %896 = vmatprep.subr.bf16.mxu0 0
      %897 = vmatpush1.bf16.msra.mxu0 0
      %898 = vmatprep.subr.bf16.mxu0 0
      %899 = vmatpush1.bf16.msra.mxu0 0
      %900 = vmatprep.subr.bf16.mxu0 0
      %901 = vmatpush1.bf16.msra.mxu0 0
      %902 = vmatprep.subr.bf16.mxu0 0
      %903 = vmatpush1.bf16.msra.mxu0 0
      %904 = vmatprep.subr.bf16.mxu0 0
      %905 = vmatpush1.bf16.msra.mxu0 0
      %906 = vmatprep.subr.bf16.mxu0 0
      %907 = vmatpush1.bf16.msra.mxu0 0
      %908 = vmatprep.subr.bf16.mxu0 0
      %909 = vmatpush1.bf16.msra.mxu0 0
      %910 = vmatprep.subr.bf16.mxu0 0
      %911 = vmatpush1.bf16.msra.mxu0 0
      %912 = vmatprep.subr.bf16.mxu0 0
      %913 = vmatpush1.bf16.msra.mxu0 0
      %914 = vmatprep.subr.bf16.mxu0 0
      %915 = vmatpush1.bf16.msra.mxu0 0
      %916 = vmatprep.subr.bf16.mxu0 0
      %917 = vmatpush1.bf16.msra.mxu0 0
      %918 = vmatprep.subr.bf16.mxu0 0
      %919 = vmatpush1.bf16.msra.mxu0 0
      %920 = vmatprep.mubr.bf16.mxu0 0
      %921 = vmatmul.mubr.bf16.gmra.mrb[0].mxu0 %v834
      %v922 = vpop.f32.mrb[0].mxu0
      %v923 = vadd.f32 0.0, %v922
      %v924 = vpop.f32.mrb[0].mxu0
      %v925 = vpop.f32.mrb[0].mxu0
      %v926 = vadd.f32 0.0, %v925
      %v927 = vpop.f32.mrb[0].mxu0
      %928 = vmatprep.mubr.bf16.mxu0 0
      %929 = vmatmul.mubr.bf16.gmra.mrb[0].mxu0 %v837
      %v930 = vpop.f32.mrb[0].mxu0
      %v931 = vadd.f32 0.0, %v930
      %v932 = vpop.f32.mrb[0].mxu0
      %v933 = vpop.f32.mrb[0].mxu0
      %v934 = vadd.f32 0.0, %v933
      %v935 = vpop.f32.mrb[0].mxu0
      %936 = vmatprep.mubr.bf16.mxu0 0
      %937 = vmatmul.mubr.bf16.gmra.mrb[0].mxu0 %v840
      %v938 = vpop.f32.mrb[0].mxu0
      %v939 = vadd.f32 0.0, %v938
      %v940 = vpop.f32.mrb[0].mxu0
      %v941 = vpop.f32.mrb[0].mxu0
      %v942 = vadd.f32 0.0, %v941
      %v943 = vpop.f32.mrb[0].mxu0
      %944 = vmatprep.mubr.bf16.mxu0 0
      %945 = vmatmul.mubr.bf16.gmra.mrb[0].mxu0 %v843
      %v946 = vpop.f32.mrb[0].mxu0
      %v947 = vadd.f32 0.0, %v946
      %v948 = vpop.f32.mrb[0].mxu0
      %v949 = vpop.f32.mrb[0].mxu0
      %v950 = vadd.f32 0.0, %v949
      %v951 = vpop.f32.mrb[0].mxu0
      %952 = vmatprep.mubr.bf16.mxu0 0
      %953 = vmatmul.mubr.bf16.gmra.mrb[0].mxu0 %v846
      %v954 = vpop.f32.mrb[0].mxu0
      %v955 = vadd.f32 0.0, %v954
      %v956 = vpop.f32.mrb[0].mxu0
      %v957 = vpop.f32.mrb[0].mxu0
      %v958 = vadd.f32 0.0, %v957
      %v959 = vpop.f32.mrb[0].mxu0
      %960 = vmatprep.mubr.bf16.mxu0 0
      %961 = vmatmul.mubr.bf16.gmra.mrb[0].mxu0 %v849
      %v962 = vpop.f32.mrb[0].mxu0
      %v963 = vadd.f32 0.0, %v962
      %v964 = vpop.f32.mrb[0].mxu0
      %v965 = vpop.f32.mrb[0].mxu0
      %v966 = vadd.f32 0.0, %v965
      %v967 = vpop.f32.mrb[0].mxu0
      %968 = vmatprep.mubr.bf16.mxu0 0
      %969 = vmatmul.mubr.bf16.gmra.mrb[0].mxu0 %v852
      %v970 = vpop.f32.mrb[0].mxu0
      %v971 = vadd.f32 0.0, %v970
      %v972 = vpop.f32.mrb[0].mxu0
      %v973 = vpop.f32.mrb[0].mxu0
      %v974 = vadd.f32 0.0, %v973
      %v975 = vpop.f32.mrb[0].mxu0
      %976 = vmatprep.mubr.bf16.mxu0 0
      %977 = vmatmul.mubr.bf16.gmra.mrb[0].mxu0 %v855
      %v978 = vpop.f32.mrb[0].mxu0
      %v979 = vadd.f32 0.0, %v978
      %v980 = vpop.f32.mrb[0].mxu0
      %v981 = vpop.f32.mrb[0].mxu0
      %v982 = vadd.f32 0.0, %v981
      %v983 = vpop.f32.mrb[0].mxu0
      %984 = vmatprep.mubr.bf16.mxu0 0
      %985 = vmatmul.mubr.bf16.gmra.mrb[0].mxu0 %v858
      %v986 = vpop.f32.mrb[0].mxu0
      %v987 = vadd.f32 0.0, %v986
      %v988 = vpop.f32.mrb[0].mxu0
      %v989 = vpop.f32.mrb[0].mxu0
      %v990 = vadd.f32 0.0, %v989
      %v991 = vpop.f32.mrb[0].mxu0
      %992 = vmatprep.mubr.bf16.mxu0 0
      %993 = vmatmul.mubr.bf16.gmra.mrb[0].mxu0 %v861
      %v994 = vpop.f32.mrb[0].mxu0
      %v995 = vadd.f32 0.0, %v994
      %v996 = vpop.f32.mrb[0].mxu0
      %v997 = vpop.f32.mrb[0].mxu0
      %v998 = vadd.f32 0.0, %v997
      %v999 = vpop.f32.mrb[0].mxu0
      %1000 = vmatprep.mubr.bf16.mxu0 0
      %1001 = vmatmul.mubr.bf16.gmra.mrb[0].mxu0 %v864
      %v1002 = vpop.f32.mrb[0].mxu0
      %v1003 = vadd.f32 0.0, %v1002
      %v1004 = vpop.f32.mrb[0].mxu0
      %v1005 = vpop.f32.mrb[0].mxu0
      %v1006 = vadd.f32 0.0, %v1005
      %v1007 = vpop.f32.mrb[0].mxu0
      %1008 = vmatprep.mubr.bf16.mxu0 0
      %1009 = vmatmul.mubr.bf16.gmra.mrb[0].mxu0 %v867
      %v1010 = vpop.f32.mrb[0].mxu0
      %v1011 = vadd.f32 0.0, %v1010
      %v1012 = vpop.f32.mrb[0].mxu0
      %v1013 = vpop.f32.mrb[0].mxu0
      %v1014 = vadd.f32 0.0, %v1013
      %v1015 = vpop.f32.mrb[0].mxu0
      %1016 = vmatprep.mubr.bf16.mxu0 0
      %1017 = vmatmul.mubr.bf16.gmra.mrb[0].mxu0 %v870
      %v1018 = vpop.f32.mrb[0].mxu0
      %v1019 = vadd.f32 0.0, %v1018
      %v1020 = vpop.f32.mrb[0].mxu0
      %v1021 = vpop.f32.mrb[0].mxu0
      %v1022 = vadd.f32 0.0, %v1021
      %v1023 = vpop.f32.mrb[0].mxu0
      %1024 = vmatprep.mubr.bf16.mxu0 0
      %1025 = vmatmul.mubr.bf16.gmra.mrb[0].mxu0 %v873
      %v1026 = vpop.f32.mrb[0].mxu0
      %v1027 = vadd.f32 0.0, %v1026
      %v1028 = vpop.f32.mrb[0].mxu0
      %v1029 = vpop.f32.mrb[0].mxu0
      %v1030 = vadd.f32 0.0, %v1029
      %v1031 = vpop.f32.mrb[0].mxu0
      %1032 = vmatprep.mubr.bf16.mxu0 0
      %1033 = vmatmul.mubr.bf16.gmra.mrb[0].mxu0 %v876
      %v1034 = vpop.f32.mrb[0].mxu0
      %v1035 = vadd.f32 0.0, %v1034
      %v1036 = vpop.f32.mrb[0].mxu0
      %v1037 = vpop.f32.mrb[0].mxu0
      %v1038 = vadd.f32 0.0, %v1037
      %v1039 = vpop.f32.mrb[0].mxu0
      %1040 = vmatprep.mubr.bf16.mxu0 0
      %1041 = vmatmul.mubr.bf16.gmra.mrb[0].mxu0 %v879
      %v1042 = vpop.f32.mrb[0].mxu0
      %v1043 = vadd.f32 0.0, %v1042
      %v1044 = vpop.f32.mrb[0].mxu0
      %v1045 = vpop.f32.mrb[0].mxu0
      %v1046 = vadd.f32 0.0, %v1045
      %v1047 = vpop.f32.mrb[0].mxu0
      %1048 = vdwg.mxu0
      %v1050 = vsel %vm523, %v766, 0
      %v1053 = vsel %vm523, %v767, 0
      %v1056 = vsel %vm523, %v768, 0
      %v1059 = vsel %vm523, %v769, 0
      %v1062 = vsel %vm523, %v770, 0
      %v1065 = vsel %vm523, %v771, 0
      %v1068 = vsel %vm523, %v772, 0
      %v1071 = vsel %vm523, %v773, 0
      %v1074 = vsel %vm523, %v774, 0
      %v1077 = vsel %vm523, %v775, 0
      %v1080 = vsel %vm523, %v776, 0
      %v1083 = vsel %vm523, %v777, 0
      %v1086 = vsel %vm523, %v778, 0
      %v1089 = vsel %vm523, %v779, 0
      %v1092 = vsel %vm523, %v780, 0
      %v1095 = vsel %vm523, %v781, 0
      %v1098 = vand.u32 %v782, %v884
      %1100 = vmatprep.subr.bf16.mxu0 0
      %1101 = vmatpush1.bf16.msra.mxu0 %v1098
      %1102 = vmatprep.subr.bf16.mxu0 0
      %1103 = vmatpush1.bf16.msra.mxu0 0
      %1104 = vmatprep.subr.bf16.mxu0 0
      %1105 = vmatpush1.bf16.msra.mxu0 0
      %1106 = vmatprep.subr.bf16.mxu0 0
      %1107 = vmatpush1.bf16.msra.mxu0 0
      %1108 = vmatprep.subr.bf16.mxu0 0
      %1109 = vmatpush1.bf16.msra.mxu0 0
      %1110 = vmatprep.subr.bf16.mxu0 0
      %1111 = vmatpush1.bf16.msra.mxu0 0
      %1112 = vmatprep.subr.bf16.mxu0 0
      %1113 = vmatpush1.bf16.msra.mxu0 0
      %1114 = vmatprep.subr.bf16.mxu0 0
      %1115 = vmatpush1.bf16.msra.mxu0 0
      %1116 = vmatprep.subr.bf16.mxu0 0
      %1117 = vmatpush1.bf16.msra.mxu0 0
      %1118 = vmatprep.subr.bf16.mxu0 0
      %1119 = vmatpush1.bf16.msra.mxu0 0
      %1120 = vmatprep.subr.bf16.mxu0 0
      %1121 = vmatpush1.bf16.msra.mxu0 0
      %1122 = vmatprep.subr.bf16.mxu0 0
      %1123 = vmatpush1.bf16.msra.mxu0 0
      %1124 = vmatprep.subr.bf16.mxu0 0
      %1125 = vmatpush1.bf16.msra.mxu0 0
      %1126 = vmatprep.subr.bf16.mxu0 0
      %1127 = vmatpush1.bf16.msra.mxu0 0
      %1128 = vmatprep.subr.bf16.mxu0 0
      %1129 = vmatpush1.bf16.msra.mxu0 0
      %1130 = vmatprep.subr.bf16.mxu0 0
      %1131 = vmatpush1.bf16.msra.mxu0 0
      %1132 = vmatprep.mubr.bf16.mxu0 0
      %1133 = vmatmul.mubr.bf16.gmra.mrb[0].mxu0 %v1050
      %v1134 = vpop.f32.mrb[0].mxu0
      %v1135 = vadd.f32 %v923, %v1134
      %v1136 = vpop.f32.mrb[0].mxu0
      %v1137 = vpop.f32.mrb[0].mxu0
      %v1138 = vadd.f32 %v926, %v1137
      %v1139 = vpop.f32.mrb[0].mxu0
      %1140 = vmatprep.mubr.bf16.mxu0 0
      %1141 = vmatmul.mubr.bf16.gmra.mrb[0].mxu0 %v1053
      %v1142 = vpop.f32.mrb[0].mxu0
      %v1143 = vadd.f32 %v931, %v1142
      %v1144 = vpop.f32.mrb[0].mxu0
      %v1145 = vpop.f32.mrb[0].mxu0
      %v1146 = vadd.f32 %v934, %v1145
      %v1147 = vpop.f32.mrb[0].mxu0
      %1148 = vmatprep.mubr.bf16.mxu0 0
      %1149 = vmatmul.mubr.bf16.gmra.mrb[0].mxu0 %v1056
      %v1150 = vpop.f32.mrb[0].mxu0
      %v1151 = vadd.f32 %v939, %v1150
      %v1152 = vpop.f32.mrb[0].mxu0
      %v1153 = vpop.f32.mrb[0].mxu0
      %v1154 = vadd.f32 %v942, %v1153
      %v1155 = vpop.f32.mrb[0].mxu0
      %1156 = vmatprep.mubr.bf16.mxu0 0
      %1157 = vmatmul.mubr.bf16.gmra.mrb[0].mxu0 %v1059
      %v1158 = vpop.f32.mrb[0].mxu0
      %v1159 = vadd.f32 %v947, %v1158
      %v1160 = vpop.f32.mrb[0].mxu0
      %v1161 = vpop.f32.mrb[0].mxu0
      %v1162 = vadd.f32 %v950, %v1161
      %v1163 = vpop.f32.mrb[0].mxu0
      %1164 = vmatprep.mubr.bf16.mxu0 0
      %1165 = vmatmul.mubr.bf16.gmra.mrb[0].mxu0 %v1062
      %v1166 = vpop.f32.mrb[0].mxu0
      %v1167 = vadd.f32 %v955, %v1166
      %v1168 = vpop.f32.mrb[0].mxu0
      %v1169 = vpop.f32.mrb[0].mxu0
      %v1170 = vadd.f32 %v958, %v1169
      %v1171 = vpop.f32.mrb[0].mxu0
      %1172 = vmatprep.mubr.bf16.mxu0 0
      %1173 = vmatmul.mubr.bf16.gmra.mrb[0].mxu0 %v1065
      %v1174 = vpop.f32.mrb[0].mxu0
      %v1175 = vadd.f32 %v963, %v1174
      %v1176 = vpop.f32.mrb[0].mxu0
      %v1177 = vpop.f32.mrb[0].mxu0
      %v1178 = vadd.f32 %v966, %v1177
      %v1179 = vpop.f32.mrb[0].mxu0
      %1180 = vmatprep.mubr.bf16.mxu0 0
      %1181 = vmatmul.mubr.bf16.gmra.mrb[0].mxu0 %v1068
      %v1182 = vpop.f32.mrb[0].mxu0
      %v1183 = vadd.f32 %v971, %v1182
      %v1184 = vpop.f32.mrb[0].mxu0
      %v1185 = vpop.f32.mrb[0].mxu0
      %v1186 = vadd.f32 %v974, %v1185
      %v1187 = vpop.f32.mrb[0].mxu0
      %1188 = vmatprep.mubr.bf16.mxu0 0
      %1189 = vmatmul.mubr.bf16.gmra.mrb[0].mxu0 %v1071
      %v1190 = vpop.f32.mrb[0].mxu0
      %v1191 = vadd.f32 %v979, %v1190
      %v1192 = vpop.f32.mrb[0].mxu0
      %v1193 = vpop.f32.mrb[0].mxu0
      %v1194 = vadd.f32 %v982, %v1193
      %v1195 = vpop.f32.mrb[0].mxu0
      %1196 = vmatprep.mubr.bf16.mxu0 0
      %1197 = vmatmul.mubr.bf16.gmra.mrb[0].mxu0 %v1074
      %v1198 = vpop.f32.mrb[0].mxu0
      %v1199 = vadd.f32 %v987, %v1198
      %v1200 = vpop.f32.mrb[0].mxu0
      %v1201 = vpop.f32.mrb[0].mxu0
      %v1202 = vadd.f32 %v990, %v1201
      %v1203 = vpop.f32.mrb[0].mxu0
      %1204 = vmatprep.mubr.bf16.mxu0 0
      %1205 = vmatmul.mubr.bf16.gmra.mrb[0].mxu0 %v1077
      %v1206 = vpop.f32.mrb[0].mxu0
      %v1207 = vadd.f32 %v995, %v1206
      %v1208 = vpop.f32.mrb[0].mxu0
      %v1209 = vpop.f32.mrb[0].mxu0
      %v1210 = vadd.f32 %v998, %v1209
      %v1211 = vpop.f32.mrb[0].mxu0
      %1212 = vmatprep.mubr.bf16.mxu0 0
      %1213 = vmatmul.mubr.bf16.gmra.mrb[0].mxu0 %v1080
      %v1214 = vpop.f32.mrb[0].mxu0
      %v1215 = vadd.f32 %v1003, %v1214
      %v1216 = vpop.f32.mrb[0].mxu0
      %v1217 = vpop.f32.mrb[0].mxu0
      %v1218 = vadd.f32 %v1006, %v1217
      %v1219 = vpop.f32.mrb[0].mxu0
      %1220 = vmatprep.mubr.bf16.mxu0 0
      %1221 = vmatmul.mubr.bf16.gmra.mrb[0].mxu0 %v1083
      %v1222 = vpop.f32.mrb[0].mxu0
      %v1223 = vadd.f32 %v1011, %v1222
      %v1224 = vpop.f32.mrb[0].mxu0
      %v1225 = vpop.f32.mrb[0].mxu0
      %v1226 = vadd.f32 %v1014, %v1225
      %v1227 = vpop.f32.mrb[0].mxu0
      %1228 = vmatprep.mubr.bf16.mxu0 0
      %1229 = vmatmul.mubr.bf16.gmra.mrb[0].mxu0 %v1086
      %v1230 = vpop.f32.mrb[0].mxu0
      %v1231 = vadd.f32 %v1019, %v1230
      %v1232 = vpop.f32.mrb[0].mxu0
      %v1233 = vpop.f32.mrb[0].mxu0
      %v1234 = vadd.f32 %v1022, %v1233
      %v1235 = vpop.f32.mrb[0].mxu0
      %1236 = vmatprep.mubr.bf16.mxu0 0
      %1237 = vmatmul.mubr.bf16.gmra.mrb[0].mxu0 %v1089
      %v1238 = vpop.f32.mrb[0].mxu0
      %v1239 = vadd.f32 %v1027, %v1238
      %v1240 = vpop.f32.mrb[0].mxu0
      %v1241 = vpop.f32.mrb[0].mxu0
      %v1242 = vadd.f32 %v1030, %v1241
      %v1243 = vpop.f32.mrb[0].mxu0
      %1244 = vmatprep.mubr.bf16.mxu0 0
      %1245 = vmatmul.mubr.bf16.gmra.mrb[0].mxu0 %v1092
      %v1246 = vpop.f32.mrb[0].mxu0
      %v1247 = vadd.f32 %v1035, %v1246
      %v1248 = vpop.f32.mrb[0].mxu0
      %v1249 = vpop.f32.mrb[0].mxu0
      %v1250 = vadd.f32 %v1038, %v1249
      %v1251 = vpop.f32.mrb[0].mxu0
      %1252 = vmatprep.mubr.bf16.mxu0 0
      %1253 = vmatmul.mubr.bf16.gmra.mrb[0].mxu0 %v1095
      %v1254 = vpop.f32.mrb[0].mxu0
      %v1255 = vadd.f32 %v1043, %v1254
      %v1256 = vpop.f32.mrb[0].mxu0
      %v1257 = vpop.f32.mrb[0].mxu0
      %v1258 = vadd.f32 %v1046, %v1257
      %v1259 = vpop.f32.mrb[0].mxu0
      %1260 = vdwg.mxu0
      %v1261 = vld [vmem:[#allocation2 + $0x2] sm:$0xff]
      %v1262 = vld [vmem:[#allocation2 + $0xa] sm:$0xff]
      %v1263 = vld [vmem:[#allocation2 + $0x1a] sm:$0xff]
      %v1264 = vld [vmem:[#allocation2 + $0x22] sm:$0xff]
      %v1265 = vld [vmem:[#allocation2 + $0x32] sm:$0xff]
      %v1266 = vld [vmem:[#allocation2 + $0x3a] sm:$0xff]
      %v1267 = vld [vmem:[#allocation2 + $0x4a] sm:$0xff]
      %v1268 = vld [vmem:[#allocation2 + $0x52] sm:$0xff]
      %v1269 = vld [vmem:[#allocation2 + $0x62] sm:$0xff]
      %v1270 = vld [vmem:[#allocation2 + $0x6a] sm:$0xff]
      %v1271 = vld [vmem:[#allocation2 + $0x7a] sm:$0xff]
      %v1272 = vld [vmem:[#allocation2 + $0x82] sm:$0xff]
      %v1273 = vld [vmem:[#allocation2 + $0x92] sm:$0xff]
      %v1274 = vld [vmem:[#allocation2 + $0x9a] sm:$0xff]
      %v1275 = vld [vmem:[#allocation2 + $0xaa] sm:$0xff]
      %v1276 = vld [vmem:[#allocation2 + $0xb2] sm:$0xff]
      %v1277 = vld [vmem:[#allocation2 + $0xc2] sm:$0xff]
      %v1278 = vld [vmem:[#allocation2 + $0xca] sm:$0xff]
      %v1279 = vld [vmem:[#allocation2 + $0xda] sm:$0xff]
      %v1280 = vld [vmem:[#allocation2 + $0xe2] sm:$0xff]
      %v1281 = vld [vmem:[#allocation2 + $0xf2] sm:$0xff]
      %v1282 = vld [vmem:[#allocation2 + $0xfa] sm:$0xff]
      %v1283 = vld [vmem:[#allocation2 + $0x10a] sm:$0xff]
      %v1284 = vld [vmem:[#allocation2 + $0x112] sm:$0xff]
      %v1285 = vld [vmem:[#allocation2 + $0x122] sm:$0xff]
      %v1286 = vld [vmem:[#allocation2 + $0x12a] sm:$0xff]
      %v1287 = vld [vmem:[#allocation2 + $0x13a] sm:$0xff]
      %v1288 = vld [vmem:[#allocation2 + $0x142] sm:$0xff]
      %v1289 = vld [vmem:[#allocation2 + $0x152] sm:$0xff]
      %v1290 = vld [vmem:[#allocation2 + $0x15a] sm:$0xff]
      %v1291 = vld [vmem:[#allocation2 + $0x16a] sm:$0xff]
      %v1292 = vld [vmem:[#allocation2 + $0x172] sm:$0xff]
      %v1293 = vpack.c.bf16 %v1262, %v1261
      %v1294 = vpack.c.bf16 %v1264, %v1263
      %v1295 = vpack.c.bf16 %v1266, %v1265
      %v1296 = vpack.c.bf16 %v1268, %v1267
      %v1297 = vpack.c.bf16 %v1270, %v1269
      %v1298 = vpack.c.bf16 %v1272, %v1271
      %v1299 = vpack.c.bf16 %v1274, %v1273
      %v1300 = vpack.c.bf16 %v1276, %v1275
      %v1301 = vpack.c.bf16 %v1278, %v1277
      %v1302 = vpack.c.bf16 %v1280, %v1279
      %v1303 = vpack.c.bf16 %v1282, %v1281
      %v1304 = vpack.c.bf16 %v1284, %v1283
      %v1305 = vpack.c.bf16 %v1286, %v1285
      %v1306 = vpack.c.bf16 %v1288, %v1287
      %v1307 = vpack.c.bf16 %v1290, %v1289
      %v1308 = vpack.c.bf16 %v1292, %v1291
      %s1309 = scalar_lea.vmem %s1, 4
      %v1310 = vld [vmem:[%s1309] sm:$0x3]
      %v1312 = vsel %vm523, %v1293, 0
      %v1315 = vsel %vm523, %v1294, 0
      %v1318 = vsel %vm523, %v1295, 0
      %v1321 = vsel %vm523, %v1296, 0
      %v1324 = vsel %vm523, %v1297, 0
      %v1327 = vsel %vm523, %v1298, 0
      %v1330 = vsel %vm523, %v1299, 0
      %v1333 = vsel %vm523, %v1300, 0
      %v1336 = vsel %vm523, %v1301, 0
      %v1339 = vsel %vm523, %v1302, 0
      %v1342 = vsel %vm523, %v1303, 0
      %v1345 = vsel %vm523, %v1304, 0
      %v1348 = vsel %vm523, %v1305, 0
      %v1351 = vsel %vm523, %v1306, 0
      %v1354 = vsel %vm523, %v1307, 0
      %v1357 = vsel %vm523, %v1308, 0
      %v1360 = vand.u32 %v1310, %v884
      %1362 = vmatprep.subr.bf16.mxu0 0
      %1363 = vmatpush1.bf16.msra.mxu0 %v1360
      %1364 = vmatprep.subr.bf16.mxu0 0
      %1365 = vmatpush1.bf16.msra.mxu0 0
      %1366 = vmatprep.subr.bf16.mxu0 0
      %1367 = vmatpush1.bf16.msra.mxu0 0
      %1368 = vmatprep.subr.bf16.mxu0 0
      %1369 = vmatpush1.bf16.msra.mxu0 0
      %1370 = vmatprep.subr.bf16.mxu0 0
      %1371 = vmatpush1.bf16.msra.mxu0 0
      %1372 = vmatprep.subr.bf16.mxu0 0
      %1373 = vmatpush1.bf16.msra.mxu0 0
      %1374 = vmatprep.subr.bf16.mxu0 0
      %1375 = vmatpush1.bf16.msra.mxu0 0
      %1376 = vmatprep.subr.bf16.mxu0 0
      %1377 = vmatpush1.bf16.msra.mxu0 0
      %1378 = vmatprep.subr.bf16.mxu0 0
      %1379 = vmatpush1.bf16.msra.mxu0 0
      %1380 = vmatprep.subr.bf16.mxu0 0
      %1381 = vmatpush1.bf16.msra.mxu0 0
      %1382 = vmatprep.subr.bf16.mxu0 0
      %1383 = vmatpush1.bf16.msra.mxu0 0
      %1384 = vmatprep.subr.bf16.mxu0 0
      %1385 = vmatpush1.bf16.msra.mxu0 0
      %1386 = vmatprep.subr.bf16.mxu0 0
      %1387 = vmatpush1.bf16.msra.mxu0 0
      %1388 = vmatprep.subr.bf16.mxu0 0
      %1389 = vmatpush1.bf16.msra.mxu0 0
      %1390 = vmatprep.subr.bf16.mxu0 0
      %1391 = vmatpush1.bf16.msra.mxu0 0
      %1392 = vmatprep.subr.bf16.mxu0 0
      %1393 = vmatpush1.bf16.msra.mxu0 0
      %1394 = vmatprep.mubr.bf16.mxu0 0
      %1395 = vmatmul.mubr.bf16.gmra.mrb[0].mxu0 %v1312
      %v1396 = vpop.f32.mrb[0].mxu0
      %v1397 = vadd.f32 0.0, %v1396
      %v1398 = vpop.f32.mrb[0].mxu0
      %v1399 = vpop.f32.mrb[0].mxu0
      %v1400 = vadd.f32 0.0, %v1399
      %v1401 = vpop.f32.mrb[0].mxu0
      %1402 = vmatprep.mubr.bf16.mxu0 0
      %1403 = vmatmul.mubr.bf16.gmra.mrb[0].mxu0 %v1315
      %v1404 = vpop.f32.mrb[0].mxu0
      %v1405 = vadd.f32 0.0, %v1404
      %v1406 = vpop.f32.mrb[0].mxu0
      %v1407 = vpop.f32.mrb[0].mxu0
      %v1408 = vadd.f32 0.0, %v1407
      %v1409 = vpop.f32.mrb[0].mxu0
      %1410 = vmatprep.mubr.bf16.mxu0 0
      %1411 = vmatmul.mubr.bf16.gmra.mrb[0].mxu0 %v1318
      %v1412 = vpop.f32.mrb[0].mxu0
      %v1413 = vadd.f32 0.0, %v1412
      %v1414 = vpop.f32.mrb[0].mxu0
      %v1415 = vpop.f32.mrb[0].mxu0
      %v1416 = vadd.f32 0.0, %v1415
      %v1417 = vpop.f32.mrb[0].mxu0
      %1418 = vmatprep.mubr.bf16.mxu0 0
      %1419 = vmatmul.mubr.bf16.gmra.mrb[0].mxu0 %v1321
      %v1420 = vpop.f32.mrb[0].mxu0
      %v1421 = vadd.f32 0.0, %v1420
      %v1422 = vpop.f32.mrb[0].mxu0
      %v1423 = vpop.f32.mrb[0].mxu0
      %v1424 = vadd.f32 0.0, %v1423
      %v1425 = vpop.f32.mrb[0].mxu0
      %1426 = vmatprep.mubr.bf16.mxu0 0
      %1427 = vmatmul.mubr.bf16.gmra.mrb[0].mxu0 %v1324
      %v1428 = vpop.f32.mrb[0].mxu0
      %v1429 = vadd.f32 0.0, %v1428
      %v1430 = vpop.f32.mrb[0].mxu0
      %v1431 = vpop.f32.mrb[0].mxu0
      %v1432 = vadd.f32 0.0, %v1431
      %v1433 = vpop.f32.mrb[0].mxu0
      %1434 = vmatprep.mubr.bf16.mxu0 0
      %1435 = vmatmul.mubr.bf16.gmra.mrb[0].mxu0 %v1327
      %v1436 = vpop.f32.mrb[0].mxu0
      %v1437 = vadd.f32 0.0, %v1436
      %v1438 = vpop.f32.mrb[0].mxu0
      %v1439 = vpop.f32.mrb[0].mxu0
      %v1440 = vadd.f32 0.0, %v1439
      %v1441 = vpop.f32.mrb[0].mxu0
      %1442 = vmatprep.mubr.bf16.mxu0 0
      %1443 = vmatmul.mubr.bf16.gmra.mrb[0].mxu0 %v1330
      %v1444 = vpop.f32.mrb[0].mxu0
      %v1445 = vadd.f32 0.0, %v1444
      %v1446 = vpop.f32.mrb[0].mxu0
      %v1447 = vpop.f32.mrb[0].mxu0
      %v1448 = vadd.f32 0.0, %v1447
      %v1449 = vpop.f32.mrb[0].mxu0
      %1450 = vmatprep.mubr.bf16.mxu0 0
      %1451 = vmatmul.mubr.bf16.gmra.mrb[0].mxu0 %v1333
      %v1452 = vpop.f32.mrb[0].mxu0
      %v1453 = vadd.f32 0.0, %v1452
      %v1454 = vpop.f32.mrb[0].mxu0
      %v1455 = vpop.f32.mrb[0].mxu0
      %v1456 = vadd.f32 0.0, %v1455
      %v1457 = vpop.f32.mrb[0].mxu0
      %1458 = vmatprep.mubr.bf16.mxu0 0
      %1459 = vmatmul.mubr.bf16.gmra.mrb[0].mxu0 %v1336
      %v1460 = vpop.f32.mrb[0].mxu0
      %v1461 = vadd.f32 0.0, %v1460
      %v1462 = vpop.f32.mrb[0].mxu0
      %v1463 = vpop.f32.mrb[0].mxu0
      %v1464 = vadd.f32 0.0, %v1463
      %v1465 = vpop.f32.mrb[0].mxu0
      %1466 = vmatprep.mubr.bf16.mxu0 0
      %1467 = vmatmul.mubr.bf16.gmra.mrb[0].mxu0 %v1339
      %v1468 = vpop.f32.mrb[0].mxu0
      %v1469 = vadd.f32 0.0, %v1468
      %v1470 = vpop.f32.mrb[0].mxu0
      %v1471 = vpop.f32.mrb[0].mxu0
      %v1472 = vadd.f32 0.0, %v1471
      %v1473 = vpop.f32.mrb[0].mxu0
      %1474 = vmatprep.mubr.bf16.mxu0 0
      %1475 = vmatmul.mubr.bf16.gmra.mrb[0].mxu0 %v1342
      %v1476 = vpop.f32.mrb[0].mxu0
      %v1477 = vadd.f32 0.0, %v1476
      %v1478 = vpop.f32.mrb[0].mxu0
      %v1479 = vpop.f32.mrb[0].mxu0
      %v1480 = vadd.f32 0.0, %v1479
      %v1481 = vpop.f32.mrb[0].mxu0
      %1482 = vmatprep.mubr.bf16.mxu0 0
      %1483 = vmatmul.mubr.bf16.gmra.mrb[0].mxu0 %v1345
      %v1484 = vpop.f32.mrb[0].mxu0
      %v1485 = vadd.f32 0.0, %v1484
      %v1486 = vpop.f32.mrb[0].mxu0
      %v1487 = vpop.f32.mrb[0].mxu0
      %v1488 = vadd.f32 0.0, %v1487
      %v1489 = vpop.f32.mrb[0].mxu0
      %1490 = vmatprep.mubr.bf16.mxu0 0
      %1491 = vmatmul.mubr.bf16.gmra.mrb[0].mxu0 %v1348
      %v1492 = vpop.f32.mrb[0].mxu0
      %v1493 = vadd.f32 0.0, %v1492
      %v1494 = vpop.f32.mrb[0].mxu0
      %v1495 = vpop.f32.mrb[0].mxu0
      %v1496 = vadd.f32 0.0, %v1495
      %v1497 = vpop.f32.mrb[0].mxu0
      %1498 = vmatprep.mubr.bf16.mxu0 0
      %1499 = vmatmul.mubr.bf16.gmra.mrb[0].mxu0 %v1351
      %v1500 = vpop.f32.mrb[0].mxu0
      %v1501 = vadd.f32 0.0, %v1500
      %v1502 = vpop.f32.mrb[0].mxu0
      %v1503 = vpop.f32.mrb[0].mxu0
      %v1504 = vadd.f32 0.0, %v1503
      %v1505 = vpop.f32.mrb[0].mxu0
      %1506 = vmatprep.mubr.bf16.mxu0 0
      %1507 = vmatmul.mubr.bf16.gmra.mrb[0].mxu0 %v1354
      %v1508 = vpop.f32.mrb[0].mxu0
      %v1509 = vadd.f32 0.0, %v1508
      %v1510 = vpop.f32.mrb[0].mxu0
      %v1511 = vpop.f32.mrb[0].mxu0
      %v1512 = vadd.f32 0.0, %v1511
      %v1513 = vpop.f32.mrb[0].mxu0
      %1514 = vmatprep.mubr.bf16.mxu0 0
      %1515 = vmatmul.mubr.bf16.gmra.mrb[0].mxu0 %v1357
      %v1516 = vpop.f32.mrb[0].mxu0
      %v1517 = vadd.f32 0.0, %v1516
      %v1518 = vpop.f32.mrb[0].mxu0
      %v1519 = vpop.f32.mrb[0].mxu0
      %v1520 = vadd.f32 0.0, %v1519
      %v1521 = vpop.f32.mrb[0].mxu0
      %1522 = vdwg.mxu0
      %v1523 = vadd.f32 %v1135, %v1397
      %v1524 = vadd.f32 %v1138, %v1400
      %v1525 = vadd.f32 %v1143, %v1405
      %v1526 = vadd.f32 %v1146, %v1408
      %v1527 = vadd.f32 %v1151, %v1413
      %v1528 = vadd.f32 %v1154, %v1416
      %v1529 = vadd.f32 %v1159, %v1421
      %v1530 = vadd.f32 %v1162, %v1424
      %v1531 = vadd.f32 %v1167, %v1429
      %v1532 = vadd.f32 %v1170, %v1432
      %v1533 = vadd.f32 %v1175, %v1437
      %v1534 = vadd.f32 %v1178, %v1440
      %v1535 = vadd.f32 %v1183, %v1445
      %v1536 = vadd.f32 %v1186, %v1448
      %v1537 = vadd.f32 %v1191, %v1453
      %v1538 = vadd.f32 %v1194, %v1456
      %v1539 = vadd.f32 %v1199, %v1461
      %v1540 = vadd.f32 %v1202, %v1464
      %v1541 = vadd.f32 %v1207, %v1469
      %v1542 = vadd.f32 %v1210, %v1472
      %v1543 = vadd.f32 %v1215, %v1477
      %v1544 = vadd.f32 %v1218, %v1480
      %v1545 = vadd.f32 %v1223, %v1485
      %v1546 = vadd.f32 %v1226, %v1488
      %v1547 = vadd.f32 %v1231, %v1493
      %v1548 = vadd.f32 %v1234, %v1496
      %v1549 = vadd.f32 %v1239, %v1501
      %v1550 = vadd.f32 %v1242, %v1504
      %v1551 = vadd.f32 %v1247, %v1509
      %v1552 = vadd.f32 %v1250, %v1512
      %v1553 = vadd.f32 %v1255, %v1517
      %v1554 = vadd.f32 %v1258, %v1520
      %v1555 = vld [vmem:[%s701] sm:$0xff]
      %v1556 = vld [vmem:[%s701 + $0x8] sm:$0xff]
      %v1557 = vld [vmem:[%s701 + $0x18] sm:$0xff]
      %v1558 = vld [vmem:[%s701 + $0x20] sm:$0xff]
      %v1559 = vld [vmem:[%s701 + $0x30] sm:$0xff]
      %v1560 = vld [vmem:[%s701 + $0x38] sm:$0xff]
      %v1561 = vld [vmem:[%s701 + $0x48] sm:$0xff]
      %v1562 = vld [vmem:[%s701 + $0x50] sm:$0xff]
      %v1563 = vld [vmem:[%s701 + $0x60] sm:$0xff]
      %v1564 = vld [vmem:[%s701 + $0x68] sm:$0xff]
      %v1565 = vld [vmem:[%s701 + $0x78] sm:$0xff]
      %v1566 = vld [vmem:[%s701 + $0x80] sm:$0xff]
      %v1567 = vld [vmem:[%s701 + $0x90] sm:$0xff]
      %v1568 = vld [vmem:[%s701 + $0x98] sm:$0xff]
      %v1569 = vld [vmem:[%s701 + $0xa8] sm:$0xff]
      %v1570 = vld [vmem:[%s701 + $0xb0] sm:$0xff]
      %v1571 = vld [vmem:[%s701 + $0xc0] sm:$0xff]
      %v1572 = vld [vmem:[%s701 + $0xc8] sm:$0xff]
      %v1573 = vld [vmem:[%s701 + $0xd8] sm:$0xff]
      %v1574 = vld [vmem:[%s701 + $0xe0] sm:$0xff]
      %v1575 = vld [vmem:[%s701 + $0xf0] sm:$0xff]
      %v1576 = vld [vmem:[%s701 + $0xf8] sm:$0xff]
      %v1577 = vld [vmem:[%s701 + $0x108] sm:$0xff]
      %v1578 = vld [vmem:[%s701 + $0x110] sm:$0xff]
      %v1579 = vld [vmem:[%s701 + $0x120] sm:$0xff]
      %v1580 = vld [vmem:[%s701 + $0x128] sm:$0xff]
      %v1581 = vld [vmem:[%s701 + $0x138] sm:$0xff]
      %v1582 = vld [vmem:[%s701 + $0x140] sm:$0xff]
      %v1583 = vld [vmem:[%s701 + $0x150] sm:$0xff]
      %v1584 = vld [vmem:[%s701 + $0x158] sm:$0xff]
      %v1585 = vld [vmem:[%s701 + $0x168] sm:$0xff]
      %v1586 = vld [vmem:[%s701 + $0x170] sm:$0xff]
      %v1587 = vpack.c.bf16 %v1556, %v1555
      %v1588 = vpack.c.bf16 %v1558, %v1557
      %v1589 = vpack.c.bf16 %v1560, %v1559
      %v1590 = vpack.c.bf16 %v1562, %v1561
      %v1591 = vpack.c.bf16 %v1564, %v1563
      %v1592 = vpack.c.bf16 %v1566, %v1565
      %v1593 = vpack.c.bf16 %v1568, %v1567
      %v1594 = vpack.c.bf16 %v1570, %v1569
      %v1595 = vpack.c.bf16 %v1572, %v1571
      %v1596 = vpack.c.bf16 %v1574, %v1573
      %v1597 = vpack.c.bf16 %v1576, %v1575
      %v1598 = vpack.c.bf16 %v1578, %v1577
      %v1599 = vpack.c.bf16 %v1580, %v1579
      %v1600 = vpack.c.bf16 %v1582, %v1581
      %v1601 = vpack.c.bf16 %v1584, %v1583
      %v1602 = vpack.c.bf16 %v1586, %v1585
      %s1603 = scalar_lea.vmem %s1, 6
      %v1604 = vld [vmem:[%s1603] sm:$0x3]
      %v1606 = vsel %vm523, %v1587, 0
      %v1609 = vsel %vm523, %v1588, 0
      %v1612 = vsel %vm523, %v1589, 0
      %v1615 = vsel %vm523, %v1590, 0
      %v1618 = vsel %vm523, %v1591, 0
      %v1621 = vsel %vm523, %v1592, 0
      %v1624 = vsel %vm523, %v1593, 0
      %v1627 = vsel %vm523, %v1594, 0
      %v1630 = vsel %vm523, %v1595, 0
      %v1633 = vsel %vm523, %v1596, 0
      %v1636 = vsel %vm523, %v1597, 0
      %v1639 = vsel %vm523, %v1598, 0
      %v1642 = vsel %vm523, %v1599, 0
      %v1645 = vsel %vm523, %v1600, 0
      %v1648 = vsel %vm523, %v1601, 0
      %v1651 = vsel %vm523, %v1602, 0
      %v1654 = vand.u32 %v1604, %v884
      %1656 = vmatprep.subr.bf16.mxu0 0
      %1657 = vmatpush1.bf16.msra.mxu0 %v1654
      %1658 = vmatprep.subr.bf16.mxu0 0
      %1659 = vmatpush1.bf16.msra.mxu0 0
      %1660 = vmatprep.subr.bf16.mxu0 0
      %1661 = vmatpush1.bf16.msra.mxu0 0
      %1662 = vmatprep.subr.bf16.mxu0 0
      %1663 = vmatpush1.bf16.msra.mxu0 0
      %1664 = vmatprep.subr.bf16.mxu0 0
      %1665 = vmatpush1.bf16.msra.mxu0 0
      %1666 = vmatprep.subr.bf16.mxu0 0
      %1667 = vmatpush1.bf16.msra.mxu0 0
      %1668 = vmatprep.subr.bf16.mxu0 0
      %1669 = vmatpush1.bf16.msra.mxu0 0
      %1670 = vmatprep.subr.bf16.mxu0 0
      %1671 = vmatpush1.bf16.msra.mxu0 0
      %1672 = vmatprep.subr.bf16.mxu0 0
      %1673 = vmatpush1.bf16.msra.mxu0 0
      %1674 = vmatprep.subr.bf16.mxu0 0
      %1675 = vmatpush1.bf16.msra.mxu0 0
      %1676 = vmatprep.subr.bf16.mxu0 0
      %1677 = vmatpush1.bf16.msra.mxu0 0
      %1678 = vmatprep.subr.bf16.mxu0 0
      %1679 = vmatpush1.bf16.msra.mxu0 0
      %1680 = vmatprep.subr.bf16.mxu0 0
      %1681 = vmatpush1.bf16.msra.mxu0 0
      %1682 = vmatprep.subr.bf16.mxu0 0
      %1683 = vmatpush1.bf16.msra.mxu0 0
      %1684 = vmatprep.subr.bf16.mxu0 0
      %1685 = vmatpush1.bf16.msra.mxu0 0
      %1686 = vmatprep.subr.bf16.mxu0 0
      %1687 = vmatpush1.bf16.msra.mxu0 0
      %1688 = vmatprep.mubr.bf16.mxu0 0
      %1689 = vmatmul.mubr.bf16.gmra.mrb[0].mxu0 %v1606
      %v1690 = vpop.f32.mrb[0].mxu0
      %v1691 = vadd.f32 0.0, %v1690
      %v1692 = vpop.f32.mrb[0].mxu0
      %v1693 = vpop.f32.mrb[0].mxu0
      %v1694 = vadd.f32 0.0, %v1693
      %v1695 = vpop.f32.mrb[0].mxu0
      %1696 = vmatprep.mubr.bf16.mxu0 0
      %1697 = vmatmul.mubr.bf16.gmra.mrb[0].mxu0 %v1609
      %v1698 = vpop.f32.mrb[0].mxu0
      %v1699 = vadd.f32 0.0, %v1698
      %v1700 = vpop.f32.mrb[0].mxu0
      %v1701 = vpop.f32.mrb[0].mxu0
      %v1702 = vadd.f32 0.0, %v1701
      %v1703 = vpop.f32.mrb[0].mxu0
      %1704 = vmatprep.mubr.bf16.mxu0 0
      %1705 = vmatmul.mubr.bf16.gmra.mrb[0].mxu0 %v1612
      %v1706 = vpop.f32.mrb[0].mxu0
      %v1707 = vadd.f32 0.0, %v1706
      %v1708 = vpop.f32.mrb[0].mxu0
      %v1709 = vpop.f32.mrb[0].mxu0
      %v1710 = vadd.f32 0.0, %v1709
      %v1711 = vpop.f32.mrb[0].mxu0
      %1712 = vmatprep.mubr.bf16.mxu0 0
      %1713 = vmatmul.mubr.bf16.gmra.mrb[0].mxu0 %v1615
      %v1714 = vpop.f32.mrb[0].mxu0
      %v1715 = vadd.f32 0.0, %v1714
      %v1716 = vpop.f32.mrb[0].mxu0
      %v1717 = vpop.f32.mrb[0].mxu0
      %v1718 = vadd.f32 0.0, %v1717
      %v1719 = vpop.f32.mrb[0].mxu0
      %1720 = vmatprep.mubr.bf16.mxu0 0
      %1721 = vmatmul.mubr.bf16.gmra.mrb[0].mxu0 %v1618
      %v1722 = vpop.f32.mrb[0].mxu0
      %v1723 = vadd.f32 0.0, %v1722
      %v1724 = vpop.f32.mrb[0].mxu0
      %v1725 = vpop.f32.mrb[0].mxu0
      %v1726 = vadd.f32 0.0, %v1725
      %v1727 = vpop.f32.mrb[0].mxu0
      %1728 = vmatprep.mubr.bf16.mxu0 0
      %1729 = vmatmul.mubr.bf16.gmra.mrb[0].mxu0 %v1621
      %v1730 = vpop.f32.mrb[0].mxu0
      %v1731 = vadd.f32 0.0, %v1730
      %v1732 = vpop.f32.mrb[0].mxu0
      %v1733 = vpop.f32.mrb[0].mxu0
      %v1734 = vadd.f32 0.0, %v1733
      %v1735 = vpop.f32.mrb[0].mxu0
      %1736 = vmatprep.mubr.bf16.mxu0 0
      %1737 = vmatmul.mubr.bf16.gmra.mrb[0].mxu0 %v1624
      %v1738 = vpop.f32.mrb[0].mxu0
      %v1739 = vadd.f32 0.0, %v1738
      %v1740 = vpop.f32.mrb[0].mxu0
      %v1741 = vpop.f32.mrb[0].mxu0
      %v1742 = vadd.f32 0.0, %v1741
      %v1743 = vpop.f32.mrb[0].mxu0
      %1744 = vmatprep.mubr.bf16.mxu0 0
      %1745 = vmatmul.mubr.bf16.gmra.mrb[0].mxu0 %v1627
      %v1746 = vpop.f32.mrb[0].mxu0
      %v1747 = vadd.f32 0.0, %v1746
      %v1748 = vpop.f32.mrb[0].mxu0
      %v1749 = vpop.f32.mrb[0].mxu0
      %v1750 = vadd.f32 0.0, %v1749
      %v1751 = vpop.f32.mrb[0].mxu0
      %1752 = vmatprep.mubr.bf16.mxu0 0
      %1753 = vmatmul.mubr.bf16.gmra.mrb[0].mxu0 %v1630
      %v1754 = vpop.f32.mrb[0].mxu0
      %v1755 = vadd.f32 0.0, %v1754
      %v1756 = vpop.f32.mrb[0].mxu0
      %v1757 = vpop.f32.mrb[0].mxu0
      %v1758 = vadd.f32 0.0, %v1757
      %v1759 = vpop.f32.mrb[0].mxu0
      %1760 = vmatprep.mubr.bf16.mxu0 0
      %1761 = vmatmul.mubr.bf16.gmra.mrb[0].mxu0 %v1633
      %v1762 = vpop.f32.mrb[0].mxu0
      %v1763 = vadd.f32 0.0, %v1762
      %v1764 = vpop.f32.mrb[0].mxu0
      %v1765 = vpop.f32.mrb[0].mxu0
      %v1766 = vadd.f32 0.0, %v1765
      %v1767 = vpop.f32.mrb[0].mxu0
      %1768 = vmatprep.mubr.bf16.mxu0 0
      %1769 = vmatmul.mubr.bf16.gmra.mrb[0].mxu0 %v1636
      %v1770 = vpop.f32.mrb[0].mxu0
      %v1771 = vadd.f32 0.0, %v1770
      %v1772 = vpop.f32.mrb[0].mxu0
      %v1773 = vpop.f32.mrb[0].mxu0
      %v1774 = vadd.f32 0.0, %v1773
      %v1775 = vpop.f32.mrb[0].mxu0
      %1776 = vmatprep.mubr.bf16.mxu0 0
      %1777 = vmatmul.mubr.bf16.gmra.mrb[0].mxu0 %v1639
      %v1778 = vpop.f32.mrb[0].mxu0
      %v1779 = vadd.f32 0.0, %v1778
      %v1780 = vpop.f32.mrb[0].mxu0
      %v1781 = vpop.f32.mrb[0].mxu0
      %v1782 = vadd.f32 0.0, %v1781
      %v1783 = vpop.f32.mrb[0].mxu0
      %1784 = vmatprep.mubr.bf16.mxu0 0
      %1785 = vmatmul.mubr.bf16.gmra.mrb[0].mxu0 %v1642
      %v1786 = vpop.f32.mrb[0].mxu0
      %v1787 = vadd.f32 0.0, %v1786
      %v1788 = vpop.f32.mrb[0].mxu0
      %v1789 = vpop.f32.mrb[0].mxu0
      %v1790 = vadd.f32 0.0, %v1789
      %v1791 = vpop.f32.mrb[0].mxu0
      %1792 = vmatprep.mubr.bf16.mxu0 0
      %1793 = vmatmul.mubr.bf16.gmra.mrb[0].mxu0 %v1645
      %v1794 = vpop.f32.mrb[0].mxu0
      %v1795 = vadd.f32 0.0, %v1794
      %v1796 = vpop.f32.mrb[0].mxu0
      %v1797 = vpop.f32.mrb[0].mxu0
      %v1798 = vadd.f32 0.0, %v1797
      %v1799 = vpop.f32.mrb[0].mxu0
      %1800 = vmatprep.mubr.bf16.mxu0 0
      %1801 = vmatmul.mubr.bf16.gmra.mrb[0].mxu0 %v1648
      %v1802 = vpop.f32.mrb[0].mxu0
      %v1803 = vadd.f32 0.0, %v1802
      %v1804 = vpop.f32.mrb[0].mxu0
      %v1805 = vpop.f32.mrb[0].mxu0
      %v1806 = vadd.f32 0.0, %v1805
      %v1807 = vpop.f32.mrb[0].mxu0
      %1808 = vmatprep.mubr.bf16.mxu0 0
      %1809 = vmatmul.mubr.bf16.gmra.mrb[0].mxu0 %v1651
      %v1810 = vpop.f32.mrb[0].mxu0
      %v1811 = vadd.f32 0.0, %v1810
      %v1812 = vpop.f32.mrb[0].mxu0
      %v1813 = vpop.f32.mrb[0].mxu0
      %v1814 = vadd.f32 0.0, %v1813
      %v1815 = vpop.f32.mrb[0].mxu0
      %1816 = vdwg.mxu0
      %v1817 = vadd.f32 %v1523, %v1691
      %v1818 = vadd.f32 %v1524, %v1694
      %v1819 = vadd.f32 %v1525, %v1699
      %v1820 = vadd.f32 %v1526, %v1702
      %v1821 = vadd.f32 %v1527, %v1707
      %v1822 = vadd.f32 %v1528, %v1710
      %v1823 = vadd.f32 %v1529, %v1715
      %v1824 = vadd.f32 %v1530, %v1718
      %v1825 = vadd.f32 %v1531, %v1723
      %v1826 = vadd.f32 %v1532, %v1726
      %v1827 = vadd.f32 %v1533, %v1731
      %v1828 = vadd.f32 %v1534, %v1734
      %v1829 = vadd.f32 %v1535, %v1739
      %v1830 = vadd.f32 %v1536, %v1742
      %v1831 = vadd.f32 %v1537, %v1747
      %v1832 = vadd.f32 %v1538, %v1750
      %v1833 = vadd.f32 %v1539, %v1755
      %v1834 = vadd.f32 %v1540, %v1758
      %v1835 = vadd.f32 %v1541, %v1763
      %v1836 = vadd.f32 %v1542, %v1766
      %v1837 = vadd.f32 %v1543, %v1771
      %v1838 = vadd.f32 %v1544, %v1774
      %v1839 = vadd.f32 %v1545, %v1779
      %v1840 = vadd.f32 %v1546, %v1782
      %v1841 = vadd.f32 %v1547, %v1787
      %v1842 = vadd.f32 %v1548, %v1790
      %v1843 = vadd.f32 %v1549, %v1795
      %v1844 = vadd.f32 %v1550, %v1798
      %v1845 = vadd.f32 %v1551, %v1803
      %v1846 = vadd.f32 %v1552, %v1806
      %v1847 = vadd.f32 %v1553, %v1811
      %v1848 = vadd.f32 %v1554, %v1814
      %v1849 = vld [vmem:[%s701 + $0x1] sm:$0xff]
      %v1850 = vld [vmem:[%s701 + $0x9] sm:$0xff]
      %v1851 = vld [vmem:[%s701 + $0x19] sm:$0xff]
      %v1852 = vld [vmem:[%s701 + $0x21] sm:$0xff]
      %v1853 = vld [vmem:[%s701 + $0x31] sm:$0xff]
      %v1854 = vld [vmem:[%s701 + $0x39] sm:$0xff]
      %v1855 = vld [vmem:[%s701 + $0x49] sm:$0xff]
      %v1856 = vld [vmem:[%s701 + $0x51] sm:$0xff]
      %v1857 = vld [vmem:[%s701 + $0x61] sm:$0xff]
      %v1858 = vld [vmem:[%s701 + $0x69] sm:$0xff]
      %v1859 = vld [vmem:[%s701 + $0x79] sm:$0xff]
      %v1860 = vld [vmem:[%s701 + $0x81] sm:$0xff]
      %v1861 = vld [vmem:[%s701 + $0x91] sm:$0xff]
      %v1862 = vld [vmem:[%s701 + $0x99] sm:$0xff]
      %v1863 = vld [vmem:[%s701 + $0xa9] sm:$0xff]
      %v1864 = vld [vmem:[%s701 + $0xb1] sm:$0xff]
      %v1865 = vld [vmem:[%s701 + $0xc1] sm:$0xff]
      %v1866 = vld [vmem:[%s701 + $0xc9] sm:$0xff]
      %v1867 = vld [vmem:[%s701 + $0xd9] sm:$0xff]
      %v1868 = vld [vmem:[%s701 + $0xe1] sm:$0xff]
      %v1869 = vld [vmem:[%s701 + $0xf1] sm:$0xff]
      %v1870 = vld [vmem:[%s701 + $0xf9] sm:$0xff]
      %v1871 = vld [vmem:[%s701 + $0x109] sm:$0xff]
      %v1872 = vld [vmem:[%s701 + $0x111] sm:$0xff]
      %v1873 = vld [vmem:[%s701 + $0x121] sm:$0xff]
      %v1874 = vld [vmem:[%s701 + $0x129] sm:$0xff]
      %v1875 = vld [vmem:[%s701 + $0x139] sm:$0xff]
      %v1876 = vld [vmem:[%s701 + $0x141] sm:$0xff]
      %v1877 = vld [vmem:[%s701 + $0x151] sm:$0xff]
      %v1878 = vld [vmem:[%s701 + $0x159] sm:$0xff]
      %v1879 = vld [vmem:[%s701 + $0x169] sm:$0xff]
      %v1880 = vld [vmem:[%s701 + $0x171] sm:$0xff]
      %v1881 = vpack.c.bf16 %v1850, %v1849
      %v1882 = vpack.c.bf16 %v1852, %v1851
      %v1883 = vpack.c.bf16 %v1854, %v1853
      %v1884 = vpack.c.bf16 %v1856, %v1855
      %v1885 = vpack.c.bf16 %v1858, %v1857
      %v1886 = vpack.c.bf16 %v1860, %v1859
      %v1887 = vpack.c.bf16 %v1862, %v1861
      %v1888 = vpack.c.bf16 %v1864, %v1863
      %v1889 = vpack.c.bf16 %v1866, %v1865
      %v1890 = vpack.c.bf16 %v1868, %v1867
      %v1891 = vpack.c.bf16 %v1870, %v1869
      %v1892 = vpack.c.bf16 %v1872, %v1871
      %v1893 = vpack.c.bf16 %v1874, %v1873
      %v1894 = vpack.c.bf16 %v1876, %v1875
      %v1895 = vpack.c.bf16 %v1878, %v1877
      %v1896 = vpack.c.bf16 %v1880, %v1879
      %s1897 = scalar_lea.vmem %s1, 8
      %v1898 = vld [vmem:[%s1897] sm:$0x3]
      %v1900 = vsel %vm523, %v1881, 0
      %v1903 = vsel %vm523, %v1882, 0
      %v1906 = vsel %vm523, %v1883, 0
      %v1909 = vsel %vm523, %v1884, 0
      %v1912 = vsel %vm523, %v1885, 0
      %v1915 = vsel %vm523, %v1886, 0
      %v1918 = vsel %vm523, %v1887, 0
      %v1921 = vsel %vm523, %v1888, 0
      %v1924 = vsel %vm523, %v1889, 0
      %v1927 = vsel %vm523, %v1890, 0
      %v1930 = vsel %vm523, %v1891, 0
      %v1933 = vsel %vm523, %v1892, 0
      %v1936 = vsel %vm523, %v1893, 0
      %v1939 = vsel %vm523, %v1894, 0
      %v1942 = vsel %vm523, %v1895, 0
      %v1945 = vsel %vm523, %v1896, 0
      %v1948 = vand.u32 %v1898, %v884
      %1950 = vmatprep.subr.bf16.mxu0 0
      %1951 = vmatpush1.bf16.msra.mxu0 %v1948
      %1952 = vmatprep.subr.bf16.mxu0 0
      %1953 = vmatpush1.bf16.msra.mxu0 0
      %1954 = vmatprep.subr.bf16.mxu0 0
      %1955 = vmatpush1.bf16.msra.mxu0 0
      %1956 = vmatprep.subr.bf16.mxu0 0
      %1957 = vmatpush1.bf16.msra.mxu0 0
      %1958 = vmatprep.subr.bf16.mxu0 0
      %1959 = vmatpush1.bf16.msra.mxu0 0
      %1960 = vmatprep.subr.bf16.mxu0 0
      %1961 = vmatpush1.bf16.msra.mxu0 0
      %1962 = vmatprep.subr.bf16.mxu0 0
      %1963 = vmatpush1.bf16.msra.mxu0 0
      %1964 = vmatprep.subr.bf16.mxu0 0
      %1965 = vmatpush1.bf16.msra.mxu0 0
      %1966 = vmatprep.subr.bf16.mxu0 0
      %1967 = vmatpush1.bf16.msra.mxu0 0
      %1968 = vmatprep.subr.bf16.mxu0 0
      %1969 = vmatpush1.bf16.msra.mxu0 0
      %1970 = vmatprep.subr.bf16.mxu0 0
      %1971 = vmatpush1.bf16.msra.mxu0 0
      %1972 = vmatprep.subr.bf16.mxu0 0
      %1973 = vmatpush1.bf16.msra.mxu0 0
      %1974 = vmatprep.subr.bf16.mxu0 0
      %1975 = vmatpush1.bf16.msra.mxu0 0
      %1976 = vmatprep.subr.bf16.mxu0 0
      %1977 = vmatpush1.bf16.msra.mxu0 0
      %1978 = vmatprep.subr.bf16.mxu0 0
      %1979 = vmatpush1.bf16.msra.mxu0 0
      %1980 = vmatprep.subr.bf16.mxu0 0
      %1981 = vmatpush1.bf16.msra.mxu0 0
      %1982 = vmatprep.mubr.bf16.mxu0 0
      %1983 = vmatmul.mubr.bf16.gmra.mrb[0].mxu0 %v1900
      %v1984 = vpop.f32.mrb[0].mxu0
      %v1985 = vadd.f32 0.0, %v1984
      %v1986 = vpop.f32.mrb[0].mxu0
      %v1987 = vpop.f32.mrb[0].mxu0
      %v1988 = vadd.f32 0.0, %v1987
      %v1989 = vpop.f32.mrb[0].mxu0
      %1990 = vmatprep.mubr.bf16.mxu0 0
      %1991 = vmatmul.mubr.bf16.gmra.mrb[0].mxu0 %v1903
      %v1992 = vpop.f32.mrb[0].mxu0
      %v1993 = vadd.f32 0.0, %v1992
      %v1994 = vpop.f32.mrb[0].mxu0
      %v1995 = vpop.f32.mrb[0].mxu0
      %v1996 = vadd.f32 0.0, %v1995
      %v1997 = vpop.f32.mrb[0].mxu0
      %1998 = vmatprep.mubr.bf16.mxu0 0
      %1999 = vmatmul.mubr.bf16.gmra.mrb[0].mxu0 %v1906
      %v2000 = vpop.f32.mrb[0].mxu0
      %v2001 = vadd.f32 0.0, %v2000
      %v2002 = vpop.f32.mrb[0].mxu0
      %v2003 = vpop.f32.mrb[0].mxu0
      %v2004 = vadd.f32 0.0, %v2003
      %v2005 = vpop.f32.mrb[0].mxu0
      %2006 = vmatprep.mubr.bf16.mxu0 0
      %2007 = vmatmul.mubr.bf16.gmra.mrb[0].mxu0 %v1909
      %v2008 = vpop.f32.mrb[0].mxu0
      %v2009 = vadd.f32 0.0, %v2008
      %v2010 = vpop.f32.mrb[0].mxu0
      %v2011 = vpop.f32.mrb[0].mxu0
      %v2012 = vadd.f32 0.0, %v2011
      %v2013 = vpop.f32.mrb[0].mxu0
      %2014 = vmatprep.mubr.bf16.mxu0 0
      %2015 = vmatmul.mubr.bf16.gmra.mrb[0].mxu0 %v1912
      %v2016 = vpop.f32.mrb[0].mxu0
      %v2017 = vadd.f32 0.0, %v2016
      %v2018 = vpop.f32.mrb[0].mxu0
      %v2019 = vpop.f32.mrb[0].mxu0
      %v2020 = vadd.f32 0.0, %v2019
      %v2021 = vpop.f32.mrb[0].mxu0
      %2022 = vmatprep.mubr.bf16.mxu0 0
      %2023 = vmatmul.mubr.bf16.gmra.mrb[0].mxu0 %v1915
      %v2024 = vpop.f32.mrb[0].mxu0
      %v2025 = vadd.f32 0.0, %v2024
      %v2026 = vpop.f32.mrb[0].mxu0
      %v2027 = vpop.f32.mrb[0].mxu0
      %v2028 = vadd.f32 0.0, %v2027
      %v2029 = vpop.f32.mrb[0].mxu0
      %2030 = vmatprep.mubr.bf16.mxu0 0
      %2031 = vmatmul.mubr.bf16.gmra.mrb[0].mxu0 %v1918
      %v2032 = vpop.f32.mrb[0].mxu0
      %v2033 = vadd.f32 0.0, %v2032
      %v2034 = vpop.f32.mrb[0].mxu0
      %v2035 = vpop.f32.mrb[0].mxu0
      %v2036 = vadd.f32 0.0, %v2035
      %v2037 = vpop.f32.mrb[0].mxu0
      %2038 = vmatprep.mubr.bf16.mxu0 0
      %2039 = vmatmul.mubr.bf16.gmra.mrb[0].mxu0 %v1921
      %v2040 = vpop.f32.mrb[0].mxu0
      %v2041 = vadd.f32 0.0, %v2040
      %v2042 = vpop.f32.mrb[0].mxu0
      %v2043 = vpop.f32.mrb[0].mxu0
      %v2044 = vadd.f32 0.0, %v2043
      %v2045 = vpop.f32.mrb[0].mxu0
      %2046 = vmatprep.mubr.bf16.mxu0 0
      %2047 = vmatmul.mubr.bf16.gmra.mrb[0].mxu0 %v1924
      %v2048 = vpop.f32.mrb[0].mxu0
      %v2049 = vadd.f32 0.0, %v2048
      %v2050 = vpop.f32.mrb[0].mxu0
      %v2051 = vpop.f32.mrb[0].mxu0
      %v2052 = vadd.f32 0.0, %v2051
      %v2053 = vpop.f32.mrb[0].mxu0
      %2054 = vmatprep.mubr.bf16.mxu0 0
      %2055 = vmatmul.mubr.bf16.gmra.mrb[0].mxu0 %v1927
      %v2056 = vpop.f32.mrb[0].mxu0
      %v2057 = vadd.f32 0.0, %v2056
      %v2058 = vpop.f32.mrb[0].mxu0
      %v2059 = vpop.f32.mrb[0].mxu0
      %v2060 = vadd.f32 0.0, %v2059
      %v2061 = vpop.f32.mrb[0].mxu0
      %2062 = vmatprep.mubr.bf16.mxu0 0
      %2063 = vmatmul.mubr.bf16.gmra.mrb[0].mxu0 %v1930
      %v2064 = vpop.f32.mrb[0].mxu0
      %v2065 = vadd.f32 0.0, %v2064
      %v2066 = vpop.f32.mrb[0].mxu0
      %v2067 = vpop.f32.mrb[0].mxu0
      %v2068 = vadd.f32 0.0, %v2067
      %v2069 = vpop.f32.mrb[0].mxu0
      %2070 = vmatprep.mubr.bf16.mxu0 0
      %2071 = vmatmul.mubr.bf16.gmra.mrb[0].mxu0 %v1933
      %v2072 = vpop.f32.mrb[0].mxu0
      %v2073 = vadd.f32 0.0, %v2072
      %v2074 = vpop.f32.mrb[0].mxu0
      %v2075 = vpop.f32.mrb[0].mxu0
      %v2076 = vadd.f32 0.0, %v2075
      %v2077 = vpop.f32.mrb[0].mxu0
      %2078 = vmatprep.mubr.bf16.mxu0 0
      %2079 = vmatmul.mubr.bf16.gmra.mrb[0].mxu0 %v1936
      %v2080 = vpop.f32.mrb[0].mxu0
      %v2081 = vadd.f32 0.0, %v2080
      %v2082 = vpop.f32.mrb[0].mxu0
      %v2083 = vpop.f32.mrb[0].mxu0
      %v2084 = vadd.f32 0.0, %v2083
      %v2085 = vpop.f32.mrb[0].mxu0
      %2086 = vmatprep.mubr.bf16.mxu0 0
      %2087 = vmatmul.mubr.bf16.gmra.mrb[0].mxu0 %v1939
      %v2088 = vpop.f32.mrb[0].mxu0
      %v2089 = vadd.f32 0.0, %v2088
      %v2090 = vpop.f32.mrb[0].mxu0
      %v2091 = vpop.f32.mrb[0].mxu0
      %v2092 = vadd.f32 0.0, %v2091
      %v2093 = vpop.f32.mrb[0].mxu0
      %2094 = vmatprep.mubr.bf16.mxu0 0
      %2095 = vmatmul.mubr.bf16.gmra.mrb[0].mxu0 %v1942
      %v2096 = vpop.f32.mrb[0].mxu0
      %v2097 = vadd.f32 0.0, %v2096
      %v2098 = vpop.f32.mrb[0].mxu0
      %v2099 = vpop.f32.mrb[0].mxu0
      %v2100 = vadd.f32 0.0, %v2099
      %v2101 = vpop.f32.mrb[0].mxu0
      %2102 = vmatprep.mubr.bf16.mxu0 0
      %2103 = vmatmul.mubr.bf16.gmra.mrb[0].mxu0 %v1945
      %v2104 = vpop.f32.mrb[0].mxu0
      %v2105 = vadd.f32 0.0, %v2104
      %v2106 = vpop.f32.mrb[0].mxu0
      %v2107 = vpop.f32.mrb[0].mxu0
      %v2108 = vadd.f32 0.0, %v2107
      %v2109 = vpop.f32.mrb[0].mxu0
      %2110 = vdwg.mxu0
      %v2111 = vadd.f32 %v1817, %v1985
      %v2112 = vadd.f32 %v1818, %v1988
      %v2113 = vadd.f32 %v1819, %v1993
      %v2114 = vadd.f32 %v1820, %v1996
      %v2115 = vadd.f32 %v1821, %v2001
      %v2116 = vadd.f32 %v1822, %v2004
      %v2117 = vadd.f32 %v1823, %v2009
      %v2118 = vadd.f32 %v1824, %v2012
      %v2119 = vadd.f32 %v1825, %v2017
      %v2120 = vadd.f32 %v1826, %v2020
      %v2121 = vadd.f32 %v1827, %v2025
      %v2122 = vadd.f32 %v1828, %v2028
      %v2123 = vadd.f32 %v1829, %v2033
      %v2124 = vadd.f32 %v1830, %v2036
      %v2125 = vadd.f32 %v1831, %v2041
      %v2126 = vadd.f32 %v1832, %v2044
      %v2127 = vadd.f32 %v1833, %v2049
      %v2128 = vadd.f32 %v1834, %v2052
      %v2129 = vadd.f32 %v1835, %v2057
      %v2130 = vadd.f32 %v1836, %v2060
      %v2131 = vadd.f32 %v1837, %v2065
      %v2132 = vadd.f32 %v1838, %v2068
      %v2133 = vadd.f32 %v1839, %v2073
      %v2134 = vadd.f32 %v1840, %v2076
      %v2135 = vadd.f32 %v1841, %v2081
      %v2136 = vadd.f32 %v1842, %v2084
      %v2137 = vadd.f32 %v1843, %v2089
      %v2138 = vadd.f32 %v1844, %v2092
      %v2139 = vadd.f32 %v1845, %v2097
      %v2140 = vadd.f32 %v1846, %v2100
      %v2141 = vadd.f32 %v1847, %v2105
      %v2142 = vadd.f32 %v1848, %v2108
      %v2143 = vld [vmem:[%s701 + $0x2] sm:$0xff]
      %v2144 = vld [vmem:[%s701 + $0xa] sm:$0xff]
      %v2145 = vld [vmem:[%s701 + $0x1a] sm:$0xff]
      %v2146 = vld [vmem:[%s701 + $0x22] sm:$0xff]
      %v2147 = vld [vmem:[%s701 + $0x32] sm:$0xff]
      %v2148 = vld [vmem:[%s701 + $0x3a] sm:$0xff]
      %v2149 = vld [vmem:[%s701 + $0x4a] sm:$0xff]
      %v2150 = vld [vmem:[%s701 + $0x52] sm:$0xff]
      %v2151 = vld [vmem:[%s701 + $0x62] sm:$0xff]
      %v2152 = vld [vmem:[%s701 + $0x6a] sm:$0xff]
      %v2153 = vld [vmem:[%s701 + $0x7a] sm:$0xff]
      %v2154 = vld [vmem:[%s701 + $0x82] sm:$0xff]
      %v2155 = vld [vmem:[%s701 + $0x92] sm:$0xff]
      %v2156 = vld [vmem:[%s701 + $0x9a] sm:$0xff]
      %v2157 = vld [vmem:[%s701 + $0xaa] sm:$0xff]
      %v2158 = vld [vmem:[%s701 + $0xb2] sm:$0xff]
      %v2159 = vld [vmem:[%s701 + $0xc2] sm:$0xff]
      %v2160 = vld [vmem:[%s701 + $0xca] sm:$0xff]
      %v2161 = vld [vmem:[%s701 + $0xda] sm:$0xff]
      %v2162 = vld [vmem:[%s701 + $0xe2] sm:$0xff]
      %v2163 = vld [vmem:[%s701 + $0xf2] sm:$0xff]
      %v2164 = vld [vmem:[%s701 + $0xfa] sm:$0xff]
      %v2165 = vld [vmem:[%s701 + $0x10a] sm:$0xff]
      %v2166 = vld [vmem:[%s701 + $0x112] sm:$0xff]
      %v2167 = vld [vmem:[%s701 + $0x122] sm:$0xff]
      %v2168 = vld [vmem:[%s701 + $0x12a] sm:$0xff]
      %v2169 = vld [vmem:[%s701 + $0x13a] sm:$0xff]
      %v2170 = vld [vmem:[%s701 + $0x142] sm:$0xff]
      %v2171 = vld [vmem:[%s701 + $0x152] sm:$0xff]
      %v2172 = vld [vmem:[%s701 + $0x15a] sm:$0xff]
      %v2173 = vld [vmem:[%s701 + $0x16a] sm:$0xff]
      %v2174 = vld [vmem:[%s701 + $0x172] sm:$0xff]
      %v2175 = vpack.c.bf16 %v2144, %v2143
      %v2176 = vpack.c.bf16 %v2146, %v2145
      %v2177 = vpack.c.bf16 %v2148, %v2147
      %v2178 = vpack.c.bf16 %v2150, %v2149
      %v2179 = vpack.c.bf16 %v2152, %v2151
      %v2180 = vpack.c.bf16 %v2154, %v2153
      %v2181 = vpack.c.bf16 %v2156, %v2155
      %v2182 = vpack.c.bf16 %v2158, %v2157
      %v2183 = vpack.c.bf16 %v2160, %v2159
      %v2184 = vpack.c.bf16 %v2162, %v2161
      %v2185 = vpack.c.bf16 %v2164, %v2163
      %v2186 = vpack.c.bf16 %v2166, %v2165
      %v2187 = vpack.c.bf16 %v2168, %v2167
      %v2188 = vpack.c.bf16 %v2170, %v2169
      %v2189 = vpack.c.bf16 %v2172, %v2171
      %v2190 = vpack.c.bf16 %v2174, %v2173
      %s2191 = scalar_lea.vmem %s1, 10
      %v2192 = vld [vmem:[%s2191] sm:$0x3]
      %v2194 = vsel %vm523, %v2175, 0
      %v2197 = vsel %vm523, %v2176, 0
      %v2200 = vsel %vm523, %v2177, 0
      %v2203 = vsel %vm523, %v2178, 0
      %v2206 = vsel %vm523, %v2179, 0
      %v2209 = vsel %vm523, %v2180, 0
      %v2212 = vsel %vm523, %v2181, 0
      %v2215 = vsel %vm523, %v2182, 0
      %v2218 = vsel %vm523, %v2183, 0
      %v2221 = vsel %vm523, %v2184, 0
      %v2224 = vsel %vm523, %v2185, 0
      %v2227 = vsel %vm523, %v2186, 0
      %v2230 = vsel %vm523, %v2187, 0
      %v2233 = vsel %vm523, %v2188, 0
      %v2236 = vsel %vm523, %v2189, 0
      %v2239 = vsel %vm523, %v2190, 0
      %v2242 = vand.u32 %v2192, %v884
      %2244 = vmatprep.subr.bf16.mxu0 0
      %2245 = vmatpush1.bf16.msra.mxu0 %v2242
      %2246 = vmatprep.subr.bf16.mxu0 0
      %2247 = vmatpush1.bf16.msra.mxu0 0
      %2248 = vmatprep.subr.bf16.mxu0 0
      %2249 = vmatpush1.bf16.msra.mxu0 0
      %2250 = vmatprep.subr.bf16.mxu0 0
      %2251 = vmatpush1.bf16.msra.mxu0 0
      %2252 = vmatprep.subr.bf16.mxu0 0
      %2253 = vmatpush1.bf16.msra.mxu0 0
      %2254 = vmatprep.subr.bf16.mxu0 0
      %2255 = vmatpush1.bf16.msra.mxu0 0
      %2256 = vmatprep.subr.bf16.mxu0 0
      %2257 = vmatpush1.bf16.msra.mxu0 0
      %2258 = vmatprep.subr.bf16.mxu0 0
      %2259 = vmatpush1.bf16.msra.mxu0 0
      %2260 = vmatprep.subr.bf16.mxu0 0
      %2261 = vmatpush1.bf16.msra.mxu0 0
      %2262 = vmatprep.subr.bf16.mxu0 0
      %2263 = vmatpush1.bf16.msra.mxu0 0
      %2264 = vmatprep.subr.bf16.mxu0 0
      %2265 = vmatpush1.bf16.msra.mxu0 0
      %2266 = vmatprep.subr.bf16.mxu0 0
      %2267 = vmatpush1.bf16.msra.mxu0 0
      %2268 = vmatprep.subr.bf16.mxu0 0
      %2269 = vmatpush1.bf16.msra.mxu0 0
      %2270 = vmatprep.subr.bf16.mxu0 0
      %2271 = vmatpush1.bf16.msra.mxu0 0
      %2272 = vmatprep.subr.bf16.mxu0 0
      %2273 = vmatpush1.bf16.msra.mxu0 0
      %2274 = vmatprep.subr.bf16.mxu0 0
      %2275 = vmatpush1.bf16.msra.mxu0 0
      %2276 = vmatprep.mubr.bf16.mxu0 0
      %2277 = vmatmul.mubr.bf16.gmra.mrb[0].mxu0 %v2194
      %v2278 = vpop.f32.mrb[0].mxu0
      %v2279 = vadd.f32 0.0, %v2278
      %v2280 = vpop.f32.mrb[0].mxu0
      %v2281 = vpop.f32.mrb[0].mxu0
      %v2282 = vadd.f32 0.0, %v2281
      %v2283 = vpop.f32.mrb[0].mxu0
      %2284 = vmatprep.mubr.bf16.mxu0 0
      %2285 = vmatmul.mubr.bf16.gmra.mrb[0].mxu0 %v2197
      %v2286 = vpop.f32.mrb[0].mxu0
      %v2287 = vadd.f32 0.0, %v2286
      %v2288 = vpop.f32.mrb[0].mxu0
      %v2289 = vpop.f32.mrb[0].mxu0
      %v2290 = vadd.f32 0.0, %v2289
      %v2291 = vpop.f32.mrb[0].mxu0
      %2292 = vmatprep.mubr.bf16.mxu0 0
      %2293 = vmatmul.mubr.bf16.gmra.mrb[0].mxu0 %v2200
      %v2294 = vpop.f32.mrb[0].mxu0
      %v2295 = vadd.f32 0.0, %v2294
      %v2296 = vpop.f32.mrb[0].mxu0
      %v2297 = vpop.f32.mrb[0].mxu0
      %v2298 = vadd.f32 0.0, %v2297
      %v2299 = vpop.f32.mrb[0].mxu0
      %2300 = vmatprep.mubr.bf16.mxu0 0
      %2301 = vmatmul.mubr.bf16.gmra.mrb[0].mxu0 %v2203
      %v2302 = vpop.f32.mrb[0].mxu0
      %v2303 = vadd.f32 0.0, %v2302
      %v2304 = vpop.f32.mrb[0].mxu0
      %v2305 = vpop.f32.mrb[0].mxu0
      %v2306 = vadd.f32 0.0, %v2305
      %v2307 = vpop.f32.mrb[0].mxu0
      %2308 = vmatprep.mubr.bf16.mxu0 0
      %2309 = vmatmul.mubr.bf16.gmra.mrb[0].mxu0 %v2206
      %v2310 = vpop.f32.mrb[0].mxu0
      %v2311 = vadd.f32 0.0, %v2310
      %v2312 = vpop.f32.mrb[0].mxu0
      %v2313 = vpop.f32.mrb[0].mxu0
      %v2314 = vadd.f32 0.0, %v2313
      %v2315 = vpop.f32.mrb[0].mxu0
      %2316 = vmatprep.mubr.bf16.mxu0 0
      %2317 = vmatmul.mubr.bf16.gmra.mrb[0].mxu0 %v2209
      %v2318 = vpop.f32.mrb[0].mxu0
      %v2319 = vadd.f32 0.0, %v2318
      %v2320 = vpop.f32.mrb[0].mxu0
      %v2321 = vpop.f32.mrb[0].mxu0
      %v2322 = vadd.f32 0.0, %v2321
      %v2323 = vpop.f32.mrb[0].mxu0
      %2324 = vmatprep.mubr.bf16.mxu0 0
      %2325 = vmatmul.mubr.bf16.gmra.mrb[0].mxu0 %v2212
      %v2326 = vpop.f32.mrb[0].mxu0
      %v2327 = vadd.f32 0.0, %v2326
      %v2328 = vpop.f32.mrb[0].mxu0
      %v2329 = vpop.f32.mrb[0].mxu0
      %v2330 = vadd.f32 0.0, %v2329
      %v2331 = vpop.f32.mrb[0].mxu0
      %2332 = vmatprep.mubr.bf16.mxu0 0
      %2333 = vmatmul.mubr.bf16.gmra.mrb[0].mxu0 %v2215
      %v2334 = vpop.f32.mrb[0].mxu0
      %v2335 = vadd.f32 0.0, %v2334
      %v2336 = vpop.f32.mrb[0].mxu0
      %v2337 = vpop.f32.mrb[0].mxu0
      %v2338 = vadd.f32 0.0, %v2337
      %v2339 = vpop.f32.mrb[0].mxu0
      %2340 = vmatprep.mubr.bf16.mxu0 0
      %2341 = vmatmul.mubr.bf16.gmra.mrb[0].mxu0 %v2218
      %v2342 = vpop.f32.mrb[0].mxu0
      %v2343 = vadd.f32 0.0, %v2342
      %v2344 = vpop.f32.mrb[0].mxu0
      %v2345 = vpop.f32.mrb[0].mxu0
      %v2346 = vadd.f32 0.0, %v2345
      %v2347 = vpop.f32.mrb[0].mxu0
      %2348 = vmatprep.mubr.bf16.mxu0 0
      %2349 = vmatmul.mubr.bf16.gmra.mrb[0].mxu0 %v2221
      %v2350 = vpop.f32.mrb[0].mxu0
      %v2351 = vadd.f32 0.0, %v2350
      %v2352 = vpop.f32.mrb[0].mxu0
      %v2353 = vpop.f32.mrb[0].mxu0
      %v2354 = vadd.f32 0.0, %v2353
      %v2355 = vpop.f32.mrb[0].mxu0
      %2356 = vmatprep.mubr.bf16.mxu0 0
      %2357 = vmatmul.mubr.bf16.gmra.mrb[0].mxu0 %v2224
      %v2358 = vpop.f32.mrb[0].mxu0
      %v2359 = vadd.f32 0.0, %v2358
      %v2360 = vpop.f32.mrb[0].mxu0
      %v2361 = vpop.f32.mrb[0].mxu0
      %v2362 = vadd.f32 0.0, %v2361
      %v2363 = vpop.f32.mrb[0].mxu0
      %2364 = vmatprep.mubr.bf16.mxu0 0
      %2365 = vmatmul.mubr.bf16.gmra.mrb[0].mxu0 %v2227
      %v2366 = vpop.f32.mrb[0].mxu0
      %v2367 = vadd.f32 0.0, %v2366
      %v2368 = vpop.f32.mrb[0].mxu0
      %v2369 = vpop.f32.mrb[0].mxu0
      %v2370 = vadd.f32 0.0, %v2369
      %v2371 = vpop.f32.mrb[0].mxu0
      %2372 = vmatprep.mubr.bf16.mxu0 0
      %2373 = vmatmul.mubr.bf16.gmra.mrb[0].mxu0 %v2230
      %v2374 = vpop.f32.mrb[0].mxu0
      %v2375 = vadd.f32 0.0, %v2374
      %v2376 = vpop.f32.mrb[0].mxu0
      %v2377 = vpop.f32.mrb[0].mxu0
      %v2378 = vadd.f32 0.0, %v2377
      %v2379 = vpop.f32.mrb[0].mxu0
      %2380 = vmatprep.mubr.bf16.mxu0 0
      %2381 = vmatmul.mubr.bf16.gmra.mrb[0].mxu0 %v2233
      %v2382 = vpop.f32.mrb[0].mxu0
      %v2383 = vadd.f32 0.0, %v2382
      %v2384 = vpop.f32.mrb[0].mxu0
      %v2385 = vpop.f32.mrb[0].mxu0
      %v2386 = vadd.f32 0.0, %v2385
      %v2387 = vpop.f32.mrb[0].mxu0
      %2388 = vmatprep.mubr.bf16.mxu0 0
      %2389 = vmatmul.mubr.bf16.gmra.mrb[0].mxu0 %v2236
      %v2390 = vpop.f32.mrb[0].mxu0
      %v2391 = vadd.f32 0.0, %v2390
      %v2392 = vpop.f32.mrb[0].mxu0
      %v2393 = vpop.f32.mrb[0].mxu0
      %v2394 = vadd.f32 0.0, %v2393
      %v2395 = vpop.f32.mrb[0].mxu0
      %2396 = vmatprep.mubr.bf16.mxu0 0
      %2397 = vmatmul.mubr.bf16.gmra.mrb[0].mxu0 %v2239
      %v2398 = vpop.f32.mrb[0].mxu0
      %v2399 = vadd.f32 0.0, %v2398
      %v2400 = vpop.f32.mrb[0].mxu0
      %v2401 = vpop.f32.mrb[0].mxu0
      %v2402 = vadd.f32 0.0, %v2401
      %v2403 = vpop.f32.mrb[0].mxu0
      %2404 = vdwg.mxu0
      %v2405 = vadd.f32 %v2111, %v2279
      %v2406 = vadd.f32 %v2112, %v2282
      %v2407 = vadd.f32 %v2113, %v2287
      %v2408 = vadd.f32 %v2114, %v2290
      %v2409 = vadd.f32 %v2115, %v2295
      %v2410 = vadd.f32 %v2116, %v2298
      %v2411 = vadd.f32 %v2117, %v2303
      %v2412 = vadd.f32 %v2118, %v2306
      %v2413 = vadd.f32 %v2119, %v2311
      %v2414 = vadd.f32 %v2120, %v2314
      %v2415 = vadd.f32 %v2121, %v2319
      %v2416 = vadd.f32 %v2122, %v2322
      %v2417 = vadd.f32 %v2123, %v2327
      %v2418 = vadd.f32 %v2124, %v2330
      %v2419 = vadd.f32 %v2125, %v2335
      %v2420 = vadd.f32 %v2126, %v2338
      %v2421 = vadd.f32 %v2127, %v2343
      %v2422 = vadd.f32 %v2128, %v2346
      %v2423 = vadd.f32 %v2129, %v2351
      %v2424 = vadd.f32 %v2130, %v2354
      %v2425 = vadd.f32 %v2131, %v2359
      %v2426 = vadd.f32 %v2132, %v2362
      %v2427 = vadd.f32 %v2133, %v2367
      %v2428 = vadd.f32 %v2134, %v2370
      %v2429 = vadd.f32 %v2135, %v2375
      %v2430 = vadd.f32 %v2136, %v2378
      %v2431 = vadd.f32 %v2137, %v2383
      %v2432 = vadd.f32 %v2138, %v2386
      %v2433 = vadd.f32 %v2139, %v2391
      %v2434 = vadd.f32 %v2140, %v2394
      %v2435 = vadd.f32 %v2141, %v2399
      %v2436 = vadd.f32 %v2142, %v2402
      %s2437 = scalar_lea.vmem [#allocation2], 48
      %v2438 = vld [vmem:[%s2437] sm:$0xff]
      %v2439 = vld [vmem:[%s2437 + $0x8] sm:$0xff]
      %v2440 = vld [vmem:[%s2437 + $0x18] sm:$0xff]
      %v2441 = vld [vmem:[%s2437 + $0x20] sm:$0xff]
      %v2442 = vld [vmem:[%s2437 + $0x30] sm:$0xff]
      %v2443 = vld [vmem:[%s2437 + $0x38] sm:$0xff]
      %v2444 = vld [vmem:[%s2437 + $0x48] sm:$0xff]
      %v2445 = vld [vmem:[%s2437 + $0x50] sm:$0xff]
      %v2446 = vld [vmem:[%s2437 + $0x60] sm:$0xff]
      %v2447 = vld [vmem:[%s2437 + $0x68] sm:$0xff]
      %v2448 = vld [vmem:[%s2437 + $0x78] sm:$0xff]
      %v2449 = vld [vmem:[%s2437 + $0x80] sm:$0xff]
      %v2450 = vld [vmem:[%s2437 + $0x90] sm:$0xff]
      %v2451 = vld [vmem:[%s2437 + $0x98] sm:$0xff]
      %v2452 = vld [vmem:[%s2437 + $0xa8] sm:$0xff]
      %v2453 = vld [vmem:[%s2437 + $0xb0] sm:$0xff]
      %v2454 = vld [vmem:[%s2437 + $0xc0] sm:$0xff]
      %v2455 = vld [vmem:[%s2437 + $0xc8] sm:$0xff]
      %v2456 = vld [vmem:[%s2437 + $0xd8] sm:$0xff]
      %v2457 = vld [vmem:[%s2437 + $0xe0] sm:$0xff]
      %v2458 = vld [vmem:[%s2437 + $0xf0] sm:$0xff]
      %v2459 = vld [vmem:[%s2437 + $0xf8] sm:$0xff]
      %v2460 = vld [vmem:[%s2437 + $0x108] sm:$0xff]
      %v2461 = vld [vmem:[%s2437 + $0x110] sm:$0xff]
      %v2462 = vld [vmem:[%s2437 + $0x120] sm:$0xff]
      %v2463 = vld [vmem:[%s2437 + $0x128] sm:$0xff]
      %v2464 = vld [vmem:[%s2437 + $0x138] sm:$0xff]
      %v2465 = vld [vmem:[%s2437 + $0x140] sm:$0xff]
      %v2466 = vld [vmem:[%s2437 + $0x150] sm:$0xff]
      %v2467 = vld [vmem:[%s2437 + $0x158] sm:$0xff]
      %v2468 = vld [vmem:[%s2437 + $0x168] sm:$0xff]
      %v2469 = vld [vmem:[%s2437 + $0x170] sm:$0xff]
      %v2470 = vpack.c.bf16 %v2439, %v2438
      %v2471 = vpack.c.bf16 %v2441, %v2440
      %v2472 = vpack.c.bf16 %v2443, %v2442
      %v2473 = vpack.c.bf16 %v2445, %v2444
      %v2474 = vpack.c.bf16 %v2447, %v2446
      %v2475 = vpack.c.bf16 %v2449, %v2448
      %v2476 = vpack.c.bf16 %v2451, %v2450
      %v2477 = vpack.c.bf16 %v2453, %v2452
      %v2478 = vpack.c.bf16 %v2455, %v2454
      %v2479 = vpack.c.bf16 %v2457, %v2456
      %v2480 = vpack.c.bf16 %v2459, %v2458
      %v2481 = vpack.c.bf16 %v2461, %v2460
      %v2482 = vpack.c.bf16 %v2463, %v2462
      %v2483 = vpack.c.bf16 %v2465, %v2464
      %v2484 = vpack.c.bf16 %v2467, %v2466
      %v2485 = vpack.c.bf16 %v2469, %v2468
      %s2486 = scalar_lea.vmem %s1, 12
      %v2487 = vld [vmem:[%s2486] sm:$0x3]
      %v2489 = vsel %vm523, %v2470, 0
      %v2492 = vsel %vm523, %v2471, 0
      %v2495 = vsel %vm523, %v2472, 0
      %v2498 = vsel %vm523, %v2473, 0
      %v2501 = vsel %vm523, %v2474, 0
      %v2504 = vsel %vm523, %v2475, 0
      %v2507 = vsel %vm523, %v2476, 0
      %v2510 = vsel %vm523, %v2477, 0
      %v2513 = vsel %vm523, %v2478, 0
      %v2516 = vsel %vm523, %v2479, 0
      %v2519 = vsel %vm523, %v2480, 0
      %v2522 = vsel %vm523, %v2481, 0
      %v2525 = vsel %vm523, %v2482, 0
      %v2528 = vsel %vm523, %v2483, 0
      %v2531 = vsel %vm523, %v2484, 0
      %v2534 = vsel %vm523, %v2485, 0
      %v2537 = vand.u32 %v2487, %v884
      %2539 = vmatprep.subr.bf16.mxu0 0
      %2540 = vmatpush1.bf16.msra.mxu0 %v2537
      %2541 = vmatprep.subr.bf16.mxu0 0
      %2542 = vmatpush1.bf16.msra.mxu0 0
      %2543 = vmatprep.subr.bf16.mxu0 0
      %2544 = vmatpush1.bf16.msra.mxu0 0
      %2545 = vmatprep.subr.bf16.mxu0 0
      %2546 = vmatpush1.bf16.msra.mxu0 0
      %2547 = vmatprep.subr.bf16.mxu0 0
      %2548 = vmatpush1.bf16.msra.mxu0 0
      %2549 = vmatprep.subr.bf16.mxu0 0
      %2550 = vmatpush1.bf16.msra.mxu0 0
      %2551 = vmatprep.subr.bf16.mxu0 0
      %2552 = vmatpush1.bf16.msra.mxu0 0
      %2553 = vmatprep.subr.bf16.mxu0 0
      %2554 = vmatpush1.bf16.msra.mxu0 0
      %2555 = vmatprep.subr.bf16.mxu0 0
      %2556 = vmatpush1.bf16.msra.mxu0 0
      %2557 = vmatprep.subr.bf16.mxu0 0
      %2558 = vmatpush1.bf16.msra.mxu0 0
      %2559 = vmatprep.subr.bf16.mxu0 0
      %2560 = vmatpush1.bf16.msra.mxu0 0
      %2561 = vmatprep.subr.bf16.mxu0 0
      %2562 = vmatpush1.bf16.msra.mxu0 0
      %2563 = vmatprep.subr.bf16.mxu0 0
      %2564 = vmatpush1.bf16.msra.mxu0 0
      %2565 = vmatprep.subr.bf16.mxu0 0
      %2566 = vmatpush1.bf16.msra.mxu0 0
      %2567 = vmatprep.subr.bf16.mxu0 0
      %2568 = vmatpush1.bf16.msra.mxu0 0
      %2569 = vmatprep.subr.bf16.mxu0 0
      %2570 = vmatpush1.bf16.msra.mxu0 0
      %2571 = vmatprep.mubr.bf16.mxu0 0
      %2572 = vmatmul.mubr.bf16.gmra.mrb[0].mxu0 %v2489
      %v2573 = vpop.f32.mrb[0].mxu0
      %v2574 = vadd.f32 0.0, %v2573
      %v2575 = vpop.f32.mrb[0].mxu0
      %v2576 = vpop.f32.mrb[0].mxu0
      %v2577 = vadd.f32 0.0, %v2576
      %v2578 = vpop.f32.mrb[0].mxu0
      %2579 = vmatprep.mubr.bf16.mxu0 0
      %2580 = vmatmul.mubr.bf16.gmra.mrb[0].mxu0 %v2492
      %v2581 = vpop.f32.mrb[0].mxu0
      %v2582 = vadd.f32 0.0, %v2581
      %v2583 = vpop.f32.mrb[0].mxu0
      %v2584 = vpop.f32.mrb[0].mxu0
      %v2585 = vadd.f32 0.0, %v2584
      %v2586 = vpop.f32.mrb[0].mxu0
      %2587 = vmatprep.mubr.bf16.mxu0 0
      %2588 = vmatmul.mubr.bf16.gmra.mrb[0].mxu0 %v2495
      %v2589 = vpop.f32.mrb[0].mxu0
      %v2590 = vadd.f32 0.0, %v2589
      %v2591 = vpop.f32.mrb[0].mxu0
      %v2592 = vpop.f32.mrb[0].mxu0
      %v2593 = vadd.f32 0.0, %v2592
      %v2594 = vpop.f32.mrb[0].mxu0
      %2595 = vmatprep.mubr.bf16.mxu0 0
      %2596 = vmatmul.mubr.bf16.gmra.mrb[0].mxu0 %v2498
      %v2597 = vpop.f32.mrb[0].mxu0
      %v2598 = vadd.f32 0.0, %v2597
      %v2599 = vpop.f32.mrb[0].mxu0
      %v2600 = vpop.f32.mrb[0].mxu0
      %v2601 = vadd.f32 0.0, %v2600
      %v2602 = vpop.f32.mrb[0].mxu0
      %2603 = vmatprep.mubr.bf16.mxu0 0
      %2604 = vmatmul.mubr.bf16.gmra.mrb[0].mxu0 %v2501
      %v2605 = vpop.f32.mrb[0].mxu0
      %v2606 = vadd.f32 0.0, %v2605
      %v2607 = vpop.f32.mrb[0].mxu0
      %v2608 = vpop.f32.mrb[0].mxu0
      %v2609 = vadd.f32 0.0, %v2608
      %v2610 = vpop.f32.mrb[0].mxu0
      %2611 = vmatprep.mubr.bf16.mxu0 0
      %2612 = vmatmul.mubr.bf16.gmra.mrb[0].mxu0 %v2504
      %v2613 = vpop.f32.mrb[0].mxu0
      %v2614 = vadd.f32 0.0, %v2613
      %v2615 = vpop.f32.mrb[0].mxu0
      %v2616 = vpop.f32.mrb[0].mxu0
      %v2617 = vadd.f32 0.0, %v2616
      %v2618 = vpop.f32.mrb[0].mxu0
      %2619 = vmatprep.mubr.bf16.mxu0 0
      %2620 = vmatmul.mubr.bf16.gmra.mrb[0].mxu0 %v2507
      %v2621 = vpop.f32.mrb[0].mxu0
      %v2622 = vadd.f32 0.0, %v2621
      %v2623 = vpop.f32.mrb[0].mxu0
      %v2624 = vpop.f32.mrb[0].mxu0
      %v2625 = vadd.f32 0.0, %v2624
      %v2626 = vpop.f32.mrb[0].mxu0
      %2627 = vmatprep.mubr.bf16.mxu0 0
      %2628 = vmatmul.mubr.bf16.gmra.mrb[0].mxu0 %v2510
      %v2629 = vpop.f32.mrb[0].mxu0
      %v2630 = vadd.f32 0.0, %v2629
      %v2631 = vpop.f32.mrb[0].mxu0
      %v2632 = vpop.f32.mrb[0].mxu0
      %v2633 = vadd.f32 0.0, %v2632
      %v2634 = vpop.f32.mrb[0].mxu0
      %2635 = vmatprep.mubr.bf16.mxu0 0
      %2636 = vmatmul.mubr.bf16.gmra.mrb[0].mxu0 %v2513
      %v2637 = vpop.f32.mrb[0].mxu0
      %v2638 = vadd.f32 0.0, %v2637
      %v2639 = vpop.f32.mrb[0].mxu0
      %v2640 = vpop.f32.mrb[0].mxu0
      %v2641 = vadd.f32 0.0, %v2640
      %v2642 = vpop.f32.mrb[0].mxu0
      %2643 = vmatprep.mubr.bf16.mxu0 0
      %2644 = vmatmul.mubr.bf16.gmra.mrb[0].mxu0 %v2516
      %v2645 = vpop.f32.mrb[0].mxu0
      %v2646 = vadd.f32 0.0, %v2645
      %v2647 = vpop.f32.mrb[0].mxu0
      %v2648 = vpop.f32.mrb[0].mxu0
      %v2649 = vadd.f32 0.0, %v2648
      %v2650 = vpop.f32.mrb[0].mxu0
      %2651 = vmatprep.mubr.bf16.mxu0 0
      %2652 = vmatmul.mubr.bf16.gmra.mrb[0].mxu0 %v2519
      %v2653 = vpop.f32.mrb[0].mxu0
      %v2654 = vadd.f32 0.0, %v2653
      %v2655 = vpop.f32.mrb[0].mxu0
      %v2656 = vpop.f32.mrb[0].mxu0
      %v2657 = vadd.f32 0.0, %v2656
      %v2658 = vpop.f32.mrb[0].mxu0
      %2659 = vmatprep.mubr.bf16.mxu0 0
      %2660 = vmatmul.mubr.bf16.gmra.mrb[0].mxu0 %v2522
      %v2661 = vpop.f32.mrb[0].mxu0
      %v2662 = vadd.f32 0.0, %v2661
      %v2663 = vpop.f32.mrb[0].mxu0
      %v2664 = vpop.f32.mrb[0].mxu0
      %v2665 = vadd.f32 0.0, %v2664
      %v2666 = vpop.f32.mrb[0].mxu0
      %2667 = vmatprep.mubr.bf16.mxu0 0
      %2668 = vmatmul.mubr.bf16.gmra.mrb[0].mxu0 %v2525
      %v2669 = vpop.f32.mrb[0].mxu0
      %v2670 = vadd.f32 0.0, %v2669
      %v2671 = vpop.f32.mrb[0].mxu0
      %v2672 = vpop.f32.mrb[0].mxu0
      %v2673 = vadd.f32 0.0, %v2672
      %v2674 = vpop.f32.mrb[0].mxu0
      %2675 = vmatprep.mubr.bf16.mxu0 0
      %2676 = vmatmul.mubr.bf16.gmra.mrb[0].mxu0 %v2528
      %v2677 = vpop.f32.mrb[0].mxu0
      %v2678 = vadd.f32 0.0, %v2677
      %v2679 = vpop.f32.mrb[0].mxu0
      %v2680 = vpop.f32.mrb[0].mxu0
      %v2681 = vadd.f32 0.0, %v2680
      %v2682 = vpop.f32.mrb[0].mxu0
      %2683 = vmatprep.mubr.bf16.mxu0 0
      %2684 = vmatmul.mubr.bf16.gmra.mrb[0].mxu0 %v2531
      %v2685 = vpop.f32.mrb[0].mxu0
      %v2686 = vadd.f32 0.0, %v2685
      %v2687 = vpop.f32.mrb[0].mxu0
      %v2688 = vpop.f32.mrb[0].mxu0
      %v2689 = vadd.f32 0.0, %v2688
      %v2690 = vpop.f32.mrb[0].mxu0
      %2691 = vmatprep.mubr.bf16.mxu0 0
      %2692 = vmatmul.mubr.bf16.gmra.mrb[0].mxu0 %v2534
      %v2693 = vpop.f32.mrb[0].mxu0
      %v2694 = vadd.f32 0.0, %v2693
      %v2695 = vpop.f32.mrb[0].mxu0
      %v2696 = vpop.f32.mrb[0].mxu0
      %v2697 = vadd.f32 0.0, %v2696
      %v2698 = vpop.f32.mrb[0].mxu0
      %2699 = vdwg.mxu0
      %v2700 = vadd.f32 %v2405, %v2574
      %v2701 = vadd.f32 %v2406, %v2577
      %v2702 = vadd.f32 %v2407, %v2582
      %v2703 = vadd.f32 %v2408, %v2585
      %v2704 = vadd.f32 %v2409, %v2590
      %v2705 = vadd.f32 %v2410, %v2593
      %v2706 = vadd.f32 %v2411, %v2598
      %v2707 = vadd.f32 %v2412, %v2601
      %v2708 = vadd.f32 %v2413, %v2606
      %v2709 = vadd.f32 %v2414, %v2609
      %v2710 = vadd.f32 %v2415, %v2614
      %v2711 = vadd.f32 %v2416, %v2617
      %v2712 = vadd.f32 %v2417, %v2622
      %v2713 = vadd.f32 %v2418, %v2625
      %v2714 = vadd.f32 %v2419, %v2630
      %v2715 = vadd.f32 %v2420, %v2633
      %v2716 = vadd.f32 %v2421, %v2638
      %v2717 = vadd.f32 %v2422, %v2641
      %v2718 = vadd.f32 %v2423, %v2646
      %v2719 = vadd.f32 %v2424, %v2649
      %v2720 = vadd.f32 %v2425, %v2654
      %v2721 = vadd.f32 %v2426, %v2657
      %v2722 = vadd.f32 %v2427, %v2662
      %v2723 = vadd.f32 %v2428, %v2665
      %v2724 = vadd.f32 %v2429, %v2670
      %v2725 = vadd.f32 %v2430, %v2673
      %v2726 = vadd.f32 %v2431, %v2678
      %v2727 = vadd.f32 %v2432, %v2681
      %v2728 = vadd.f32 %v2433, %v2686
      %v2729 = vadd.f32 %v2434, %v2689
      %v2730 = vadd.f32 %v2435, %v2694
      %v2731 = vadd.f32 %v2436, %v2697
      %v2732 = vld [vmem:[%s2437 + $0x1] sm:$0xff]
      %v2733 = vld [vmem:[%s2437 + $0x9] sm:$0xff]
      %v2734 = vld [vmem:[%s2437 + $0x19] sm:$0xff]
      %v2735 = vld [vmem:[%s2437 + $0x21] sm:$0xff]
      %v2736 = vld [vmem:[%s2437 + $0x31] sm:$0xff]
      %v2737 = vld [vmem:[%s2437 + $0x39] sm:$0xff]
      %v2738 = vld [vmem:[%s2437 + $0x49] sm:$0xff]
      %v2739 = vld [vmem:[%s2437 + $0x51] sm:$0xff]
      %v2740 = vld [vmem:[%s2437 + $0x61] sm:$0xff]
      %v2741 = vld [vmem:[%s2437 + $0x69] sm:$0xff]
      %v2742 = vld [vmem:[%s2437 + $0x79] sm:$0xff]
      %v2743 = vld [vmem:[%s2437 + $0x81] sm:$0xff]
      %v2744 = vld [vmem:[%s2437 + $0x91] sm:$0xff]
      %v2745 = vld [vmem:[%s2437 + $0x99] sm:$0xff]
      %v2746 = vld [vmem:[%s2437 + $0xa9] sm:$0xff]
      %v2747 = vld [vmem:[%s2437 + $0xb1] sm:$0xff]
      %v2748 = vld [vmem:[%s2437 + $0xc1] sm:$0xff]
      %v2749 = vld [vmem:[%s2437 + $0xc9] sm:$0xff]
      %v2750 = vld [vmem:[%s2437 + $0xd9] sm:$0xff]
      %v2751 = vld [vmem:[%s2437 + $0xe1] sm:$0xff]
      %v2752 = vld [vmem:[%s2437 + $0xf1] sm:$0xff]
      %v2753 = vld [vmem:[%s2437 + $0xf9] sm:$0xff]
      %v2754 = vld [vmem:[%s2437 + $0x109] sm:$0xff]
      %v2755 = vld [vmem:[%s2437 + $0x111] sm:$0xff]
      %v2756 = vld [vmem:[%s2437 + $0x121] sm:$0xff]
      %v2757 = vld [vmem:[%s2437 + $0x129] sm:$0xff]
      %v2758 = vld [vmem:[%s2437 + $0x139] sm:$0xff]
      %v2759 = vld [vmem:[%s2437 + $0x141] sm:$0xff]
      %v2760 = vld [vmem:[%s2437 + $0x151] sm:$0xff]
      %v2761 = vld [vmem:[%s2437 + $0x159] sm:$0xff]
      %v2762 = vld [vmem:[%s2437 + $0x169] sm:$0xff]
      %v2763 = vld [vmem:[%s2437 + $0x171] sm:$0xff]
      %v2764 = vpack.c.bf16 %v2733, %v2732
      %v2765 = vpack.c.bf16 %v2735, %v2734
      %v2766 = vpack.c.bf16 %v2737, %v2736
      %v2767 = vpack.c.bf16 %v2739, %v2738
      %v2768 = vpack.c.bf16 %v2741, %v2740
      %v2769 = vpack.c.bf16 %v2743, %v2742
      %v2770 = vpack.c.bf16 %v2745, %v2744
      %v2771 = vpack.c.bf16 %v2747, %v2746
      %v2772 = vpack.c.bf16 %v2749, %v2748
      %v2773 = vpack.c.bf16 %v2751, %v2750
      %v2774 = vpack.c.bf16 %v2753, %v2752
      %v2775 = vpack.c.bf16 %v2755, %v2754
      %v2776 = vpack.c.bf16 %v2757, %v2756
      %v2777 = vpack.c.bf16 %v2759, %v2758
      %v2778 = vpack.c.bf16 %v2761, %v2760
      %v2779 = vpack.c.bf16 %v2763, %v2762
      %s2780 = scalar_lea.vmem %s1, 14
      %v2781 = vld [vmem:[%s2780] sm:$0x3]
      %v2783 = vsel %vm523, %v2764, 0
      %v2786 = vsel %vm523, %v2765, 0
      %v2789 = vsel %vm523, %v2766, 0
      %v2792 = vsel %vm523, %v2767, 0
      %v2795 = vsel %vm523, %v2768, 0
      %v2798 = vsel %vm523, %v2769, 0
      %v2801 = vsel %vm523, %v2770, 0
      %v2804 = vsel %vm523, %v2771, 0
      %v2807 = vsel %vm523, %v2772, 0
      %v2810 = vsel %vm523, %v2773, 0
      %v2813 = vsel %vm523, %v2774, 0
      %v2816 = vsel %vm523, %v2775, 0
      %v2819 = vsel %vm523, %v2776, 0
      %v2822 = vsel %vm523, %v2777, 0
      %v2825 = vsel %vm523, %v2778, 0
      %v2828 = vsel %vm523, %v2779, 0
      %v2831 = vand.u32 %v2781, %v884
      %2833 = vmatprep.subr.bf16.mxu0 0
      %2834 = vmatpush1.bf16.msra.mxu0 %v2831
      %2835 = vmatprep.subr.bf16.mxu0 0
      %2836 = vmatpush1.bf16.msra.mxu0 0
      %2837 = vmatprep.subr.bf16.mxu0 0
      %2838 = vmatpush1.bf16.msra.mxu0 0
      %2839 = vmatprep.subr.bf16.mxu0 0
      %2840 = vmatpush1.bf16.msra.mxu0 0
      %2841 = vmatprep.subr.bf16.mxu0 0
      %2842 = vmatpush1.bf16.msra.mxu0 0
      %2843 = vmatprep.subr.bf16.mxu0 0
      %2844 = vmatpush1.bf16.msra.mxu0 0
      %2845 = vmatprep.subr.bf16.mxu0 0
      %2846 = vmatpush1.bf16.msra.mxu0 0
      %2847 = vmatprep.subr.bf16.mxu0 0
      %2848 = vmatpush1.bf16.msra.mxu0 0
      %2849 = vmatprep.subr.bf16.mxu0 0
      %2850 = vmatpush1.bf16.msra.mxu0 0
      %2851 = vmatprep.subr.bf16.mxu0 0
      %2852 = vmatpush1.bf16.msra.mxu0 0
      %2853 = vmatprep.subr.bf16.mxu0 0
      %2854 = vmatpush1.bf16.msra.mxu0 0
      %2855 = vmatprep.subr.bf16.mxu0 0
      %2856 = vmatpush1.bf16.msra.mxu0 0
      %2857 = vmatprep.subr.bf16.mxu0 0
      %2858 = vmatpush1.bf16.msra.mxu0 0
      %2859 = vmatprep.subr.bf16.mxu0 0
      %2860 = vmatpush1.bf16.msra.mxu0 0
      %2861 = vmatprep.subr.bf16.mxu0 0
      %2862 = vmatpush1.bf16.msra.mxu0 0
      %2863 = vmatprep.subr.bf16.mxu0 0
      %2864 = vmatpush1.bf16.msra.mxu0 0
      %2865 = vmatprep.mubr.bf16.mxu0 0
      %2866 = vmatmul.mubr.bf16.gmra.mrb[0].mxu0 %v2783
      %v2867 = vpop.f32.mrb[0].mxu0
      %v2868 = vadd.f32 0.0, %v2867
      %v2869 = vpop.f32.mrb[0].mxu0
      %v2870 = vpop.f32.mrb[0].mxu0
      %v2871 = vadd.f32 0.0, %v2870
      %v2872 = vpop.f32.mrb[0].mxu0
      %2873 = vmatprep.mubr.bf16.mxu0 0
      %2874 = vmatmul.mubr.bf16.gmra.mrb[0].mxu0 %v2786
      %v2875 = vpop.f32.mrb[0].mxu0
      %v2876 = vadd.f32 0.0, %v2875
      %v2877 = vpop.f32.mrb[0].mxu0
      %v2878 = vpop.f32.mrb[0].mxu0
      %v2879 = vadd.f32 0.0, %v2878
      %v2880 = vpop.f32.mrb[0].mxu0
      %2881 = vmatprep.mubr.bf16.mxu0 0
      %2882 = vmatmul.mubr.bf16.gmra.mrb[0].mxu0 %v2789
      %v2883 = vpop.f32.mrb[0].mxu0
      %v2884 = vadd.f32 0.0, %v2883
      %v2885 = vpop.f32.mrb[0].mxu0
      %v2886 = vpop.f32.mrb[0].mxu0
      %v2887 = vadd.f32 0.0, %v2886
      %v2888 = vpop.f32.mrb[0].mxu0
      %2889 = vmatprep.mubr.bf16.mxu0 0
      %2890 = vmatmul.mubr.bf16.gmra.mrb[0].mxu0 %v2792
      %v2891 = vpop.f32.mrb[0].mxu0
      %v2892 = vadd.f32 0.0, %v2891
      %v2893 = vpop.f32.mrb[0].mxu0
      %v2894 = vpop.f32.mrb[0].mxu0
      %v2895 = vadd.f32 0.0, %v2894
      %v2896 = vpop.f32.mrb[0].mxu0
      %2897 = vmatprep.mubr.bf16.mxu0 0
      %2898 = vmatmul.mubr.bf16.gmra.mrb[0].mxu0 %v2795
      %v2899 = vpop.f32.mrb[0].mxu0
      %v2900 = vadd.f32 0.0, %v2899
      %v2901 = vpop.f32.mrb[0].mxu0
      %v2902 = vpop.f32.mrb[0].mxu0
      %v2903 = vadd.f32 0.0, %v2902
      %v2904 = vpop.f32.mrb[0].mxu0
      %2905 = vmatprep.mubr.bf16.mxu0 0
      %2906 = vmatmul.mubr.bf16.gmra.mrb[0].mxu0 %v2798
      %v2907 = vpop.f32.mrb[0].mxu0
      %v2908 = vadd.f32 0.0, %v2907
      %v2909 = vpop.f32.mrb[0].mxu0
      %v2910 = vpop.f32.mrb[0].mxu0
      %v2911 = vadd.f32 0.0, %v2910
      %v2912 = vpop.f32.mrb[0].mxu0
      %2913 = vmatprep.mubr.bf16.mxu0 0
      %2914 = vmatmul.mubr.bf16.gmra.mrb[0].mxu0 %v2801
      %v2915 = vpop.f32.mrb[0].mxu0
      %v2916 = vadd.f32 0.0, %v2915
      %v2917 = vpop.f32.mrb[0].mxu0
      %v2918 = vpop.f32.mrb[0].mxu0
      %v2919 = vadd.f32 0.0, %v2918
      %v2920 = vpop.f32.mrb[0].mxu0
      %2921 = vmatprep.mubr.bf16.mxu0 0
      %2922 = vmatmul.mubr.bf16.gmra.mrb[0].mxu0 %v2804
      %v2923 = vpop.f32.mrb[0].mxu0
      %v2924 = vadd.f32 0.0, %v2923
      %v2925 = vpop.f32.mrb[0].mxu0
      %v2926 = vpop.f32.mrb[0].mxu0
      %v2927 = vadd.f32 0.0, %v2926
      %v2928 = vpop.f32.mrb[0].mxu0
      %2929 = vmatprep.mubr.bf16.mxu0 0
      %2930 = vmatmul.mubr.bf16.gmra.mrb[0].mxu0 %v2807
      %v2931 = vpop.f32.mrb[0].mxu0
      %v2932 = vadd.f32 0.0, %v2931
      %v2933 = vpop.f32.mrb[0].mxu0
      %v2934 = vpop.f32.mrb[0].mxu0
      %v2935 = vadd.f32 0.0, %v2934
      %v2936 = vpop.f32.mrb[0].mxu0
      %2937 = vmatprep.mubr.bf16.mxu0 0
      %2938 = vmatmul.mubr.bf16.gmra.mrb[0].mxu0 %v2810
      %v2939 = vpop.f32.mrb[0].mxu0
      %v2940 = vadd.f32 0.0, %v2939
      %v2941 = vpop.f32.mrb[0].mxu0
      %v2942 = vpop.f32.mrb[0].mxu0
      %v2943 = vadd.f32 0.0, %v2942
      %v2944 = vpop.f32.mrb[0].mxu0
      %2945 = vmatprep.mubr.bf16.mxu0 0
      %2946 = vmatmul.mubr.bf16.gmra.mrb[0].mxu0 %v2813
      %v2947 = vpop.f32.mrb[0].mxu0
      %v2948 = vadd.f32 0.0, %v2947
      %v2949 = vpop.f32.mrb[0].mxu0
      %v2950 = vpop.f32.mrb[0].mxu0
      %v2951 = vadd.f32 0.0, %v2950
      %v2952 = vpop.f32.mrb[0].mxu0
      %2953 = vmatprep.mubr.bf16.mxu0 0
      %2954 = vmatmul.mubr.bf16.gmra.mrb[0].mxu0 %v2816
      %v2955 = vpop.f32.mrb[0].mxu0
      %v2956 = vadd.f32 0.0, %v2955
      %v2957 = vpop.f32.mrb[0].mxu0
      %v2958 = vpop.f32.mrb[0].mxu0
      %v2959 = vadd.f32 0.0, %v2958
      %v2960 = vpop.f32.mrb[0].mxu0
      %2961 = vmatprep.mubr.bf16.mxu0 0
      %2962 = vmatmul.mubr.bf16.gmra.mrb[0].mxu0 %v2819
      %v2963 = vpop.f32.mrb[0].mxu0
      %v2964 = vadd.f32 0.0, %v2963
      %v2965 = vpop.f32.mrb[0].mxu0
      %v2966 = vpop.f32.mrb[0].mxu0
      %v2967 = vadd.f32 0.0, %v2966
      %v2968 = vpop.f32.mrb[0].mxu0
      %2969 = vmatprep.mubr.bf16.mxu0 0
      %2970 = vmatmul.mubr.bf16.gmra.mrb[0].mxu0 %v2822
      %v2971 = vpop.f32.mrb[0].mxu0
      %v2972 = vadd.f32 0.0, %v2971
      %v2973 = vpop.f32.mrb[0].mxu0
      %v2974 = vpop.f32.mrb[0].mxu0
      %v2975 = vadd.f32 0.0, %v2974
      %v2976 = vpop.f32.mrb[0].mxu0
      %2977 = vmatprep.mubr.bf16.mxu0 0
      %2978 = vmatmul.mubr.bf16.gmra.mrb[0].mxu0 %v2825
      %v2979 = vpop.f32.mrb[0].mxu0
      %v2980 = vadd.f32 0.0, %v2979
      %v2981 = vpop.f32.mrb[0].mxu0
      %v2982 = vpop.f32.mrb[0].mxu0
      %v2983 = vadd.f32 0.0, %v2982
      %v2984 = vpop.f32.mrb[0].mxu0
      %2985 = vmatprep.mubr.bf16.mxu0 0
      %2986 = vmatmul.mubr.bf16.gmra.mrb[0].mxu0 %v2828
      %v2987 = vpop.f32.mrb[0].mxu0
      %v2988 = vadd.f32 0.0, %v2987
      %v2989 = vpop.f32.mrb[0].mxu0
      %v2990 = vpop.f32.mrb[0].mxu0
      %v2991 = vadd.f32 0.0, %v2990
      %v2992 = vpop.f32.mrb[0].mxu0
      %2993 = vdwg.mxu0
      %v2994 = vadd.f32 %v2700, %v2868
      %v2995 = vadd.f32 %v2701, %v2871
      %v2996 = vadd.f32 %v2702, %v2876
      %v2997 = vadd.f32 %v2703, %v2879
      %v2998 = vadd.f32 %v2704, %v2884
      %v2999 = vadd.f32 %v2705, %v2887
      %v3000 = vadd.f32 %v2706, %v2892
      %v3001 = vadd.f32 %v2707, %v2895
      %v3002 = vadd.f32 %v2708, %v2900
      %v3003 = vadd.f32 %v2709, %v2903
      %v3004 = vadd.f32 %v2710, %v2908
      %v3005 = vadd.f32 %v2711, %v2911
      %v3006 = vadd.f32 %v2712, %v2916
      %v3007 = vadd.f32 %v2713, %v2919
      %v3008 = vadd.f32 %v2714, %v2924
      %v3009 = vadd.f32 %v2715, %v2927
      %v3010 = vadd.f32 %v2716, %v2932
      %v3011 = vadd.f32 %v2717, %v2935
      %v3012 = vadd.f32 %v2718, %v2940
      %v3013 = vadd.f32 %v2719, %v2943
      %v3014 = vadd.f32 %v2720, %v2948
      %v3015 = vadd.f32 %v2721, %v2951
      %v3016 = vadd.f32 %v2722, %v2956
      %v3017 = vadd.f32 %v2723, %v2959
      %v3018 = vadd.f32 %v2724, %v2964
      %v3019 = vadd.f32 %v2725, %v2967
      %v3020 = vadd.f32 %v2726, %v2972
      %v3021 = vadd.f32 %v2727, %v2975
      %v3022 = vadd.f32 %v2728, %v2980
      %v3023 = vadd.f32 %v2729, %v2983
      %v3024 = vadd.f32 %v2730, %v2988
      %v3025 = vadd.f32 %v2731, %v2991
      %v3026 = vld [vmem:[%s2437 + $0x2] sm:$0xff]
      %v3027 = vld [vmem:[%s2437 + $0xa] sm:$0xff]
      %v3028 = vld [vmem:[%s2437 + $0x1a] sm:$0xff]
      %v3029 = vld [vmem:[%s2437 + $0x22] sm:$0xff]
      %v3030 = vld [vmem:[%s2437 + $0x32] sm:$0xff]
      %v3031 = vld [vmem:[%s2437 + $0x3a] sm:$0xff]
      %v3032 = vld [vmem:[%s2437 + $0x4a] sm:$0xff]
      %v3033 = vld [vmem:[%s2437 + $0x52] sm:$0xff]
      %v3034 = vld [vmem:[%s2437 + $0x62] sm:$0xff]
      %v3035 = vld [vmem:[%s2437 + $0x6a] sm:$0xff]
      %v3036 = vld [vmem:[%s2437 + $0x7a] sm:$0xff]
      %v3037 = vld [vmem:[%s2437 + $0x82] sm:$0xff]
      %v3038 = vld [vmem:[%s2437 + $0x92] sm:$0xff]
      %v3039 = vld [vmem:[%s2437 + $0x9a] sm:$0xff]
      %v3040 = vld [vmem:[%s2437 + $0xaa] sm:$0xff]
      %v3041 = vld [vmem:[%s2437 + $0xb2] sm:$0xff]
      %v3042 = vld [vmem:[%s2437 + $0xc2] sm:$0xff]
      %v3043 = vld [vmem:[%s2437 + $0xca] sm:$0xff]
      %v3044 = vld [vmem:[%s2437 + $0xda] sm:$0xff]
      %v3045 = vld [vmem:[%s2437 + $0xe2] sm:$0xff]
      %v3046 = vld [vmem:[%s2437 + $0xf2] sm:$0xff]
      %v3047 = vld [vmem:[%s2437 + $0xfa] sm:$0xff]
      %v3048 = vld [vmem:[%s2437 + $0x10a] sm:$0xff]
      %v3049 = vld [vmem:[%s2437 + $0x112] sm:$0xff]
      %v3050 = vld [vmem:[%s2437 + $0x122] sm:$0xff]
      %v3051 = vld [vmem:[%s2437 + $0x12a] sm:$0xff]
      %v3052 = vld [vmem:[%s2437 + $0x13a] sm:$0xff]
      %v3053 = vld [vmem:[%s2437 + $0x142] sm:$0xff]
      %v3054 = vld [vmem:[%s2437 + $0x152] sm:$0xff]
      %v3055 = vld [vmem:[%s2437 + $0x15a] sm:$0xff]
      %v3056 = vld [vmem:[%s2437 + $0x16a] sm:$0xff]
      %v3057 = vld [vmem:[%s2437 + $0x172] sm:$0xff]
      %v3058 = vpack.c.bf16 %v3027, %v3026
      %v3059 = vpack.c.bf16 %v3029, %v3028
      %v3060 = vpack.c.bf16 %v3031, %v3030
      %v3061 = vpack.c.bf16 %v3033, %v3032
      %v3062 = vpack.c.bf16 %v3035, %v3034
      %v3063 = vpack.c.bf16 %v3037, %v3036
      %v3064 = vpack.c.bf16 %v3039, %v3038
      %v3065 = vpack.c.bf16 %v3041, %v3040
      %v3066 = vpack.c.bf16 %v3043, %v3042
      %v3067 = vpack.c.bf16 %v3045, %v3044
      %v3068 = vpack.c.bf16 %v3047, %v3046
      %v3069 = vpack.c.bf16 %v3049, %v3048
      %v3070 = vpack.c.bf16 %v3051, %v3050
      %v3071 = vpack.c.bf16 %v3053, %v3052
      %v3072 = vpack.c.bf16 %v3055, %v3054
      %v3073 = vpack.c.bf16 %v3057, %v3056
      %s3074 = scalar_lea.vmem %s1, 16
      %v3075 = vld [vmem:[%s3074] sm:$0x3]
      %v3077 = vsel %vm523, %v3058, 0
      %v3080 = vsel %vm523, %v3059, 0
      %v3083 = vsel %vm523, %v3060, 0
      %v3086 = vsel %vm523, %v3061, 0
      %v3089 = vsel %vm523, %v3062, 0
      %v3092 = vsel %vm523, %v3063, 0
      %v3095 = vsel %vm523, %v3064, 0
      %v3098 = vsel %vm523, %v3065, 0
      %v3101 = vsel %vm523, %v3066, 0
      %v3104 = vsel %vm523, %v3067, 0
      %v3107 = vsel %vm523, %v3068, 0
      %v3110 = vsel %vm523, %v3069, 0
      %v3113 = vsel %vm523, %v3070, 0
      %v3116 = vsel %vm523, %v3071, 0
      %v3119 = vsel %vm523, %v3072, 0
      %v3122 = vsel %vm523, %v3073, 0
      %v3125 = vand.u32 %v3075, %v884
      %3127 = vmatprep.subr.bf16.mxu0 0
      %3128 = vmatpush1.bf16.msra.mxu0 %v3125
      %3129 = vmatprep.subr.bf16.mxu0 0
      %3130 = vmatpush1.bf16.msra.mxu0 0
      %3131 = vmatprep.subr.bf16.mxu0 0
      %3132 = vmatpush1.bf16.msra.mxu0 0
      %3133 = vmatprep.subr.bf16.mxu0 0
      %3134 = vmatpush1.bf16.msra.mxu0 0
      %3135 = vmatprep.subr.bf16.mxu0 0
      %3136 = vmatpush1.bf16.msra.mxu0 0
      %3137 = vmatprep.subr.bf16.mxu0 0
      %3138 = vmatpush1.bf16.msra.mxu0 0
      %3139 = vmatprep.subr.bf16.mxu0 0
      %3140 = vmatpush1.bf16.msra.mxu0 0
      %3141 = vmatprep.subr.bf16.mxu0 0
      %3142 = vmatpush1.bf16.msra.mxu0 0
      %3143 = vmatprep.subr.bf16.mxu0 0
      %3144 = vmatpush1.bf16.msra.mxu0 0
      %3145 = vmatprep.subr.bf16.mxu0 0
      %3146 = vmatpush1.bf16.msra.mxu0 0
      %3147 = vmatprep.subr.bf16.mxu0 0
      %3148 = vmatpush1.bf16.msra.mxu0 0
      %3149 = vmatprep.subr.bf16.mxu0 0
      %3150 = vmatpush1.bf16.msra.mxu0 0
      %3151 = vmatprep.subr.bf16.mxu0 0
      %3152 = vmatpush1.bf16.msra.mxu0 0
      %3153 = vmatprep.subr.bf16.mxu0 0
      %3154 = vmatpush1.bf16.msra.mxu0 0
      %3155 = vmatprep.subr.bf16.mxu0 0
      %3156 = vmatpush1.bf16.msra.mxu0 0
      %3157 = vmatprep.subr.bf16.mxu0 0
      %3158 = vmatpush1.bf16.msra.mxu0 0
      %3159 = vmatprep.mubr.bf16.mxu0 0
      %3160 = vmatmul.mubr.bf16.gmra.mrb[0].mxu0 %v3077
      %v3161 = vpop.f32.mrb[0].mxu0
      %v3162 = vadd.f32 0.0, %v3161
      %v3163 = vpop.f32.mrb[0].mxu0
      %v3164 = vpop.f32.mrb[0].mxu0
      %v3165 = vadd.f32 0.0, %v3164
      %v3166 = vpop.f32.mrb[0].mxu0
      %3167 = vmatprep.mubr.bf16.mxu0 0
      %3168 = vmatmul.mubr.bf16.gmra.mrb[0].mxu0 %v3080
      %v3169 = vpop.f32.mrb[0].mxu0
      %v3170 = vadd.f32 0.0, %v3169
      %v3171 = vpop.f32.mrb[0].mxu0
      %v3172 = vpop.f32.mrb[0].mxu0
      %v3173 = vadd.f32 0.0, %v3172
      %v3174 = vpop.f32.mrb[0].mxu0
      %3175 = vmatprep.mubr.bf16.mxu0 0
      %3176 = vmatmul.mubr.bf16.gmra.mrb[0].mxu0 %v3083
      %v3177 = vpop.f32.mrb[0].mxu0
      %v3178 = vadd.f32 0.0, %v3177
      %v3179 = vpop.f32.mrb[0].mxu0
      %v3180 = vpop.f32.mrb[0].mxu0
      %v3181 = vadd.f32 0.0, %v3180
      %v3182 = vpop.f32.mrb[0].mxu0
      %3183 = vmatprep.mubr.bf16.mxu0 0
      %3184 = vmatmul.mubr.bf16.gmra.mrb[0].mxu0 %v3086
      %v3185 = vpop.f32.mrb[0].mxu0
      %v3186 = vadd.f32 0.0, %v3185
      %v3187 = vpop.f32.mrb[0].mxu0
      %v3188 = vpop.f32.mrb[0].mxu0
      %v3189 = vadd.f32 0.0, %v3188
      %v3190 = vpop.f32.mrb[0].mxu0
      %3191 = vmatprep.mubr.bf16.mxu0 0
      %3192 = vmatmul.mubr.bf16.gmra.mrb[0].mxu0 %v3089
      %v3193 = vpop.f32.mrb[0].mxu0
      %v3194 = vadd.f32 0.0, %v3193
      %v3195 = vpop.f32.mrb[0].mxu0
      %v3196 = vpop.f32.mrb[0].mxu0
      %v3197 = vadd.f32 0.0, %v3196
      %v3198 = vpop.f32.mrb[0].mxu0
      %3199 = vmatprep.mubr.bf16.mxu0 0
      %3200 = vmatmul.mubr.bf16.gmra.mrb[0].mxu0 %v3092
      %v3201 = vpop.f32.mrb[0].mxu0
      %v3202 = vadd.f32 0.0, %v3201
      %v3203 = vpop.f32.mrb[0].mxu0
      %v3204 = vpop.f32.mrb[0].mxu0
      %v3205 = vadd.f32 0.0, %v3204
      %v3206 = vpop.f32.mrb[0].mxu0
      %3207 = vmatprep.mubr.bf16.mxu0 0
      %3208 = vmatmul.mubr.bf16.gmra.mrb[0].mxu0 %v3095
      %v3209 = vpop.f32.mrb[0].mxu0
      %v3210 = vadd.f32 0.0, %v3209
      %v3211 = vpop.f32.mrb[0].mxu0
      %v3212 = vpop.f32.mrb[0].mxu0
      %v3213 = vadd.f32 0.0, %v3212
      %v3214 = vpop.f32.mrb[0].mxu0
      %3215 = vmatprep.mubr.bf16.mxu0 0
      %3216 = vmatmul.mubr.bf16.gmra.mrb[0].mxu0 %v3098
      %v3217 = vpop.f32.mrb[0].mxu0
      %v3218 = vadd.f32 0.0, %v3217
      %v3219 = vpop.f32.mrb[0].mxu0
      %v3220 = vpop.f32.mrb[0].mxu0
      %v3221 = vadd.f32 0.0, %v3220
      %v3222 = vpop.f32.mrb[0].mxu0
      %3223 = vmatprep.mubr.bf16.mxu0 0
      %3224 = vmatmul.mubr.bf16.gmra.mrb[0].mxu0 %v3101
      %v3225 = vpop.f32.mrb[0].mxu0
      %v3226 = vadd.f32 0.0, %v3225
      %v3227 = vpop.f32.mrb[0].mxu0
      %v3228 = vpop.f32.mrb[0].mxu0
      %v3229 = vadd.f32 0.0, %v3228
      %v3230 = vpop.f32.mrb[0].mxu0
      %3231 = vmatprep.mubr.bf16.mxu0 0
      %3232 = vmatmul.mubr.bf16.gmra.mrb[0].mxu0 %v3104
      %v3233 = vpop.f32.mrb[0].mxu0
      %v3234 = vadd.f32 0.0, %v3233
      %v3235 = vpop.f32.mrb[0].mxu0
      %v3236 = vpop.f32.mrb[0].mxu0
      %v3237 = vadd.f32 0.0, %v3236
      %v3238 = vpop.f32.mrb[0].mxu0
      %3239 = vmatprep.mubr.bf16.mxu0 0
      %3240 = vmatmul.mubr.bf16.gmra.mrb[0].mxu0 %v3107
      %v3241 = vpop.f32.mrb[0].mxu0
      %v3242 = vadd.f32 0.0, %v3241
      %v3243 = vpop.f32.mrb[0].mxu0
      %v3244 = vpop.f32.mrb[0].mxu0
      %v3245 = vadd.f32 0.0, %v3244
      %v3246 = vpop.f32.mrb[0].mxu0
      %3247 = vmatprep.mubr.bf16.mxu0 0
      %3248 = vmatmul.mubr.bf16.gmra.mrb[0].mxu0 %v3110
      %v3249 = vpop.f32.mrb[0].mxu0
      %v3250 = vadd.f32 0.0, %v3249
      %v3251 = vpop.f32.mrb[0].mxu0
      %v3252 = vpop.f32.mrb[0].mxu0
      %v3253 = vadd.f32 0.0, %v3252
      %v3254 = vpop.f32.mrb[0].mxu0
      %3255 = vmatprep.mubr.bf16.mxu0 0
      %3256 = vmatmul.mubr.bf16.gmra.mrb[0].mxu0 %v3113
      %v3257 = vpop.f32.mrb[0].mxu0
      %v3258 = vadd.f32 0.0, %v3257
      %v3259 = vpop.f32.mrb[0].mxu0
      %v3260 = vpop.f32.mrb[0].mxu0
      %v3261 = vadd.f32 0.0, %v3260
      %v3262 = vpop.f32.mrb[0].mxu0
      %3263 = vmatprep.mubr.bf16.mxu0 0
      %3264 = vmatmul.mubr.bf16.gmra.mrb[0].mxu0 %v3116
      %v3265 = vpop.f32.mrb[0].mxu0
      %v3266 = vadd.f32 0.0, %v3265
      %v3267 = vpop.f32.mrb[0].mxu0
      %v3268 = vpop.f32.mrb[0].mxu0
      %v3269 = vadd.f32 0.0, %v3268
      %v3270 = vpop.f32.mrb[0].mxu0
      %3271 = vmatprep.mubr.bf16.mxu0 0
      %3272 = vmatmul.mubr.bf16.gmra.mrb[0].mxu0 %v3119
      %v3273 = vpop.f32.mrb[0].mxu0
      %v3274 = vadd.f32 0.0, %v3273
      %v3275 = vpop.f32.mrb[0].mxu0
      %v3276 = vpop.f32.mrb[0].mxu0
      %v3277 = vadd.f32 0.0, %v3276
      %v3278 = vpop.f32.mrb[0].mxu0
      %3279 = vmatprep.mubr.bf16.mxu0 0
      %3280 = vmatmul.mubr.bf16.gmra.mrb[0].mxu0 %v3122
      %v3281 = vpop.f32.mrb[0].mxu0
      %v3282 = vadd.f32 0.0, %v3281
      %v3283 = vpop.f32.mrb[0].mxu0
      %v3284 = vpop.f32.mrb[0].mxu0
      %v3285 = vadd.f32 0.0, %v3284
      %v3286 = vpop.f32.mrb[0].mxu0
      %3287 = vdwg.mxu0
      %v3288 = vadd.f32 %v2994, %v3162
      %v3289 = vadd.f32 %v2995, %v3165
      %v3290 = vadd.f32 %v2996, %v3170
      %v3291 = vadd.f32 %v2997, %v3173
      %v3292 = vadd.f32 %v2998, %v3178
      %v3293 = vadd.f32 %v2999, %v3181
      %v3294 = vadd.f32 %v3000, %v3186
      %v3295 = vadd.f32 %v3001, %v3189
      %v3296 = vadd.f32 %v3002, %v3194
      %v3297 = vadd.f32 %v3003, %v3197
      %v3298 = vadd.f32 %v3004, %v3202
      %v3299 = vadd.f32 %v3005, %v3205
      %v3300 = vadd.f32 %v3006, %v3210
      %v3301 = vadd.f32 %v3007, %v3213
      %v3302 = vadd.f32 %v3008, %v3218
      %v3303 = vadd.f32 %v3009, %v3221
      %v3304 = vadd.f32 %v3010, %v3226
      %v3305 = vadd.f32 %v3011, %v3229
      %v3306 = vadd.f32 %v3012, %v3234
      %v3307 = vadd.f32 %v3013, %v3237
      %v3308 = vadd.f32 %v3014, %v3242
      %v3309 = vadd.f32 %v3015, %v3245
      %v3310 = vadd.f32 %v3016, %v3250
      %v3311 = vadd.f32 %v3017, %v3253
      %v3312 = vadd.f32 %v3018, %v3258
      %v3313 = vadd.f32 %v3019, %v3261
      %v3314 = vadd.f32 %v3020, %v3266
      %v3315 = vadd.f32 %v3021, %v3269
      %v3316 = vadd.f32 %v3022, %v3274
      %v3317 = vadd.f32 %v3023, %v3277
      %v3318 = vadd.f32 %v3024, %v3282
      %v3319 = vadd.f32 %v3025, %v3285
      %v3320 = vld [vmem:[%s2] sm:$0x1]
      %v3322 = vlaneseq
      %v3323 = vshrl.u32 %v3322, 7
      %v3324 = vsub.s32 0, %v3323
      %v3325 = vrot.slane %v3320, %v3324
      %v3327 = vadd.f32 %v3288, %v3325
      %v3328 = vadd.f32 %v3289, %v3325
      %v3329 = vadd.f32 %v3290, %v3325
      %v3330 = vadd.f32 %v3291, %v3325
      %v3331 = vadd.f32 %v3292, %v3325
      %v3332 = vadd.f32 %v3293, %v3325
      %v3333 = vadd.f32 %v3294, %v3325
      %v3334 = vadd.f32 %v3295, %v3325
      %v3335 = vadd.f32 %v3296, %v3325
      %v3336 = vadd.f32 %v3297, %v3325
      %v3337 = vadd.f32 %v3298, %v3325
      %v3338 = vadd.f32 %v3299, %v3325
      %v3339 = vadd.f32 %v3300, %v3325
      %v3340 = vadd.f32 %v3301, %v3325
      %v3341 = vadd.f32 %v3302, %v3325
      %v3342 = vadd.f32 %v3303, %v3325
      %v3343 = vadd.f32 %v3304, %v3325
      %v3344 = vadd.f32 %v3305, %v3325
      %v3345 = vadd.f32 %v3306, %v3325
      %v3346 = vadd.f32 %v3307, %v3325
      %v3347 = vadd.f32 %v3308, %v3325
      %v3348 = vadd.f32 %v3309, %v3325
      %v3349 = vadd.f32 %v3310, %v3325
      %v3350 = vadd.f32 %v3311, %v3325
      %v3351 = vadd.f32 %v3312, %v3325
      %v3352 = vadd.f32 %v3313, %v3325
      %v3353 = vadd.f32 %v3314, %v3325
      %v3354 = vadd.f32 %v3315, %v3325
      %v3355 = vadd.f32 %v3316, %v3325
      %v3356 = vadd.f32 %v3317, %v3325
      %v3357 = vadd.f32 %v3318, %v3325
      %v3358 = vadd.f32 %v3319, %v3325
      %v3359 = vmax.f32 %v3327, 0.0
      %v3360 = vmax.f32 %v3328, 0.0
      %v3361 = vmax.f32 %v3329, 0.0
      %v3362 = vmax.f32 %v3330, 0.0
      %v3363 = vmax.f32 %v3331, 0.0
      %v3364 = vmax.f32 %v3332, 0.0
      %v3365 = vmax.f32 %v3333, 0.0
      %v3366 = vmax.f32 %v3334, 0.0
      %v3367 = vmax.f32 %v3335, 0.0
      %v3368 = vmax.f32 %v3336, 0.0
      %v3369 = vmax.f32 %v3337, 0.0
      %v3370 = vmax.f32 %v3338, 0.0
      %v3371 = vmax.f32 %v3339, 0.0
      %v3372 = vmax.f32 %v3340, 0.0
      %v3373 = vmax.f32 %v3341, 0.0
      %v3374 = vmax.f32 %v3342, 0.0
      %v3375 = vmax.f32 %v3343, 0.0
      %v3376 = vmax.f32 %v3344, 0.0
      %v3377 = vmax.f32 %v3345, 0.0
      %v3378 = vmax.f32 %v3346, 0.0
      %v3379 = vmax.f32 %v3347, 0.0
      %v3380 = vmax.f32 %v3348, 0.0
      %v3381 = vmax.f32 %v3349, 0.0
      %v3382 = vmax.f32 %v3350, 0.0
      %v3383 = vmax.f32 %v3351, 0.0
      %v3384 = vmax.f32 %v3352, 0.0
      %v3385 = vmax.f32 %v3353, 0.0
      %v3386 = vmax.f32 %v3354, 0.0
      %v3387 = vmax.f32 %v3355, 0.0
      %v3388 = vmax.f32 %v3356, 0.0
      %v3389 = vmax.f32 %v3357, 0.0
      %v3390 = vmax.f32 %v3358, 0.0
      %s3391 = scalar_lea.vmem [#allocation3], 24
      %3392 = vst.msk [vmem:[%s3391 + $0x1] sm:$0xff] %vm579, %v3359
      %3393 = vst.msk [vmem:[%s3391 + $0x9] sm:$0xff] %vm579, %v3360
      %3394 = vst.msk [vmem:[%s3391 + $0x19] sm:$0xff] %vm579, %v3361
      %3395 = vst.msk [vmem:[%s3391 + $0x21] sm:$0xff] %vm579, %v3362
      %3396 = vst.msk [vmem:[%s3391 + $0x31] sm:$0xff] %vm579, %v3363
      %3397 = vst.msk [vmem:[%s3391 + $0x39] sm:$0xff] %vm579, %v3364
      %3398 = vst.msk [vmem:[%s3391 + $0x49] sm:$0xff] %vm579, %v3365
      %3399 = vst.msk [vmem:[%s3391 + $0x51] sm:$0xff] %vm579, %v3366
      %3400 = vst.msk [vmem:[%s3391 + $0x61] sm:$0xff] %vm579, %v3367
      %3401 = vst.msk [vmem:[%s3391 + $0x69] sm:$0xff] %vm579, %v3368
      %3402 = vst.msk [vmem:[%s3391 + $0x79] sm:$0xff] %vm579, %v3369
      %3403 = vst.msk [vmem:[%s3391 + $0x81] sm:$0xff] %vm579, %v3370
      %3404 = vst.msk [vmem:[%s3391 + $0x91] sm:$0xff] %vm579, %v3371
      %3405 = vst.msk [vmem:[%s3391 + $0x99] sm:$0xff] %vm579, %v3372
      %3406 = vst.msk [vmem:[%s3391 + $0xa9] sm:$0xff] %vm579, %v3373
      %3407 = vst.msk [vmem:[%s3391 + $0xb1] sm:$0xff] %vm579, %v3374
      %3408 = vst.msk [vmem:[%s3391 + $0xc1] sm:$0xff] %vm579, %v3375
      %3409 = vst.msk [vmem:[%s3391 + $0xc9] sm:$0xff] %vm579, %v3376
      %3410 = vst.msk [vmem:[%s3391 + $0xd9] sm:$0xff] %vm579, %v3377
      %3411 = vst.msk [vmem:[%s3391 + $0xe1] sm:$0xff] %vm579, %v3378
      %3412 = vst.msk [vmem:[%s3391 + $0xf1] sm:$0xff] %vm579, %v3379
      %3413 = vst.msk [vmem:[%s3391 + $0xf9] sm:$0xff] %vm579, %v3380
      %3414 = vst.msk [vmem:[%s3391 + $0x109] sm:$0xff] %vm579, %v3381
      %3415 = vst.msk [vmem:[%s3391 + $0x111] sm:$0xff] %vm579, %v3382
      %3416 = vst.msk [vmem:[%s3391 + $0x121] sm:$0xff] %vm579, %v3383
      %3417 = vst.msk [vmem:[%s3391 + $0x129] sm:$0xff] %vm579, %v3384
      %3418 = vst.msk [vmem:[%s3391 + $0x139] sm:$0xff] %vm579, %v3385
      %3419 = vst.msk [vmem:[%s3391 + $0x141] sm:$0xff] %vm579, %v3386
      %3420 = vst.msk [vmem:[%s3391 + $0x151] sm:$0xff] %vm579, %v3387
      %3421 = vst.msk [vmem:[%s3391 + $0x159] sm:$0xff] %vm579, %v3388
      %3422 = vst.msk [vmem:[%s3391 + $0x169] sm:$0xff] %vm579, %v3389
      %3423 = vst.msk [vmem:[%s3391 + $0x171] sm:$0xff] %vm579, %v3390
      %v3424 = vld [vmem:[#allocation3] sm:$0xff]
      %v3425 = vld [vmem:[#allocation3 + $0x8] sm:$0xff]
      %v3426 = vld [vmem:[#allocation3 + $0x30] sm:$0xff]
      %v3427 = vld [vmem:[#allocation3 + $0x38] sm:$0xff]
      %v3428 = vld [vmem:[#allocation3 + $0x60] sm:$0xff]
      %v3429 = vld [vmem:[#allocation3 + $0x68] sm:$0xff]
      %v3430 = vld [vmem:[#allocation3 + $0x90] sm:$0xff]
      %v3431 = vld [vmem:[#allocation3 + $0x98] sm:$0xff]
      %v3432 = vld [vmem:[#allocation3 + $0xc0] sm:$0xff]
      %v3433 = vld [vmem:[#allocation3 + $0xc8] sm:$0xff]
      %v3434 = vld [vmem:[#allocation3 + $0xf0] sm:$0xff]
      %v3435 = vld [vmem:[#allocation3 + $0xf8] sm:$0xff]
      %v3436 = vld [vmem:[#allocation3 + $0x120] sm:$0xff]
      %v3437 = vld [vmem:[#allocation3 + $0x128] sm:$0xff]
      %v3438 = vld [vmem:[#allocation3 + $0x150] sm:$0xff]
      %v3439 = vld [vmem:[#allocation3 + $0x158] sm:$0xff]
      %v3440 = vpack.c.bf16 %v3425, %v3424
      %v3441 = vpack.c.bf16 %v3427, %v3426
      %v3442 = vpack.c.bf16 %v3429, %v3428
      %v3443 = vpack.c.bf16 %v3431, %v3430
      %v3444 = vpack.c.bf16 %v3433, %v3432
      %v3445 = vpack.c.bf16 %v3435, %v3434
      %v3446 = vpack.c.bf16 %v3437, %v3436
      %v3447 = vpack.c.bf16 %v3439, %v3438
      %v3448 = vld [vmem:[%s3] sm:$0xf]
      %v3449 = vld [vmem:[#allocation3 + $0x1] sm:$0xff]
      %v3450 = vld [vmem:[#allocation3 + $0x9] sm:$0xff]
      %v3451 = vld [vmem:[#allocation3 + $0x31] sm:$0xff]
      %v3452 = vld [vmem:[#allocation3 + $0x39] sm:$0xff]
      %v3453 = vld [vmem:[#allocation3 + $0x61] sm:$0xff]
      %v3454 = vld [vmem:[#allocation3 + $0x69] sm:$0xff]
      %v3455 = vld [vmem:[#allocation3 + $0x91] sm:$0xff]
      %v3456 = vld [vmem:[#allocation3 + $0x99] sm:$0xff]
      %v3457 = vld [vmem:[#allocation3 + $0xc1] sm:$0xff]
      %v3458 = vld [vmem:[#allocation3 + $0xc9] sm:$0xff]
      %v3459 = vld [vmem:[#allocation3 + $0xf1] sm:$0xff]
      %v3460 = vld [vmem:[#allocation3 + $0xf9] sm:$0xff]
      %v3461 = vld [vmem:[#allocation3 + $0x121] sm:$0xff]
      %v3462 = vld [vmem:[#allocation3 + $0x129] sm:$0xff]
      %v3463 = vld [vmem:[#allocation3 + $0x151] sm:$0xff]
      %v3464 = vld [vmem:[#allocation3 + $0x159] sm:$0xff]
      %v3465 = vpack.c.bf16 %v3450, %v3449
      %v3466 = vpack.c.bf16 %v3452, %v3451
      %v3467 = vpack.c.bf16 %v3454, %v3453
      %v3468 = vpack.c.bf16 %v3456, %v3455
      %v3469 = vpack.c.bf16 %v3458, %v3457
      %v3470 = vpack.c.bf16 %v3460, %v3459
      %v3471 = vpack.c.bf16 %v3462, %v3461
      %v3472 = vpack.c.bf16 %v3464, %v3463
      %s3473 = scalar_lea.vmem %s3, 4
      %v3474 = vld [vmem:[%s3473] sm:$0xf]
      %v3476 = vsel %vm579, %v3465, 0
      %v3479 = vsel %vm579, %v3466, 0
      %v3482 = vsel %vm579, %v3467, 0
      %v3485 = vsel %vm579, %v3468, 0
      %v3488 = vsel %vm579, %v3469, 0
      %v3491 = vsel %vm579, %v3470, 0
      %v3494 = vsel %vm579, %v3471, 0
      %v3497 = vsel %vm579, %v3472, 0
      %vm3499 = vcmask 1043456
      %v3501 = vsel %vm3499, %v3474, 0
      %3503 = vmatprep.subr.bf16.mxu0 0
      %3504 = vmatpush1.bf16.msra.mxu0 %v3501
      %3505 = vmatprep.subr.bf16.mxu0 0
      %3506 = vmatpush1.bf16.msra.mxu0 0
      %3507 = vmatprep.subr.bf16.mxu0 0
      %3508 = vmatpush1.bf16.msra.mxu0 0
      %3509 = vmatprep.subr.bf16.mxu0 0
      %3510 = vmatpush1.bf16.msra.mxu0 0
      %3511 = vmatprep.subr.bf16.mxu0 0
      %3512 = vmatpush1.bf16.msra.mxu0 0
      %3513 = vmatprep.subr.bf16.mxu0 0
      %3514 = vmatpush1.bf16.msra.mxu0 0
      %3515 = vmatprep.subr.bf16.mxu0 0
      %3516 = vmatpush1.bf16.msra.mxu0 0
      %3517 = vmatprep.subr.bf16.mxu0 0
      %3518 = vmatpush1.bf16.msra.mxu0 0
      %3519 = vmatprep.subr.bf16.mxu0 0
      %3520 = vmatpush1.bf16.msra.mxu0 0
      %3521 = vmatprep.subr.bf16.mxu0 0
      %3522 = vmatpush1.bf16.msra.mxu0 0
      %3523 = vmatprep.subr.bf16.mxu0 0
      %3524 = vmatpush1.bf16.msra.mxu0 0
      %3525 = vmatprep.subr.bf16.mxu0 0
      %3526 = vmatpush1.bf16.msra.mxu0 0
      %3527 = vmatprep.subr.bf16.mxu0 0
      %3528 = vmatpush1.bf16.msra.mxu0 0
      %3529 = vmatprep.subr.bf16.mxu0 0
      %3530 = vmatpush1.bf16.msra.mxu0 0
      %3531 = vmatprep.subr.bf16.mxu0 0
      %3532 = vmatpush1.bf16.msra.mxu0 0
      %3533 = vmatprep.subr.bf16.mxu0 0
      %3534 = vmatpush1.bf16.msra.mxu0 0
      %3535 = vmatprep.mubr.bf16.mxu0 0
      %3536 = vmatmul.mubr.bf16.gmra.mrb[0].mxu0 %v3476
      %v3537 = vpop.f32.mrb[0].mxu0
      %v3538 = vadd.f32 0.0, %v3537
      %v3539 = vpop.f32.mrb[0].mxu0
      %v3540 = vpop.f32.mrb[0].mxu0
      %v3541 = vadd.f32 0.0, %v3540
      %v3542 = vpop.f32.mrb[0].mxu0
      %3543 = vmatprep.mubr.bf16.mxu0 0
      %3544 = vmatmul.mubr.bf16.gmra.mrb[0].mxu0 %v3479
      %v3545 = vpop.f32.mrb[0].mxu0
      %v3546 = vadd.f32 0.0, %v3545
      %v3547 = vpop.f32.mrb[0].mxu0
      %v3548 = vpop.f32.mrb[0].mxu0
      %v3549 = vadd.f32 0.0, %v3548
      %v3550 = vpop.f32.mrb[0].mxu0
      %3551 = vmatprep.mubr.bf16.mxu0 0
      %3552 = vmatmul.mubr.bf16.gmra.mrb[0].mxu0 %v3482
      %v3553 = vpop.f32.mrb[0].mxu0
      %v3554 = vadd.f32 0.0, %v3553
      %v3555 = vpop.f32.mrb[0].mxu0
      %v3556 = vpop.f32.mrb[0].mxu0
      %v3557 = vadd.f32 0.0, %v3556
      %v3558 = vpop.f32.mrb[0].mxu0
      %3559 = vmatprep.mubr.bf16.mxu0 0
      %3560 = vmatmul.mubr.bf16.gmra.mrb[0].mxu0 %v3485
      %v3561 = vpop.f32.mrb[0].mxu0
      %v3562 = vadd.f32 0.0, %v3561
      %v3563 = vpop.f32.mrb[0].mxu0
      %v3564 = vpop.f32.mrb[0].mxu0
      %v3565 = vadd.f32 0.0, %v3564
      %v3566 = vpop.f32.mrb[0].mxu0
      %3567 = vmatprep.mubr.bf16.mxu0 0
      %3568 = vmatmul.mubr.bf16.gmra.mrb[0].mxu0 %v3488
      %v3569 = vpop.f32.mrb[0].mxu0
      %v3570 = vadd.f32 0.0, %v3569
      %v3571 = vpop.f32.mrb[0].mxu0
      %v3572 = vpop.f32.mrb[0].mxu0
      %v3573 = vadd.f32 0.0, %v3572
      %v3574 = vpop.f32.mrb[0].mxu0
      %3575 = vmatprep.mubr.bf16.mxu0 0
      %3576 = vmatmul.mubr.bf16.gmra.mrb[0].mxu0 %v3491
      %v3577 = vpop.f32.mrb[0].mxu0
      %v3578 = vadd.f32 0.0, %v3577
      %v3579 = vpop.f32.mrb[0].mxu0
      %v3580 = vpop.f32.mrb[0].mxu0
      %v3581 = vadd.f32 0.0, %v3580
      %v3582 = vpop.f32.mrb[0].mxu0
      %3583 = vmatprep.mubr.bf16.mxu0 0
      %3584 = vmatmul.mubr.bf16.gmra.mrb[0].mxu0 %v3494
      %v3585 = vpop.f32.mrb[0].mxu0
      %v3586 = vadd.f32 0.0, %v3585
      %v3587 = vpop.f32.mrb[0].mxu0
      %v3588 = vpop.f32.mrb[0].mxu0
      %v3589 = vadd.f32 0.0, %v3588
      %v3590 = vpop.f32.mrb[0].mxu0
      %3591 = vmatprep.mubr.bf16.mxu0 0
      %3592 = vmatmul.mubr.bf16.gmra.mrb[0].mxu0 %v3497
      %v3593 = vpop.f32.mrb[0].mxu0
      %v3594 = vadd.f32 0.0, %v3593
      %v3595 = vpop.f32.mrb[0].mxu0
      %v3596 = vpop.f32.mrb[0].mxu0
      %v3597 = vadd.f32 0.0, %v3596
      %v3598 = vpop.f32.mrb[0].mxu0
      %3599 = vdwg.mxu0
      %v3601 = vsel %vm579, %v3440, 0
      %v3604 = vsel %vm579, %v3441, 0
      %v3607 = vsel %vm579, %v3442, 0
      %v3610 = vsel %vm579, %v3443, 0
      %v3613 = vsel %vm579, %v3444, 0
      %v3616 = vsel %vm579, %v3445, 0
      %v3619 = vsel %vm579, %v3446, 0
      %v3622 = vsel %vm579, %v3447, 0
      %v3625 = vsel %vm3499, %v3448, 0
      %3627 = vmatprep.subr.bf16.mxu0 0
      %3628 = vmatpush1.bf16.msra.mxu0 %v3625
      %3629 = vmatprep.subr.bf16.mxu0 0
      %3630 = vmatpush1.bf16.msra.mxu0 0
      %3631 = vmatprep.subr.bf16.mxu0 0
      %3632 = vmatpush1.bf16.msra.mxu0 0
      %3633 = vmatprep.subr.bf16.mxu0 0
      %3634 = vmatpush1.bf16.msra.mxu0 0
      %3635 = vmatprep.subr.bf16.mxu0 0
      %3636 = vmatpush1.bf16.msra.mxu0 0
      %3637 = vmatprep.subr.bf16.mxu0 0
      %3638 = vmatpush1.bf16.msra.mxu0 0
      %3639 = vmatprep.subr.bf16.mxu0 0
      %3640 = vmatpush1.bf16.msra.mxu0 0
      %3641 = vmatprep.subr.bf16.mxu0 0
      %3642 = vmatpush1.bf16.msra.mxu0 0
      %3643 = vmatprep.subr.bf16.mxu0 0
      %3644 = vmatpush1.bf16.msra.mxu0 0
      %3645 = vmatprep.subr.bf16.mxu0 0
      %3646 = vmatpush1.bf16.msra.mxu0 0
      %3647 = vmatprep.subr.bf16.mxu0 0
      %3648 = vmatpush1.bf16.msra.mxu0 0
      %3649 = vmatprep.subr.bf16.mxu0 0
      %3650 = vmatpush1.bf16.msra.mxu0 0
      %3651 = vmatprep.subr.bf16.mxu0 0
      %3652 = vmatpush1.bf16.msra.mxu0 0
      %3653 = vmatprep.subr.bf16.mxu0 0
      %3654 = vmatpush1.bf16.msra.mxu0 0
      %3655 = vmatprep.subr.bf16.mxu0 0
      %3656 = vmatpush1.bf16.msra.mxu0 0
      %3657 = vmatprep.subr.bf16.mxu0 0
      %3658 = vmatpush1.bf16.msra.mxu0 0
      %3659 = vmatprep.mubr.bf16.mxu0 0
      %3660 = vmatmul.mubr.bf16.gmra.mrb[0].mxu0 %v3601
      %v3661 = vpop.f32.mrb[0].mxu0
      %v3662 = vadd.f32 %v3538, %v3661
      %v3663 = vpop.f32.mrb[0].mxu0
      %v3664 = vpop.f32.mrb[0].mxu0
      %v3665 = vadd.f32 %v3541, %v3664
      %v3666 = vpop.f32.mrb[0].mxu0
      %3667 = vmatprep.mubr.bf16.mxu0 0
      %3668 = vmatmul.mubr.bf16.gmra.mrb[0].mxu0 %v3604
      %v3669 = vpop.f32.mrb[0].mxu0
      %v3670 = vadd.f32 %v3546, %v3669
      %v3671 = vpop.f32.mrb[0].mxu0
      %v3672 = vpop.f32.mrb[0].mxu0
      %v3673 = vadd.f32 %v3549, %v3672
      %v3674 = vpop.f32.mrb[0].mxu0
      %3675 = vmatprep.mubr.bf16.mxu0 0
      %3676 = vmatmul.mubr.bf16.gmra.mrb[0].mxu0 %v3607
      %v3677 = vpop.f32.mrb[0].mxu0
      %v3678 = vadd.f32 %v3554, %v3677
      %v3679 = vpop.f32.mrb[0].mxu0
      %v3680 = vpop.f32.mrb[0].mxu0
      %v3681 = vadd.f32 %v3557, %v3680
      %v3682 = vpop.f32.mrb[0].mxu0
      %3683 = vmatprep.mubr.bf16.mxu0 0
      %3684 = vmatmul.mubr.bf16.gmra.mrb[0].mxu0 %v3610
      %v3685 = vpop.f32.mrb[0].mxu0
      %v3686 = vadd.f32 %v3562, %v3685
      %v3687 = vpop.f32.mrb[0].mxu0
      %v3688 = vpop.f32.mrb[0].mxu0
      %v3689 = vadd.f32 %v3565, %v3688
      %v3690 = vpop.f32.mrb[0].mxu0
      %3691 = vmatprep.mubr.bf16.mxu0 0
      %3692 = vmatmul.mubr.bf16.gmra.mrb[0].mxu0 %v3613
      %v3693 = vpop.f32.mrb[0].mxu0
      %v3694 = vadd.f32 %v3570, %v3693
      %v3695 = vpop.f32.mrb[0].mxu0
      %v3696 = vpop.f32.mrb[0].mxu0
      %v3697 = vadd.f32 %v3573, %v3696
      %v3698 = vpop.f32.mrb[0].mxu0
      %3699 = vmatprep.mubr.bf16.mxu0 0
      %3700 = vmatmul.mubr.bf16.gmra.mrb[0].mxu0 %v3616
      %v3701 = vpop.f32.mrb[0].mxu0
      %v3702 = vadd.f32 %v3578, %v3701
      %v3703 = vpop.f32.mrb[0].mxu0
      %v3704 = vpop.f32.mrb[0].mxu0
      %v3705 = vadd.f32 %v3581, %v3704
      %v3706 = vpop.f32.mrb[0].mxu0
      %3707 = vmatprep.mubr.bf16.mxu0 0
      %3708 = vmatmul.mubr.bf16.gmra.mrb[0].mxu0 %v3619
      %v3709 = vpop.f32.mrb[0].mxu0
      %v3710 = vadd.f32 %v3586, %v3709
      %v3711 = vpop.f32.mrb[0].mxu0
      %v3712 = vpop.f32.mrb[0].mxu0
      %v3713 = vadd.f32 %v3589, %v3712
      %v3714 = vpop.f32.mrb[0].mxu0
      %3715 = vmatprep.mubr.bf16.mxu0 0
      %3716 = vmatmul.mubr.bf16.gmra.mrb[0].mxu0 %v3622
      %v3717 = vpop.f32.mrb[0].mxu0
      %v3718 = vadd.f32 %v3594, %v3717
      %v3719 = vpop.f32.mrb[0].mxu0
      %v3720 = vpop.f32.mrb[0].mxu0
      %v3721 = vadd.f32 %v3597, %v3720
      %v3722 = vpop.f32.mrb[0].mxu0
      %3723 = vdwg.mxu0
      %v3724 = vld [vmem:[#allocation3 + $0x2] sm:$0xff]
      %v3725 = vld [vmem:[#allocation3 + $0xa] sm:$0xff]
      %v3726 = vld [vmem:[#allocation3 + $0x32] sm:$0xff]
      %v3727 = vld [vmem:[#allocation3 + $0x3a] sm:$0xff]
      %v3728 = vld [vmem:[#allocation3 + $0x62] sm:$0xff]
      %v3729 = vld [vmem:[#allocation3 + $0x6a] sm:$0xff]
      %v3730 = vld [vmem:[#allocation3 + $0x92] sm:$0xff]
      %v3731 = vld [vmem:[#allocation3 + $0x9a] sm:$0xff]
      %v3732 = vld [vmem:[#allocation3 + $0xc2] sm:$0xff]
      %v3733 = vld [vmem:[#allocation3 + $0xca] sm:$0xff]
      %v3734 = vld [vmem:[#allocation3 + $0xf2] sm:$0xff]
      %v3735 = vld [vmem:[#allocation3 + $0xfa] sm:$0xff]
      %v3736 = vld [vmem:[#allocation3 + $0x122] sm:$0xff]
      %v3737 = vld [vmem:[#allocation3 + $0x12a] sm:$0xff]
      %v3738 = vld [vmem:[#allocation3 + $0x152] sm:$0xff]
      %v3739 = vld [vmem:[#allocation3 + $0x15a] sm:$0xff]
      %v3740 = vpack.c.bf16 %v3725, %v3724
      %v3741 = vpack.c.bf16 %v3727, %v3726
      %v3742 = vpack.c.bf16 %v3729, %v3728
      %v3743 = vpack.c.bf16 %v3731, %v3730
      %v3744 = vpack.c.bf16 %v3733, %v3732
      %v3745 = vpack.c.bf16 %v3735, %v3734
      %v3746 = vpack.c.bf16 %v3737, %v3736
      %v3747 = vpack.c.bf16 %v3739, %v3738
      %s3748 = scalar_lea.vmem %s3, 8
      %v3749 = vld [vmem:[%s3748] sm:$0xf]
      %v3751 = vsel %vm579, %v3740, 0
      %v3754 = vsel %vm579, %v3741, 0
      %v3757 = vsel %vm579, %v3742, 0
      %v3760 = vsel %vm579, %v3743, 0
      %v3763 = vsel %vm579, %v3744, 0
      %v3766 = vsel %vm579, %v3745, 0
      %v3769 = vsel %vm579, %v3746, 0
      %v3772 = vsel %vm579, %v3747, 0
      %v3775 = vsel %vm3499, %v3749, 0
      %3777 = vmatprep.subr.bf16.mxu0 0
      %3778 = vmatpush1.bf16.msra.mxu0 %v3775
      %3779 = vmatprep.subr.bf16.mxu0 0
      %3780 = vmatpush1.bf16.msra.mxu0 0
      %3781 = vmatprep.subr.bf16.mxu0 0
      %3782 = vmatpush1.bf16.msra.mxu0 0
      %3783 = vmatprep.subr.bf16.mxu0 0
      %3784 = vmatpush1.bf16.msra.mxu0 0
      %3785 = vmatprep.subr.bf16.mxu0 0
      %3786 = vmatpush1.bf16.msra.mxu0 0
      %3787 = vmatprep.subr.bf16.mxu0 0
      %3788 = vmatpush1.bf16.msra.mxu0 0
      %3789 = vmatprep.subr.bf16.mxu0 0
      %3790 = vmatpush1.bf16.msra.mxu0 0
      %3791 = vmatprep.subr.bf16.mxu0 0
      %3792 = vmatpush1.bf16.msra.mxu0 0
      %3793 = vmatprep.subr.bf16.mxu0 0
      %3794 = vmatpush1.bf16.msra.mxu0 0
      %3795 = vmatprep.subr.bf16.mxu0 0
      %3796 = vmatpush1.bf16.msra.mxu0 0
      %3797 = vmatprep.subr.bf16.mxu0 0
      %3798 = vmatpush1.bf16.msra.mxu0 0
      %3799 = vmatprep.subr.bf16.mxu0 0
      %3800 = vmatpush1.bf16.msra.mxu0 0
      %3801 = vmatprep.subr.bf16.mxu0 0
      %3802 = vmatpush1.bf16.msra.mxu0 0
      %3803 = vmatprep.subr.bf16.mxu0 0
      %3804 = vmatpush1.bf16.msra.mxu0 0
      %3805 = vmatprep.subr.bf16.mxu0 0
      %3806 = vmatpush1.bf16.msra.mxu0 0
      %3807 = vmatprep.subr.bf16.mxu0 0
      %3808 = vmatpush1.bf16.msra.mxu0 0
      %3809 = vmatprep.mubr.bf16.mxu0 0
      %3810 = vmatmul.mubr.bf16.gmra.mrb[0].mxu0 %v3751
      %v3811 = vpop.f32.mrb[0].mxu0
      %v3812 = vadd.f32 0.0, %v3811
      %v3813 = vpop.f32.mrb[0].mxu0
      %v3814 = vpop.f32.mrb[0].mxu0
      %v3815 = vadd.f32 0.0, %v3814
      %v3816 = vpop.f32.mrb[0].mxu0
      %3817 = vmatprep.mubr.bf16.mxu0 0
      %3818 = vmatmul.mubr.bf16.gmra.mrb[0].mxu0 %v3754
      %v3819 = vpop.f32.mrb[0].mxu0
      %v3820 = vadd.f32 0.0, %v3819
      %v3821 = vpop.f32.mrb[0].mxu0
      %v3822 = vpop.f32.mrb[0].mxu0
      %v3823 = vadd.f32 0.0, %v3822
      %v3824 = vpop.f32.mrb[0].mxu0
      %3825 = vmatprep.mubr.bf16.mxu0 0
      %3826 = vmatmul.mubr.bf16.gmra.mrb[0].mxu0 %v3757
      %v3827 = vpop.f32.mrb[0].mxu0
      %v3828 = vadd.f32 0.0, %v3827
      %v3829 = vpop.f32.mrb[0].mxu0
      %v3830 = vpop.f32.mrb[0].mxu0
      %v3831 = vadd.f32 0.0, %v3830
      %v3832 = vpop.f32.mrb[0].mxu0
      %3833 = vmatprep.mubr.bf16.mxu0 0
      %3834 = vmatmul.mubr.bf16.gmra.mrb[0].mxu0 %v3760
      %v3835 = vpop.f32.mrb[0].mxu0
      %v3836 = vadd.f32 0.0, %v3835
      %v3837 = vpop.f32.mrb[0].mxu0
      %v3838 = vpop.f32.mrb[0].mxu0
      %v3839 = vadd.f32 0.0, %v3838
      %v3840 = vpop.f32.mrb[0].mxu0
      %3841 = vmatprep.mubr.bf16.mxu0 0
      %3842 = vmatmul.mubr.bf16.gmra.mrb[0].mxu0 %v3763
      %v3843 = vpop.f32.mrb[0].mxu0
      %v3844 = vadd.f32 0.0, %v3843
      %v3845 = vpop.f32.mrb[0].mxu0
      %v3846 = vpop.f32.mrb[0].mxu0
      %v3847 = vadd.f32 0.0, %v3846
      %v3848 = vpop.f32.mrb[0].mxu0
      %3849 = vmatprep.mubr.bf16.mxu0 0
      %3850 = vmatmul.mubr.bf16.gmra.mrb[0].mxu0 %v3766
      %v3851 = vpop.f32.mrb[0].mxu0
      %v3852 = vadd.f32 0.0, %v3851
      %v3853 = vpop.f32.mrb[0].mxu0
      %v3854 = vpop.f32.mrb[0].mxu0
      %v3855 = vadd.f32 0.0, %v3854
      %v3856 = vpop.f32.mrb[0].mxu0
      %3857 = vmatprep.mubr.bf16.mxu0 0
      %3858 = vmatmul.mubr.bf16.gmra.mrb[0].mxu0 %v3769
      %v3859 = vpop.f32.mrb[0].mxu0
      %v3860 = vadd.f32 0.0, %v3859
      %v3861 = vpop.f32.mrb[0].mxu0
      %v3862 = vpop.f32.mrb[0].mxu0
      %v3863 = vadd.f32 0.0, %v3862
      %v3864 = vpop.f32.mrb[0].mxu0
      %3865 = vmatprep.mubr.bf16.mxu0 0
      %3866 = vmatmul.mubr.bf16.gmra.mrb[0].mxu0 %v3772
      %v3867 = vpop.f32.mrb[0].mxu0
      %v3868 = vadd.f32 0.0, %v3867
      %v3869 = vpop.f32.mrb[0].mxu0
      %v3870 = vpop.f32.mrb[0].mxu0
      %v3871 = vadd.f32 0.0, %v3870
      %v3872 = vpop.f32.mrb[0].mxu0
      %3873 = vdwg.mxu0
      %v3874 = vadd.f32 %v3662, %v3812
      %v3875 = vadd.f32 %v3665, %v3815
      %v3876 = vadd.f32 %v3670, %v3820
      %v3877 = vadd.f32 %v3673, %v3823
      %v3878 = vadd.f32 %v3678, %v3828
      %v3879 = vadd.f32 %v3681, %v3831
      %v3880 = vadd.f32 %v3686, %v3836
      %v3881 = vadd.f32 %v3689, %v3839
      %v3882 = vadd.f32 %v3694, %v3844
      %v3883 = vadd.f32 %v3697, %v3847
      %v3884 = vadd.f32 %v3702, %v3852
      %v3885 = vadd.f32 %v3705, %v3855
      %v3886 = vadd.f32 %v3710, %v3860
      %v3887 = vadd.f32 %v3713, %v3863
      %v3888 = vadd.f32 %v3718, %v3868
      %v3889 = vadd.f32 %v3721, %v3871
      %v3890 = vld [vmem:[%s3391] sm:$0xff]
      %v3891 = vld [vmem:[%s3391 + $0x8] sm:$0xff]
      %v3892 = vld [vmem:[%s3391 + $0x30] sm:$0xff]
      %v3893 = vld [vmem:[%s3391 + $0x38] sm:$0xff]
      %v3894 = vld [vmem:[%s3391 + $0x60] sm:$0xff]
      %v3895 = vld [vmem:[%s3391 + $0x68] sm:$0xff]
      %v3896 = vld [vmem:[%s3391 + $0x90] sm:$0xff]
      %v3897 = vld [vmem:[%s3391 + $0x98] sm:$0xff]
      %v3898 = vld [vmem:[%s3391 + $0xc0] sm:$0xff]
      %v3899 = vld [vmem:[%s3391 + $0xc8] sm:$0xff]
      %v3900 = vld [vmem:[%s3391 + $0xf0] sm:$0xff]
      %v3901 = vld [vmem:[%s3391 + $0xf8] sm:$0xff]
      %v3902 = vld [vmem:[%s3391 + $0x120] sm:$0xff]
      %v3903 = vld [vmem:[%s3391 + $0x128] sm:$0xff]
      %v3904 = vld [vmem:[%s3391 + $0x150] sm:$0xff]
      %v3905 = vld [vmem:[%s3391 + $0x158] sm:$0xff]
      %v3906 = vpack.c.bf16 %v3891, %v3890
      %v3907 = vpack.c.bf16 %v3893, %v3892
      %v3908 = vpack.c.bf16 %v3895, %v3894
      %v3909 = vpack.c.bf16 %v3897, %v3896
      %v3910 = vpack.c.bf16 %v3899, %v3898
      %v3911 = vpack.c.bf16 %v3901, %v3900
      %v3912 = vpack.c.bf16 %v3903, %v3902
      %v3913 = vpack.c.bf16 %v3905, %v3904
      %s3914 = scalar_lea.vmem %s3, 12
      %v3915 = vld [vmem:[%s3914] sm:$0xf]
      %v3917 = vsel %vm579, %v3906, 0
      %v3920 = vsel %vm579, %v3907, 0
      %v3923 = vsel %vm579, %v3908, 0
      %v3926 = vsel %vm579, %v3909, 0
      %v3929 = vsel %vm579, %v3910, 0
      %v3932 = vsel %vm579, %v3911, 0
      %v3935 = vsel %vm579, %v3912, 0
      %v3938 = vsel %vm579, %v3913, 0
      %v3941 = vsel %vm3499, %v3915, 0
      %3943 = vmatprep.subr.bf16.mxu0 0
      %3944 = vmatpush1.bf16.msra.mxu0 %v3941
      %3945 = vmatprep.subr.bf16.mxu0 0
      %3946 = vmatpush1.bf16.msra.mxu0 0
      %3947 = vmatprep.subr.bf16.mxu0 0
      %3948 = vmatpush1.bf16.msra.mxu0 0
      %3949 = vmatprep.subr.bf16.mxu0 0
      %3950 = vmatpush1.bf16.msra.mxu0 0
      %3951 = vmatprep.subr.bf16.mxu0 0
      %3952 = vmatpush1.bf16.msra.mxu0 0
      %3953 = vmatprep.subr.bf16.mxu0 0
      %3954 = vmatpush1.bf16.msra.mxu0 0
      %3955 = vmatprep.subr.bf16.mxu0 0
      %3956 = vmatpush1.bf16.msra.mxu0 0
      %3957 = vmatprep.subr.bf16.mxu0 0
      %3958 = vmatpush1.bf16.msra.mxu0 0
      %3959 = vmatprep.subr.bf16.mxu0 0
      %3960 = vmatpush1.bf16.msra.mxu0 0
      %3961 = vmatprep.subr.bf16.mxu0 0
      %3962 = vmatpush1.bf16.msra.mxu0 0
      %3963 = vmatprep.subr.bf16.mxu0 0
      %3964 = vmatpush1.bf16.msra.mxu0 0
      %3965 = vmatprep.subr.bf16.mxu0 0
      %3966 = vmatpush1.bf16.msra.mxu0 0
      %3967 = vmatprep.subr.bf16.mxu0 0
      %3968 = vmatpush1.bf16.msra.mxu0 0
      %3969 = vmatprep.subr.bf16.mxu0 0
      %3970 = vmatpush1.bf16.msra.mxu0 0
      %3971 = vmatprep.subr.bf16.mxu0 0
      %3972 = vmatpush1.bf16.msra.mxu0 0
      %3973 = vmatprep.subr.bf16.mxu0 0
      %3974 = vmatpush1.bf16.msra.mxu0 0
      %3975 = vmatprep.mubr.bf16.mxu0 0
      %3976 = vmatmul.mubr.bf16.gmra.mrb[0].mxu0 %v3917
      %v3977 = vpop.f32.mrb[0].mxu0
      %v3978 = vadd.f32 0.0, %v3977
      %v3979 = vpop.f32.mrb[0].mxu0
      %v3980 = vpop.f32.mrb[0].mxu0
      %v3981 = vadd.f32 0.0, %v3980
      %v3982 = vpop.f32.mrb[0].mxu0
      %3983 = vmatprep.mubr.bf16.mxu0 0
      %3984 = vmatmul.mubr.bf16.gmra.mrb[0].mxu0 %v3920
      %v3985 = vpop.f32.mrb[0].mxu0
      %v3986 = vadd.f32 0.0, %v3985
      %v3987 = vpop.f32.mrb[0].mxu0
      %v3988 = vpop.f32.mrb[0].mxu0
      %v3989 = vadd.f32 0.0, %v3988
      %v3990 = vpop.f32.mrb[0].mxu0
      %3991 = vmatprep.mubr.bf16.mxu0 0
      %3992 = vmatmul.mubr.bf16.gmra.mrb[0].mxu0 %v3923
      %v3993 = vpop.f32.mrb[0].mxu0
      %v3994 = vadd.f32 0.0, %v3993
      %v3995 = vpop.f32.mrb[0].mxu0
      %v3996 = vpop.f32.mrb[0].mxu0
      %v3997 = vadd.f32 0.0, %v3996
      %v3998 = vpop.f32.mrb[0].mxu0
      %3999 = vmatprep.mubr.bf16.mxu0 0
      %4000 = vmatmul.mubr.bf16.gmra.mrb[0].mxu0 %v3926
      %v4001 = vpop.f32.mrb[0].mxu0
      %v4002 = vadd.f32 0.0, %v4001
      %v4003 = vpop.f32.mrb[0].mxu0
      %v4004 = vpop.f32.mrb[0].mxu0
      %v4005 = vadd.f32 0.0, %v4004
      %v4006 = vpop.f32.mrb[0].mxu0
      %4007 = vmatprep.mubr.bf16.mxu0 0
      %4008 = vmatmul.mubr.bf16.gmra.mrb[0].mxu0 %v3929
      %v4009 = vpop.f32.mrb[0].mxu0
      %v4010 = vadd.f32 0.0, %v4009
      %v4011 = vpop.f32.mrb[0].mxu0
      %v4012 = vpop.f32.mrb[0].mxu0
      %v4013 = vadd.f32 0.0, %v4012
      %v4014 = vpop.f32.mrb[0].mxu0
      %4015 = vmatprep.mubr.bf16.mxu0 0
      %4016 = vmatmul.mubr.bf16.gmra.mrb[0].mxu0 %v3932
      %v4017 = vpop.f32.mrb[0].mxu0
      %v4018 = vadd.f32 0.0, %v4017
      %v4019 = vpop.f32.mrb[0].mxu0
      %v4020 = vpop.f32.mrb[0].mxu0
      %v4021 = vadd.f32 0.0, %v4020
      %v4022 = vpop.f32.mrb[0].mxu0
      %4023 = vmatprep.mubr.bf16.mxu0 0
      %4024 = vmatmul.mubr.bf16.gmra.mrb[0].mxu0 %v3935
      %v4025 = vpop.f32.mrb[0].mxu0
      %v4026 = vadd.f32 0.0, %v4025
      %v4027 = vpop.f32.mrb[0].mxu0
      %v4028 = vpop.f32.mrb[0].mxu0
      %v4029 = vadd.f32 0.0, %v4028
      %v4030 = vpop.f32.mrb[0].mxu0
      %4031 = vmatprep.mubr.bf16.mxu0 0
      %4032 = vmatmul.mubr.bf16.gmra.mrb[0].mxu0 %v3938
      %v4033 = vpop.f32.mrb[0].mxu0
      %v4034 = vadd.f32 0.0, %v4033
      %v4035 = vpop.f32.mrb[0].mxu0
      %v4036 = vpop.f32.mrb[0].mxu0
      %v4037 = vadd.f32 0.0, %v4036
      %v4038 = vpop.f32.mrb[0].mxu0
      %4039 = vdwg.mxu0
      %v4040 = vadd.f32 %v3874, %v3978
      %v4041 = vadd.f32 %v3875, %v3981
      %v4042 = vadd.f32 %v3876, %v3986
      %v4043 = vadd.f32 %v3877, %v3989
      %v4044 = vadd.f32 %v3878, %v3994
      %v4045 = vadd.f32 %v3879, %v3997
      %v4046 = vadd.f32 %v3880, %v4002
      %v4047 = vadd.f32 %v3881, %v4005
      %v4048 = vadd.f32 %v3882, %v4010
      %v4049 = vadd.f32 %v3883, %v4013
      %v4050 = vadd.f32 %v3884, %v4018
      %v4051 = vadd.f32 %v3885, %v4021
      %v4052 = vadd.f32 %v3886, %v4026
      %v4053 = vadd.f32 %v3887, %v4029
      %v4054 = vadd.f32 %v3888, %v4034
      %v4055 = vadd.f32 %v3889, %v4037
      %v4056 = vld [vmem:[%s3391 + $0x1] sm:$0xff]
      %v4057 = vld [vmem:[%s3391 + $0x9] sm:$0xff]
      %v4058 = vld [vmem:[%s3391 + $0x31] sm:$0xff]
      %v4059 = vld [vmem:[%s3391 + $0x39] sm:$0xff]
      %v4060 = vld [vmem:[%s3391 + $0x61] sm:$0xff]
      %v4061 = vld [vmem:[%s3391 + $0x69] sm:$0xff]
      %v4062 = vld [vmem:[%s3391 + $0x91] sm:$0xff]
      %v4063 = vld [vmem:[%s3391 + $0x99] sm:$0xff]
      %v4064 = vld [vmem:[%s3391 + $0xc1] sm:$0xff]
      %v4065 = vld [vmem:[%s3391 + $0xc9] sm:$0xff]
      %v4066 = vld [vmem:[%s3391 + $0xf1] sm:$0xff]
      %v4067 = vld [vmem:[%s3391 + $0xf9] sm:$0xff]
      %v4068 = vld [vmem:[%s3391 + $0x121] sm:$0xff]
      %v4069 = vld [vmem:[%s3391 + $0x129] sm:$0xff]
      %v4070 = vld [vmem:[%s3391 + $0x151] sm:$0xff]
      %v4071 = vld [vmem:[%s3391 + $0x159] sm:$0xff]
      %v4072 = vpack.c.bf16 %v4057, %v4056
      %v4073 = vpack.c.bf16 %v4059, %v4058
      %v4074 = vpack.c.bf16 %v4061, %v4060
      %v4075 = vpack.c.bf16 %v4063, %v4062
      %v4076 = vpack.c.bf16 %v4065, %v4064
      %v4077 = vpack.c.bf16 %v4067, %v4066
      %v4078 = vpack.c.bf16 %v4069, %v4068
      %v4079 = vpack.c.bf16 %v4071, %v4070
      %s4080 = scalar_lea.vmem %s3, 16
      %v4081 = vld [vmem:[%s4080] sm:$0xf]
      %v4083 = vsel %vm579, %v4072, 0
      %v4086 = vsel %vm579, %v4073, 0
      %v4089 = vsel %vm579, %v4074, 0
      %v4092 = vsel %vm579, %v4075, 0
      %v4095 = vsel %vm579, %v4076, 0
      %v4098 = vsel %vm579, %v4077, 0
      %v4101 = vsel %vm579, %v4078, 0
      %v4104 = vsel %vm579, %v4079, 0
      %v4107 = vsel %vm3499, %v4081, 0
      %4109 = vmatprep.subr.bf16.mxu0 0
      %4110 = vmatpush1.bf16.msra.mxu0 %v4107
      %4111 = vmatprep.subr.bf16.mxu0 0
      %4112 = vmatpush1.bf16.msra.mxu0 0
      %4113 = vmatprep.subr.bf16.mxu0 0
      %4114 = vmatpush1.bf16.msra.mxu0 0
      %4115 = vmatprep.subr.bf16.mxu0 0
      %4116 = vmatpush1.bf16.msra.mxu0 0
      %4117 = vmatprep.subr.bf16.mxu0 0
      %4118 = vmatpush1.bf16.msra.mxu0 0
      %4119 = vmatprep.subr.bf16.mxu0 0
      %4120 = vmatpush1.bf16.msra.mxu0 0
      %4121 = vmatprep.subr.bf16.mxu0 0
      %4122 = vmatpush1.bf16.msra.mxu0 0
      %4123 = vmatprep.subr.bf16.mxu0 0
      %4124 = vmatpush1.bf16.msra.mxu0 0
      %4125 = vmatprep.subr.bf16.mxu0 0
      %4126 = vmatpush1.bf16.msra.mxu0 0
      %4127 = vmatprep.subr.bf16.mxu0 0
      %4128 = vmatpush1.bf16.msra.mxu0 0
      %4129 = vmatprep.subr.bf16.mxu0 0
      %4130 = vmatpush1.bf16.msra.mxu0 0
      %4131 = vmatprep.subr.bf16.mxu0 0
      %4132 = vmatpush1.bf16.msra.mxu0 0
      %4133 = vmatprep.subr.bf16.mxu0 0
      %4134 = vmatpush1.bf16.msra.mxu0 0
      %4135 = vmatprep.subr.bf16.mxu0 0
      %4136 = vmatpush1.bf16.msra.mxu0 0
      %4137 = vmatprep.subr.bf16.mxu0 0
      %4138 = vmatpush1.bf16.msra.mxu0 0
      %4139 = vmatprep.subr.bf16.mxu0 0
      %4140 = vmatpush1.bf16.msra.mxu0 0
      %4141 = vmatprep.mubr.bf16.mxu0 0
      %4142 = vmatmul.mubr.bf16.gmra.mrb[0].mxu0 %v4083
      %v4143 = vpop.f32.mrb[0].mxu0
      %v4144 = vadd.f32 0.0, %v4143
      %v4145 = vpop.f32.mrb[0].mxu0
      %v4146 = vpop.f32.mrb[0].mxu0
      %v4147 = vadd.f32 0.0, %v4146
      %v4148 = vpop.f32.mrb[0].mxu0
      %4149 = vmatprep.mubr.bf16.mxu0 0
      %4150 = vmatmul.mubr.bf16.gmra.mrb[0].mxu0 %v4086
      %v4151 = vpop.f32.mrb[0].mxu0
      %v4152 = vadd.f32 0.0, %v4151
      %v4153 = vpop.f32.mrb[0].mxu0
      %v4154 = vpop.f32.mrb[0].mxu0
      %v4155 = vadd.f32 0.0, %v4154
      %v4156 = vpop.f32.mrb[0].mxu0
      %4157 = vmatprep.mubr.bf16.mxu0 0
      %4158 = vmatmul.mubr.bf16.gmra.mrb[0].mxu0 %v4089
      %v4159 = vpop.f32.mrb[0].mxu0
      %v4160 = vadd.f32 0.0, %v4159
      %v4161 = vpop.f32.mrb[0].mxu0
      %v4162 = vpop.f32.mrb[0].mxu0
      %v4163 = vadd.f32 0.0, %v4162
      %v4164 = vpop.f32.mrb[0].mxu0
      %4165 = vmatprep.mubr.bf16.mxu0 0
      %4166 = vmatmul.mubr.bf16.gmra.mrb[0].mxu0 %v4092
      %v4167 = vpop.f32.mrb[0].mxu0
      %v4168 = vadd.f32 0.0, %v4167
      %v4169 = vpop.f32.mrb[0].mxu0
      %v4170 = vpop.f32.mrb[0].mxu0
      %v4171 = vadd.f32 0.0, %v4170
      %v4172 = vpop.f32.mrb[0].mxu0
      %4173 = vmatprep.mubr.bf16.mxu0 0
      %4174 = vmatmul.mubr.bf16.gmra.mrb[0].mxu0 %v4095
      %v4175 = vpop.f32.mrb[0].mxu0
      %v4176 = vadd.f32 0.0, %v4175
      %v4177 = vpop.f32.mrb[0].mxu0
      %v4178 = vpop.f32.mrb[0].mxu0
      %v4179 = vadd.f32 0.0, %v4178
      %v4180 = vpop.f32.mrb[0].mxu0
      %4181 = vmatprep.mubr.bf16.mxu0 0
      %4182 = vmatmul.mubr.bf16.gmra.mrb[0].mxu0 %v4098
      %v4183 = vpop.f32.mrb[0].mxu0
      %v4184 = vadd.f32 0.0, %v4183
      %v4185 = vpop.f32.mrb[0].mxu0
      %v4186 = vpop.f32.mrb[0].mxu0
      %v4187 = vadd.f32 0.0, %v4186
      %v4188 = vpop.f32.mrb[0].mxu0
      %4189 = vmatprep.mubr.bf16.mxu0 0
      %4190 = vmatmul.mubr.bf16.gmra.mrb[0].mxu0 %v4101
      %v4191 = vpop.f32.mrb[0].mxu0
      %v4192 = vadd.f32 0.0, %v4191
      %v4193 = vpop.f32.mrb[0].mxu0
      %v4194 = vpop.f32.mrb[0].mxu0
      %v4195 = vadd.f32 0.0, %v4194
      %v4196 = vpop.f32.mrb[0].mxu0
      %4197 = vmatprep.mubr.bf16.mxu0 0
      %4198 = vmatmul.mubr.bf16.gmra.mrb[0].mxu0 %v4104
      %v4199 = vpop.f32.mrb[0].mxu0
      %v4200 = vadd.f32 0.0, %v4199
      %v4201 = vpop.f32.mrb[0].mxu0
      %v4202 = vpop.f32.mrb[0].mxu0
      %v4203 = vadd.f32 0.0, %v4202
      %v4204 = vpop.f32.mrb[0].mxu0
      %4205 = vdwg.mxu0
      %v4206 = vadd.f32 %v4040, %v4144
      %v4207 = vadd.f32 %v4041, %v4147
      %v4208 = vadd.f32 %v4042, %v4152
      %v4209 = vadd.f32 %v4043, %v4155
      %v4210 = vadd.f32 %v4044, %v4160
      %v4211 = vadd.f32 %v4045, %v4163
      %v4212 = vadd.f32 %v4046, %v4168
      %v4213 = vadd.f32 %v4047, %v4171
      %v4214 = vadd.f32 %v4048, %v4176
      %v4215 = vadd.f32 %v4049, %v4179
      %v4216 = vadd.f32 %v4050, %v4184
      %v4217 = vadd.f32 %v4051, %v4187
      %v4218 = vadd.f32 %v4052, %v4192
      %v4219 = vadd.f32 %v4053, %v4195
      %v4220 = vadd.f32 %v4054, %v4200
      %v4221 = vadd.f32 %v4055, %v4203
      %v4222 = vld [vmem:[%s3391 + $0x2] sm:$0xff]
      %v4223 = vld [vmem:[%s3391 + $0xa] sm:$0xff]
      %v4224 = vld [vmem:[%s3391 + $0x32] sm:$0xff]
      %v4225 = vld [vmem:[%s3391 + $0x3a] sm:$0xff]
      %v4226 = vld [vmem:[%s3391 + $0x62] sm:$0xff]
      %v4227 = vld [vmem:[%s3391 + $0x6a] sm:$0xff]
      %v4228 = vld [vmem:[%s3391 + $0x92] sm:$0xff]
      %v4229 = vld [vmem:[%s3391 + $0x9a] sm:$0xff]
      %v4230 = vld [vmem:[%s3391 + $0xc2] sm:$0xff]
      %v4231 = vld [vmem:[%s3391 + $0xca] sm:$0xff]
      %v4232 = vld [vmem:[%s3391 + $0xf2] sm:$0xff]
      %v4233 = vld [vmem:[%s3391 + $0xfa] sm:$0xff]
      %v4234 = vld [vmem:[%s3391 + $0x122] sm:$0xff]
      %v4235 = vld [vmem:[%s3391 + $0x12a] sm:$0xff]
      %v4236 = vld [vmem:[%s3391 + $0x152] sm:$0xff]
      %v4237 = vld [vmem:[%s3391 + $0x15a] sm:$0xff]
      %v4238 = vpack.c.bf16 %v4223, %v4222
      %v4239 = vpack.c.bf16 %v4225, %v4224
      %v4240 = vpack.c.bf16 %v4227, %v4226
      %v4241 = vpack.c.bf16 %v4229, %v4228
      %v4242 = vpack.c.bf16 %v4231, %v4230
      %v4243 = vpack.c.bf16 %v4233, %v4232
      %v4244 = vpack.c.bf16 %v4235, %v4234
      %v4245 = vpack.c.bf16 %v4237, %v4236
      %s4246 = scalar_lea.vmem %s3, 20
      %v4247 = vld [vmem:[%s4246] sm:$0xf]
      %v4249 = vsel %vm579, %v4238, 0
      %v4252 = vsel %vm579, %v4239, 0
      %v4255 = vsel %vm579, %v4240, 0
      %v4258 = vsel %vm579, %v4241, 0
      %v4261 = vsel %vm579, %v4242, 0
      %v4264 = vsel %vm579, %v4243, 0
      %v4267 = vsel %vm579, %v4244, 0
      %v4270 = vsel %vm579, %v4245, 0
      %v4273 = vsel %vm3499, %v4247, 0
      %4275 = vmatprep.subr.bf16.mxu0 0
      %4276 = vmatpush1.bf16.msra.mxu0 %v4273
      %4277 = vmatprep.subr.bf16.mxu0 0
      %4278 = vmatpush1.bf16.msra.mxu0 0
      %4279 = vmatprep.subr.bf16.mxu0 0
      %4280 = vmatpush1.bf16.msra.mxu0 0
      %4281 = vmatprep.subr.bf16.mxu0 0
      %4282 = vmatpush1.bf16.msra.mxu0 0
      %4283 = vmatprep.subr.bf16.mxu0 0
      %4284 = vmatpush1.bf16.msra.mxu0 0
      %4285 = vmatprep.subr.bf16.mxu0 0
      %4286 = vmatpush1.bf16.msra.mxu0 0
      %4287 = vmatprep.subr.bf16.mxu0 0
      %4288 = vmatpush1.bf16.msra.mxu0 0
      %4289 = vmatprep.subr.bf16.mxu0 0
      %4290 = vmatpush1.bf16.msra.mxu0 0
      %4291 = vmatprep.subr.bf16.mxu0 0
      %4292 = vmatpush1.bf16.msra.mxu0 0
      %4293 = vmatprep.subr.bf16.mxu0 0
      %4294 = vmatpush1.bf16.msra.mxu0 0
      %4295 = vmatprep.subr.bf16.mxu0 0
      %4296 = vmatpush1.bf16.msra.mxu0 0
      %4297 = vmatprep.subr.bf16.mxu0 0
      %4298 = vmatpush1.bf16.msra.mxu0 0
      %4299 = vmatprep.subr.bf16.mxu0 0
      %4300 = vmatpush1.bf16.msra.mxu0 0
      %4301 = vmatprep.subr.bf16.mxu0 0
      %4302 = vmatpush1.bf16.msra.mxu0 0
      %4303 = vmatprep.subr.bf16.mxu0 0
      %4304 = vmatpush1.bf16.msra.mxu0 0
      %4305 = vmatprep.subr.bf16.mxu0 0
      %4306 = vmatpush1.bf16.msra.mxu0 0
      %4307 = vmatprep.mubr.bf16.mxu0 0
      %4308 = vmatmul.mubr.bf16.gmra.mrb[0].mxu0 %v4249
      %v4309 = vpop.f32.mrb[0].mxu0
      %v4310 = vadd.f32 0.0, %v4309
      %v4311 = vpop.f32.mrb[0].mxu0
      %v4312 = vpop.f32.mrb[0].mxu0
      %v4313 = vadd.f32 0.0, %v4312
      %v4314 = vpop.f32.mrb[0].mxu0
      %4315 = vmatprep.mubr.bf16.mxu0 0
      %4316 = vmatmul.mubr.bf16.gmra.mrb[0].mxu0 %v4252
      %v4317 = vpop.f32.mrb[0].mxu0
      %v4318 = vadd.f32 0.0, %v4317
      %v4319 = vpop.f32.mrb[0].mxu0
      %v4320 = vpop.f32.mrb[0].mxu0
      %v4321 = vadd.f32 0.0, %v4320
      %v4322 = vpop.f32.mrb[0].mxu0
      %4323 = vmatprep.mubr.bf16.mxu0 0
      %4324 = vmatmul.mubr.bf16.gmra.mrb[0].mxu0 %v4255
      %v4325 = vpop.f32.mrb[0].mxu0
      %v4326 = vadd.f32 0.0, %v4325
      %v4327 = vpop.f32.mrb[0].mxu0
      %v4328 = vpop.f32.mrb[0].mxu0
      %v4329 = vadd.f32 0.0, %v4328
      %v4330 = vpop.f32.mrb[0].mxu0
      %4331 = vmatprep.mubr.bf16.mxu0 0
      %4332 = vmatmul.mubr.bf16.gmra.mrb[0].mxu0 %v4258
      %v4333 = vpop.f32.mrb[0].mxu0
      %v4334 = vadd.f32 0.0, %v4333
      %v4335 = vpop.f32.mrb[0].mxu0
      %v4336 = vpop.f32.mrb[0].mxu0
      %v4337 = vadd.f32 0.0, %v4336
      %v4338 = vpop.f32.mrb[0].mxu0
      %4339 = vmatprep.mubr.bf16.mxu0 0
      %4340 = vmatmul.mubr.bf16.gmra.mrb[0].mxu0 %v4261
      %v4341 = vpop.f32.mrb[0].mxu0
      %v4342 = vadd.f32 0.0, %v4341
      %v4343 = vpop.f32.mrb[0].mxu0
      %v4344 = vpop.f32.mrb[0].mxu0
      %v4345 = vadd.f32 0.0, %v4344
      %v4346 = vpop.f32.mrb[0].mxu0
      %4347 = vmatprep.mubr.bf16.mxu0 0
      %4348 = vmatmul.mubr.bf16.gmra.mrb[0].mxu0 %v4264
      %v4349 = vpop.f32.mrb[0].mxu0
      %v4350 = vadd.f32 0.0, %v4349
      %v4351 = vpop.f32.mrb[0].mxu0
      %v4352 = vpop.f32.mrb[0].mxu0
      %v4353 = vadd.f32 0.0, %v4352
      %v4354 = vpop.f32.mrb[0].mxu0
      %4355 = vmatprep.mubr.bf16.mxu0 0
      %4356 = vmatmul.mubr.bf16.gmra.mrb[0].mxu0 %v4267
      %v4357 = vpop.f32.mrb[0].mxu0
      %v4358 = vadd.f32 0.0, %v4357
      %v4359 = vpop.f32.mrb[0].mxu0
      %v4360 = vpop.f32.mrb[0].mxu0
      %v4361 = vadd.f32 0.0, %v4360
      %v4362 = vpop.f32.mrb[0].mxu0
      %4363 = vmatprep.mubr.bf16.mxu0 0
      %4364 = vmatmul.mubr.bf16.gmra.mrb[0].mxu0 %v4270
      %v4365 = vpop.f32.mrb[0].mxu0
      %v4366 = vadd.f32 0.0, %v4365
      %v4367 = vpop.f32.mrb[0].mxu0
      %v4368 = vpop.f32.mrb[0].mxu0
      %v4369 = vadd.f32 0.0, %v4368
      %v4370 = vpop.f32.mrb[0].mxu0
      %4371 = vdwg.mxu0
      %v4372 = vadd.f32 %v4206, %v4310
      %v4373 = vadd.f32 %v4207, %v4313
      %v4374 = vadd.f32 %v4208, %v4318
      %v4375 = vadd.f32 %v4209, %v4321
      %v4376 = vadd.f32 %v4210, %v4326
      %v4377 = vadd.f32 %v4211, %v4329
      %v4378 = vadd.f32 %v4212, %v4334
      %v4379 = vadd.f32 %v4213, %v4337
      %v4380 = vadd.f32 %v4214, %v4342
      %v4381 = vadd.f32 %v4215, %v4345
      %v4382 = vadd.f32 %v4216, %v4350
      %v4383 = vadd.f32 %v4217, %v4353
      %v4384 = vadd.f32 %v4218, %v4358
      %v4385 = vadd.f32 %v4219, %v4361
      %v4386 = vadd.f32 %v4220, %v4366
      %v4387 = vadd.f32 %v4221, %v4369
      %s4388 = scalar_lea.vmem [#allocation3], 48
      %v4389 = vld [vmem:[%s4388] sm:$0xff]
      %v4390 = vld [vmem:[%s4388 + $0x8] sm:$0xff]
      %v4391 = vld [vmem:[%s4388 + $0x30] sm:$0xff]
      %v4392 = vld [vmem:[%s4388 + $0x38] sm:$0xff]
      %v4393 = vld [vmem:[%s4388 + $0x60] sm:$0xff]
      %v4394 = vld [vmem:[%s4388 + $0x68] sm:$0xff]
      %v4395 = vld [vmem:[%s4388 + $0x90] sm:$0xff]
      %v4396 = vld [vmem:[%s4388 + $0x98] sm:$0xff]
      %v4397 = vld [vmem:[%s4388 + $0xc0] sm:$0xff]
      %v4398 = vld [vmem:[%s4388 + $0xc8] sm:$0xff]
      %v4399 = vld [vmem:[%s4388 + $0xf0] sm:$0xff]
      %v4400 = vld [vmem:[%s4388 + $0xf8] sm:$0xff]
      %v4401 = vld [vmem:[%s4388 + $0x120] sm:$0xff]
      %v4402 = vld [vmem:[%s4388 + $0x128] sm:$0xff]
      %v4403 = vld [vmem:[%s4388 + $0x150] sm:$0xff]
      %v4404 = vld [vmem:[%s4388 + $0x158] sm:$0xff]
      %v4405 = vpack.c.bf16 %v4390, %v4389
      %v4406 = vpack.c.bf16 %v4392, %v4391
      %v4407 = vpack.c.bf16 %v4394, %v4393
      %v4408 = vpack.c.bf16 %v4396, %v4395
      %v4409 = vpack.c.bf16 %v4398, %v4397
      %v4410 = vpack.c.bf16 %v4400, %v4399
      %v4411 = vpack.c.bf16 %v4402, %v4401
      %v4412 = vpack.c.bf16 %v4404, %v4403
      %s4413 = scalar_lea.vmem %s3, 24
      %v4414 = vld [vmem:[%s4413] sm:$0xf]
      %v4416 = vsel %vm579, %v4405, 0
      %v4419 = vsel %vm579, %v4406, 0
      %v4422 = vsel %vm579, %v4407, 0
      %v4425 = vsel %vm579, %v4408, 0
      %v4428 = vsel %vm579, %v4409, 0
      %v4431 = vsel %vm579, %v4410, 0
      %v4434 = vsel %vm579, %v4411, 0
      %v4437 = vsel %vm579, %v4412, 0
      %v4440 = vsel %vm3499, %v4414, 0
      %4442 = vmatprep.subr.bf16.mxu0 0
      %4443 = vmatpush1.bf16.msra.mxu0 %v4440
      %4444 = vmatprep.subr.bf16.mxu0 0
      %4445 = vmatpush1.bf16.msra.mxu0 0
      %4446 = vmatprep.subr.bf16.mxu0 0
      %4447 = vmatpush1.bf16.msra.mxu0 0
      %4448 = vmatprep.subr.bf16.mxu0 0
      %4449 = vmatpush1.bf16.msra.mxu0 0
      %4450 = vmatprep.subr.bf16.mxu0 0
      %4451 = vmatpush1.bf16.msra.mxu0 0
      %4452 = vmatprep.subr.bf16.mxu0 0
      %4453 = vmatpush1.bf16.msra.mxu0 0
      %4454 = vmatprep.subr.bf16.mxu0 0
      %4455 = vmatpush1.bf16.msra.mxu0 0
      %4456 = vmatprep.subr.bf16.mxu0 0
      %4457 = vmatpush1.bf16.msra.mxu0 0
      %4458 = vmatprep.subr.bf16.mxu0 0
      %4459 = vmatpush1.bf16.msra.mxu0 0
      %4460 = vmatprep.subr.bf16.mxu0 0
      %4461 = vmatpush1.bf16.msra.mxu0 0
      %4462 = vmatprep.subr.bf16.mxu0 0
      %4463 = vmatpush1.bf16.msra.mxu0 0
      %4464 = vmatprep.subr.bf16.mxu0 0
      %4465 = vmatpush1.bf16.msra.mxu0 0
      %4466 = vmatprep.subr.bf16.mxu0 0
      %4467 = vmatpush1.bf16.msra.mxu0 0
      %4468 = vmatprep.subr.bf16.mxu0 0
      %4469 = vmatpush1.bf16.msra.mxu0 0
      %4470 = vmatprep.subr.bf16.mxu0 0
      %4471 = vmatpush1.bf16.msra.mxu0 0
      %4472 = vmatprep.subr.bf16.mxu0 0
      %4473 = vmatpush1.bf16.msra.mxu0 0
      %4474 = vmatprep.mubr.bf16.mxu0 0
      %4475 = vmatmul.mubr.bf16.gmra.mrb[0].mxu0 %v4416
      %v4476 = vpop.f32.mrb[0].mxu0
      %v4477 = vadd.f32 0.0, %v4476
      %v4478 = vpop.f32.mrb[0].mxu0
      %v4479 = vpop.f32.mrb[0].mxu0
      %v4480 = vadd.f32 0.0, %v4479
      %v4481 = vpop.f32.mrb[0].mxu0
      %4482 = vmatprep.mubr.bf16.mxu0 0
      %4483 = vmatmul.mubr.bf16.gmra.mrb[0].mxu0 %v4419
      %v4484 = vpop.f32.mrb[0].mxu0
      %v4485 = vadd.f32 0.0, %v4484
      %v4486 = vpop.f32.mrb[0].mxu0
      %v4487 = vpop.f32.mrb[0].mxu0
      %v4488 = vadd.f32 0.0, %v4487
      %v4489 = vpop.f32.mrb[0].mxu0
      %4490 = vmatprep.mubr.bf16.mxu0 0
      %4491 = vmatmul.mubr.bf16.gmra.mrb[0].mxu0 %v4422
      %v4492 = vpop.f32.mrb[0].mxu0
      %v4493 = vadd.f32 0.0, %v4492
      %v4494 = vpop.f32.mrb[0].mxu0
      %v4495 = vpop.f32.mrb[0].mxu0
      %v4496 = vadd.f32 0.0, %v4495
      %v4497 = vpop.f32.mrb[0].mxu0
      %4498 = vmatprep.mubr.bf16.mxu0 0
      %4499 = vmatmul.mubr.bf16.gmra.mrb[0].mxu0 %v4425
      %v4500 = vpop.f32.mrb[0].mxu0
      %v4501 = vadd.f32 0.0, %v4500
      %v4502 = vpop.f32.mrb[0].mxu0
      %v4503 = vpop.f32.mrb[0].mxu0
      %v4504 = vadd.f32 0.0, %v4503
      %v4505 = vpop.f32.mrb[0].mxu0
      %4506 = vmatprep.mubr.bf16.mxu0 0
      %4507 = vmatmul.mubr.bf16.gmra.mrb[0].mxu0 %v4428
      %v4508 = vpop.f32.mrb[0].mxu0
      %v4509 = vadd.f32 0.0, %v4508
      %v4510 = vpop.f32.mrb[0].mxu0
      %v4511 = vpop.f32.mrb[0].mxu0
      %v4512 = vadd.f32 0.0, %v4511
      %v4513 = vpop.f32.mrb[0].mxu0
      %4514 = vmatprep.mubr.bf16.mxu0 0
      %4515 = vmatmul.mubr.bf16.gmra.mrb[0].mxu0 %v4431
      %v4516 = vpop.f32.mrb[0].mxu0
      %v4517 = vadd.f32 0.0, %v4516
      %v4518 = vpop.f32.mrb[0].mxu0
      %v4519 = vpop.f32.mrb[0].mxu0
      %v4520 = vadd.f32 0.0, %v4519
      %v4521 = vpop.f32.mrb[0].mxu0
      %4522 = vmatprep.mubr.bf16.mxu0 0
      %4523 = vmatmul.mubr.bf16.gmra.mrb[0].mxu0 %v4434
      %v4524 = vpop.f32.mrb[0].mxu0
      %v4525 = vadd.f32 0.0, %v4524
      %v4526 = vpop.f32.mrb[0].mxu0
      %v4527 = vpop.f32.mrb[0].mxu0
      %v4528 = vadd.f32 0.0, %v4527
      %v4529 = vpop.f32.mrb[0].mxu0
      %4530 = vmatprep.mubr.bf16.mxu0 0
      %4531 = vmatmul.mubr.bf16.gmra.mrb[0].mxu0 %v4437
      %v4532 = vpop.f32.mrb[0].mxu0
      %v4533 = vadd.f32 0.0, %v4532
      %v4534 = vpop.f32.mrb[0].mxu0
      %v4535 = vpop.f32.mrb[0].mxu0
      %v4536 = vadd.f32 0.0, %v4535
      %v4537 = vpop.f32.mrb[0].mxu0
      %4538 = vdwg.mxu0
      %v4539 = vadd.f32 %v4372, %v4477
      %v4540 = vadd.f32 %v4373, %v4480
      %v4541 = vadd.f32 %v4374, %v4485
      %v4542 = vadd.f32 %v4375, %v4488
      %v4543 = vadd.f32 %v4376, %v4493
      %v4544 = vadd.f32 %v4377, %v4496
      %v4545 = vadd.f32 %v4378, %v4501
      %v4546 = vadd.f32 %v4379, %v4504
      %v4547 = vadd.f32 %v4380, %v4509
      %v4548 = vadd.f32 %v4381, %v4512
      %v4549 = vadd.f32 %v4382, %v4517
      %v4550 = vadd.f32 %v4383, %v4520
      %v4551 = vadd.f32 %v4384, %v4525
      %v4552 = vadd.f32 %v4385, %v4528
      %v4553 = vadd.f32 %v4386, %v4533
      %v4554 = vadd.f32 %v4387, %v4536
      %v4555 = vld [vmem:[%s4388 + $0x1] sm:$0xff]
      %v4556 = vld [vmem:[%s4388 + $0x9] sm:$0xff]
      %v4557 = vld [vmem:[%s4388 + $0x31] sm:$0xff]
      %v4558 = vld [vmem:[%s4388 + $0x39] sm:$0xff]
      %v4559 = vld [vmem:[%s4388 + $0x61] sm:$0xff]
      %v4560 = vld [vmem:[%s4388 + $0x69] sm:$0xff]
      %v4561 = vld [vmem:[%s4388 + $0x91] sm:$0xff]
      %v4562 = vld [vmem:[%s4388 + $0x99] sm:$0xff]
      %v4563 = vld [vmem:[%s4388 + $0xc1] sm:$0xff]
      %v4564 = vld [vmem:[%s4388 + $0xc9] sm:$0xff]
      %v4565 = vld [vmem:[%s4388 + $0xf1] sm:$0xff]
      %v4566 = vld [vmem:[%s4388 + $0xf9] sm:$0xff]
      %v4567 = vld [vmem:[%s4388 + $0x121] sm:$0xff]
      %v4568 = vld [vmem:[%s4388 + $0x129] sm:$0xff]
      %v4569 = vld [vmem:[%s4388 + $0x151] sm:$0xff]
      %v4570 = vld [vmem:[%s4388 + $0x159] sm:$0xff]
      %v4571 = vpack.c.bf16 %v4556, %v4555
      %v4572 = vpack.c.bf16 %v4558, %v4557
      %v4573 = vpack.c.bf16 %v4560, %v4559
      %v4574 = vpack.c.bf16 %v4562, %v4561
      %v4575 = vpack.c.bf16 %v4564, %v4563
      %v4576 = vpack.c.bf16 %v4566, %v4565
      %v4577 = vpack.c.bf16 %v4568, %v4567
      %v4578 = vpack.c.bf16 %v4570, %v4569
      %s4579 = scalar_lea.vmem %s3, 28
      %v4580 = vld [vmem:[%s4579] sm:$0xf]
      %v4582 = vsel %vm579, %v4571, 0
      %v4585 = vsel %vm579, %v4572, 0
      %v4588 = vsel %vm579, %v4573, 0
      %v4591 = vsel %vm579, %v4574, 0
      %v4594 = vsel %vm579, %v4575, 0
      %v4597 = vsel %vm579, %v4576, 0
      %v4600 = vsel %vm579, %v4577, 0
      %v4603 = vsel %vm579, %v4578, 0
      %v4606 = vsel %vm3499, %v4580, 0
      %4608 = vmatprep.subr.bf16.mxu0 0
      %4609 = vmatpush1.bf16.msra.mxu0 %v4606
      %4610 = vmatprep.subr.bf16.mxu0 0
      %4611 = vmatpush1.bf16.msra.mxu0 0
      %4612 = vmatprep.subr.bf16.mxu0 0
      %4613 = vmatpush1.bf16.msra.mxu0 0
      %4614 = vmatprep.subr.bf16.mxu0 0
      %4615 = vmatpush1.bf16.msra.mxu0 0
      %4616 = vmatprep.subr.bf16.mxu0 0
      %4617 = vmatpush1.bf16.msra.mxu0 0
      %4618 = vmatprep.subr.bf16.mxu0 0
      %4619 = vmatpush1.bf16.msra.mxu0 0
      %4620 = vmatprep.subr.bf16.mxu0 0
      %4621 = vmatpush1.bf16.msra.mxu0 0
      %4622 = vmatprep.subr.bf16.mxu0 0
      %4623 = vmatpush1.bf16.msra.mxu0 0
      %4624 = vmatprep.subr.bf16.mxu0 0
      %4625 = vmatpush1.bf16.msra.mxu0 0
      %4626 = vmatprep.subr.bf16.mxu0 0
      %4627 = vmatpush1.bf16.msra.mxu0 0
      %4628 = vmatprep.subr.bf16.mxu0 0
      %4629 = vmatpush1.bf16.msra.mxu0 0
      %4630 = vmatprep.subr.bf16.mxu0 0
      %4631 = vmatpush1.bf16.msra.mxu0 0
      %4632 = vmatprep.subr.bf16.mxu0 0
      %4633 = vmatpush1.bf16.msra.mxu0 0
      %4634 = vmatprep.subr.bf16.mxu0 0
      %4635 = vmatpush1.bf16.msra.mxu0 0
      %4636 = vmatprep.subr.bf16.mxu0 0
      %4637 = vmatpush1.bf16.msra.mxu0 0
      %4638 = vmatprep.subr.bf16.mxu0 0
      %4639 = vmatpush1.bf16.msra.mxu0 0
      %4640 = vmatprep.mubr.bf16.mxu0 0
      %4641 = vmatmul.mubr.bf16.gmra.mrb[0].mxu0 %v4582
      %v4642 = vpop.f32.mrb[0].mxu0
      %v4643 = vadd.f32 0.0, %v4642
      %v4644 = vpop.f32.mrb[0].mxu0
      %v4645 = vpop.f32.mrb[0].mxu0
      %v4646 = vadd.f32 0.0, %v4645
      %v4647 = vpop.f32.mrb[0].mxu0
      %4648 = vmatprep.mubr.bf16.mxu0 0
      %4649 = vmatmul.mubr.bf16.gmra.mrb[0].mxu0 %v4585
      %v4650 = vpop.f32.mrb[0].mxu0
      %v4651 = vadd.f32 0.0, %v4650
      %v4652 = vpop.f32.mrb[0].mxu0
      %v4653 = vpop.f32.mrb[0].mxu0
      %v4654 = vadd.f32 0.0, %v4653
      %v4655 = vpop.f32.mrb[0].mxu0
      %4656 = vmatprep.mubr.bf16.mxu0 0
      %4657 = vmatmul.mubr.bf16.gmra.mrb[0].mxu0 %v4588
      %v4658 = vpop.f32.mrb[0].mxu0
      %v4659 = vadd.f32 0.0, %v4658
      %v4660 = vpop.f32.mrb[0].mxu0
      %v4661 = vpop.f32.mrb[0].mxu0
      %v4662 = vadd.f32 0.0, %v4661
      %v4663 = vpop.f32.mrb[0].mxu0
      %4664 = vmatprep.mubr.bf16.mxu0 0
      %4665 = vmatmul.mubr.bf16.gmra.mrb[0].mxu0 %v4591
      %v4666 = vpop.f32.mrb[0].mxu0
      %v4667 = vadd.f32 0.0, %v4666
      %v4668 = vpop.f32.mrb[0].mxu0
      %v4669 = vpop.f32.mrb[0].mxu0
      %v4670 = vadd.f32 0.0, %v4669
      %v4671 = vpop.f32.mrb[0].mxu0
      %4672 = vmatprep.mubr.bf16.mxu0 0
      %4673 = vmatmul.mubr.bf16.gmra.mrb[0].mxu0 %v4594
      %v4674 = vpop.f32.mrb[0].mxu0
      %v4675 = vadd.f32 0.0, %v4674
      %v4676 = vpop.f32.mrb[0].mxu0
      %v4677 = vpop.f32.mrb[0].mxu0
      %v4678 = vadd.f32 0.0, %v4677
      %v4679 = vpop.f32.mrb[0].mxu0
      %4680 = vmatprep.mubr.bf16.mxu0 0
      %4681 = vmatmul.mubr.bf16.gmra.mrb[0].mxu0 %v4597
      %v4682 = vpop.f32.mrb[0].mxu0
      %v4683 = vadd.f32 0.0, %v4682
      %v4684 = vpop.f32.mrb[0].mxu0
      %v4685 = vpop.f32.mrb[0].mxu0
      %v4686 = vadd.f32 0.0, %v4685
      %v4687 = vpop.f32.mrb[0].mxu0
      %4688 = vmatprep.mubr.bf16.mxu0 0
      %4689 = vmatmul.mubr.bf16.gmra.mrb[0].mxu0 %v4600
      %v4690 = vpop.f32.mrb[0].mxu0
      %v4691 = vadd.f32 0.0, %v4690
      %v4692 = vpop.f32.mrb[0].mxu0
      %v4693 = vpop.f32.mrb[0].mxu0
      %v4694 = vadd.f32 0.0, %v4693
      %v4695 = vpop.f32.mrb[0].mxu0
      %4696 = vmatprep.mubr.bf16.mxu0 0
      %4697 = vmatmul.mubr.bf16.gmra.mrb[0].mxu0 %v4603
      %v4698 = vpop.f32.mrb[0].mxu0
      %v4699 = vadd.f32 0.0, %v4698
      %v4700 = vpop.f32.mrb[0].mxu0
      %v4701 = vpop.f32.mrb[0].mxu0
      %v4702 = vadd.f32 0.0, %v4701
      %v4703 = vpop.f32.mrb[0].mxu0
      %4704 = vdwg.mxu0
      %v4705 = vadd.f32 %v4539, %v4643
      %v4706 = vadd.f32 %v4540, %v4646
      %v4707 = vadd.f32 %v4541, %v4651
      %v4708 = vadd.f32 %v4542, %v4654
      %v4709 = vadd.f32 %v4543, %v4659
      %v4710 = vadd.f32 %v4544, %v4662
      %v4711 = vadd.f32 %v4545, %v4667
      %v4712 = vadd.f32 %v4546, %v4670
      %v4713 = vadd.f32 %v4547, %v4675
      %v4714 = vadd.f32 %v4548, %v4678
      %v4715 = vadd.f32 %v4549, %v4683
      %v4716 = vadd.f32 %v4550, %v4686
      %v4717 = vadd.f32 %v4551, %v4691
      %v4718 = vadd.f32 %v4552, %v4694
      %v4719 = vadd.f32 %v4553, %v4699
      %v4720 = vadd.f32 %v4554, %v4702
      %v4721 = vld [vmem:[%s4388 + $0x2] sm:$0xff]
      %v4722 = vld [vmem:[%s4388 + $0xa] sm:$0xff]
      %v4723 = vld [vmem:[%s4388 + $0x32] sm:$0xff]
      %v4724 = vld [vmem:[%s4388 + $0x3a] sm:$0xff]
      %v4725 = vld [vmem:[%s4388 + $0x62] sm:$0xff]
      %v4726 = vld [vmem:[%s4388 + $0x6a] sm:$0xff]
      %v4727 = vld [vmem:[%s4388 + $0x92] sm:$0xff]
      %v4728 = vld [vmem:[%s4388 + $0x9a] sm:$0xff]
      %v4729 = vld [vmem:[%s4388 + $0xc2] sm:$0xff]
      %v4730 = vld [vmem:[%s4388 + $0xca] sm:$0xff]
      %v4731 = vld [vmem:[%s4388 + $0xf2] sm:$0xff]
      %v4732 = vld [vmem:[%s4388 + $0xfa] sm:$0xff]
      %v4733 = vld [vmem:[%s4388 + $0x122] sm:$0xff]
      %v4734 = vld [vmem:[%s4388 + $0x12a] sm:$0xff]
      %v4735 = vld [vmem:[%s4388 + $0x152] sm:$0xff]
      %v4736 = vld [vmem:[%s4388 + $0x15a] sm:$0xff]
      %v4737 = vpack.c.bf16 %v4722, %v4721
      %v4738 = vpack.c.bf16 %v4724, %v4723
      %v4739 = vpack.c.bf16 %v4726, %v4725
      %v4740 = vpack.c.bf16 %v4728, %v4727
      %v4741 = vpack.c.bf16 %v4730, %v4729
      %v4742 = vpack.c.bf16 %v4732, %v4731
      %v4743 = vpack.c.bf16 %v4734, %v4733
      %v4744 = vpack.c.bf16 %v4736, %v4735
      %s4745 = scalar_lea.vmem %s3, 32
      %v4746 = vld [vmem:[%s4745] sm:$0xf]
      %v4748 = vsel %vm579, %v4737, 0
      %v4751 = vsel %vm579, %v4738, 0
      %v4754 = vsel %vm579, %v4739, 0
      %v4757 = vsel %vm579, %v4740, 0
      %v4760 = vsel %vm579, %v4741, 0
      %v4763 = vsel %vm579, %v4742, 0
      %v4766 = vsel %vm579, %v4743, 0
      %v4769 = vsel %vm579, %v4744, 0
      %v4772 = vsel %vm3499, %v4746, 0
      %4774 = vmatprep.subr.bf16.mxu0 0
      %4775 = vmatpush1.bf16.msra.mxu0 %v4772
      %4776 = vmatprep.subr.bf16.mxu0 0
      %4777 = vmatpush1.bf16.msra.mxu0 0
      %4778 = vmatprep.subr.bf16.mxu0 0
      %4779 = vmatpush1.bf16.msra.mxu0 0
      %4780 = vmatprep.subr.bf16.mxu0 0
      %4781 = vmatpush1.bf16.msra.mxu0 0
      %4782 = vmatprep.subr.bf16.mxu0 0
      %4783 = vmatpush1.bf16.msra.mxu0 0
      %4784 = vmatprep.subr.bf16.mxu0 0
      %4785 = vmatpush1.bf16.msra.mxu0 0
      %4786 = vmatprep.subr.bf16.mxu0 0
      %4787 = vmatpush1.bf16.msra.mxu0 0
      %4788 = vmatprep.subr.bf16.mxu0 0
      %4789 = vmatpush1.bf16.msra.mxu0 0
      %4790 = vmatprep.subr.bf16.mxu0 0
      %4791 = vmatpush1.bf16.msra.mxu0 0
      %4792 = vmatprep.subr.bf16.mxu0 0
      %4793 = vmatpush1.bf16.msra.mxu0 0
      %4794 = vmatprep.subr.bf16.mxu0 0
      %4795 = vmatpush1.bf16.msra.mxu0 0
      %4796 = vmatprep.subr.bf16.mxu0 0
      %4797 = vmatpush1.bf16.msra.mxu0 0
      %4798 = vmatprep.subr.bf16.mxu0 0
      %4799 = vmatpush1.bf16.msra.mxu0 0
      %4800 = vmatprep.subr.bf16.mxu0 0
      %4801 = vmatpush1.bf16.msra.mxu0 0
      %4802 = vmatprep.subr.bf16.mxu0 0
      %4803 = vmatpush1.bf16.msra.mxu0 0
      %4804 = vmatprep.subr.bf16.mxu0 0
      %4805 = vmatpush1.bf16.msra.mxu0 0
      %4806 = vmatprep.mubr.bf16.mxu0 0
      %4807 = vmatmul.mubr.bf16.gmra.mrb[0].mxu0 %v4748
      %v4808 = vpop.f32.mrb[0].mxu0
      %v4809 = vadd.f32 0.0, %v4808
      %v4810 = vpop.f32.mrb[0].mxu0
      %v4811 = vpop.f32.mrb[0].mxu0
      %v4812 = vadd.f32 0.0, %v4811
      %v4813 = vpop.f32.mrb[0].mxu0
      %4814 = vmatprep.mubr.bf16.mxu0 0
      %4815 = vmatmul.mubr.bf16.gmra.mrb[0].mxu0 %v4751
      %v4816 = vpop.f32.mrb[0].mxu0
      %v4817 = vadd.f32 0.0, %v4816
      %v4818 = vpop.f32.mrb[0].mxu0
      %v4819 = vpop.f32.mrb[0].mxu0
      %v4820 = vadd.f32 0.0, %v4819
      %v4821 = vpop.f32.mrb[0].mxu0
      %4822 = vmatprep.mubr.bf16.mxu0 0
      %4823 = vmatmul.mubr.bf16.gmra.mrb[0].mxu0 %v4754
      %v4824 = vpop.f32.mrb[0].mxu0
      %v4825 = vadd.f32 0.0, %v4824
      %v4826 = vpop.f32.mrb[0].mxu0
      %v4827 = vpop.f32.mrb[0].mxu0
      %v4828 = vadd.f32 0.0, %v4827
      %v4829 = vpop.f32.mrb[0].mxu0
      %4830 = vmatprep.mubr.bf16.mxu0 0
      %4831 = vmatmul.mubr.bf16.gmra.mrb[0].mxu0 %v4757
      %v4832 = vpop.f32.mrb[0].mxu0
      %v4833 = vadd.f32 0.0, %v4832
      %v4834 = vpop.f32.mrb[0].mxu0
      %v4835 = vpop.f32.mrb[0].mxu0
      %v4836 = vadd.f32 0.0, %v4835
      %v4837 = vpop.f32.mrb[0].mxu0
      %4838 = vmatprep.mubr.bf16.mxu0 0
      %4839 = vmatmul.mubr.bf16.gmra.mrb[0].mxu0 %v4760
      %v4840 = vpop.f32.mrb[0].mxu0
      %v4841 = vadd.f32 0.0, %v4840
      %v4842 = vpop.f32.mrb[0].mxu0
      %v4843 = vpop.f32.mrb[0].mxu0
      %v4844 = vadd.f32 0.0, %v4843
      %v4845 = vpop.f32.mrb[0].mxu0
      %4846 = vmatprep.mubr.bf16.mxu0 0
      %4847 = vmatmul.mubr.bf16.gmra.mrb[0].mxu0 %v4763
      %v4848 = vpop.f32.mrb[0].mxu0
      %v4849 = vadd.f32 0.0, %v4848
      %v4850 = vpop.f32.mrb[0].mxu0
      %v4851 = vpop.f32.mrb[0].mxu0
      %v4852 = vadd.f32 0.0, %v4851
      %v4853 = vpop.f32.mrb[0].mxu0
      %4854 = vmatprep.mubr.bf16.mxu0 0
      %4855 = vmatmul.mubr.bf16.gmra.mrb[0].mxu0 %v4766
      %v4856 = vpop.f32.mrb[0].mxu0
      %v4857 = vadd.f32 0.0, %v4856
      %v4858 = vpop.f32.mrb[0].mxu0
      %v4859 = vpop.f32.mrb[0].mxu0
      %v4860 = vadd.f32 0.0, %v4859
      %v4861 = vpop.f32.mrb[0].mxu0
      %4862 = vmatprep.mubr.bf16.mxu0 0
      %4863 = vmatmul.mubr.bf16.gmra.mrb[0].mxu0 %v4769
      %v4864 = vpop.f32.mrb[0].mxu0
      %v4865 = vadd.f32 0.0, %v4864
      %v4866 = vpop.f32.mrb[0].mxu0
      %v4867 = vpop.f32.mrb[0].mxu0
      %v4868 = vadd.f32 0.0, %v4867
      %v4869 = vpop.f32.mrb[0].mxu0
      %4870 = vdwg.mxu0
      %v4871 = vadd.f32 %v4705, %v4809
      %v4872 = vadd.f32 %v4706, %v4812
      %v4873 = vadd.f32 %v4707, %v4817
      %v4874 = vadd.f32 %v4708, %v4820
      %v4875 = vadd.f32 %v4709, %v4825
      %v4876 = vadd.f32 %v4710, %v4828
      %v4877 = vadd.f32 %v4711, %v4833
      %v4878 = vadd.f32 %v4712, %v4836
      %v4879 = vadd.f32 %v4713, %v4841
      %v4880 = vadd.f32 %v4714, %v4844
      %v4881 = vadd.f32 %v4715, %v4849
      %v4882 = vadd.f32 %v4716, %v4852
      %v4883 = vadd.f32 %v4717, %v4857
      %v4884 = vadd.f32 %v4718, %v4860
      %v4885 = vadd.f32 %v4719, %v4865
      %v4886 = vadd.f32 %v4720, %v4868
      %v4887 = vld [vmem:[%s11] sm:$0xff]
      %v4888 = vld [vmem:[%s11 + $0x8] sm:$0xff]
      %v4889 = vld [vmem:[%s11 + $0x10] sm:$0xff]
      %v4890 = vld [vmem:[%s11 + $0x18] sm:$0xff]
      %v4891 = vld [vmem:[%s11 + $0x20] sm:$0xff]
      %v4892 = vld [vmem:[%s11 + $0x28] sm:$0xff]
      %v4893 = vld [vmem:[%s11 + $0x30] sm:$0xff]
      %v4894 = vld [vmem:[%s11 + $0x38] sm:$0xff]
      %v4895 = vld [vmem:[%s4] sm:$0x1]
      %v4897 = vlaneseq
      %v4898 = vshrl.u32 %v4897, 7
      %v4899 = vsub.s32 0, %v4898
      %v4900 = vrot.slane %v4895, %v4899
      %4902 = vmatprep.subr.mxu0 0.0
      %4903 = vmatpush1.msra.mxu0 %v4871
      %4904 = vmatprep.subr.mxu0 0.0
      %4905 = vmatpush1.msra.mxu0 %v4872
      %4906 = vmatprep.subr.mxu0 0.0
      %4907 = vmatpush1.msra.mxu0 %v4873
      %4908 = vmatprep.subr.mxu0 0.0
      %4909 = vmatpush1.msra.mxu0 %v4874
      %4910 = vmatprep.subr.mxu0 0.0
      %4911 = vmatpush1.msra.mxu0 %v4875
      %4912 = vmatprep.subr.mxu0 0.0
      %4913 = vmatpush1.msra.mxu0 %v4876
      %4914 = vmatprep.subr.mxu0 0.0
      %4915 = vmatpush1.msra.mxu0 %v4877
      %4916 = vmatprep.subr.mxu0 0.0
      %4917 = vmatpush1.msra.mxu0 %v4878
      %4918 = vmatprep.subr.mxu0 0.0
      %4919 = vmatpush1.msra.mxu0 %v4879
      %4920 = vmatprep.subr.mxu0 0.0
      %4921 = vmatpush1.msra.mxu0 %v4880
      %4922 = vmatprep.subr.mxu0 0.0
      %4923 = vmatpush1.msra.mxu0 %v4881
      %4924 = vmatprep.subr.mxu0 0.0
      %4925 = vmatpush1.msra.mxu0 %v4882
      %4926 = vmatprep.subr.mxu0 0.0
      %4927 = vmatpush1.msra.mxu0 %v4883
      %4928 = vmatprep.subr.mxu0 0.0
      %4929 = vmatpush1.msra.mxu0 %v4884
      %4930 = vmatprep.subr.mxu0 0.0
      %4931 = vmatpush1.msra.mxu0 %v4885
      %4932 = vmatprep.subr.mxu0 0.0
      %4933 = vmatpush1.msra.mxu0 %v4886
      %4934 = vmatprep.subr.mxu0 0.0
      %4935 = vmatpush1.msra.mxu0 0.0
      %4936 = vmatprep.subr.mxu0 0.0
      %4937 = vmatpush1.msra.mxu0 0.0
      %4938 = vmatprep.subr.mxu0 0.0
      %4939 = vmatpush1.msra.mxu0 0.0
      %4940 = vmatprep.subr.mxu0 0.0
      %4941 = vmatpush1.msra.mxu0 0.0
      %4942 = vmatprep.subr.mxu0 0.0
      %4943 = vmatpush1.msra.mxu0 0.0
      %4944 = vmatprep.subr.mxu0 0.0
      %4945 = vmatpush1.msra.mxu0 0.0
      %4946 = vmatprep.subr.mxu0 0.0
      %4947 = vmatpush1.msra.mxu0 0.0
      %4948 = vmatprep.subr.mxu0 0.0
      %4949 = vmatpush1.msra.mxu0 0.0
      %4950 = vmatprep.subr.mxu0 0.0
      %4951 = vmatpush1.msra.mxu0 0.0
      %4952 = vmatprep.subr.mxu0 0.0
      %4953 = vmatpush1.msra.mxu0 0.0
      %4954 = vmatprep.subr.mxu0 0.0
      %4955 = vmatpush1.msra.mxu0 0.0
      %4956 = vmatprep.subr.mxu0 0.0
      %4957 = vmatpush1.msra.mxu0 0.0
      %4958 = vmatprep.subr.mxu0 0.0
      %4959 = vmatpush1.msra.mxu0 0.0
      %4960 = vmatprep.subr.mxu0 0.0
      %4961 = vmatpush1.msra.mxu0 0.0
      %4962 = vmatprep.subr.mxu0 0.0
      %4963 = vmatpush1.msra.mxu0 0.0
      %4964 = vmatprep.subr.mxu0 0.0
      %4965 = vmatpush1.msra.mxu0 0.0
      %4966 = vmatprep.mubr.f32.mxu0 0.0
      %4967 = vmatmul.mubr.f32.gmra.mrb[0].mxu0 %v4887
      %v4968 = vpop.f32.mrb[0].mxu0
      %v4969 = vadd.f32 %v4900, %v4968
      %v4970 = vpop.f32.mrb[0].mxu0
      %4971 = vmatprep.mubr.f32.mxu0 0.0
      %4972 = vmatmul.mubr.f32.gmra.mrb[0].mxu0 %v4888
      %v4973 = vpop.f32.mrb[0].mxu0
      %v4974 = vadd.f32 %v4900, %v4973
      %v4975 = vpop.f32.mrb[0].mxu0
      %4976 = vmatprep.mubr.f32.mxu0 0.0
      %4977 = vmatmul.mubr.f32.gmra.mrb[0].mxu0 %v4889
      %v4978 = vpop.f32.mrb[0].mxu0
      %v4979 = vadd.f32 %v4900, %v4978
      %v4980 = vpop.f32.mrb[0].mxu0
      %4981 = vmatprep.mubr.f32.mxu0 0.0
      %4982 = vmatmul.mubr.f32.gmra.mrb[0].mxu0 %v4890
      %v4983 = vpop.f32.mrb[0].mxu0
      %v4984 = vadd.f32 %v4900, %v4983
      %v4985 = vpop.f32.mrb[0].mxu0
      %4986 = vmatprep.mubr.f32.mxu0 0.0
      %4987 = vmatmul.mubr.f32.gmra.mrb[0].mxu0 %v4891
      %v4988 = vpop.f32.mrb[0].mxu0
      %v4989 = vadd.f32 %v4900, %v4988
      %v4990 = vpop.f32.mrb[0].mxu0
      %4991 = vmatprep.mubr.f32.mxu0 0.0
      %4992 = vmatmul.mubr.f32.gmra.mrb[0].mxu0 %v4892
      %v4993 = vpop.f32.mrb[0].mxu0
      %v4994 = vadd.f32 %v4900, %v4993
      %v4995 = vpop.f32.mrb[0].mxu0
      %4996 = vmatprep.mubr.f32.mxu0 0.0
      %4997 = vmatmul.mubr.f32.gmra.mrb[0].mxu0 %v4893
      %v4998 = vpop.f32.mrb[0].mxu0
      %v4999 = vadd.f32 %v4900, %v4998
      %v5000 = vpop.f32.mrb[0].mxu0
      %5001 = vmatprep.mubr.f32.mxu0 0.0
      %5002 = vmatmul.mubr.f32.gmra.mrb[0].mxu0 %v4894
      %v5003 = vpop.f32.mrb[0].mxu0
      %v5004 = vadd.f32 %v4900, %v5003
      %v5005 = vpop.f32.mrb[0].mxu0
      %5006 = vdwg.mxu0
      %v5007 = vmax.f32 %v4969, 0.0
      %v5008 = vmax.f32 %v4974, 0.0
      %v5009 = vmax.f32 %v4979, 0.0
      %v5010 = vmax.f32 %v4984, 0.0
      %v5011 = vmax.f32 %v4989, 0.0
      %v5012 = vmax.f32 %v4994, 0.0
      %v5013 = vmax.f32 %v4999, 0.0
      %v5014 = vmax.f32 %v5004, 0.0
      %s5015 = scalar_lea.vmem [#allocation4], 16
      %5016 = vst.msk [vmem:[%s5015 + $0x1] sm:$0xff] %vm635, %v5007
      %5017 = vst.msk [vmem:[%s5015 + $0x11] sm:$0xff] %vm635, %v5008
      %5018 = vst.msk [vmem:[%s5015 + $0x21] sm:$0xff] %vm635, %v5009
      %5019 = vst.msk [vmem:[%s5015 + $0x31] sm:$0xff] %vm635, %v5010
      %5020 = vst.msk [vmem:[%s5015 + $0x41] sm:$0xff] %vm635, %v5011
      %5021 = vst.msk [vmem:[%s5015 + $0x51] sm:$0xff] %vm635, %v5012
      %5022 = vst.msk [vmem:[%s5015 + $0x61] sm:$0xff] %vm635, %v5013
      %5023 = vst.msk [vmem:[%s5015 + $0x71] sm:$0xff] %vm635, %v5014
      %v5024 = vld [vmem:[#allocation4] sm:$0xff]
      %v5025 = vld [vmem:[#allocation4 + $0x20] sm:$0xff]
      %v5026 = vld [vmem:[#allocation4 + $0x40] sm:$0xff]
      %v5027 = vld [vmem:[#allocation4 + $0x60] sm:$0xff]
      %v5028 = vpack.c.bf16 %v5025, %v5024
      %v5029 = vpack.c.bf16 %v5027, %v5026
      %v5030 = vld [vmem:[%s5] sm:$0xf]
      %v5031 = vld [vmem:[%s5 + $0x4] sm:$0xf]
      %v5032 = vld [vmem:[#allocation4 + $0x1] sm:$0xff]
      %v5033 = vld [vmem:[#allocation4 + $0x21] sm:$0xff]
      %v5034 = vld [vmem:[#allocation4 + $0x41] sm:$0xff]
      %v5035 = vld [vmem:[#allocation4 + $0x61] sm:$0xff]
      %v5036 = vpack.c.bf16 %v5033, %v5032
      %v5037 = vpack.c.bf16 %v5035, %v5034
      %s5038 = scalar_lea.vmem %s5, 8
      %v5039 = vld [vmem:[%s5038] sm:$0xf]
      %v5040 = vld [vmem:[%s5038 + $0x4] sm:$0xf]
      %v5043 = vunpack.c.l.b16 %v5039
      %v5044 = vunpack.c.l.b16 %v5040
      %v5045 = vpack.c.b16 %v5044, %v5043
      %v5048 = vsel %vm635, %v5036, 0
      %v5051 = vsel %vm635, %v5037, 0
      %5053 = vmatprep.subr.bf16.mxu0 0
      %5054 = vmatpush1.bf16.msra.mxu0 %v5045
      %5055 = vmatprep.subr.bf16.mxu0 0
      %5056 = vmatpush1.bf16.msra.mxu0 0
      %5057 = vmatprep.subr.bf16.mxu0 0
      %5058 = vmatpush1.bf16.msra.mxu0 0
      %5059 = vmatprep.subr.bf16.mxu0 0
      %5060 = vmatpush1.bf16.msra.mxu0 0
      %5061 = vmatprep.subr.bf16.mxu0 0
      %5062 = vmatpush1.bf16.msra.mxu0 0
      %5063 = vmatprep.subr.bf16.mxu0 0
      %5064 = vmatpush1.bf16.msra.mxu0 0
      %5065 = vmatprep.subr.bf16.mxu0 0
      %5066 = vmatpush1.bf16.msra.mxu0 0
      %5067 = vmatprep.subr.bf16.mxu0 0
      %5068 = vmatpush1.bf16.msra.mxu0 0
      %5069 = vmatprep.subr.bf16.mxu0 0
      %5070 = vmatpush1.bf16.msra.mxu0 0
      %5071 = vmatprep.subr.bf16.mxu0 0
      %5072 = vmatpush1.bf16.msra.mxu0 0
      %5073 = vmatprep.subr.bf16.mxu0 0
      %5074 = vmatpush1.bf16.msra.mxu0 0
      %5075 = vmatprep.subr.bf16.mxu0 0
      %5076 = vmatpush1.bf16.msra.mxu0 0
      %5077 = vmatprep.subr.bf16.mxu0 0
      %5078 = vmatpush1.bf16.msra.mxu0 0
      %5079 = vmatprep.subr.bf16.mxu0 0
      %5080 = vmatpush1.bf16.msra.mxu0 0
      %5081 = vmatprep.subr.bf16.mxu0 0
      %5082 = vmatpush1.bf16.msra.mxu0 0
      %5083 = vmatprep.subr.bf16.mxu0 0
      %5084 = vmatpush1.bf16.msra.mxu0 0
      %5085 = vmatprep.mubr.bf16.mxu0 0
      %5086 = vmatmul.mubr.bf16.gmra.mrb[0].mxu0 %v5048
      %v5087 = vpop.f32.mrb[0].mxu0
      %v5088 = vadd.f32 0.0, %v5087
      %v5089 = vpop.f32.mrb[0].mxu0
      %v5090 = vpop.f32.mrb[0].mxu0
      %v5091 = vadd.f32 0.0, %v5090
      %v5092 = vpop.f32.mrb[0].mxu0
      %5093 = vmatprep.mubr.bf16.mxu0 0
      %5094 = vmatmul.mubr.bf16.gmra.mrb[0].mxu0 %v5051
      %v5095 = vpop.f32.mrb[0].mxu0
      %v5096 = vadd.f32 0.0, %v5095
      %v5097 = vpop.f32.mrb[0].mxu0
      %v5098 = vpop.f32.mrb[0].mxu0
      %v5099 = vadd.f32 0.0, %v5098
      %v5100 = vpop.f32.mrb[0].mxu0
      %5101 = vdwg.mxu0
      %v5104 = vunpack.c.l.b16 %v5030
      %v5105 = vunpack.c.l.b16 %v5031
      %v5106 = vpack.c.b16 %v5105, %v5104
      %v5109 = vsel %vm635, %v5028, 0
      %v5112 = vsel %vm635, %v5029, 0
      %5114 = vmatprep.subr.bf16.mxu0 0
      %5115 = vmatpush1.bf16.msra.mxu0 %v5106
      %5116 = vmatprep.subr.bf16.mxu0 0
      %5117 = vmatpush1.bf16.msra.mxu0 0
      %5118 = vmatprep.subr.bf16.mxu0 0
      %5119 = vmatpush1.bf16.msra.mxu0 0
      %5120 = vmatprep.subr.bf16.mxu0 0
      %5121 = vmatpush1.bf16.msra.mxu0 0
      %5122 = vmatprep.subr.bf16.mxu0 0
      %5123 = vmatpush1.bf16.msra.mxu0 0
      %5124 = vmatprep.subr.bf16.mxu0 0
      %5125 = vmatpush1.bf16.msra.mxu0 0
      %5126 = vmatprep.subr.bf16.mxu0 0
      %5127 = vmatpush1.bf16.msra.mxu0 0
      %5128 = vmatprep.subr.bf16.mxu0 0
      %5129 = vmatpush1.bf16.msra.mxu0 0
      %5130 = vmatprep.subr.bf16.mxu0 0
      %5131 = vmatpush1.bf16.msra.mxu0 0
      %5132 = vmatprep.subr.bf16.mxu0 0
      %5133 = vmatpush1.bf16.msra.mxu0 0
      %5134 = vmatprep.subr.bf16.mxu0 0
      %5135 = vmatpush1.bf16.msra.mxu0 0
      %5136 = vmatprep.subr.bf16.mxu0 0
      %5137 = vmatpush1.bf16.msra.mxu0 0
      %5138 = vmatprep.subr.bf16.mxu0 0
      %5139 = vmatpush1.bf16.msra.mxu0 0
      %5140 = vmatprep.subr.bf16.mxu0 0
      %5141 = vmatpush1.bf16.msra.mxu0 0
      %5142 = vmatprep.subr.bf16.mxu0 0
      %5143 = vmatpush1.bf16.msra.mxu0 0
      %5144 = vmatprep.subr.bf16.mxu0 0
      %5145 = vmatpush1.bf16.msra.mxu0 0
      %5146 = vmatprep.mubr.bf16.mxu0 0
      %5147 = vmatmul.mubr.bf16.gmra.mrb[0].mxu0 %v5109
      %v5148 = vpop.f32.mrb[0].mxu0
      %v5149 = vadd.f32 %v5088, %v5148
      %v5150 = vpop.f32.mrb[0].mxu0
      %v5151 = vpop.f32.mrb[0].mxu0
      %v5152 = vadd.f32 %v5091, %v5151
      %v5153 = vpop.f32.mrb[0].mxu0
      %5154 = vmatprep.mubr.bf16.mxu0 0
      %5155 = vmatmul.mubr.bf16.gmra.mrb[0].mxu0 %v5112
      %v5156 = vpop.f32.mrb[0].mxu0
      %v5157 = vadd.f32 %v5096, %v5156
      %v5158 = vpop.f32.mrb[0].mxu0
      %v5159 = vpop.f32.mrb[0].mxu0
      %v5160 = vadd.f32 %v5099, %v5159
      %v5161 = vpop.f32.mrb[0].mxu0
      %5162 = vdwg.mxu0
      %v5163 = vld [vmem:[#allocation4 + $0x2] sm:$0xff]
      %v5164 = vld [vmem:[#allocation4 + $0x22] sm:$0xff]
      %v5165 = vld [vmem:[#allocation4 + $0x42] sm:$0xff]
      %v5166 = vld [vmem:[#allocation4 + $0x62] sm:$0xff]
      %v5167 = vpack.c.bf16 %v5164, %v5163
      %v5168 = vpack.c.bf16 %v5166, %v5165
      %s5169 = scalar_lea.vmem %s5, 16
      %v5170 = vld [vmem:[%s5169] sm:$0xf]
      %v5171 = vld [vmem:[%s5169 + $0x4] sm:$0xf]
      %v5174 = vunpack.c.l.b16 %v5170
      %v5175 = vunpack.c.l.b16 %v5171
      %v5176 = vpack.c.b16 %v5175, %v5174
      %v5179 = vsel %vm635, %v5167, 0
      %v5182 = vsel %vm635, %v5168, 0
      %5184 = vmatprep.subr.bf16.mxu0 0
      %5185 = vmatpush1.bf16.msra.mxu0 %v5176
      %5186 = vmatprep.subr.bf16.mxu0 0
      %5187 = vmatpush1.bf16.msra.mxu0 0
      %5188 = vmatprep.subr.bf16.mxu0 0
      %5189 = vmatpush1.bf16.msra.mxu0 0
      %5190 = vmatprep.subr.bf16.mxu0 0
      %5191 = vmatpush1.bf16.msra.mxu0 0
      %5192 = vmatprep.subr.bf16.mxu0 0
      %5193 = vmatpush1.bf16.msra.mxu0 0
      %5194 = vmatprep.subr.bf16.mxu0 0
      %5195 = vmatpush1.bf16.msra.mxu0 0
      %5196 = vmatprep.subr.bf16.mxu0 0
      %5197 = vmatpush1.bf16.msra.mxu0 0
      %5198 = vmatprep.subr.bf16.mxu0 0
      %5199 = vmatpush1.bf16.msra.mxu0 0
      %5200 = vmatprep.subr.bf16.mxu0 0
      %5201 = vmatpush1.bf16.msra.mxu0 0
      %5202 = vmatprep.subr.bf16.mxu0 0
      %5203 = vmatpush1.bf16.msra.mxu0 0
      %5204 = vmatprep.subr.bf16.mxu0 0
      %5205 = vmatpush1.bf16.msra.mxu0 0
      %5206 = vmatprep.subr.bf16.mxu0 0
      %5207 = vmatpush1.bf16.msra.mxu0 0
      %5208 = vmatprep.subr.bf16.mxu0 0
      %5209 = vmatpush1.bf16.msra.mxu0 0
      %5210 = vmatprep.subr.bf16.mxu0 0
      %5211 = vmatpush1.bf16.msra.mxu0 0
      %5212 = vmatprep.subr.bf16.mxu0 0
      %5213 = vmatpush1.bf16.msra.mxu0 0
      %5214 = vmatprep.subr.bf16.mxu0 0
      %5215 = vmatpush1.bf16.msra.mxu0 0
      %5216 = vmatprep.mubr.bf16.mxu0 0
      %5217 = vmatmul.mubr.bf16.gmra.mrb[0].mxu0 %v5179
      %v5218 = vpop.f32.mrb[0].mxu0
      %v5219 = vadd.f32 0.0, %v5218
      %v5220 = vpop.f32.mrb[0].mxu0
      %v5221 = vpop.f32.mrb[0].mxu0
      %v5222 = vadd.f32 0.0, %v5221
      %v5223 = vpop.f32.mrb[0].mxu0
      %5224 = vmatprep.mubr.bf16.mxu0 0
      %5225 = vmatmul.mubr.bf16.gmra.mrb[0].mxu0 %v5182
      %v5226 = vpop.f32.mrb[0].mxu0
      %v5227 = vadd.f32 0.0, %v5226
      %v5228 = vpop.f32.mrb[0].mxu0
      %v5229 = vpop.f32.mrb[0].mxu0
      %v5230 = vadd.f32 0.0, %v5229
      %v5231 = vpop.f32.mrb[0].mxu0
      %5232 = vdwg.mxu0
      %v5233 = vadd.f32 %v5149, %v5219
      %v5234 = vadd.f32 %v5152, %v5222
      %v5235 = vadd.f32 %v5157, %v5227
      %v5236 = vadd.f32 %v5160, %v5230
      %v5237 = vld [vmem:[%s5015] sm:$0xff]
      %v5238 = vld [vmem:[%s5015 + $0x20] sm:$0xff]
      %v5239 = vld [vmem:[%s5015 + $0x40] sm:$0xff]
      %v5240 = vld [vmem:[%s5015 + $0x60] sm:$0xff]
      %v5241 = vpack.c.bf16 %v5238, %v5237
      %v5242 = vpack.c.bf16 %v5240, %v5239
      %s5243 = scalar_lea.vmem %s5, 24
      %v5244 = vld [vmem:[%s5243] sm:$0xf]
      %v5245 = vld [vmem:[%s5243 + $0x4] sm:$0xf]
      %v5248 = vunpack.c.l.b16 %v5244
      %v5249 = vunpack.c.l.b16 %v5245
      %v5250 = vpack.c.b16 %v5249, %v5248
      %v5253 = vsel %vm635, %v5241, 0
      %v5256 = vsel %vm635, %v5242, 0
      %5258 = vmatprep.subr.bf16.mxu0 0
      %5259 = vmatpush1.bf16.msra.mxu0 %v5250
      %5260 = vmatprep.subr.bf16.mxu0 0
      %5261 = vmatpush1.bf16.msra.mxu0 0
      %5262 = vmatprep.subr.bf16.mxu0 0
      %5263 = vmatpush1.bf16.msra.mxu0 0
      %5264 = vmatprep.subr.bf16.mxu0 0
      %5265 = vmatpush1.bf16.msra.mxu0 0
      %5266 = vmatprep.subr.bf16.mxu0 0
      %5267 = vmatpush1.bf16.msra.mxu0 0
      %5268 = vmatprep.subr.bf16.mxu0 0
      %5269 = vmatpush1.bf16.msra.mxu0 0
      %5270 = vmatprep.subr.bf16.mxu0 0
      %5271 = vmatpush1.bf16.msra.mxu0 0
      %5272 = vmatprep.subr.bf16.mxu0 0
      %5273 = vmatpush1.bf16.msra.mxu0 0
      %5274 = vmatprep.subr.bf16.mxu0 0
      %5275 = vmatpush1.bf16.msra.mxu0 0
      %5276 = vmatprep.subr.bf16.mxu0 0
      %5277 = vmatpush1.bf16.msra.mxu0 0
      %5278 = vmatprep.subr.bf16.mxu0 0
      %5279 = vmatpush1.bf16.msra.mxu0 0
      %5280 = vmatprep.subr.bf16.mxu0 0
      %5281 = vmatpush1.bf16.msra.mxu0 0
      %5282 = vmatprep.subr.bf16.mxu0 0
      %5283 = vmatpush1.bf16.msra.mxu0 0
      %5284 = vmatprep.subr.bf16.mxu0 0
      %5285 = vmatpush1.bf16.msra.mxu0 0
      %5286 = vmatprep.subr.bf16.mxu0 0
      %5287 = vmatpush1.bf16.msra.mxu0 0
      %5288 = vmatprep.subr.bf16.mxu0 0
      %5289 = vmatpush1.bf16.msra.mxu0 0
      %5290 = vmatprep.mubr.bf16.mxu0 0
      %5291 = vmatmul.mubr.bf16.gmra.mrb[0].mxu0 %v5253
      %v5292 = vpop.f32.mrb[0].mxu0
      %v5293 = vadd.f32 0.0, %v5292
      %v5294 = vpop.f32.mrb[0].mxu0
      %v5295 = vpop.f32.mrb[0].mxu0
      %v5296 = vadd.f32 0.0, %v5295
      %v5297 = vpop.f32.mrb[0].mxu0
      %5298 = vmatprep.mubr.bf16.mxu0 0
      %5299 = vmatmul.mubr.bf16.gmra.mrb[0].mxu0 %v5256
      %v5300 = vpop.f32.mrb[0].mxu0
      %v5301 = vadd.f32 0.0, %v5300
      %v5302 = vpop.f32.mrb[0].mxu0
      %v5303 = vpop.f32.mrb[0].mxu0
      %v5304 = vadd.f32 0.0, %v5303
      %v5305 = vpop.f32.mrb[0].mxu0
      %5306 = vdwg.mxu0
      %v5307 = vadd.f32 %v5233, %v5293
      %v5308 = vadd.f32 %v5234, %v5296
      %v5309 = vadd.f32 %v5235, %v5301
      %v5310 = vadd.f32 %v5236, %v5304
      %v5311 = vld [vmem:[%s5015 + $0x1] sm:$0xff]
      %v5312 = vld [vmem:[%s5015 + $0x21] sm:$0xff]
      %v5313 = vld [vmem:[%s5015 + $0x41] sm:$0xff]
      %v5314 = vld [vmem:[%s5015 + $0x61] sm:$0xff]
      %v5315 = vpack.c.bf16 %v5312, %v5311
      %v5316 = vpack.c.bf16 %v5314, %v5313
      %s5317 = scalar_lea.vmem %s5, 32
      %v5318 = vld [vmem:[%s5317] sm:$0xf]
      %v5319 = vld [vmem:[%s5317 + $0x4] sm:$0xf]
      %v5322 = vunpack.c.l.b16 %v5318
      %v5323 = vunpack.c.l.b16 %v5319
      %v5324 = vpack.c.b16 %v5323, %v5322
      %v5327 = vsel %vm635, %v5315, 0
      %v5330 = vsel %vm635, %v5316, 0
      %5332 = vmatprep.subr.bf16.mxu0 0
      %5333 = vmatpush1.bf16.msra.mxu0 %v5324
      %5334 = vmatprep.subr.bf16.mxu0 0
      %5335 = vmatpush1.bf16.msra.mxu0 0
      %5336 = vmatprep.subr.bf16.mxu0 0
      %5337 = vmatpush1.bf16.msra.mxu0 0
      %5338 = vmatprep.subr.bf16.mxu0 0
      %5339 = vmatpush1.bf16.msra.mxu0 0
      %5340 = vmatprep.subr.bf16.mxu0 0
      %5341 = vmatpush1.bf16.msra.mxu0 0
      %5342 = vmatprep.subr.bf16.mxu0 0
      %5343 = vmatpush1.bf16.msra.mxu0 0
      %5344 = vmatprep.subr.bf16.mxu0 0
      %5345 = vmatpush1.bf16.msra.mxu0 0
      %5346 = vmatprep.subr.bf16.mxu0 0
      %5347 = vmatpush1.bf16.msra.mxu0 0
      %5348 = vmatprep.subr.bf16.mxu0 0
      %5349 = vmatpush1.bf16.msra.mxu0 0
      %5350 = vmatprep.subr.bf16.mxu0 0
      %5351 = vmatpush1.bf16.msra.mxu0 0
      %5352 = vmatprep.subr.bf16.mxu0 0
      %5353 = vmatpush1.bf16.msra.mxu0 0
      %5354 = vmatprep.subr.bf16.mxu0 0
      %5355 = vmatpush1.bf16.msra.mxu0 0
      %5356 = vmatprep.subr.bf16.mxu0 0
      %5357 = vmatpush1.bf16.msra.mxu0 0
      %5358 = vmatprep.subr.bf16.mxu0 0
      %5359 = vmatpush1.bf16.msra.mxu0 0
      %5360 = vmatprep.subr.bf16.mxu0 0
      %5361 = vmatpush1.bf16.msra.mxu0 0
      %5362 = vmatprep.subr.bf16.mxu0 0
      %5363 = vmatpush1.bf16.msra.mxu0 0
      %5364 = vmatprep.mubr.bf16.mxu0 0
      %5365 = vmatmul.mubr.bf16.gmra.mrb[0].mxu0 %v5327
      %v5366 = vpop.f32.mrb[0].mxu0
      %v5367 = vadd.f32 0.0, %v5366
      %v5368 = vpop.f32.mrb[0].mxu0
      %v5369 = vpop.f32.mrb[0].mxu0
      %v5370 = vadd.f32 0.0, %v5369
      %v5371 = vpop.f32.mrb[0].mxu0
      %5372 = vmatprep.mubr.bf16.mxu0 0
      %5373 = vmatmul.mubr.bf16.gmra.mrb[0].mxu0 %v5330
      %v5374 = vpop.f32.mrb[0].mxu0
      %v5375 = vadd.f32 0.0, %v5374
      %v5376 = vpop.f32.mrb[0].mxu0
      %v5377 = vpop.f32.mrb[0].mxu0
      %v5378 = vadd.f32 0.0, %v5377
      %v5379 = vpop.f32.mrb[0].mxu0
      %5380 = vdwg.mxu0
      %v5381 = vadd.f32 %v5307, %v5367
      %v5382 = vadd.f32 %v5308, %v5370
      %v5383 = vadd.f32 %v5309, %v5375
      %v5384 = vadd.f32 %v5310, %v5378
      %v5385 = vld [vmem:[%s5015 + $0x2] sm:$0xff]
      %v5386 = vld [vmem:[%s5015 + $0x22] sm:$0xff]
      %v5387 = vld [vmem:[%s5015 + $0x42] sm:$0xff]
      %v5388 = vld [vmem:[%s5015 + $0x62] sm:$0xff]
      %v5389 = vpack.c.bf16 %v5386, %v5385
      %v5390 = vpack.c.bf16 %v5388, %v5387
      %s5391 = scalar_lea.vmem %s5, 40
      %v5392 = vld [vmem:[%s5391] sm:$0xf]
      %v5393 = vld [vmem:[%s5391 + $0x4] sm:$0xf]
      %v5396 = vunpack.c.l.b16 %v5392
      %v5397 = vunpack.c.l.b16 %v5393
      %v5398 = vpack.c.b16 %v5397, %v5396
      %v5401 = vsel %vm635, %v5389, 0
      %v5404 = vsel %vm635, %v5390, 0
      %5406 = vmatprep.subr.bf16.mxu0 0
      %5407 = vmatpush1.bf16.msra.mxu0 %v5398
      %5408 = vmatprep.subr.bf16.mxu0 0
      %5409 = vmatpush1.bf16.msra.mxu0 0
      %5410 = vmatprep.subr.bf16.mxu0 0
      %5411 = vmatpush1.bf16.msra.mxu0 0
      %5412 = vmatprep.subr.bf16.mxu0 0
      %5413 = vmatpush1.bf16.msra.mxu0 0
      %5414 = vmatprep.subr.bf16.mxu0 0
      %5415 = vmatpush1.bf16.msra.mxu0 0
      %5416 = vmatprep.subr.bf16.mxu0 0
      %5417 = vmatpush1.bf16.msra.mxu0 0
      %5418 = vmatprep.subr.bf16.mxu0 0
      %5419 = vmatpush1.bf16.msra.mxu0 0
      %5420 = vmatprep.subr.bf16.mxu0 0
      %5421 = vmatpush1.bf16.msra.mxu0 0
      %5422 = vmatprep.subr.bf16.mxu0 0
      %5423 = vmatpush1.bf16.msra.mxu0 0
      %5424 = vmatprep.subr.bf16.mxu0 0
      %5425 = vmatpush1.bf16.msra.mxu0 0
      %5426 = vmatprep.subr.bf16.mxu0 0
      %5427 = vmatpush1.bf16.msra.mxu0 0
      %5428 = vmatprep.subr.bf16.mxu0 0
      %5429 = vmatpush1.bf16.msra.mxu0 0
      %5430 = vmatprep.subr.bf16.mxu0 0
      %5431 = vmatpush1.bf16.msra.mxu0 0
      %5432 = vmatprep.subr.bf16.mxu0 0
      %5433 = vmatpush1.bf16.msra.mxu0 0
      %5434 = vmatprep.subr.bf16.mxu0 0
      %5435 = vmatpush1.bf16.msra.mxu0 0
      %5436 = vmatprep.subr.bf16.mxu0 0
      %5437 = vmatpush1.bf16.msra.mxu0 0
      %5438 = vmatprep.mubr.bf16.mxu0 0
      %5439 = vmatmul.mubr.bf16.gmra.mrb[0].mxu0 %v5401
      %v5440 = vpop.f32.mrb[0].mxu0
      %v5441 = vadd.f32 0.0, %v5440
      %v5442 = vpop.f32.mrb[0].mxu0
      %v5443 = vpop.f32.mrb[0].mxu0
      %v5444 = vadd.f32 0.0, %v5443
      %v5445 = vpop.f32.mrb[0].mxu0
      %5446 = vmatprep.mubr.bf16.mxu0 0
      %5447 = vmatmul.mubr.bf16.gmra.mrb[0].mxu0 %v5404
      %v5448 = vpop.f32.mrb[0].mxu0
      %v5449 = vadd.f32 0.0, %v5448
      %v5450 = vpop.f32.mrb[0].mxu0
      %v5451 = vpop.f32.mrb[0].mxu0
      %v5452 = vadd.f32 0.0, %v5451
      %v5453 = vpop.f32.mrb[0].mxu0
      %5454 = vdwg.mxu0
      %v5455 = vadd.f32 %v5381, %v5441
      %v5456 = vadd.f32 %v5382, %v5444
      %v5457 = vadd.f32 %v5383, %v5449
      %v5458 = vadd.f32 %v5384, %v5452
      %s5459 = scalar_lea.vmem [#allocation4], 32
      %v5460 = vld [vmem:[%s5459] sm:$0xff]
      %v5461 = vld [vmem:[%s5459 + $0x20] sm:$0xff]
      %v5462 = vld [vmem:[%s5459 + $0x40] sm:$0xff]
      %v5463 = vld [vmem:[%s5459 + $0x60] sm:$0xff]
      %v5464 = vpack.c.bf16 %v5461, %v5460
      %v5465 = vpack.c.bf16 %v5463, %v5462
      %s5466 = scalar_lea.vmem %s5, 48
      %v5467 = vld [vmem:[%s5466] sm:$0xf]
      %v5468 = vld [vmem:[%s5466 + $0x4] sm:$0xf]
      %v5471 = vunpack.c.l.b16 %v5467
      %v5472 = vunpack.c.l.b16 %v5468
      %v5473 = vpack.c.b16 %v5472, %v5471
      %v5476 = vsel %vm635, %v5464, 0
      %v5479 = vsel %vm635, %v5465, 0
      %5481 = vmatprep.subr.bf16.mxu0 0
      %5482 = vmatpush1.bf16.msra.mxu0 %v5473
      %5483 = vmatprep.subr.bf16.mxu0 0
      %5484 = vmatpush1.bf16.msra.mxu0 0
      %5485 = vmatprep.subr.bf16.mxu0 0
      %5486 = vmatpush1.bf16.msra.mxu0 0
      %5487 = vmatprep.subr.bf16.mxu0 0
      %5488 = vmatpush1.bf16.msra.mxu0 0
      %5489 = vmatprep.subr.bf16.mxu0 0
      %5490 = vmatpush1.bf16.msra.mxu0 0
      %5491 = vmatprep.subr.bf16.mxu0 0
      %5492 = vmatpush1.bf16.msra.mxu0 0
      %5493 = vmatprep.subr.bf16.mxu0 0
      %5494 = vmatpush1.bf16.msra.mxu0 0
      %5495 = vmatprep.subr.bf16.mxu0 0
      %5496 = vmatpush1.bf16.msra.mxu0 0
      %5497 = vmatprep.subr.bf16.mxu0 0
      %5498 = vmatpush1.bf16.msra.mxu0 0
      %5499 = vmatprep.subr.bf16.mxu0 0
      %5500 = vmatpush1.bf16.msra.mxu0 0
      %5501 = vmatprep.subr.bf16.mxu0 0
      %5502 = vmatpush1.bf16.msra.mxu0 0
      %5503 = vmatprep.subr.bf16.mxu0 0
      %5504 = vmatpush1.bf16.msra.mxu0 0
      %5505 = vmatprep.subr.bf16.mxu0 0
      %5506 = vmatpush1.bf16.msra.mxu0 0
      %5507 = vmatprep.subr.bf16.mxu0 0
      %5508 = vmatpush1.bf16.msra.mxu0 0
      %5509 = vmatprep.subr.bf16.mxu0 0
      %5510 = vmatpush1.bf16.msra.mxu0 0
      %5511 = vmatprep.subr.bf16.mxu0 0
      %5512 = vmatpush1.bf16.msra.mxu0 0
      %5513 = vmatprep.mubr.bf16.mxu0 0
      %5514 = vmatmul.mubr.bf16.gmra.mrb[0].mxu0 %v5476
      %v5515 = vpop.f32.mrb[0].mxu0
      %v5516 = vadd.f32 0.0, %v5515
      %v5517 = vpop.f32.mrb[0].mxu0
      %v5518 = vpop.f32.mrb[0].mxu0
      %v5519 = vadd.f32 0.0, %v5518
      %v5520 = vpop.f32.mrb[0].mxu0
      %5521 = vmatprep.mubr.bf16.mxu0 0
      %5522 = vmatmul.mubr.bf16.gmra.mrb[0].mxu0 %v5479
      %v5523 = vpop.f32.mrb[0].mxu0
      %v5524 = vadd.f32 0.0, %v5523
      %v5525 = vpop.f32.mrb[0].mxu0
      %v5526 = vpop.f32.mrb[0].mxu0
      %v5527 = vadd.f32 0.0, %v5526
      %v5528 = vpop.f32.mrb[0].mxu0
      %5529 = vdwg.mxu0
      %v5530 = vadd.f32 %v5455, %v5516
      %v5531 = vadd.f32 %v5456, %v5519
      %v5532 = vadd.f32 %v5457, %v5524
      %v5533 = vadd.f32 %v5458, %v5527
      %v5534 = vld [vmem:[%s5459 + $0x1] sm:$0xff]
      %v5535 = vld [vmem:[%s5459 + $0x21] sm:$0xff]
      %v5536 = vld [vmem:[%s5459 + $0x41] sm:$0xff]
      %v5537 = vld [vmem:[%s5459 + $0x61] sm:$0xff]
      %v5538 = vpack.c.bf16 %v5535, %v5534
      %v5539 = vpack.c.bf16 %v5537, %v5536
      %s5540 = scalar_lea.vmem %s5, 56
      %v5541 = vld [vmem:[%s5540] sm:$0xf]
      %v5542 = vld [vmem:[%s5540 + $0x4] sm:$0xf]
      %v5545 = vunpack.c.l.b16 %v5541
      %v5546 = vunpack.c.l.b16 %v5542
      %v5547 = vpack.c.b16 %v5546, %v5545
      %v5550 = vsel %vm635, %v5538, 0
      %v5553 = vsel %vm635, %v5539, 0
      %5555 = vmatprep.subr.bf16.mxu0 0
      %5556 = vmatpush1.bf16.msra.mxu0 %v5547
      %5557 = vmatprep.subr.bf16.mxu0 0
      %5558 = vmatpush1.bf16.msra.mxu0 0
      %5559 = vmatprep.subr.bf16.mxu0 0
      %5560 = vmatpush1.bf16.msra.mxu0 0
      %5561 = vmatprep.subr.bf16.mxu0 0
      %5562 = vmatpush1.bf16.msra.mxu0 0
      %5563 = vmatprep.subr.bf16.mxu0 0
      %5564 = vmatpush1.bf16.msra.mxu0 0
      %5565 = vmatprep.subr.bf16.mxu0 0
      %5566 = vmatpush1.bf16.msra.mxu0 0
      %5567 = vmatprep.subr.bf16.mxu0 0
      %5568 = vmatpush1.bf16.msra.mxu0 0
      %5569 = vmatprep.subr.bf16.mxu0 0
      %5570 = vmatpush1.bf16.msra.mxu0 0
      %5571 = vmatprep.subr.bf16.mxu0 0
      %5572 = vmatpush1.bf16.msra.mxu0 0
      %5573 = vmatprep.subr.bf16.mxu0 0
      %5574 = vmatpush1.bf16.msra.mxu0 0
      %5575 = vmatprep.subr.bf16.mxu0 0
      %5576 = vmatpush1.bf16.msra.mxu0 0
      %5577 = vmatprep.subr.bf16.mxu0 0
      %5578 = vmatpush1.bf16.msra.mxu0 0
      %5579 = vmatprep.subr.bf16.mxu0 0
      %5580 = vmatpush1.bf16.msra.mxu0 0
      %5581 = vmatprep.subr.bf16.mxu0 0
      %5582 = vmatpush1.bf16.msra.mxu0 0
      %5583 = vmatprep.subr.bf16.mxu0 0
      %5584 = vmatpush1.bf16.msra.mxu0 0
      %5585 = vmatprep.subr.bf16.mxu0 0
      %5586 = vmatpush1.bf16.msra.mxu0 0
      %5587 = vmatprep.mubr.bf16.mxu0 0
      %5588 = vmatmul.mubr.bf16.gmra.mrb[0].mxu0 %v5550
      %v5589 = vpop.f32.mrb[0].mxu0
      %v5590 = vadd.f32 0.0, %v5589
      %v5591 = vpop.f32.mrb[0].mxu0
      %v5592 = vpop.f32.mrb[0].mxu0
      %v5593 = vadd.f32 0.0, %v5592
      %v5594 = vpop.f32.mrb[0].mxu0
      %5595 = vmatprep.mubr.bf16.mxu0 0
      %5596 = vmatmul.mubr.bf16.gmra.mrb[0].mxu0 %v5553
      %v5597 = vpop.f32.mrb[0].mxu0
      %v5598 = vadd.f32 0.0, %v5597
      %v5599 = vpop.f32.mrb[0].mxu0
      %v5600 = vpop.f32.mrb[0].mxu0
      %v5601 = vadd.f32 0.0, %v5600
      %v5602 = vpop.f32.mrb[0].mxu0
      %5603 = vdwg.mxu0
      %v5604 = vadd.f32 %v5530, %v5590
      %v5605 = vadd.f32 %v5531, %v5593
      %v5606 = vadd.f32 %v5532, %v5598
      %v5607 = vadd.f32 %v5533, %v5601
      %v5608 = vld [vmem:[%s5459 + $0x2] sm:$0xff]
      %v5609 = vld [vmem:[%s5459 + $0x22] sm:$0xff]
      %v5610 = vld [vmem:[%s5459 + $0x42] sm:$0xff]
      %v5611 = vld [vmem:[%s5459 + $0x62] sm:$0xff]
      %v5612 = vpack.c.bf16 %v5609, %v5608
      %v5613 = vpack.c.bf16 %v5611, %v5610
      %s5614 = scalar_lea.vmem %s5, 64
      %v5615 = vld [vmem:[%s5614] sm:$0xf]
      %v5616 = vld [vmem:[%s5614 + $0x4] sm:$0xf]
      %v5619 = vunpack.c.l.b16 %v5615
      %v5620 = vunpack.c.l.b16 %v5616
      %v5621 = vpack.c.b16 %v5620, %v5619
      %v5624 = vsel %vm635, %v5612, 0
      %v5627 = vsel %vm635, %v5613, 0
      %5629 = vmatprep.subr.bf16.mxu0 0
      %5630 = vmatpush1.bf16.msra.mxu0 %v5621
      %5631 = vmatprep.subr.bf16.mxu0 0
      %5632 = vmatpush1.bf16.msra.mxu0 0
      %5633 = vmatprep.subr.bf16.mxu0 0
      %5634 = vmatpush1.bf16.msra.mxu0 0
      %5635 = vmatprep.subr.bf16.mxu0 0
      %5636 = vmatpush1.bf16.msra.mxu0 0
      %5637 = vmatprep.subr.bf16.mxu0 0
      %5638 = vmatpush1.bf16.msra.mxu0 0
      %5639 = vmatprep.subr.bf16.mxu0 0
      %5640 = vmatpush1.bf16.msra.mxu0 0
      %5641 = vmatprep.subr.bf16.mxu0 0
      %5642 = vmatpush1.bf16.msra.mxu0 0
      %5643 = vmatprep.subr.bf16.mxu0 0
      %5644 = vmatpush1.bf16.msra.mxu0 0
      %5645 = vmatprep.subr.bf16.mxu0 0
      %5646 = vmatpush1.bf16.msra.mxu0 0
      %5647 = vmatprep.subr.bf16.mxu0 0
      %5648 = vmatpush1.bf16.msra.mxu0 0
      %5649 = vmatprep.subr.bf16.mxu0 0
      %5650 = vmatpush1.bf16.msra.mxu0 0
      %5651 = vmatprep.subr.bf16.mxu0 0
      %5652 = vmatpush1.bf16.msra.mxu0 0
      %5653 = vmatprep.subr.bf16.mxu0 0
      %5654 = vmatpush1.bf16.msra.mxu0 0
      %5655 = vmatprep.subr.bf16.mxu0 0
      %5656 = vmatpush1.bf16.msra.mxu0 0
      %5657 = vmatprep.subr.bf16.mxu0 0
      %5658 = vmatpush1.bf16.msra.mxu0 0
      %5659 = vmatprep.subr.bf16.mxu0 0
      %5660 = vmatpush1.bf16.msra.mxu0 0
      %5661 = vmatprep.mubr.bf16.mxu0 0
      %5662 = vmatmul.mubr.bf16.gmra.mrb[0].mxu0 %v5624
      %v5663 = vpop.f32.mrb[0].mxu0
      %v5664 = vadd.f32 0.0, %v5663
      %v5665 = vpop.f32.mrb[0].mxu0
      %v5666 = vpop.f32.mrb[0].mxu0
      %v5667 = vadd.f32 0.0, %v5666
      %v5668 = vpop.f32.mrb[0].mxu0
      %5669 = vmatprep.mubr.bf16.mxu0 0
      %5670 = vmatmul.mubr.bf16.gmra.mrb[0].mxu0 %v5627
      %v5671 = vpop.f32.mrb[0].mxu0
      %v5672 = vadd.f32 0.0, %v5671
      %v5673 = vpop.f32.mrb[0].mxu0
      %v5674 = vpop.f32.mrb[0].mxu0
      %v5675 = vadd.f32 0.0, %v5674
      %v5676 = vpop.f32.mrb[0].mxu0
      %5677 = vdwg.mxu0
      %v5678 = vadd.f32 %v5604, %v5664
      %v5679 = vadd.f32 %v5605, %v5667
      %v5680 = vadd.f32 %v5606, %v5672
      %v5681 = vadd.f32 %v5607, %v5675
      %v5682 = vld [vmem:[%s12] sm:$0xff]
      %v5683 = vld [vmem:[%s12 + $0x8] sm:$0xff]
      %v5684 = vld [vmem:[%s6] sm:$0x1]
      %v5686 = vlaneseq
      %v5687 = vshrl.u32 %v5686, 7
      %v5688 = vsub.s32 0, %v5687
      %v5689 = vrot.slane %v5684, %v5688
      %vm5691 = vcmask 261120
      %v5693 = vsel %vm5691, %v5682, 0
      %v5696 = vsel %vm5691, %v5683, 0
      %5698 = vmatprep.subr.mxu0 0.0
      %5699 = vmatpush1.msra.mxu0 %v5678
      %5700 = vmatprep.subr.mxu0 0.0
      %5701 = vmatpush1.msra.mxu0 %v5679
      %5702 = vmatprep.subr.mxu0 0.0
      %5703 = vmatpush1.msra.mxu0 %v5680
      %5704 = vmatprep.subr.mxu0 0.0
      %5705 = vmatpush1.msra.mxu0 %v5681
      %5706 = vmatprep.subr.mxu0 0.0
      %5707 = vmatpush1.msra.mxu0 0.0
      %5708 = vmatprep.subr.mxu0 0.0
      %5709 = vmatpush1.msra.mxu0 0.0
      %5710 = vmatprep.subr.mxu0 0.0
      %5711 = vmatpush1.msra.mxu0 0.0
      %5712 = vmatprep.subr.mxu0 0.0
      %5713 = vmatpush1.msra.mxu0 0.0
      %5714 = vmatprep.subr.mxu0 0.0
      %5715 = vmatpush1.msra.mxu0 0.0
      %5716 = vmatprep.subr.mxu0 0.0
      %5717 = vmatpush1.msra.mxu0 0.0
      %5718 = vmatprep.subr.mxu0 0.0
      %5719 = vmatpush1.msra.mxu0 0.0
      %5720 = vmatprep.subr.mxu0 0.0
      %5721 = vmatpush1.msra.mxu0 0.0
      %5722 = vmatprep.subr.mxu0 0.0
      %5723 = vmatpush1.msra.mxu0 0.0
      %5724 = vmatprep.subr.mxu0 0.0
      %5725 = vmatpush1.msra.mxu0 0.0
      %5726 = vmatprep.subr.mxu0 0.0
      %5727 = vmatpush1.msra.mxu0 0.0
      %5728 = vmatprep.subr.mxu0 0.0
      %5729 = vmatpush1.msra.mxu0 0.0
      %5730 = vmatprep.subr.mxu0 0.0
      %5731 = vmatpush1.msra.mxu0 0.0
      %5732 = vmatprep.subr.mxu0 0.0
      %5733 = vmatpush1.msra.mxu0 0.0
      %5734 = vmatprep.subr.mxu0 0.0
      %5735 = vmatpush1.msra.mxu0 0.0
      %5736 = vmatprep.subr.mxu0 0.0
      %5737 = vmatpush1.msra.mxu0 0.0
      %5738 = vmatprep.subr.mxu0 0.0
      %5739 = vmatpush1.msra.mxu0 0.0
      %5740 = vmatprep.subr.mxu0 0.0
      %5741 = vmatpush1.msra.mxu0 0.0
      %5742 = vmatprep.subr.mxu0 0.0
      %5743 = vmatpush1.msra.mxu0 0.0
      %5744 = vmatprep.subr.mxu0 0.0
      %5745 = vmatpush1.msra.mxu0 0.0
      %5746 = vmatprep.subr.mxu0 0.0
      %5747 = vmatpush1.msra.mxu0 0.0
      %5748 = vmatprep.subr.mxu0 0.0
      %5749 = vmatpush1.msra.mxu0 0.0
      %5750 = vmatprep.subr.mxu0 0.0
      %5751 = vmatpush1.msra.mxu0 0.0
      %5752 = vmatprep.subr.mxu0 0.0
      %5753 = vmatpush1.msra.mxu0 0.0
      %5754 = vmatprep.subr.mxu0 0.0
      %5755 = vmatpush1.msra.mxu0 0.0
      %5756 = vmatprep.subr.mxu0 0.0
      %5757 = vmatpush1.msra.mxu0 0.0
      %5758 = vmatprep.subr.mxu0 0.0
      %5759 = vmatpush1.msra.mxu0 0.0
      %5760 = vmatprep.subr.mxu0 0.0
      %5761 = vmatpush1.msra.mxu0 0.0
      %5762 = vmatprep.mubr.f32.mxu0 0.0
      %5763 = vmatmul.mubr.f32.gmra.mrb[0].mxu0 %v5693
      %v5764 = vpop.f32.mrb[0].mxu0
      %v5765 = vadd.f32 %v5689, %v5764
      %v5766 = vpop.f32.mrb[0].mxu0
      %5767 = vmatprep.mubr.f32.mxu0 0.0
      %5768 = vmatmul.mubr.f32.gmra.mrb[0].mxu0 %v5696
      %v5769 = vpop.f32.mrb[0].mxu0
      %v5770 = vadd.f32 %v5689, %v5769
      %v5771 = vpop.f32.mrb[0].mxu0
      %5772 = vdwg.mxu0
      %v5773 = vmax.f32 %v5765, 0.0
      %v5774 = vmax.f32 %v5770, 0.0
      %s5775 = scalar_lea.vmem [#allocation5], 16
      %vm5776 = vcmask 125952
      %5777 = vst.msk [vmem:[%s5775 + $0x1] sm:$0xf] %vm5776, %v5773
      %s5778 = scalar_lea.vmem [#allocation5], 32
      %vm5779 = vcmask 130052
      %5780 = vst.msk [vmem:[%s5778 - $0x3] sm:$0xf0] %vm5779, %v5773
      %s5781 = scalar_lea.vmem [#allocation5], 48
      %5782 = vst.msk [vmem:[%s5781 + $0x1] sm:$0xf] %vm5776, %v5774
      %s5783 = scalar_lea.vmem [#allocation5], 64
      %5784 = vst.msk [vmem:[%s5783 - $0x3] sm:$0xf0] %vm5779, %v5774
      %v5785 = vld [vmem:[#allocation5] sm:$0xff]
      %v5786 = vld [vmem:[#allocation5 + $0x20] sm:$0xff]
      %v5787 = vpack.c.bf16 %v5786, %v5785
      %v5788 = vld [vmem:[%s7] sm:$0xf]
      %v5789 = vld [vmem:[%s7 + $0x4] sm:$0xf]
      %v5790 = vld [vmem:[#allocation5 + $0x1] sm:$0xff]
      %v5791 = vld [vmem:[#allocation5 + $0x21] sm:$0xff]
      %v5792 = vpack.c.bf16 %v5791, %v5790
      %s5793 = scalar_lea.vmem %s7, 8
      %v5794 = vld [vmem:[%s5793] sm:$0xf]
      %v5795 = vld [vmem:[%s5793 + $0x4] sm:$0xf]
      %v5798 = vunpack.c.l.b16 %v5794
      %v5799 = vunpack.c.l.b16 %v5795
      %v5800 = vpack.c.b16 %v5799, %v5798
      %v5803 = vsel %vm635, %v5792, 0
      %5805 = vmatprep.subr.bf16.mxu0 0
      %5806 = vmatpush1.bf16.msra.mxu0 %v5800
      %5807 = vmatprep.subr.bf16.mxu0 0
      %5808 = vmatpush1.bf16.msra.mxu0 0
      %5809 = vmatprep.subr.bf16.mxu0 0
      %5810 = vmatpush1.bf16.msra.mxu0 0
      %5811 = vmatprep.subr.bf16.mxu0 0
      %5812 = vmatpush1.bf16.msra.mxu0 0
      %5813 = vmatprep.subr.bf16.mxu0 0
      %5814 = vmatpush1.bf16.msra.mxu0 0
      %5815 = vmatprep.subr.bf16.mxu0 0
      %5816 = vmatpush1.bf16.msra.mxu0 0
      %5817 = vmatprep.subr.bf16.mxu0 0
      %5818 = vmatpush1.bf16.msra.mxu0 0
      %5819 = vmatprep.subr.bf16.mxu0 0
      %5820 = vmatpush1.bf16.msra.mxu0 0
      %5821 = vmatprep.subr.bf16.mxu0 0
      %5822 = vmatpush1.bf16.msra.mxu0 0
      %5823 = vmatprep.subr.bf16.mxu0 0
      %5824 = vmatpush1.bf16.msra.mxu0 0
      %5825 = vmatprep.subr.bf16.mxu0 0
      %5826 = vmatpush1.bf16.msra.mxu0 0
      %5827 = vmatprep.subr.bf16.mxu0 0
      %5828 = vmatpush1.bf16.msra.mxu0 0
      %5829 = vmatprep.subr.bf16.mxu0 0
      %5830 = vmatpush1.bf16.msra.mxu0 0
      %5831 = vmatprep.subr.bf16.mxu0 0
      %5832 = vmatpush1.bf16.msra.mxu0 0
      %5833 = vmatprep.subr.bf16.mxu0 0
      %5834 = vmatpush1.bf16.msra.mxu0 0
      %5835 = vmatprep.subr.bf16.mxu0 0
      %5836 = vmatpush1.bf16.msra.mxu0 0
      %5837 = vmatprep.mubr.bf16.mxu0 0
      %5838 = vmatmul.mubr.bf16.gmra.mrb[0].mxu0 %v5803
      %v5839 = vpop.f32.mrb[0].mxu0
      %v5840 = vadd.f32 0.0, %v5839
      %v5841 = vpop.f32.mrb[0].mxu0
      %v5842 = vpop.f32.mrb[0].mxu0
      %v5843 = vadd.f32 0.0, %v5842
      %v5844 = vpop.f32.mrb[0].mxu0
      %5845 = vdwg.mxu0
      %v5848 = vunpack.c.l.b16 %v5788
      %v5849 = vunpack.c.l.b16 %v5789
      %v5850 = vpack.c.b16 %v5849, %v5848
      %v5853 = vsel %vm635, %v5787, 0
      %5855 = vmatprep.subr.bf16.mxu0 0
      %5856 = vmatpush1.bf16.msra.mxu0 %v5850
      %5857 = vmatprep.subr.bf16.mxu0 0
      %5858 = vmatpush1.bf16.msra.mxu0 0
      %5859 = vmatprep.subr.bf16.mxu0 0
      %5860 = vmatpush1.bf16.msra.mxu0 0
      %5861 = vmatprep.subr.bf16.mxu0 0
      %5862 = vmatpush1.bf16.msra.mxu0 0
      %5863 = vmatprep.subr.bf16.mxu0 0
      %5864 = vmatpush1.bf16.msra.mxu0 0
      %5865 = vmatprep.subr.bf16.mxu0 0
      %5866 = vmatpush1.bf16.msra.mxu0 0
      %5867 = vmatprep.subr.bf16.mxu0 0
      %5868 = vmatpush1.bf16.msra.mxu0 0
      %5869 = vmatprep.subr.bf16.mxu0 0
      %5870 = vmatpush1.bf16.msra.mxu0 0
      %5871 = vmatprep.subr.bf16.mxu0 0
      %5872 = vmatpush1.bf16.msra.mxu0 0
      %5873 = vmatprep.subr.bf16.mxu0 0
      %5874 = vmatpush1.bf16.msra.mxu0 0
      %5875 = vmatprep.subr.bf16.mxu0 0
      %5876 = vmatpush1.bf16.msra.mxu0 0
      %5877 = vmatprep.subr.bf16.mxu0 0
      %5878 = vmatpush1.bf16.msra.mxu0 0
      %5879 = vmatprep.subr.bf16.mxu0 0
      %5880 = vmatpush1.bf16.msra.mxu0 0
      %5881 = vmatprep.subr.bf16.mxu0 0
      %5882 = vmatpush1.bf16.msra.mxu0 0
      %5883 = vmatprep.subr.bf16.mxu0 0
      %5884 = vmatpush1.bf16.msra.mxu0 0
      %5885 = vmatprep.subr.bf16.mxu0 0
      %5886 = vmatpush1.bf16.msra.mxu0 0
      %5887 = vmatprep.mubr.bf16.mxu0 0
      %5888 = vmatmul.mubr.bf16.gmra.mrb[0].mxu0 %v5853
      %v5889 = vpop.f32.mrb[0].mxu0
      %v5890 = vadd.f32 %v5840, %v5889
      %v5891 = vpop.f32.mrb[0].mxu0
      %v5892 = vpop.f32.mrb[0].mxu0
      %v5893 = vadd.f32 %v5843, %v5892
      %v5894 = vpop.f32.mrb[0].mxu0
      %5895 = vdwg.mxu0
      %v5896 = vld [vmem:[#allocation5 + $0x2] sm:$0xff]
      %v5897 = vld [vmem:[#allocation5 + $0x22] sm:$0xff]
      %v5898 = vpack.c.bf16 %v5897, %v5896
      %s5899 = scalar_lea.vmem %s7, 16
      %v5900 = vld [vmem:[%s5899] sm:$0xf]
      %v5901 = vld [vmem:[%s5899 + $0x4] sm:$0xf]
      %v5904 = vunpack.c.l.b16 %v5900
      %v5905 = vunpack.c.l.b16 %v5901
      %v5906 = vpack.c.b16 %v5905, %v5904
      %v5909 = vsel %vm635, %v5898, 0
      %5911 = vmatprep.subr.bf16.mxu0 0
      %5912 = vmatpush1.bf16.msra.mxu0 %v5906
      %5913 = vmatprep.subr.bf16.mxu0 0
      %5914 = vmatpush1.bf16.msra.mxu0 0
      %5915 = vmatprep.subr.bf16.mxu0 0
      %5916 = vmatpush1.bf16.msra.mxu0 0
      %5917 = vmatprep.subr.bf16.mxu0 0
      %5918 = vmatpush1.bf16.msra.mxu0 0
      %5919 = vmatprep.subr.bf16.mxu0 0
      %5920 = vmatpush1.bf16.msra.mxu0 0
      %5921 = vmatprep.subr.bf16.mxu0 0
      %5922 = vmatpush1.bf16.msra.mxu0 0
      %5923 = vmatprep.subr.bf16.mxu0 0
      %5924 = vmatpush1.bf16.msra.mxu0 0
      %5925 = vmatprep.subr.bf16.mxu0 0
      %5926 = vmatpush1.bf16.msra.mxu0 0
      %5927 = vmatprep.subr.bf16.mxu0 0
      %5928 = vmatpush1.bf16.msra.mxu0 0
      %5929 = vmatprep.subr.bf16.mxu0 0
      %5930 = vmatpush1.bf16.msra.mxu0 0
      %5931 = vmatprep.subr.bf16.mxu0 0
      %5932 = vmatpush1.bf16.msra.mxu0 0
      %5933 = vmatprep.subr.bf16.mxu0 0
      %5934 = vmatpush1.bf16.msra.mxu0 0
      %5935 = vmatprep.subr.bf16.mxu0 0
      %5936 = vmatpush1.bf16.msra.mxu0 0
      %5937 = vmatprep.subr.bf16.mxu0 0
      %5938 = vmatpush1.bf16.msra.mxu0 0
      %5939 = vmatprep.subr.bf16.mxu0 0
      %5940 = vmatpush1.bf16.msra.mxu0 0
      %5941 = vmatprep.subr.bf16.mxu0 0
      %5942 = vmatpush1.bf16.msra.mxu0 0
      %5943 = vmatprep.mubr.bf16.mxu0 0
      %5944 = vmatmul.mubr.bf16.gmra.mrb[0].mxu0 %v5909
      %v5945 = vpop.f32.mrb[0].mxu0
      %v5946 = vadd.f32 0.0, %v5945
      %v5947 = vpop.f32.mrb[0].mxu0
      %v5948 = vpop.f32.mrb[0].mxu0
      %v5949 = vadd.f32 0.0, %v5948
      %v5950 = vpop.f32.mrb[0].mxu0
      %5951 = vdwg.mxu0
      %v5952 = vadd.f32 %v5890, %v5946
      %v5953 = vadd.f32 %v5893, %v5949
      %v5954 = vld [vmem:[%s5775] sm:$0xff]
      %v5955 = vld [vmem:[%s5775 + $0x20] sm:$0xff]
      %v5956 = vpack.c.bf16 %v5955, %v5954
      %s5957 = scalar_lea.vmem %s7, 24
      %v5958 = vld [vmem:[%s5957] sm:$0xf]
      %v5959 = vld [vmem:[%s5957 + $0x4] sm:$0xf]
      %v5962 = vunpack.c.l.b16 %v5958
      %v5963 = vunpack.c.l.b16 %v5959
      %v5964 = vpack.c.b16 %v5963, %v5962
      %v5967 = vsel %vm635, %v5956, 0
      %5969 = vmatprep.subr.bf16.mxu0 0
      %5970 = vmatpush1.bf16.msra.mxu0 %v5964
      %5971 = vmatprep.subr.bf16.mxu0 0
      %5972 = vmatpush1.bf16.msra.mxu0 0
      %5973 = vmatprep.subr.bf16.mxu0 0
      %5974 = vmatpush1.bf16.msra.mxu0 0
      %5975 = vmatprep.subr.bf16.mxu0 0
      %5976 = vmatpush1.bf16.msra.mxu0 0
      %5977 = vmatprep.subr.bf16.mxu0 0
      %5978 = vmatpush1.bf16.msra.mxu0 0
      %5979 = vmatprep.subr.bf16.mxu0 0
      %5980 = vmatpush1.bf16.msra.mxu0 0
      %5981 = vmatprep.subr.bf16.mxu0 0
      %5982 = vmatpush1.bf16.msra.mxu0 0
      %5983 = vmatprep.subr.bf16.mxu0 0
      %5984 = vmatpush1.bf16.msra.mxu0 0
      %5985 = vmatprep.subr.bf16.mxu0 0
      %5986 = vmatpush1.bf16.msra.mxu0 0
      %5987 = vmatprep.subr.bf16.mxu0 0
      %5988 = vmatpush1.bf16.msra.mxu0 0
      %5989 = vmatprep.subr.bf16.mxu0 0
      %5990 = vmatpush1.bf16.msra.mxu0 0
      %5991 = vmatprep.subr.bf16.mxu0 0
      %5992 = vmatpush1.bf16.msra.mxu0 0
      %5993 = vmatprep.subr.bf16.mxu0 0
      %5994 = vmatpush1.bf16.msra.mxu0 0
      %5995 = vmatprep.subr.bf16.mxu0 0
      %5996 = vmatpush1.bf16.msra.mxu0 0
      %5997 = vmatprep.subr.bf16.mxu0 0
      %5998 = vmatpush1.bf16.msra.mxu0 0
      %5999 = vmatprep.subr.bf16.mxu0 0
      %6000 = vmatpush1.bf16.msra.mxu0 0
      %6001 = vmatprep.mubr.bf16.mxu0 0
      %6002 = vmatmul.mubr.bf16.gmra.mrb[0].mxu0 %v5967
      %v6003 = vpop.f32.mrb[0].mxu0
      %v6004 = vadd.f32 0.0, %v6003
      %v6005 = vpop.f32.mrb[0].mxu0
      %v6006 = vpop.f32.mrb[0].mxu0
      %v6007 = vadd.f32 0.0, %v6006
      %v6008 = vpop.f32.mrb[0].mxu0
      %6009 = vdwg.mxu0
      %v6010 = vadd.f32 %v5952, %v6004
      %v6011 = vadd.f32 %v5953, %v6007
      %v6012 = vld [vmem:[%s5775 + $0x1] sm:$0xff]
      %v6013 = vld [vmem:[%s5775 + $0x21] sm:$0xff]
      %v6014 = vpack.c.bf16 %v6013, %v6012
      %s6015 = scalar_lea.vmem %s7, 32
      %v6016 = vld [vmem:[%s6015] sm:$0xf]
      %v6017 = vld [vmem:[%s6015 + $0x4] sm:$0xf]
      %v6020 = vunpack.c.l.b16 %v6016
      %v6021 = vunpack.c.l.b16 %v6017
      %v6022 = vpack.c.b16 %v6021, %v6020
      %v6025 = vsel %vm635, %v6014, 0
      %6027 = vmatprep.subr.bf16.mxu0 0
      %6028 = vmatpush1.bf16.msra.mxu0 %v6022
      %6029 = vmatprep.subr.bf16.mxu0 0
      %6030 = vmatpush1.bf16.msra.mxu0 0
      %6031 = vmatprep.subr.bf16.mxu0 0
      %6032 = vmatpush1.bf16.msra.mxu0 0
      %6033 = vmatprep.subr.bf16.mxu0 0
      %6034 = vmatpush1.bf16.msra.mxu0 0
      %6035 = vmatprep.subr.bf16.mxu0 0
      %6036 = vmatpush1.bf16.msra.mxu0 0
      %6037 = vmatprep.subr.bf16.mxu0 0
      %6038 = vmatpush1.bf16.msra.mxu0 0
      %6039 = vmatprep.subr.bf16.mxu0 0
      %6040 = vmatpush1.bf16.msra.mxu0 0
      %6041 = vmatprep.subr.bf16.mxu0 0
      %6042 = vmatpush1.bf16.msra.mxu0 0
      %6043 = vmatprep.subr.bf16.mxu0 0
      %6044 = vmatpush1.bf16.msra.mxu0 0
      %6045 = vmatprep.subr.bf16.mxu0 0
      %6046 = vmatpush1.bf16.msra.mxu0 0
      %6047 = vmatprep.subr.bf16.mxu0 0
      %6048 = vmatpush1.bf16.msra.mxu0 0
      %6049 = vmatprep.subr.bf16.mxu0 0
      %6050 = vmatpush1.bf16.msra.mxu0 0
      %6051 = vmatprep.subr.bf16.mxu0 0
      %6052 = vmatpush1.bf16.msra.mxu0 0
      %6053 = vmatprep.subr.bf16.mxu0 0
      %6054 = vmatpush1.bf16.msra.mxu0 0
      %6055 = vmatprep.subr.bf16.mxu0 0
      %6056 = vmatpush1.bf16.msra.mxu0 0
      %6057 = vmatprep.subr.bf16.mxu0 0
      %6058 = vmatpush1.bf16.msra.mxu0 0
      %6059 = vmatprep.mubr.bf16.mxu0 0
      %6060 = vmatmul.mubr.bf16.gmra.mrb[0].mxu0 %v6025
      %v6061 = vpop.f32.mrb[0].mxu0
      %v6062 = vadd.f32 0.0, %v6061
      %v6063 = vpop.f32.mrb[0].mxu0
      %v6064 = vpop.f32.mrb[0].mxu0
      %v6065 = vadd.f32 0.0, %v6064
      %v6066 = vpop.f32.mrb[0].mxu0
      %6067 = vdwg.mxu0
      %v6068 = vadd.f32 %v6010, %v6062
      %v6069 = vadd.f32 %v6011, %v6065
      %v6070 = vld [vmem:[%s5775 + $0x2] sm:$0xff]
      %v6071 = vld [vmem:[%s5775 + $0x22] sm:$0xff]
      %v6072 = vpack.c.bf16 %v6071, %v6070
      %s6073 = scalar_lea.vmem %s7, 40
      %v6074 = vld [vmem:[%s6073] sm:$0xf]
      %v6075 = vld [vmem:[%s6073 + $0x4] sm:$0xf]
      %v6078 = vunpack.c.l.b16 %v6074
      %v6079 = vunpack.c.l.b16 %v6075
      %v6080 = vpack.c.b16 %v6079, %v6078
      %v6083 = vsel %vm635, %v6072, 0
      %6085 = vmatprep.subr.bf16.mxu0 0
      %6086 = vmatpush1.bf16.msra.mxu0 %v6080
      %6087 = vmatprep.subr.bf16.mxu0 0
      %6088 = vmatpush1.bf16.msra.mxu0 0
      %6089 = vmatprep.subr.bf16.mxu0 0
      %6090 = vmatpush1.bf16.msra.mxu0 0
      %6091 = vmatprep.subr.bf16.mxu0 0
      %6092 = vmatpush1.bf16.msra.mxu0 0
      %6093 = vmatprep.subr.bf16.mxu0 0
      %6094 = vmatpush1.bf16.msra.mxu0 0
      %6095 = vmatprep.subr.bf16.mxu0 0
      %6096 = vmatpush1.bf16.msra.mxu0 0
      %6097 = vmatprep.subr.bf16.mxu0 0
      %6098 = vmatpush1.bf16.msra.mxu0 0
      %6099 = vmatprep.subr.bf16.mxu0 0
      %6100 = vmatpush1.bf16.msra.mxu0 0
      %6101 = vmatprep.subr.bf16.mxu0 0
      %6102 = vmatpush1.bf16.msra.mxu0 0
      %6103 = vmatprep.subr.bf16.mxu0 0
      %6104 = vmatpush1.bf16.msra.mxu0 0
      %6105 = vmatprep.subr.bf16.mxu0 0
      %6106 = vmatpush1.bf16.msra.mxu0 0
      %6107 = vmatprep.subr.bf16.mxu0 0
      %6108 = vmatpush1.bf16.msra.mxu0 0
      %6109 = vmatprep.subr.bf16.mxu0 0
      %6110 = vmatpush1.bf16.msra.mxu0 0
      %6111 = vmatprep.subr.bf16.mxu0 0
      %6112 = vmatpush1.bf16.msra.mxu0 0
      %6113 = vmatprep.subr.bf16.mxu0 0
      %6114 = vmatpush1.bf16.msra.mxu0 0
      %6115 = vmatprep.subr.bf16.mxu0 0
      %6116 = vmatpush1.bf16.msra.mxu0 0
      %6117 = vmatprep.mubr.bf16.mxu0 0
      %6118 = vmatmul.mubr.bf16.gmra.mrb[0].mxu0 %v6083
      %v6119 = vpop.f32.mrb[0].mxu0
      %v6120 = vadd.f32 0.0, %v6119
      %v6121 = vpop.f32.mrb[0].mxu0
      %v6122 = vpop.f32.mrb[0].mxu0
      %v6123 = vadd.f32 0.0, %v6122
      %v6124 = vpop.f32.mrb[0].mxu0
      %6125 = vdwg.mxu0
      %v6126 = vadd.f32 %v6068, %v6120
      %v6127 = vadd.f32 %v6069, %v6123
      %v6128 = vld [vmem:[%s5778] sm:$0xff]
      %v6129 = vld [vmem:[%s5778 + $0x20] sm:$0xff]
      %v6130 = vpack.c.bf16 %v6129, %v6128
      %s6131 = scalar_lea.vmem %s7, 48
      %v6132 = vld [vmem:[%s6131] sm:$0xf]
      %v6133 = vld [vmem:[%s6131 + $0x4] sm:$0xf]
      %v6136 = vunpack.c.l.b16 %v6132
      %v6137 = vunpack.c.l.b16 %v6133
      %v6138 = vpack.c.b16 %v6137, %v6136
      %v6141 = vsel %vm635, %v6130, 0
      %6143 = vmatprep.subr.bf16.mxu0 0
      %6144 = vmatpush1.bf16.msra.mxu0 %v6138
      %6145 = vmatprep.subr.bf16.mxu0 0
      %6146 = vmatpush1.bf16.msra.mxu0 0
      %6147 = vmatprep.subr.bf16.mxu0 0
      %6148 = vmatpush1.bf16.msra.mxu0 0
      %6149 = vmatprep.subr.bf16.mxu0 0
      %6150 = vmatpush1.bf16.msra.mxu0 0
      %6151 = vmatprep.subr.bf16.mxu0 0
      %6152 = vmatpush1.bf16.msra.mxu0 0
      %6153 = vmatprep.subr.bf16.mxu0 0
      %6154 = vmatpush1.bf16.msra.mxu0 0
      %6155 = vmatprep.subr.bf16.mxu0 0
      %6156 = vmatpush1.bf16.msra.mxu0 0
      %6157 = vmatprep.subr.bf16.mxu0 0
      %6158 = vmatpush1.bf16.msra.mxu0 0
      %6159 = vmatprep.subr.bf16.mxu0 0
      %6160 = vmatpush1.bf16.msra.mxu0 0
      %6161 = vmatprep.subr.bf16.mxu0 0
      %6162 = vmatpush1.bf16.msra.mxu0 0
      %6163 = vmatprep.subr.bf16.mxu0 0
      %6164 = vmatpush1.bf16.msra.mxu0 0
      %6165 = vmatprep.subr.bf16.mxu0 0
      %6166 = vmatpush1.bf16.msra.mxu0 0
      %6167 = vmatprep.subr.bf16.mxu0 0
      %6168 = vmatpush1.bf16.msra.mxu0 0
      %6169 = vmatprep.subr.bf16.mxu0 0
      %6170 = vmatpush1.bf16.msra.mxu0 0
      %6171 = vmatprep.subr.bf16.mxu0 0
      %6172 = vmatpush1.bf16.msra.mxu0 0
      %6173 = vmatprep.subr.bf16.mxu0 0
      %6174 = vmatpush1.bf16.msra.mxu0 0
      %6175 = vmatprep.mubr.bf16.mxu0 0
      %6176 = vmatmul.mubr.bf16.gmra.mrb[0].mxu0 %v6141
      %v6177 = vpop.f32.mrb[0].mxu0
      %v6178 = vadd.f32 0.0, %v6177
      %v6179 = vpop.f32.mrb[0].mxu0
      %v6180 = vpop.f32.mrb[0].mxu0
      %v6181 = vadd.f32 0.0, %v6180
      %v6182 = vpop.f32.mrb[0].mxu0
      %6183 = vdwg.mxu0
      %v6184 = vadd.f32 %v6126, %v6178
      %v6185 = vadd.f32 %v6127, %v6181
      %v6186 = vld [vmem:[%s5778 + $0x1] sm:$0xff]
      %v6187 = vld [vmem:[%s5778 + $0x21] sm:$0xff]
      %v6188 = vpack.c.bf16 %v6187, %v6186
      %s6189 = scalar_lea.vmem %s7, 56
      %v6190 = vld [vmem:[%s6189] sm:$0xf]
      %v6191 = vld [vmem:[%s6189 + $0x4] sm:$0xf]
      %v6194 = vunpack.c.l.b16 %v6190
      %v6195 = vunpack.c.l.b16 %v6191
      %v6196 = vpack.c.b16 %v6195, %v6194
      %v6199 = vsel %vm635, %v6188, 0
      %6201 = vmatprep.subr.bf16.mxu0 0
      %6202 = vmatpush1.bf16.msra.mxu0 %v6196
      %6203 = vmatprep.subr.bf16.mxu0 0
      %6204 = vmatpush1.bf16.msra.mxu0 0
      %6205 = vmatprep.subr.bf16.mxu0 0
      %6206 = vmatpush1.bf16.msra.mxu0 0
      %6207 = vmatprep.subr.bf16.mxu0 0
      %6208 = vmatpush1.bf16.msra.mxu0 0
      %6209 = vmatprep.subr.bf16.mxu0 0
      %6210 = vmatpush1.bf16.msra.mxu0 0
      %6211 = vmatprep.subr.bf16.mxu0 0
      %6212 = vmatpush1.bf16.msra.mxu0 0
      %6213 = vmatprep.subr.bf16.mxu0 0
      %6214 = vmatpush1.bf16.msra.mxu0 0
      %6215 = vmatprep.subr.bf16.mxu0 0
      %6216 = vmatpush1.bf16.msra.mxu0 0
      %6217 = vmatprep.subr.bf16.mxu0 0
      %6218 = vmatpush1.bf16.msra.mxu0 0
      %6219 = vmatprep.subr.bf16.mxu0 0
      %6220 = vmatpush1.bf16.msra.mxu0 0
      %6221 = vmatprep.subr.bf16.mxu0 0
      %6222 = vmatpush1.bf16.msra.mxu0 0
      %6223 = vmatprep.subr.bf16.mxu0 0
      %6224 = vmatpush1.bf16.msra.mxu0 0
      %6225 = vmatprep.subr.bf16.mxu0 0
      %6226 = vmatpush1.bf16.msra.mxu0 0
      %6227 = vmatprep.subr.bf16.mxu0 0
      %6228 = vmatpush1.bf16.msra.mxu0 0
      %6229 = vmatprep.subr.bf16.mxu0 0
      %6230 = vmatpush1.bf16.msra.mxu0 0
      %6231 = vmatprep.subr.bf16.mxu0 0
      %6232 = vmatpush1.bf16.msra.mxu0 0
      %6233 = vmatprep.mubr.bf16.mxu0 0
      %6234 = vmatmul.mubr.bf16.gmra.mrb[0].mxu0 %v6199
      %v6235 = vpop.f32.mrb[0].mxu0
      %v6236 = vadd.f32 0.0, %v6235
      %v6237 = vpop.f32.mrb[0].mxu0
      %v6238 = vpop.f32.mrb[0].mxu0
      %v6239 = vadd.f32 0.0, %v6238
      %v6240 = vpop.f32.mrb[0].mxu0
      %6241 = vdwg.mxu0
      %v6242 = vadd.f32 %v6184, %v6236
      %v6243 = vadd.f32 %v6185, %v6239
      %v6244 = vld [vmem:[%s5778 + $0x2] sm:$0xff]
      %v6245 = vld [vmem:[%s5778 + $0x22] sm:$0xff]
      %v6246 = vpack.c.bf16 %v6245, %v6244
      %s6247 = scalar_lea.vmem %s7, 64
      %v6248 = vld [vmem:[%s6247] sm:$0xf]
      %v6249 = vld [vmem:[%s6247 + $0x4] sm:$0xf]
      %v6252 = vunpack.c.l.b16 %v6248
      %v6253 = vunpack.c.l.b16 %v6249
      %v6254 = vpack.c.b16 %v6253, %v6252
      %v6257 = vsel %vm635, %v6246, 0
      %6259 = vmatprep.subr.bf16.mxu0 0
      %6260 = vmatpush1.bf16.msra.mxu0 %v6254
      %6261 = vmatprep.subr.bf16.mxu0 0
      %6262 = vmatpush1.bf16.msra.mxu0 0
      %6263 = vmatprep.subr.bf16.mxu0 0
      %6264 = vmatpush1.bf16.msra.mxu0 0
      %6265 = vmatprep.subr.bf16.mxu0 0
      %6266 = vmatpush1.bf16.msra.mxu0 0
      %6267 = vmatprep.subr.bf16.mxu0 0
      %6268 = vmatpush1.bf16.msra.mxu0 0
      %6269 = vmatprep.subr.bf16.mxu0 0
      %6270 = vmatpush1.bf16.msra.mxu0 0
      %6271 = vmatprep.subr.bf16.mxu0 0
      %6272 = vmatpush1.bf16.msra.mxu0 0
      %6273 = vmatprep.subr.bf16.mxu0 0
      %6274 = vmatpush1.bf16.msra.mxu0 0
      %6275 = vmatprep.subr.bf16.mxu0 0
      %6276 = vmatpush1.bf16.msra.mxu0 0
      %6277 = vmatprep.subr.bf16.mxu0 0
      %6278 = vmatpush1.bf16.msra.mxu0 0
      %6279 = vmatprep.subr.bf16.mxu0 0
      %6280 = vmatpush1.bf16.msra.mxu0 0
      %6281 = vmatprep.subr.bf16.mxu0 0
      %6282 = vmatpush1.bf16.msra.mxu0 0
      %6283 = vmatprep.subr.bf16.mxu0 0
      %6284 = vmatpush1.bf16.msra.mxu0 0
      %6285 = vmatprep.subr.bf16.mxu0 0
      %6286 = vmatpush1.bf16.msra.mxu0 0
      %6287 = vmatprep.subr.bf16.mxu0 0
      %6288 = vmatpush1.bf16.msra.mxu0 0
      %6289 = vmatprep.subr.bf16.mxu0 0
      %6290 = vmatpush1.bf16.msra.mxu0 0
      %6291 = vmatprep.mubr.bf16.mxu0 0
      %6292 = vmatmul.mubr.bf16.gmra.mrb[0].mxu0 %v6257
      %v6293 = vpop.f32.mrb[0].mxu0
      %v6294 = vadd.f32 0.0, %v6293
      %v6295 = vpop.f32.mrb[0].mxu0
      %v6296 = vpop.f32.mrb[0].mxu0
      %v6297 = vadd.f32 0.0, %v6296
      %v6298 = vpop.f32.mrb[0].mxu0
      %6299 = vdwg.mxu0
      %v6300 = vadd.f32 %v6242, %v6294
      %v6301 = vadd.f32 %v6243, %v6297
      %v6302 = vld [vmem:[%s13] sm:$0xf]
      %v6303 = vld [vmem:[%s8] sm:$0x1]
      %v6305 = vlaneseq
      %v6306 = vshrl.u32 %v6305, 7
      %v6307 = vsub.s32 0, %v6306
      %v6308 = vrot.slane %v6303, %v6307
      %v6311 = vsel %vm635, %v6302, 0
      %6313 = vmatprep.subr.mxu0 0.0
      %6314 = vmatpush1.msra.mxu0 %v6300
      %6315 = vmatprep.subr.mxu0 0.0
      %6316 = vmatpush1.msra.mxu0 %v6301
      %6317 = vmatprep.subr.mxu0 0.0
      %6318 = vmatpush1.msra.mxu0 0.0
      %6319 = vmatprep.subr.mxu0 0.0
      %6320 = vmatpush1.msra.mxu0 0.0
      %6321 = vmatprep.subr.mxu0 0.0
      %6322 = vmatpush1.msra.mxu0 0.0
      %6323 = vmatprep.subr.mxu0 0.0
      %6324 = vmatpush1.msra.mxu0 0.0
      %6325 = vmatprep.subr.mxu0 0.0
      %6326 = vmatpush1.msra.mxu0 0.0
      %6327 = vmatprep.subr.mxu0 0.0
      %6328 = vmatpush1.msra.mxu0 0.0
      %6329 = vmatprep.subr.mxu0 0.0
      %6330 = vmatpush1.msra.mxu0 0.0
      %6331 = vmatprep.subr.mxu0 0.0
      %6332 = vmatpush1.msra.mxu0 0.0
      %6333 = vmatprep.subr.mxu0 0.0
      %6334 = vmatpush1.msra.mxu0 0.0
      %6335 = vmatprep.subr.mxu0 0.0
      %6336 = vmatpush1.msra.mxu0 0.0
      %6337 = vmatprep.subr.mxu0 0.0
      %6338 = vmatpush1.msra.mxu0 0.0
      %6339 = vmatprep.subr.mxu0 0.0
      %6340 = vmatpush1.msra.mxu0 0.0
      %6341 = vmatprep.subr.mxu0 0.0
      %6342 = vmatpush1.msra.mxu0 0.0
      %6343 = vmatprep.subr.mxu0 0.0
      %6344 = vmatpush1.msra.mxu0 0.0
      %6345 = vmatprep.subr.mxu0 0.0
      %6346 = vmatpush1.msra.mxu0 0.0
      %6347 = vmatprep.subr.mxu0 0.0
      %6348 = vmatpush1.msra.mxu0 0.0
      %6349 = vmatprep.subr.mxu0 0.0
      %6350 = vmatpush1.msra.mxu0 0.0
      %6351 = vmatprep.subr.mxu0 0.0
      %6352 = vmatpush1.msra.mxu0 0.0
      %6353 = vmatprep.subr.mxu0 0.0
      %6354 = vmatpush1.msra.mxu0 0.0
      %6355 = vmatprep.subr.mxu0 0.0
      %6356 = vmatpush1.msra.mxu0 0.0
      %6357 = vmatprep.subr.mxu0 0.0
      %6358 = vmatpush1.msra.mxu0 0.0
      %6359 = vmatprep.subr.mxu0 0.0
      %6360 = vmatpush1.msra.mxu0 0.0
      %6361 = vmatprep.subr.mxu0 0.0
      %6362 = vmatpush1.msra.mxu0 0.0
      %6363 = vmatprep.subr.mxu0 0.0
      %6364 = vmatpush1.msra.mxu0 0.0
      %6365 = vmatprep.subr.mxu0 0.0
      %6366 = vmatpush1.msra.mxu0 0.0
      %6367 = vmatprep.subr.mxu0 0.0
      %6368 = vmatpush1.msra.mxu0 0.0
      %6369 = vmatprep.subr.mxu0 0.0
      %6370 = vmatpush1.msra.mxu0 0.0
      %6371 = vmatprep.subr.mxu0 0.0
      %6372 = vmatpush1.msra.mxu0 0.0
      %6373 = vmatprep.subr.mxu0 0.0
      %6374 = vmatpush1.msra.mxu0 0.0
      %6375 = vmatprep.subr.mxu0 0.0
      %6376 = vmatpush1.msra.mxu0 0.0
      %6377 = vmatprep.mubr.f32.mxu0 0.0
      %6378 = vmatmul.mubr.f32.gmra.mrb[0].mxu0 %v6311
      %v6379 = vpop.f32.mrb[0].mxu0
      %v6380 = vadd.f32 %v6308, %v6379
      %v6381 = vpop.f32.mrb[0].mxu0
      %6382 = vdwg.mxu0
      %v6383 = vmax.f32 %v6380, 0.0
      %v6384 = vpack.c.bf16 %v6383, %v6383
      %v6385 = vld [vmem:[%s9] sm:$0xf]
      %v6386 = vld [vmem:[%s9 + $0x4] sm:$0xf]
      %v6387 = vld [vmem:[%s9 + $0x8] sm:$0xf]
      %v6388 = vld [vmem:[%s9 + $0xc] sm:$0xf]
      %v6389 = vld [vmem:[%s10] sm:$0x1]
      %v6391 = vlaneseq
      %v6392 = vshrl.u32 %v6391, 7
      %v6393 = vsub.s32 0, %v6392
      %v6394 = vrot.slane %v6389, %v6393
      %v6400 = vunpack.c.l.b16 %v6385
      %v6401 = vunpack.c.l.b16 %v6386
      %v6402 = vunpack.c.l.b16 %v6387
      %v6403 = vunpack.c.l.b16 %v6388
      %v6404 = vpack.c.b16 %v6401, %v6400
      %v6405 = vpack.c.b16 %v6403, %v6402
      %v6409 = vsel %vm5691, %v6384, 0
      %6411 = vmatprep.subr.bf16.mxu0 0
      %6412 = vmatpush1.bf16.msra.mxu0 %v6404
      %6413 = vmatprep.subr.bf16.mxu0 0
      %6414 = vmatpush1.bf16.msra.mxu0 %v6405
      %6415 = vmatprep.subr.bf16.mxu0 0
      %6416 = vmatpush1.bf16.msra.mxu0 0
      %6417 = vmatprep.subr.bf16.mxu0 0
      %6418 = vmatpush1.bf16.msra.mxu0 0
      %6419 = vmatprep.subr.bf16.mxu0 0
      %6420 = vmatpush1.bf16.msra.mxu0 0
      %6421 = vmatprep.subr.bf16.mxu0 0
      %6422 = vmatpush1.bf16.msra.mxu0 0
      %6423 = vmatprep.subr.bf16.mxu0 0
      %6424 = vmatpush1.bf16.msra.mxu0 0
      %6425 = vmatprep.subr.bf16.mxu0 0
      %6426 = vmatpush1.bf16.msra.mxu0 0
      %6427 = vmatprep.subr.bf16.mxu0 0
      %6428 = vmatpush1.bf16.msra.mxu0 0
      %6429 = vmatprep.subr.bf16.mxu0 0
      %6430 = vmatpush1.bf16.msra.mxu0 0
      %6431 = vmatprep.subr.bf16.mxu0 0
      %6432 = vmatpush1.bf16.msra.mxu0 0
      %6433 = vmatprep.subr.bf16.mxu0 0
      %6434 = vmatpush1.bf16.msra.mxu0 0
      %6435 = vmatprep.subr.bf16.mxu0 0
      %6436 = vmatpush1.bf16.msra.mxu0 0
      %6437 = vmatprep.subr.bf16.mxu0 0
      %6438 = vmatpush1.bf16.msra.mxu0 0
      %6439 = vmatprep.subr.bf16.mxu0 0
      %6440 = vmatpush1.bf16.msra.mxu0 0
      %6441 = vmatprep.subr.bf16.mxu0 0
      %6442 = vmatpush1.bf16.msra.mxu0 0
      %6443 = vmatprep.mubr.bf16.mxu0 0
      %6444 = vmatmul.mubr.bf16.gmra.mrb[0].mxu0 %v6409
      %v6445 = vpop.f32.mrb[0].mxu0
      %v6446 = vadd.f32 %v6394, %v6445
      %v6447 = vpop.f32.mrb[0].mxu0
      %v6448 = vpop.f32.mrb[0].mxu0
      %v6449 = vpop.f32.mrb[0].mxu0
      %6450 = vdwg.mxu0
      %6451 = vxpose.xlu0.b32.start [1/16] %v6446, 128
      %6452 = vxpose.xlu0.b32.cont [2/16] 0.0, 128
      %6453 = vxpose.xlu0.b32.cont [3/16] 0.0, 128
      %6454 = vxpose.xlu0.b32.cont [4/16] 0.0, 128
      %6455 = vxpose.xlu0.b32.cont [5/16] 0.0, 128
      %6456 = vxpose.xlu0.b32.cont [6/16] 0.0, 128
      %6457 = vxpose.xlu0.b32.cont [7/16] 0.0, 128
      %6458 = vxpose.xlu0.b32.cont [8/16] 0.0, 128
      %6459 = vxpose.xlu0.b32.cont [9/16] 0.0, 128
      %6460 = vxpose.xlu0.b32.cont [10/16] 0.0, 128
      %6461 = vxpose.xlu0.b32.cont [11/16] 0.0, 128
      %6462 = vxpose.xlu0.b32.cont [12/16] 0.0, 128
      %6463 = vxpose.xlu0.b32.cont [13/16] 0.0, 128
      %6464 = vxpose.xlu0.b32.cont [14/16] 0.0, 128
      %6465 = vxpose.xlu0.b32.cont [15/16] 0.0, 128
      %6466 = vxpose.xlu0.b32.end [16/16] 0.0, 128
      %v6467 = vpop.trf.xlu0
      %v6468 = vpop.trf.xlu0
      %v6469 = vpop.trf.xlu0
      %v6470 = vpop.trf.xlu0
      %v6471 = vpop.trf.xlu0
      %v6472 = vpop.trf.xlu0
      %v6473 = vpop.trf.xlu0
      %v6474 = vpop.trf.xlu0
      %v6475 = vpop.trf.xlu0
      %v6476 = vpop.trf.xlu0
      %v6477 = vpop.trf.xlu0
      %v6478 = vpop.trf.xlu0
      %v6479 = vpop.trf.xlu0
      %v6480 = vpop.trf.xlu0
      %v6481 = vpop.trf.xlu0
      %v6482 = vpop.trf.xlu0
      %v6483 = vld [vmem:[%s14] sm:$0xf]
      %vm6484 = vcmask 31744
      %v6486 = vsel %vm6484, %v6467, 0
      %v6489 = vsel %vm3499, %v6483, 0
      %6491 = vmatprep.subr.mxu0 0.0
      %6492 = vmatpush1.msra.mxu0 %v6489
      %6493 = vmatprep.subr.mxu0 0.0
      %6494 = vmatpush1.msra.mxu0 0.0
      %6495 = vmatprep.subr.mxu0 0.0
      %6496 = vmatpush1.msra.mxu0 0.0
      %6497 = vmatprep.subr.mxu0 0.0
      %6498 = vmatpush1.msra.mxu0 0.0
      %6499 = vmatprep.subr.mxu0 0.0
      %6500 = vmatpush1.msra.mxu0 0.0
      %6501 = vmatprep.subr.mxu0 0.0
      %6502 = vmatpush1.msra.mxu0 0.0
      %6503 = vmatprep.subr.mxu0 0.0
      %6504 = vmatpush1.msra.mxu0 0.0
      %6505 = vmatprep.subr.mxu0 0.0
      %6506 = vmatpush1.msra.mxu0 0.0
      %6507 = vmatprep.subr.mxu0 0.0
      %6508 = vmatpush1.msra.mxu0 0.0
      %6509 = vmatprep.subr.mxu0 0.0
      %6510 = vmatpush1.msra.mxu0 0.0
      %6511 = vmatprep.subr.mxu0 0.0
      %6512 = vmatpush1.msra.mxu0 0.0
      %6513 = vmatprep.subr.mxu0 0.0
      %6514 = vmatpush1.msra.mxu0 0.0
      %6515 = vmatprep.subr.mxu0 0.0
      %6516 = vmatpush1.msra.mxu0 0.0
      %6517 = vmatprep.subr.mxu0 0.0
      %6518 = vmatpush1.msra.mxu0 0.0
      %6519 = vmatprep.subr.mxu0 0.0
      %6520 = vmatpush1.msra.mxu0 0.0
      %6521 = vmatprep.subr.mxu0 0.0
      %6522 = vmatpush1.msra.mxu0 0.0
      %6523 = vmatprep.subr.mxu0 0.0
      %6524 = vmatpush1.msra.mxu0 0.0
      %6525 = vmatprep.subr.mxu0 0.0
      %6526 = vmatpush1.msra.mxu0 0.0
      %6527 = vmatprep.subr.mxu0 0.0
      %6528 = vmatpush1.msra.mxu0 0.0
      %6529 = vmatprep.subr.mxu0 0.0
      %6530 = vmatpush1.msra.mxu0 0.0
      %6531 = vmatprep.subr.mxu0 0.0
      %6532 = vmatpush1.msra.mxu0 0.0
      %6533 = vmatprep.subr.mxu0 0.0
      %6534 = vmatpush1.msra.mxu0 0.0
      %6535 = vmatprep.subr.mxu0 0.0
      %6536 = vmatpush1.msra.mxu0 0.0
      %6537 = vmatprep.subr.mxu0 0.0
      %6538 = vmatpush1.msra.mxu0 0.0
      %6539 = vmatprep.subr.mxu0 0.0
      %6540 = vmatpush1.msra.mxu0 0.0
      %6541 = vmatprep.subr.mxu0 0.0
      %6542 = vmatpush1.msra.mxu0 0.0
      %6543 = vmatprep.subr.mxu0 0.0
      %6544 = vmatpush1.msra.mxu0 0.0
      %6545 = vmatprep.subr.mxu0 0.0
      %6546 = vmatpush1.msra.mxu0 0.0
      %6547 = vmatprep.subr.mxu0 0.0
      %6548 = vmatpush1.msra.mxu0 0.0
      %6549 = vmatprep.subr.mxu0 0.0
      %6550 = vmatpush1.msra.mxu0 0.0
      %6551 = vmatprep.subr.mxu0 0.0
      %6552 = vmatpush1.msra.mxu0 0.0
      %6553 = vmatprep.subr.mxu0 0.0
      %6554 = vmatpush1.msra.mxu0 0.0
      %6555 = vmatprep.mubr.f32.mxu0 0.0
      %6556 = vmatmul.mubr.f32.gmra.mrb[0].mxu0 %v6486
      %v6557 = vpop.f32.mrb[0].mxu0
      %v6558 = vadd.f32 0.0, %v6557
      %v6559 = vpop.f32.mrb[0].mxu0
      %6560 = vdwg.mxu0
      %v6561 = vld [vmem:[%s15] sm:$0xff]
      %v6562 = vld [vmem:[%s15 + $0x8] sm:$0xff]
      %v6563 = vld [vmem:[%s15 + $0x10] sm:$0xff]
      %v6564 = vld [vmem:[%s15 + $0x18] sm:$0xff]
      %v6565 = vld [vmem:[%s15 + $0x20] sm:$0xff]
      %v6566 = vld [vmem:[%s15 + $0x28] sm:$0xff]
      %v6567 = vld [vmem:[%s15 + $0x30] sm:$0xff]
      %v6568 = vld [vmem:[%s15 + $0x38] sm:$0xff]
      %v6570 = vsel %vm5691, %v6558, 0
      %6572 = vmatprep.subr.mxu0 %v6562
      %6573 = vmatpush1.msra.mxu0 %v6561
      %6574 = vmatprep.subr.mxu0 %v6564
      %6575 = vmatpush1.msra.mxu0 %v6563
      %6576 = vmatprep.subr.mxu0 %v6566
      %6577 = vmatpush1.msra.mxu0 %v6565
      %6578 = vmatprep.subr.mxu0 %v6568
      %6579 = vmatpush1.msra.mxu0 %v6567
      %6580 = vmatprep.subr.mxu0 0.0
      %6581 = vmatpush1.msra.mxu0 0.0
      %6582 = vmatprep.subr.mxu0 0.0
      %6583 = vmatpush1.msra.mxu0 0.0
      %6584 = vmatprep.subr.mxu0 0.0
      %6585 = vmatpush1.msra.mxu0 0.0
      %6586 = vmatprep.subr.mxu0 0.0
      %6587 = vmatpush1.msra.mxu0 0.0
      %6588 = vmatprep.subr.mxu0 0.0
      %6589 = vmatpush1.msra.mxu0 0.0
      %6590 = vmatprep.subr.mxu0 0.0
      %6591 = vmatpush1.msra.mxu0 0.0
      %6592 = vmatprep.subr.mxu0 0.0
      %6593 = vmatpush1.msra.mxu0 0.0
      %6594 = vmatprep.subr.mxu0 0.0
      %6595 = vmatpush1.msra.mxu0 0.0
      %6596 = vmatprep.subr.mxu0 0.0
      %6597 = vmatpush1.msra.mxu0 0.0
      %6598 = vmatprep.subr.mxu0 0.0
      %6599 = vmatpush1.msra.mxu0 0.0
      %6600 = vmatprep.subr.mxu0 0.0
      %6601 = vmatpush1.msra.mxu0 0.0
      %6602 = vmatprep.subr.mxu0 0.0
      %6603 = vmatpush1.msra.mxu0 0.0
      %6604 = vmatprep.subr.mxu0 0.0
      %6605 = vmatpush1.msra.mxu0 0.0
      %6606 = vmatprep.subr.mxu0 0.0
      %6607 = vmatpush1.msra.mxu0 0.0
      %6608 = vmatprep.subr.mxu0 0.0
      %6609 = vmatpush1.msra.mxu0 0.0
      %6610 = vmatprep.subr.mxu0 0.0
      %6611 = vmatpush1.msra.mxu0 0.0
      %6612 = vmatprep.subr.mxu0 0.0
      %6613 = vmatpush1.msra.mxu0 0.0
      %6614 = vmatprep.subr.mxu0 0.0
      %6615 = vmatpush1.msra.mxu0 0.0
      %6616 = vmatprep.subr.mxu0 0.0
      %6617 = vmatpush1.msra.mxu0 0.0
      %6618 = vmatprep.subr.mxu0 0.0
      %6619 = vmatpush1.msra.mxu0 0.0
      %6620 = vmatprep.subr.mxu0 0.0
      %6621 = vmatpush1.msra.mxu0 0.0
      %6622 = vmatprep.subr.mxu0 0.0
      %6623 = vmatpush1.msra.mxu0 0.0
      %6624 = vmatprep.subr.mxu0 0.0
      %6625 = vmatpush1.msra.mxu0 0.0
      %6626 = vmatprep.subr.mxu0 0.0
      %6627 = vmatpush1.msra.mxu0 0.0
      %6628 = vmatprep.subr.mxu0 0.0
      %6629 = vmatpush1.msra.mxu0 0.0
      %6630 = vmatprep.subr.mxu0 0.0
      %6631 = vmatpush1.msra.mxu0 0.0
      %6632 = vmatprep.subr.mxu0 0.0
      %6633 = vmatpush1.msra.mxu0 0.0
      %6634 = vmatprep.subr.mxu0 0.0
      %6635 = vmatpush1.msra.mxu0 0.0
      %6636 = vmatprep.mubr.f32.mxu0 0.0
      %6637 = vmatmul.mubr.f32.gmra.mrb[0].mxu0 %v6570
      %v6638 = vpop.f32.mrb[0].mxu0
      %v6639 = vadd.f32 0.0, %v6638
      %v6640 = vpop.f32.mrb[0].mxu0
      %v6641 = vadd.f32 0.0, %v6640
      %6642 = vdwg.mxu0
      %v6645 = vcombine.low %v6639, %v6641
      %v6647 = vunpack.c.l.s4 1983009808
      %v6648 = vunpack.c.0.s8 %v6647
      %v6649 = vlaneseq
      %v6650 = vshrl.u32 %v6649, 7
      %v6651 = vsub.s32 %v6648, %v6650
      %v6652 = vrot.slane %v6645, %v6651
      %6654 = vst [vmem:[%s521] sm:$0xf] %v6652
      %p6655 = scmp.lt.s32.totalorder %s27, 1
      %s6656 = scalar_select %p6655, %s27, 1
      %s6657 = smul.addr %s6656, 2
      %s6658 = smul.addr %s6657, 2
      %s6659 = scalar_lea.vmem %s16, %s6658
      // Predicated region
      $region85: #{generator_forward.1} parent=83 // pred_check
        %p6660 = pneg %p386
      $region86: #{generator_forward.1} parent=83 // pred_check_branch
        %6662 = sbr.rel (%p6660) target = $region88
      $region87: #{generator_forward.1} parent=83 // pred_region
        _
      $region88: #{generator_forward.1} parent=83 // pred_fallthru
        _
    $region84: #{generator_forward.1} parent=5 // pred_fallthru
      _
    %p6663 = scmp.le.s32.totalorder 2, %s22
    // Predicated region
    $region89: #{generator_forward.1} parent=5 // pred_check
      %p6664 = pneg %p6663
    $region90: #{generator_forward.1} parent=5 // pred_check_branch
      %6666 = sbr.rel (%p6664) target = $region92
    $region91: #{generator_forward.1} parent=5 // pred_region
      %s6667 = ssub.s32 %s22, 2
      // Predicated region
      $region93: #{generator_forward.1} parent=91 // pred_check
        %p6668 = pneg %p392
      $region94: #{generator_forward.1} parent=91 // pred_check_branch
        %6670 = sbr.rel (%p6668) target = $region96
      $region95: #{generator_forward.1} parent=91 // pred_region
        %p6671 = scmp.lt.s32.totalorder %s28, 1
        %s6672 = scalar_select %p6671, %s28, 1
        %s6673 = smul.addr %s6672, 2
        %s6674 = smul.addr %s6673, 2
        %s6675 = scalar_lea.vmem %s16, %s6674
      $region96: #{generator_forward.1} parent=91 // pred_fallthru
        _
    $region92: #{generator_forward.1} parent=5 // pred_fallthru
      _
  $region6: #{generator_forward.1} parent=0 // loop_footer
    %s26 = sadd.s32 1, %s22
  $region7: #{generator_forward.1} parent=0 // loop_footer_branch
    %21 = sbr.rel target = $region3
  $region8: #{generator_forward.1} parent=0 // loop_exit
    _

</llo_original>
